<compile_context>
chip_gen: v7x
topology: tpu7x:2x2x1
jax: 0.10.0
libtpu: 0.0.40
codegen_flags: <defaults>
</compile_context>

<pallas_src>
import functools

import numpy as np
import jax
import jax.numpy as jnp
from jax.experimental import pallas as pl
from jax.experimental.pallas import tpu as pltpu

BF16 = jnp.bfloat16
F32 = jnp.float32

# ---------------------------------------------------------------------------
# Static geometry of the four transposed convolutions (batch independent)
# ---------------------------------------------------------------------------
_CFG = (
    dict(IC=128, OC=64, k=3, s=2, p=1, op=0),   # conv_transpose1
    dict(IC=64,  OC=32, k=3, s=2, p=1, op=0),   # conv_transpose2
    dict(IC=32,  OC=16, k=2, s=2, p=1, op=1),   # conv_transpose3 (OC = newW = 16)
    dict(IC=16,  OC=16, k=3, s=2, p=1, op=0),   # upsample
)


def _make_geoms():
    geoms = []
    IH = IW = 2
    for cfg in _CFG:
        k, s, p, op = cfg["k"], cfg["s"], cfg["p"], cfg["op"]
        OH = (IH - 1) * s - 2 * p + k + op
        OW = (IW - 1) * s - 2 * p + k + op
        S_in = IH * IW
        geoms.append(dict(IC=cfg["IC"], OC=cfg["OC"], k=k, s=s, p=p, op=op,
                          IH=IH, IW=IW, OH=OH, OW=OW, T=k * k,
                          S_in=S_in, S_in_pad=-(-S_in // 8) * 8, S_out=OH * OW))
        IH, IW = OH, OW
    return tuple(geoms)


GEOMS = _make_geoms()
assert GEOMS[-1]["OH"] == 17 and GEOMS[-1]["OW"] == 17


# ---------------------------------------------------------------------------
# Host-side constant construction (runs once at init time, NOT per forward)
# ---------------------------------------------------------------------------
def _build_g_w(w_np, geo):
    """Per-image tap-concatenated scatter matrix Gcat and channel-mix Wcat.

    Gcat (S_out, T*S_in_pad) int8 0/1, columns grouped by tap (zero pad cols).
    Wcat (IC, T*OC), columns grouped by tap.
    With pstack[t*S_in_pad + i, c] = (X @ W_t)[i, c]:
        Y = Gcat @ pstack  ==  PyTorch ConvTranspose2d (oh = s*ih - p + kh).
    """
    IC, OC = geo["IC"], geo["OC"]
    k, s, p = geo["k"], geo["s"], geo["p"]
    IH, IW, OH, OW = geo["IH"], geo["IW"], geo["OH"], geo["OW"]
    T, S_in_pad, S_out = geo["T"], geo["S_in_pad"], geo["S_out"]
    G = np.zeros((S_out, T * S_in_pad), np.int8)
    for kh in range(k):
        for kw in range(k):
            t = kh * k + kw
            for oh in range(OH):
                nh = oh + p - kh
                if nh % s != 0 or not (0 <= nh // s < IH):
                    continue
                ih = nh // s
                for ow in range(OW):
                    nw = ow + p - kw
                    if nw % s != 0 or not (0 <= nw // s < IW):
                        continue
                    iw = nw // s
                    G[oh * OW + ow, t * S_in_pad + ih * IW + iw] = 1
    # (IC, OC, k, k) -> (IC, T*OC), column index = t*OC + oc, t = kh*k + kw.
    Wcat = np.transpose(w_np, (2, 3, 0, 1)).reshape(T, IC, OC)
    Wcat = np.transpose(Wcat, (1, 0, 2)).reshape(IC, T * OC)
    return G, Wcat


def init_params(key, newW=16):
    assert newW == 16, "upsample has 16 input channels -> newW must be 16"
    ks = jax.random.split(key, 14)
    rnd = lambda k_, shape, sc: np.asarray(sc * jax.random.normal(k_, shape, jnp.float32))

    params = {}
    # fc: Linear(512 -> 512); output is viewed as (128, 2, 2) = (c, h, w).
    # Permute output columns to (s = h*2+w, c) so 128-wide channel blocks per
    # spatial position are lane-contiguous.
    fc_w = rnd(ks[0], (512, 512), 0.03)            # (in, out) == PyTorch fc.weight.T
    fc_b = rnd(ks[1], (512,), 0.03)
    perm = np.array([c * 4 + s for s in range(4) for c in range(128)], np.int64)
    params["fc_w"] = jnp.asarray(fc_w[:, perm], BF16)

    biases = []
    for i, geo in enumerate(GEOMS):
        w = rnd(ks[2 + 2 * i], (geo["IC"], geo["OC"], geo["k"], geo["k"]), 0.05)
        b = rnd(ks[3 + 2 * i], (geo["OC"],), 0.05)
        G, Wcat = _build_g_w(w, geo)
        params[f"g{i+1}"] = jnp.asarray(G, jnp.int8)     # 0/1 -> int8 HBM, exact cast
        params[f"w{i+1}"] = jnp.asarray(Wcat, BF16)
        biases.append(b)

    bn1_g = 1.0 + rnd(ks[10], (64,), 0.1)
    bn1_b = rnd(ks[11], (64,), 0.1)
    bn2_g = 1.0 + rnd(ks[12], (32,), 0.1)
    bn2_b = rnd(ks[13], (32,), 0.1)

    # Pack all tiny per-stage vectors into ONE constant (review item: fewer DMAs).
    vecs = np.zeros((9, 512), np.float32)
    vecs[0, :512] = fc_b[perm]
    vecs[1, :64] = biases[0]
    vecs[2, :64] = bn1_g
    vecs[3, :64] = bn1_b
    vecs[4, :32] = biases[1]
    vecs[5, :32] = bn2_g
    vecs[6, :32] = bn2_b
    vecs[7, :16] = biases[2]
    vecs[8, :16] = biases[3]
    params["vecs"] = jnp.asarray(vecs, F32)
    return params


# ---------------------------------------------------------------------------
# Single fused Pallas kernel: whole decoder forward, all stages VMEM-resident
# ---------------------------------------------------------------------------
def _make_kernel(B):
    def kernel(x_ref, fcw_ref, vec_ref,
               w1_ref, g1_ref, w2_ref, g2_ref, w3_ref, g3_ref,
               w4_ref, g4_hbm_ref,
               o_ref,
               x1_ref, ps_ref, g4_vmem_ref, g4_sem):
        geo1, geo2, geo3, geo4 = GEOMS

        # Kick off the DMA of the largest constant (upsample-stage G) now so it
        # overlaps with fc / ct1 / ct2 / ct3 compute.
        g4_copy = pltpu.make_async_copy(g4_hbm_ref, g4_vmem_ref, g4_sem)
        g4_copy.start()

        # P-stack padding rows multiply all-zero Gcat columns; they only need to be
        # FINITE, so one zero-fill at kernel start suffices for every stage.
        ps_ref[...] = jnp.zeros_like(ps_ref)

        def vrow(r, width):
            return vec_ref[r:r + 1, 0:width]

        # ---- fc : one (B,512) @ (512,512) matmul ----
        h = jnp.dot(x_ref[...].astype(BF16), fcw_ref[...],
                    preferred_element_type=F32) + vrow(0, 512)        # (B, 512) f32
        # Re-layout to spatial-rows / (batch x channel)-lanes: x1[s, b*128+c] = h[b, s*128+c]
        for b in range(B):
            for s in range(4):
                x1_ref[s:s + 1, b * 128:(b + 1) * 128] = h[b:b + 1, s * 128:(s + 1) * 128]
        xs = [x1_ref[0:4, b * 128:(b + 1) * 128] for b in range(B)]   # B x (4, 128)

        def deconv(xs_in, w_ref, g_f32, bias_row, geo):
            # ConvTranspose2d:  Y = bias + Gcat @ stack_t(X @ W_t)
            #   * one X @ Wcat matmul per image (reordered: channel-mix BEFORE scatter)
            #   * one long-K scatter matmul per stage (all taps + batch collapsed)
            T, S_in, S_in_pad = geo["T"], geo["S_in"], geo["S_in_pad"]
            OC = geo["OC"]
            rows = T * S_in_pad
            for b in range(B):
                pb = jnp.dot(xs_in[b].astype(BF16), w_ref[...],
                             preferred_element_type=F32)              # (S_in, T*OC) f32
                for t in range(T):
                    ps_ref[t * S_in_pad:t * S_in_pad + S_in, b * OC:(b + 1) * OC] = \
                        pb[:, t * OC:(t + 1) * OC]
            y = jnp.dot(g_f32, ps_ref[0:rows, 0:B * OC],
                        preferred_element_type=F32)                   # (S_out, B*OC)
            bias = vrow(bias_row, OC)
            return [y[:, b * OC:(b + 1) * OC] + bias for b in range(B)]

        def bn_relu(ys, g_row, b_row, geo):
            # Training-mode BatchNorm (batch stats, biased variance, eps=1e-5) with the
            # two-pass (subtract-mean) variance, then ReLU.  f32 throughout.
            OC, S_out = geo["OC"], geo["S_out"]
            inv_n = 1.0 / float(B * S_out)
            tot = jnp.sum(ys[0], axis=0, keepdims=True)
            for b in range(1, B):
                tot = tot + jnp.sum(ys[b], axis=0, keepdims=True)
            mean = tot * inv_n                                        # (1, OC)
            cs = [yb - mean for yb in ys]
            sq = jnp.sum(cs[0] * cs[0], axis=0, keepdims=True)
            for b in range(1, B):
                sq = sq + jnp.sum(cs[b] * cs[b], axis=0, keepdims=True)
            var = sq * inv_n
            scale = vrow(g_row, OC) * jax.lax.rsqrt(var + 1e-5)
            shift = vrow(b_row, OC)
            return [jnp.maximum(cb * scale + shift, 0.0) for cb in cs]

        # ct1 + bn1 + relu : (4, B*128) -> (9, B*64)
        a1 = bn_relu(deconv(xs, w1_ref, g1_ref[...].astype(F32), 1, geo1), 2, 3, geo1)
        # ct2 + bn2 + relu : (9, B*64) -> (25, B*32)
        a2 = bn_relu(deconv(a1, w2_ref, g2_ref[...].astype(F32), 4, geo2), 5, 6, geo2)
        # ct3 + sigmoid    : (25, B*32) -> (81, B*16)
        a3 = [jax.nn.sigmoid(yb)
              for yb in deconv(a2, w3_ref, g3_ref[...].astype(F32), 7, geo3)]
        # upsample         : (81, B*16) -> (289, B*16); wait for its G to land first.
        g4_copy.wait()
        y4 = deconv(a3, w4_ref, g4_vmem_ref[...].astype(F32), 8, geo4)
        for b in range(B):
            o_ref[b, :, :] = y4[b]

    return kernel


def _full_spec(shape):
    zeros = (0,) * len(shape)
    return pl.BlockSpec(shape, lambda i, _z=zeros: _z)


@functools.partial(jax.jit, static_argnames=("newW",))
def decoder_forward(x, params, newW=16):
    assert newW == 16, "upsample has 16 input channels -> newW must be 16"
    assert x.ndim == 2 and x.shape[1] == 512, x.shape
    B = x.shape[0]

    ops = (x, params["fc_w"], params["vecs"],
           params["w1"], params["g1"], params["w2"], params["g2"],
           params["w3"], params["g3"], params["w4"], params["g4"])

    S_out4 = GEOMS[-1]["S_out"]                                   # 289 = 17*17
    ps_rows = max(g["T"] * g["S_in_pad"] for g in GEOMS)          # 792
    ps_cols = max(B * g["OC"] for g in GEOMS)                     # 128 for B=2

    # Advisory cost estimate computed from shapes (review nit).
    flops = 2 * B * 512 * 512
    for g in GEOMS:
        flops += 2 * B * g["S_in"] * g["IC"] * g["T"] * g["OC"]           # X @ Wcat
        flops += 2 * g["S_out"] * g["T"] * g["S_in_pad"] * B * g["OC"]    # Gcat @ pstack
    trans = B * GEOMS[2]["S_out"] * GEOMS[2]["OC"] + 2 * (64 + 32)
    in_bytes = sum(int(np.prod(a.shape)) * a.dtype.itemsize for a in ops)
    cost = pl.CostEstimate(flops=int(flops), transcendentals=int(trans),
                           bytes_accessed=int(in_bytes + B * S_out4 * newW * 4))

    in_specs = ([_full_spec(a.shape) for a in ops[:-1]]
                + [pl.BlockSpec(memory_space=pl.ANY)])            # g4 stays in HBM

    y = pl.pallas_call(
        _make_kernel(B),
        out_shape=jax.ShapeDtypeStruct((B, S_out4, newW), F32),
        grid=(1,),
        in_specs=in_specs,
        out_specs=_full_spec((B, S_out4, newW)),
        scratch_shapes=[
            pltpu.VMEM((8, B * 128), F32),                 # fc-output relayout buffer
            pltpu.VMEM((ps_rows, ps_cols), F32),           # shared per-stage P-stack
            pltpu.VMEM(params["g4"].shape, jnp.int8),      # manual-DMA landing buffer
            pltpu.SemaphoreType.DMA,                       # completion semaphore
        ],
        compiler_params=pltpu.CompilerParams(dimension_semantics=("arbitrary",)),
        cost_estimate=cost,
    )(*ops)

    # Single relayout at the module boundary: (B, 17*17, C) -> NCHW.
    return y.reshape(B, 17, 17, newW).transpose(0, 3, 1, 2)


if __name__ == "__main__":
    key = jax.random.PRNGKey(0)
    params = init_params(key, newW=16)
    x = jax.random.normal(jax.random.fold_in(key, 999), (2, 512), jnp.float32)

    out = decoder_forward(x, params, newW=16)
    out = jax.block_until_ready(out)

    assert out.shape == (2, 16, 17, 17), out.shape
    assert bool(jnp.all(jnp.isfinite(out)))
    print("KERNEL_OK")
</pallas_src>

<mosaic_0001>
module attributes {stable_mosaic.version = 11 : i64} {
  func.func @kernel(%arg0: i32, %arg1: memref<2x512xf32, #tpu.memory_space<vmem>>, %arg2: memref<512x512xbf16, #tpu.memory_space<vmem>>, %arg3: memref<9x512xf32, #tpu.memory_space<vmem>>, %arg4: memref<128x576xbf16, #tpu.memory_space<vmem>>, %arg5: memref<9x72xi8, #tpu.memory_space<vmem>>, %arg6: memref<64x288xbf16, #tpu.memory_space<vmem>>, %arg7: memref<25x144xi8, #tpu.memory_space<vmem>>, %arg8: memref<32x64xbf16, #tpu.memory_space<vmem>>, %arg9: memref<81x128xi8, #tpu.memory_space<vmem>>, %arg10: memref<16x144xbf16, #tpu.memory_space<vmem>>, %arg11: memref<289x792xi8, #tpu.memory_space<any>>, %arg12: memref<2x289x16xf32, #tpu.memory_space<vmem>>, %arg13: memref<8x256xf32, #tpu.memory_space<vmem>>, %arg14: memref<792x128xf32, #tpu.memory_space<vmem>>, %arg15: memref<289x792xi8, #tpu.memory_space<vmem>>, %arg16: memref<!tpu.dma_semaphore, #tpu.memory_space<semaphore_mem>>) attributes {dimension_semantics = [#tpu.dimension_semantics<arbitrary>], iteration_bounds = array<i64: 1>, scalar_prefetch = 0 : i64, scratch_operands = 4 : i64, tpu.core_type = #tpu.core_type<tc>, window_params = [{pipeline_mode = #tpu.pipeline_mode<synchronous>, transform_indices = @transform_0, window_bounds = array<i64: 2, 512>}, {pipeline_mode = #tpu.pipeline_mode<synchronous>, transform_indices = @transform_1, window_bounds = array<i64: 512, 512>}, {pipeline_mode = #tpu.pipeline_mode<synchronous>, transform_indices = @transform_2, window_bounds = array<i64: 9, 512>}, {pipeline_mode = #tpu.pipeline_mode<synchronous>, transform_indices = @transform_3, window_bounds = array<i64: 128, 576>}, {pipeline_mode = #tpu.pipeline_mode<synchronous>, transform_indices = @transform_4, window_bounds = array<i64: 9, 72>}, {pipeline_mode = #tpu.pipeline_mode<synchronous>, transform_indices = @transform_5, window_bounds = array<i64: 64, 288>}, {pipeline_mode = #tpu.pipeline_mode<synchronous>, transform_indices = @transform_6, window_bounds = array<i64: 25, 144>}, {pipeline_mode = #tpu.pipeline_mode<synchronous>, transform_indices = @transform_7, window_bounds = array<i64: 32, 64>}, {pipeline_mode = #tpu.pipeline_mode<synchronous>, transform_indices = @transform_8, window_bounds = array<i64: 81, 128>}, {pipeline_mode = #tpu.pipeline_mode<synchronous>, transform_indices = @transform_9, window_bounds = array<i64: 16, 144>}, {}, {pipeline_mode = #tpu.pipeline_mode<synchronous>, transform_indices = @transform_11, window_bounds = array<i64: 2, 289, 16>}]} {
    tpu.enqueue_dma source(%arg11 : memref<289x792xi8, #tpu.memory_space<any>>) target(%arg15 : memref<289x792xi8, #tpu.memory_space<vmem>>) target_semaphore(%arg16 : memref<!tpu.dma_semaphore, #tpu.memory_space<semaphore_mem>>)
    %cst = arith.constant 0.000000e+00 : f32
    %0 = vector.broadcast %cst : f32 to vector<792x128xf32>
    %c0 = arith.constant 0 : index
    %c0_0 = arith.constant 0 : index
    %1 = vector.load %arg14[%c0, %c0_0] : memref<792x128xf32, #tpu.memory_space<vmem>>, vector<792x128xf32>
    tpu.vector_store %arg14[%c0, %c0_0], %0 {strides = array<i32>} : memref<792x128xf32, #tpu.memory_space<vmem>>, vector<792x128xf32>,
    %c0_1 = arith.constant 0 : index
    %c0_2 = arith.constant 0 : index
    %2 = vector.load %arg1[%c0_1, %c0_2] : memref<2x512xf32, #tpu.memory_space<vmem>>, vector<2x512xf32>
    %3 = arith.truncf %2 : vector<2x512xf32> to vector<2x512xbf16>
    %c0_3 = arith.constant 0 : index
    %c0_4 = arith.constant 0 : index
    %4 = vector.load %arg2[%c0_3, %c0_4] : memref<512x512xbf16, #tpu.memory_space<vmem>>, vector<512x512xbf16>
    %cst_5 = arith.constant dense<0.000000e+00> : vector<2x512xf32>
    %5 = tpu.matmul %3, %4, %cst_5 {dimension_numbers = #tpu.dot_dimension_numbers<[1], [0], [0], [1], [0, 0, 1, 1], [], []>} : vector<2x512xbf16>, vector<512x512xbf16>, vector<2x512xf32> -> vector<2x512xf32>
    %c0_6 = arith.constant 0 : index
    %c0_7 = arith.constant 0 : index
    %6 = vector.load %arg3[%c0_6, %c0_7] : memref<9x512xf32, #tpu.memory_space<vmem>>, vector<1x512xf32>
    %7 = vector.broadcast %6 : vector<1x512xf32> to vector<2x512xf32>
    %8 = arith.addf %5, %7 : vector<2x512xf32>
    %9 = vector.extract_strided_slice %8 {offsets = [0, 0], sizes = [1, 128], strides = [1, 1]} : vector<2x512xf32> to vector<1x128xf32>
    %c0_8 = arith.constant 0 : index
    %c0_9 = arith.constant 0 : index
    %10 = vector.load %arg13[%c0_8, %c0_9] : memref<8x256xf32, #tpu.memory_space<vmem>>, vector<1x128xf32>
    tpu.vector_store %arg13[%c0_8, %c0_9], %9 {strides = array<i32>} : memref<8x256xf32, #tpu.memory_space<vmem>>, vector<1x128xf32>,
    %11 = vector.extract_strided_slice %8 {offsets = [0, 128], sizes = [1, 128], strides = [1, 1]} : vector<2x512xf32> to vector<1x128xf32>
    %c1 = arith.constant 1 : index
    %c0_10 = arith.constant 0 : index
    %12 = vector.load %arg13[%c1, %c0_10] : memref<8x256xf32, #tpu.memory_space<vmem>>, vector<1x128xf32>
    tpu.vector_store %arg13[%c1, %c0_10], %11 {strides = array<i32>} : memref<8x256xf32, #tpu.memory_space<vmem>>, vector<1x128xf32>,
    %13 = vector.extract_strided_slice %8 {offsets = [0, 256], sizes = [1, 128], strides = [1, 1]} : vector<2x512xf32> to vector<1x128xf32>
    %c2 = arith.constant 2 : index
    %c0_11 = arith.constant 0 : index
    %14 = vector.load %arg13[%c2, %c0_11] : memref<8x256xf32, #tpu.memory_space<vmem>>, vector<1x128xf32>
    tpu.vector_store %arg13[%c2, %c0_11], %13 {strides = array<i32>} : memref<8x256xf32, #tpu.memory_space<vmem>>, vector<1x128xf32>,
    %15 = vector.extract_strided_slice %8 {offsets = [0, 384], sizes = [1, 128], strides = [1, 1]} : vector<2x512xf32> to vector<1x128xf32>
    %c3 = arith.constant 3 : index
    %c0_12 = arith.constant 0 : index
    %16 = vector.load %arg13[%c3, %c0_12] : memref<8x256xf32, #tpu.memory_space<vmem>>, vector<1x128xf32>
    tpu.vector_store %arg13[%c3, %c0_12], %15 {strides = array<i32>} : memref<8x256xf32, #tpu.memory_space<vmem>>, vector<1x128xf32>,
    %17 = vector.extract_strided_slice %8 {offsets = [1, 0], sizes = [1, 128], strides = [1, 1]} : vector<2x512xf32> to vector<1x128xf32>
    %c0_13 = arith.constant 0 : index
    %c128 = arith.constant 128 : index
    %18 = vector.load %arg13[%c0_13, %c128] : memref<8x256xf32, #tpu.memory_space<vmem>>, vector<1x128xf32>
    tpu.vector_store %arg13[%c0_13, %c128], %17 {strides = array<i32>} : memref<8x256xf32, #tpu.memory_space<vmem>>, vector<1x128xf32>,
    %19 = vector.extract_strided_slice %8 {offsets = [1, 128], sizes = [1, 128], strides = [1, 1]} : vector<2x512xf32> to vector<1x128xf32>
    %c1_14 = arith.constant 1 : index
    %c128_15 = arith.constant 128 : index
    %20 = vector.load %arg13[%c1_14, %c128_15] : memref<8x256xf32, #tpu.memory_space<vmem>>, vector<1x128xf32>
    tpu.vector_store %arg13[%c1_14, %c128_15], %19 {strides = array<i32>} : memref<8x256xf32, #tpu.memory_space<vmem>>, vector<1x128xf32>,
    %21 = vector.extract_strided_slice %8 {offsets = [1, 256], sizes = [1, 128], strides = [1, 1]} : vector<2x512xf32> to vector<1x128xf32>
    %c2_16 = arith.constant 2 : index
    %c128_17 = arith.constant 128 : index
    %22 = vector.load %arg13[%c2_16, %c128_17] : memref<8x256xf32, #tpu.memory_space<vmem>>, vector<1x128xf32>
    tpu.vector_store %arg13[%c2_16, %c128_17], %21 {strides = array<i32>} : memref<8x256xf32, #tpu.memory_space<vmem>>, vector<1x128xf32>,
    %23 = vector.extract_strided_slice %8 {offsets = [1, 384], sizes = [1, 128], strides = [1, 1]} : vector<2x512xf32> to vector<1x128xf32>
    %c3_18 = arith.constant 3 : index
    %c128_19 = arith.constant 128 : index
    %24 = vector.load %arg13[%c3_18, %c128_19] : memref<8x256xf32, #tpu.memory_space<vmem>>, vector<1x128xf32>
    tpu.vector_store %arg13[%c3_18, %c128_19], %23 {strides = array<i32>} : memref<8x256xf32, #tpu.memory_space<vmem>>, vector<1x128xf32>,
    %c0_20 = arith.constant 0 : index
    %c0_21 = arith.constant 0 : index
    %25 = vector.load %arg13[%c0_20, %c0_21] : memref<8x256xf32, #tpu.memory_space<vmem>>, vector<4x128xf32>
    %c0_22 = arith.constant 0 : index
    %c128_23 = arith.constant 128 : index
    %26 = vector.load %arg13[%c0_22, %c128_23] : memref<8x256xf32, #tpu.memory_space<vmem>>, vector<4x128xf32>
    %c0_24 = arith.constant 0 : index
    %c0_25 = arith.constant 0 : index
    %27 = vector.load %arg5[%c0_24, %c0_25] : memref<9x72xi8, #tpu.memory_space<vmem>>, vector<9x72xi8>
    %28 = arith.sitofp %27 : vector<9x72xi8> to vector<9x72xf32>
    %29 = arith.truncf %25 : vector<4x128xf32> to vector<4x128xbf16>
    %c0_26 = arith.constant 0 : index
    %c0_27 = arith.constant 0 : index
    %30 = vector.load %arg4[%c0_26, %c0_27] : memref<128x576xbf16, #tpu.memory_space<vmem>>, vector<128x576xbf16>
    %cst_28 = arith.constant dense<0.000000e+00> : vector<4x576xf32>
    %31 = tpu.matmul %29, %30, %cst_28 {dimension_numbers = #tpu.dot_dimension_numbers<[1], [0], [0], [1], [0, 0, 1, 1], [], []>} : vector<4x128xbf16>, vector<128x576xbf16>, vector<4x576xf32> -> vector<4x576xf32>
    %32 = vector.extract_strided_slice %31 {offsets = [0, 0], sizes = [4, 64], strides = [1, 1]} : vector<4x576xf32> to vector<4x64xf32>
    %c0_29 = arith.constant 0 : index
    %c0_30 = arith.constant 0 : index
    %33 = vector.load %arg14[%c0_29, %c0_30] : memref<792x128xf32, #tpu.memory_space<vmem>>, vector<4x64xf32>
    tpu.vector_store %arg14[%c0_29, %c0_30], %32 {strides = array<i32>} : memref<792x128xf32, #tpu.memory_space<vmem>>, vector<4x64xf32>,
    %34 = vector.extract_strided_slice %31 {offsets = [0, 64], sizes = [4, 64], strides = [1, 1]} : vector<4x576xf32> to vector<4x64xf32>
    %c8 = arith.constant 8 : index
    %c0_31 = arith.constant 0 : index
    %35 = vector.load %arg14[%c8, %c0_31] : memref<792x128xf32, #tpu.memory_space<vmem>>, vector<4x64xf32>
    tpu.vector_store %arg14[%c8, %c0_31], %34 {strides = array<i32>} : memref<792x128xf32, #tpu.memory_space<vmem>>, vector<4x64xf32>,
    %36 = vector.extract_strided_slice %31 {offsets = [0, 128], sizes = [4, 64], strides = [1, 1]} : vector<4x576xf32> to vector<4x64xf32>
    %c16 = arith.constant 16 : index
    %c0_32 = arith.constant 0 : index
    %37 = vector.load %arg14[%c16, %c0_32] : memref<792x128xf32, #tpu.memory_space<vmem>>, vector<4x64xf32>
    tpu.vector_store %arg14[%c16, %c0_32], %36 {strides = array<i32>} : memref<792x128xf32, #tpu.memory_space<vmem>>, vector<4x64xf32>,
    %38 = vector.extract_strided_slice %31 {offsets = [0, 192], sizes = [4, 64], strides = [1, 1]} : vector<4x576xf32> to vector<4x64xf32>
    %c24 = arith.constant 24 : index
    %c0_33 = arith.constant 0 : index
    %39 = vector.load %arg14[%c24, %c0_33] : memref<792x128xf32, #tpu.memory_space<vmem>>, vector<4x64xf32>
    tpu.vector_store %arg14[%c24, %c0_33], %38 {strides = array<i32>} : memref<792x128xf32, #tpu.memory_space<vmem>>, vector<4x64xf32>,
    %40 = vector.extract_strided_slice %31 {offsets = [0, 256], sizes = [4, 64], strides = [1, 1]} : vector<4x576xf32> to vector<4x64xf32>
    %c32 = arith.constant 32 : index
    %c0_34 = arith.constant 0 : index
    %41 = vector.load %arg14[%c32, %c0_34] : memref<792x128xf32, #tpu.memory_space<vmem>>, vector<4x64xf32>
    tpu.vector_store %arg14[%c32, %c0_34], %40 {strides = array<i32>} : memref<792x128xf32, #tpu.memory_space<vmem>>, vector<4x64xf32>,
    %42 = vector.extract_strided_slice %31 {offsets = [0, 320], sizes = [4, 64], strides = [1, 1]} : vector<4x576xf32> to vector<4x64xf32>
    %c40 = arith.constant 40 : index
    %c0_35 = arith.constant 0 : index
    %43 = vector.load %arg14[%c40, %c0_35] : memref<792x128xf32, #tpu.memory_space<vmem>>, vector<4x64xf32>
    tpu.vector_store %arg14[%c40, %c0_35], %42 {strides = array<i32>} : memref<792x128xf32, #tpu.memory_space<vmem>>, vector<4x64xf32>,
    %44 = vector.extract_strided_slice %31 {offsets = [0, 384], sizes = [4, 64], strides = [1, 1]} : vector<4x576xf32> to vector<4x64xf32>
    %c48 = arith.constant 48 : index
    %c0_36 = arith.constant 0 : index
    %45 = vector.load %arg14[%c48, %c0_36] : memref<792x128xf32, #tpu.memory_space<vmem>>, vector<4x64xf32>
    tpu.vector_store %arg14[%c48, %c0_36], %44 {strides = array<i32>} : memref<792x128xf32, #tpu.memory_space<vmem>>, vector<4x64xf32>,
    %46 = vector.extract_strided_slice %31 {offsets = [0, 448], sizes = [4, 64], strides = [1, 1]} : vector<4x576xf32> to vector<4x64xf32>
    %c56 = arith.constant 56 : index
    %c0_37 = arith.constant 0 : index
    %47 = vector.load %arg14[%c56, %c0_37] : memref<792x128xf32, #tpu.memory_space<vmem>>, vector<4x64xf32>
    tpu.vector_store %arg14[%c56, %c0_37], %46 {strides = array<i32>} : memref<792x128xf32, #tpu.memory_space<vmem>>, vector<4x64xf32>,
    %48 = vector.extract_strided_slice %31 {offsets = [0, 512], sizes = [4, 64], strides = [1, 1]} : vector<4x576xf32> to vector<4x64xf32>
    %c64 = arith.constant 64 : index
    %c0_38 = arith.constant 0 : index
    %49 = vector.load %arg14[%c64, %c0_38] : memref<792x128xf32, #tpu.memory_space<vmem>>, vector<4x64xf32>
    tpu.vector_store %arg14[%c64, %c0_38], %48 {strides = array<i32>} : memref<792x128xf32, #tpu.memory_space<vmem>>, vector<4x64xf32>,
    %50 = arith.truncf %26 : vector<4x128xf32> to vector<4x128xbf16>
    %c0_39 = arith.constant 0 : index
    %c0_40 = arith.constant 0 : index
    %51 = vector.load %arg4[%c0_39, %c0_40] : memref<128x576xbf16, #tpu.memory_space<vmem>>, vector<128x576xbf16>
    %cst_41 = arith.constant dense<0.000000e+00> : vector<4x576xf32>
    %52 = tpu.matmul %50, %51, %cst_41 {dimension_numbers = #tpu.dot_dimension_numbers<[1], [0], [0], [1], [0, 0, 1, 1], [], []>} : vector<4x128xbf16>, vector<128x576xbf16>, vector<4x576xf32> -> vector<4x576xf32>
    %53 = vector.extract_strided_slice %52 {offsets = [0, 0], sizes = [4, 64], strides = [1, 1]} : vector<4x576xf32> to vector<4x64xf32>
    %c0_42 = arith.constant 0 : index
    %c64_43 = arith.constant 64 : index
    %54 = vector.load %arg14[%c0_42, %c64_43] : memref<792x128xf32, #tpu.memory_space<vmem>>, vector<4x64xf32>
    tpu.vector_store %arg14[%c0_42, %c64_43], %53 {strides = array<i32>} : memref<792x128xf32, #tpu.memory_space<vmem>>, vector<4x64xf32>,
    %55 = vector.extract_strided_slice %52 {offsets = [0, 64], sizes = [4, 64], strides = [1, 1]} : vector<4x576xf32> to vector<4x64xf32>
    %c8_44 = arith.constant 8 : index
    %c64_45 = arith.constant 64 : index
    %56 = vector.load %arg14[%c8_44, %c64_45] : memref<792x128xf32, #tpu.memory_space<vmem>>, vector<4x64xf32>
    tpu.vector_store %arg14[%c8_44, %c64_45], %55 {strides = array<i32>} : memref<792x128xf32, #tpu.memory_space<vmem>>, vector<4x64xf32>,
    %57 = vector.extract_strided_slice %52 {offsets = [0, 128], sizes = [4, 64], strides = [1, 1]} : vector<4x576xf32> to vector<4x64xf32>
    %c16_46 = arith.constant 16 : index
    %c64_47 = arith.constant 64 : index
    %58 = vector.load %arg14[%c16_46, %c64_47] : memref<792x128xf32, #tpu.memory_space<vmem>>, vector<4x64xf32>
    tpu.vector_store %arg14[%c16_46, %c64_47], %57 {strides = array<i32>} : memref<792x128xf32, #tpu.memory_space<vmem>>, vector<4x64xf32>,
    %59 = vector.extract_strided_slice %52 {offsets = [0, 192], sizes = [4, 64], strides = [1, 1]} : vector<4x576xf32> to vector<4x64xf32>
    %c24_48 = arith.constant 24 : index
    %c64_49 = arith.constant 64 : index
    %60 = vector.load %arg14[%c24_48, %c64_49] : memref<792x128xf32, #tpu.memory_space<vmem>>, vector<4x64xf32>
    tpu.vector_store %arg14[%c24_48, %c64_49], %59 {strides = array<i32>} : memref<792x128xf32, #tpu.memory_space<vmem>>, vector<4x64xf32>,
    %61 = vector.extract_strided_slice %52 {offsets = [0, 256], sizes = [4, 64], strides = [1, 1]} : vector<4x576xf32> to vector<4x64xf32>
    %c32_50 = arith.constant 32 : index
    %c64_51 = arith.constant 64 : index
    %62 = vector.load %arg14[%c32_50, %c64_51] : memref<792x128xf32, #tpu.memory_space<vmem>>, vector<4x64xf32>
    tpu.vector_store %arg14[%c32_50, %c64_51], %61 {strides = array<i32>} : memref<792x128xf32, #tpu.memory_space<vmem>>, vector<4x64xf32>,
    %63 = vector.extract_strided_slice %52 {offsets = [0, 320], sizes = [4, 64], strides = [1, 1]} : vector<4x576xf32> to vector<4x64xf32>
    %c40_52 = arith.constant 40 : index
    %c64_53 = arith.constant 64 : index
    %64 = vector.load %arg14[%c40_52, %c64_53] : memref<792x128xf32, #tpu.memory_space<vmem>>, vector<4x64xf32>
    tpu.vector_store %arg14[%c40_52, %c64_53], %63 {strides = array<i32>} : memref<792x128xf32, #tpu.memory_space<vmem>>, vector<4x64xf32>,
    %65 = vector.extract_strided_slice %52 {offsets = [0, 384], sizes = [4, 64], strides = [1, 1]} : vector<4x576xf32> to vector<4x64xf32>
    %c48_54 = arith.constant 48 : index
    %c64_55 = arith.constant 64 : index
    %66 = vector.load %arg14[%c48_54, %c64_55] : memref<792x128xf32, #tpu.memory_space<vmem>>, vector<4x64xf32>
    tpu.vector_store %arg14[%c48_54, %c64_55], %65 {strides = array<i32>} : memref<792x128xf32, #tpu.memory_space<vmem>>, vector<4x64xf32>,
    %67 = vector.extract_strided_slice %52 {offsets = [0, 448], sizes = [4, 64], strides = [1, 1]} : vector<4x576xf32> to vector<4x64xf32>
    %c56_56 = arith.constant 56 : index
    %c64_57 = arith.constant 64 : index
    %68 = vector.load %arg14[%c56_56, %c64_57] : memref<792x128xf32, #tpu.memory_space<vmem>>, vector<4x64xf32>
    tpu.vector_store %arg14[%c56_56, %c64_57], %67 {strides = array<i32>} : memref<792x128xf32, #tpu.memory_space<vmem>>, vector<4x64xf32>,
    %69 = vector.extract_strided_slice %52 {offsets = [0, 512], sizes = [4, 64], strides = [1, 1]} : vector<4x576xf32> to vector<4x64xf32>
    %c64_58 = arith.constant 64 : index
    %c64_59 = arith.constant 64 : index
    %70 = vector.load %arg14[%c64_58, %c64_59] : memref<792x128xf32, #tpu.memory_space<vmem>>, vector<4x64xf32>
    tpu.vector_store %arg14[%c64_58, %c64_59], %69 {strides = array<i32>} : memref<792x128xf32, #tpu.memory_space<vmem>>, vector<4x64xf32>,
    %c0_60 = arith.constant 0 : index
    %c0_61 = arith.constant 0 : index
    %71 = vector.load %arg14[%c0_60, %c0_61] : memref<792x128xf32, #tpu.memory_space<vmem>>, vector<72x128xf32>
    %cst_62 = arith.constant dense<0.000000e+00> : vector<9x128xf32>
    %72 = tpu.matmul %28, %71, %cst_62 {dimension_numbers = #tpu.dot_dimension_numbers<[1], [0], [0], [1], [0, 0, 1, 1], [], []>} : vector<9x72xf32>, vector<72x128xf32>, vector<9x128xf32> -> vector<9x128xf32>
    %c1_63 = arith.constant 1 : index
    %c0_64 = arith.constant 0 : index
    %73 = vector.load %arg3[%c1_63, %c0_64] : memref<9x512xf32, #tpu.memory_space<vmem>>, vector<1x64xf32>
    %74 = vector.extract_strided_slice %72 {offsets = [0, 0], sizes = [9, 64], strides = [1, 1]} : vector<9x128xf32> to vector<9x64xf32>
    %75 = vector.broadcast %73 : vector<1x64xf32> to vector<9x64xf32>
    %76 = arith.addf %74, %75 : vector<9x64xf32>
    %77 = vector.extract_strided_slice %72 {offsets = [0, 64], sizes = [9, 64], strides = [1, 1]} : vector<9x128xf32> to vector<9x64xf32>
    %78 = vector.broadcast %73 : vector<1x64xf32> to vector<9x64xf32>
    %79 = arith.addf %77, %78 : vector<9x64xf32>
    %cst_65 = arith.constant dense<0.000000e+00> : vector<64xf32>
    %80 = vector.multi_reduction <add>, %76, %cst_65 [0] : vector<9x64xf32> to vector<64xf32>
    %81 = vector.shape_cast %80 : vector<64xf32> to vector<1x64xf32>
    %cst_66 = arith.constant dense<0.000000e+00> : vector<64xf32>
    %82 = vector.multi_reduction <add>, %79, %cst_66 [0] : vector<9x64xf32> to vector<64xf32>
    %83 = vector.shape_cast %82 : vector<64xf32> to vector<1x64xf32>
    %84 = arith.addf %81, %83 : vector<1x64xf32>
    %cst_67 = arith.constant 0.055555556 : f32
    %85 = vector.broadcast %cst_67 : f32 to vector<1x64xf32>
    %86 = arith.mulf %84, %85 : vector<1x64xf32>
    %87 = vector.broadcast %86 : vector<1x64xf32> to vector<9x64xf32>
    %88 = arith.subf %76, %87 : vector<9x64xf32>
    %89 = vector.broadcast %86 : vector<1x64xf32> to vector<9x64xf32>
    %90 = arith.subf %79, %89 : vector<9x64xf32>
    %91 = arith.mulf %88, %88 : vector<9x64xf32>
    %cst_68 = arith.constant dense<0.000000e+00> : vector<64xf32>
    %92 = vector.multi_reduction <add>, %91, %cst_68 [0] : vector<9x64xf32> to vector<64xf32>
    %93 = vector.shape_cast %92 : vector<64xf32> to vector<1x64xf32>
    %94 = arith.mulf %90, %90 : vector<9x64xf32>
    %cst_69 = arith.constant dense<0.000000e+00> : vector<64xf32>
    %95 = vector.multi_reduction <add>, %94, %cst_69 [0] : vector<9x64xf32> to vector<64xf32>
    %96 = vector.shape_cast %95 : vector<64xf32> to vector<1x64xf32>
    %97 = arith.addf %93, %96 : vector<1x64xf32>
    %cst_70 = arith.constant 0.055555556 : f32
    %98 = vector.broadcast %cst_70 : f32 to vector<1x64xf32>
    %99 = arith.mulf %97, %98 : vector<1x64xf32>
    %c2_71 = arith.constant 2 : index
    %c0_72 = arith.constant 0 : index
    %100 = vector.load %arg3[%c2_71, %c0_72] : memref<9x512xf32, #tpu.memory_space<vmem>>, vector<1x64xf32>
    %cst_73 = arith.constant 9.99999974E-6 : f32
    %101 = vector.broadcast %cst_73 : f32 to vector<1x64xf32>
    %102 = arith.addf %99, %101 : vector<1x64xf32>
    %103 = math.rsqrt %102 : vector<1x64xf32>
    %104 = arith.mulf %100, %103 : vector<1x64xf32>
    %c3_74 = arith.constant 3 : index
    %c0_75 = arith.constant 0 : index
    %105 = vector.load %arg3[%c3_74, %c0_75] : memref<9x512xf32, #tpu.memory_space<vmem>>, vector<1x64xf32>
    %106 = vector.broadcast %104 : vector<1x64xf32> to vector<9x64xf32>
    %107 = arith.mulf %88, %106 : vector<9x64xf32>
    %108 = vector.broadcast %105 : vector<1x64xf32> to vector<9x64xf32>
    %109 = arith.addf %107, %108 : vector<9x64xf32>
    %cst_76 = arith.constant 0.000000e+00 : f32
    %110 = vector.broadcast %cst_76 : f32 to vector<9x64xf32>
    %111 = arith.maximumf %109, %110 : vector<9x64xf32>
    %112 = vector.broadcast %104 : vector<1x64xf32> to vector<9x64xf32>
    %113 = arith.mulf %90, %112 : vector<9x64xf32>
    %114 = vector.broadcast %105 : vector<1x64xf32> to vector<9x64xf32>
    %115 = arith.addf %113, %114 : vector<9x64xf32>
    %cst_77 = arith.constant 0.000000e+00 : f32
    %116 = vector.broadcast %cst_77 : f32 to vector<9x64xf32>
    %117 = arith.maximumf %115, %116 : vector<9x64xf32>
    %c0_78 = arith.constant 0 : index
    %c0_79 = arith.constant 0 : index
    %118 = vector.load %arg7[%c0_78, %c0_79] : memref<25x144xi8, #tpu.memory_space<vmem>>, vector<25x144xi8>
    %119 = arith.sitofp %118 : vector<25x144xi8> to vector<25x144xf32>
    %120 = arith.truncf %111 : vector<9x64xf32> to vector<9x64xbf16>
    %c0_80 = arith.constant 0 : index
    %c0_81 = arith.constant 0 : index
    %121 = vector.load %arg6[%c0_80, %c0_81] : memref<64x288xbf16, #tpu.memory_space<vmem>>, vector<64x288xbf16>
    %cst_82 = arith.constant dense<0.000000e+00> : vector<9x288xf32>
    %122 = tpu.matmul %120, %121, %cst_82 {dimension_numbers = #tpu.dot_dimension_numbers<[1], [0], [0], [1], [0, 0, 1, 1], [], []>} : vector<9x64xbf16>, vector<64x288xbf16>, vector<9x288xf32> -> vector<9x288xf32>
    %123 = vector.extract_strided_slice %122 {offsets = [0, 0], sizes = [9, 32], strides = [1, 1]} : vector<9x288xf32> to vector<9x32xf32>
    %c0_83 = arith.constant 0 : index
    %c0_84 = arith.constant 0 : index
    %124 = vector.load %arg14[%c0_83, %c0_84] : memref<792x128xf32, #tpu.memory_space<vmem>>, vector<9x32xf32>
    tpu.vector_store %arg14[%c0_83, %c0_84], %123 {strides = array<i32>} : memref<792x128xf32, #tpu.memory_space<vmem>>, vector<9x32xf32>,
    %125 = vector.extract_strided_slice %122 {offsets = [0, 32], sizes = [9, 32], strides = [1, 1]} : vector<9x288xf32> to vector<9x32xf32>
    %c16_85 = arith.constant 16 : index
    %c0_86 = arith.constant 0 : index
    %126 = vector.load %arg14[%c16_85, %c0_86] : memref<792x128xf32, #tpu.memory_space<vmem>>, vector<9x32xf32>
    tpu.vector_store %arg14[%c16_85, %c0_86], %125 {strides = array<i32>} : memref<792x128xf32, #tpu.memory_space<vmem>>, vector<9x32xf32>,
    %127 = vector.extract_strided_slice %122 {offsets = [0, 64], sizes = [9, 32], strides = [1, 1]} : vector<9x288xf32> to vector<9x32xf32>
    %c32_87 = arith.constant 32 : index
    %c0_88 = arith.constant 0 : index
    %128 = vector.load %arg14[%c32_87, %c0_88] : memref<792x128xf32, #tpu.memory_space<vmem>>, vector<9x32xf32>
    tpu.vector_store %arg14[%c32_87, %c0_88], %127 {strides = array<i32>} : memref<792x128xf32, #tpu.memory_space<vmem>>, vector<9x32xf32>,
    %129 = vector.extract_strided_slice %122 {offsets = [0, 96], sizes = [9, 32], strides = [1, 1]} : vector<9x288xf32> to vector<9x32xf32>
    %c48_89 = arith.constant 48 : index
    %c0_90 = arith.constant 0 : index
    %130 = vector.load %arg14[%c48_89, %c0_90] : memref<792x128xf32, #tpu.memory_space<vmem>>, vector<9x32xf32>
    tpu.vector_store %arg14[%c48_89, %c0_90], %129 {strides = array<i32>} : memref<792x128xf32, #tpu.memory_space<vmem>>, vector<9x32xf32>,
    %131 = vector.extract_strided_slice %122 {offsets = [0, 128], sizes = [9, 32], strides = [1, 1]} : vector<9x288xf32> to vector<9x32xf32>
    %c64_91 = arith.constant 64 : index
    %c0_92 = arith.constant 0 : index
    %132 = vector.load %arg14[%c64_91, %c0_92] : memref<792x128xf32, #tpu.memory_space<vmem>>, vector<9x32xf32>
    tpu.vector_store %arg14[%c64_91, %c0_92], %131 {strides = array<i32>} : memref<792x128xf32, #tpu.memory_space<vmem>>, vector<9x32xf32>,
    %133 = vector.extract_strided_slice %122 {offsets = [0, 160], sizes = [9, 32], strides = [1, 1]} : vector<9x288xf32> to vector<9x32xf32>
    %c80 = arith.constant 80 : index
    %c0_93 = arith.constant 0 : index
    %134 = vector.load %arg14[%c80, %c0_93] : memref<792x128xf32, #tpu.memory_space<vmem>>, vector<9x32xf32>
    tpu.vector_store %arg14[%c80, %c0_93], %133 {strides = array<i32>} : memref<792x128xf32, #tpu.memory_space<vmem>>, vector<9x32xf32>,
    %135 = vector.extract_strided_slice %122 {offsets = [0, 192], sizes = [9, 32], strides = [1, 1]} : vector<9x288xf32> to vector<9x32xf32>
    %c96 = arith.constant 96 : index
    %c0_94 = arith.constant 0 : index
    %136 = vector.load %arg14[%c96, %c0_94] : memref<792x128xf32, #tpu.memory_space<vmem>>, vector<9x32xf32>
    tpu.vector_store %arg14[%c96, %c0_94], %135 {strides = array<i32>} : memref<792x128xf32, #tpu.memory_space<vmem>>, vector<9x32xf32>,
    %137 = vector.extract_strided_slice %122 {offsets = [0, 224], sizes = [9, 32], strides = [1, 1]} : vector<9x288xf32> to vector<9x32xf32>
    %c112 = arith.constant 112 : index
    %c0_95 = arith.constant 0 : index
    %138 = vector.load %arg14[%c112, %c0_95] : memref<792x128xf32, #tpu.memory_space<vmem>>, vector<9x32xf32>
    tpu.vector_store %arg14[%c112, %c0_95], %137 {strides = array<i32>} : memref<792x128xf32, #tpu.memory_space<vmem>>, vector<9x32xf32>,
    %139 = vector.extract_strided_slice %122 {offsets = [0, 256], sizes = [9, 32], strides = [1, 1]} : vector<9x288xf32> to vector<9x32xf32>
    %c128_96 = arith.constant 128 : index
    %c0_97 = arith.constant 0 : index
    %140 = vector.load %arg14[%c128_96, %c0_97] : memref<792x128xf32, #tpu.memory_space<vmem>>, vector<9x32xf32>
    tpu.vector_store %arg14[%c128_96, %c0_97], %139 {strides = array<i32>} : memref<792x128xf32, #tpu.memory_space<vmem>>, vector<9x32xf32>,
    %141 = arith.truncf %117 : vector<9x64xf32> to vector<9x64xbf16>
    %c0_98 = arith.constant 0 : index
    %c0_99 = arith.constant 0 : index
    %142 = vector.load %arg6[%c0_98, %c0_99] : memref<64x288xbf16, #tpu.memory_space<vmem>>, vector<64x288xbf16>
    %cst_100 = arith.constant dense<0.000000e+00> : vector<9x288xf32>
    %143 = tpu.matmul %141, %142, %cst_100 {dimension_numbers = #tpu.dot_dimension_numbers<[1], [0], [0], [1], [0, 0, 1, 1], [], []>} : vector<9x64xbf16>, vector<64x288xbf16>, vector<9x288xf32> -> vector<9x288xf32>
    %144 = vector.extract_strided_slice %143 {offsets = [0, 0], sizes = [9, 32], strides = [1, 1]} : vector<9x288xf32> to vector<9x32xf32>
    %c0_101 = arith.constant 0 : index
    %c32_102 = arith.constant 32 : index
    %145 = vector.load %arg14[%c0_101, %c32_102] : memref<792x128xf32, #tpu.memory_space<vmem>>, vector<9x32xf32>
    tpu.vector_store %arg14[%c0_101, %c32_102], %144 {strides = array<i32>} : memref<792x128xf32, #tpu.memory_space<vmem>>, vector<9x32xf32>,
    %146 = vector.extract_strided_slice %143 {offsets = [0, 32], sizes = [9, 32], strides = [1, 1]} : vector<9x288xf32> to vector<9x32xf32>
    %c16_103 = arith.constant 16 : index
    %c32_104 = arith.constant 32 : index
    %147 = vector.load %arg14[%c16_103, %c32_104] : memref<792x128xf32, #tpu.memory_space<vmem>>, vector<9x32xf32>
    tpu.vector_store %arg14[%c16_103, %c32_104], %146 {strides = array<i32>} : memref<792x128xf32, #tpu.memory_space<vmem>>, vector<9x32xf32>,
    %148 = vector.extract_strided_slice %143 {offsets = [0, 64], sizes = [9, 32], strides = [1, 1]} : vector<9x288xf32> to vector<9x32xf32>
    %c32_105 = arith.constant 32 : index
    %c32_106 = arith.constant 32 : index
    %149 = vector.load %arg14[%c32_105, %c32_106] : memref<792x128xf32, #tpu.memory_space<vmem>>, vector<9x32xf32>
    tpu.vector_store %arg14[%c32_105, %c32_106], %148 {strides = array<i32>} : memref<792x128xf32, #tpu.memory_space<vmem>>, vector<9x32xf32>,
    %150 = vector.extract_strided_slice %143 {offsets = [0, 96], sizes = [9, 32], strides = [1, 1]} : vector<9x288xf32> to vector<9x32xf32>
    %c48_107 = arith.constant 48 : index
    %c32_108 = arith.constant 32 : index
    %151 = vector.load %arg14[%c48_107, %c32_108] : memref<792x128xf32, #tpu.memory_space<vmem>>, vector<9x32xf32>
    tpu.vector_store %arg14[%c48_107, %c32_108], %150 {strides = array<i32>} : memref<792x128xf32, #tpu.memory_space<vmem>>, vector<9x32xf32>,
    %152 = vector.extract_strided_slice %143 {offsets = [0, 128], sizes = [9, 32], strides = [1, 1]} : vector<9x288xf32> to vector<9x32xf32>
    %c64_109 = arith.constant 64 : index
    %c32_110 = arith.constant 32 : index
    %153 = vector.load %arg14[%c64_109, %c32_110] : memref<792x128xf32, #tpu.memory_space<vmem>>, vector<9x32xf32>
    tpu.vector_store %arg14[%c64_109, %c32_110], %152 {strides = array<i32>} : memref<792x128xf32, #tpu.memory_space<vmem>>, vector<9x32xf32>,
    %154 = vector.extract_strided_slice %143 {offsets = [0, 160], sizes = [9, 32], strides = [1, 1]} : vector<9x288xf32> to vector<9x32xf32>
    %c80_111 = arith.constant 80 : index
    %c32_112 = arith.constant 32 : index
    %155 = vector.load %arg14[%c80_111, %c32_112] : memref<792x128xf32, #tpu.memory_space<vmem>>, vector<9x32xf32>
    tpu.vector_store %arg14[%c80_111, %c32_112], %154 {strides = array<i32>} : memref<792x128xf32, #tpu.memory_space<vmem>>, vector<9x32xf32>,
    %156 = vector.extract_strided_slice %143 {offsets = [0, 192], sizes = [9, 32], strides = [1, 1]} : vector<9x288xf32> to vector<9x32xf32>
    %c96_113 = arith.constant 96 : index
    %c32_114 = arith.constant 32 : index
    %157 = vector.load %arg14[%c96_113, %c32_114] : memref<792x128xf32, #tpu.memory_space<vmem>>, vector<9x32xf32>
    tpu.vector_store %arg14[%c96_113, %c32_114], %156 {strides = array<i32>} : memref<792x128xf32, #tpu.memory_space<vmem>>, vector<9x32xf32>,
    %158 = vector.extract_strided_slice %143 {offsets = [0, 224], sizes = [9, 32], strides = [1, 1]} : vector<9x288xf32> to vector<9x32xf32>
    %c112_115 = arith.constant 112 : index
    %c32_116 = arith.constant 32 : index
    %159 = vector.load %arg14[%c112_115, %c32_116] : memref<792x128xf32, #tpu.memory_space<vmem>>, vector<9x32xf32>
    tpu.vector_store %arg14[%c112_115, %c32_116], %158 {strides = array<i32>} : memref<792x128xf32, #tpu.memory_space<vmem>>, vector<9x32xf32>,
    %160 = vector.extract_strided_slice %143 {offsets = [0, 256], sizes = [9, 32], strides = [1, 1]} : vector<9x288xf32> to vector<9x32xf32>
    %c128_117 = arith.constant 128 : index
    %c32_118 = arith.constant 32 : index
    %161 = vector.load %arg14[%c128_117, %c32_118] : memref<792x128xf32, #tpu.memory_space<vmem>>, vector<9x32xf32>
    tpu.vector_store %arg14[%c128_117, %c32_118], %160 {strides = array<i32>} : memref<792x128xf32, #tpu.memory_space<vmem>>, vector<9x32xf32>,
    %c0_119 = arith.constant 0 : index
    %c0_120 = arith.constant 0 : index
    %162 = vector.load %arg14[%c0_119, %c0_120] : memref<792x128xf32, #tpu.memory_space<vmem>>, vector<144x64xf32>
    %cst_121 = arith.constant dense<0.000000e+00> : vector<25x64xf32>
    %163 = tpu.matmul %119, %162, %cst_121 {dimension_numbers = #tpu.dot_dimension_numbers<[1], [0], [0], [1], [0, 0, 1, 1], [], []>} : vector<25x144xf32>, vector<144x64xf32>, vector<25x64xf32> -> vector<25x64xf32>
    %c4 = arith.constant 4 : index
    %c0_122 = arith.constant 0 : index
    %164 = vector.load %arg3[%c4, %c0_122] : memref<9x512xf32, #tpu.memory_space<vmem>>, vector<1x32xf32>
    %165 = vector.extract_strided_slice %163 {offsets = [0, 0], sizes = [25, 32], strides = [1, 1]} : vector<25x64xf32> to vector<25x32xf32>
    %166 = vector.broadcast %164 : vector<1x32xf32> to vector<25x32xf32>
    %167 = arith.addf %165, %166 : vector<25x32xf32>
    %168 = vector.extract_strided_slice %163 {offsets = [0, 32], sizes = [25, 32], strides = [1, 1]} : vector<25x64xf32> to vector<25x32xf32>
    %169 = vector.broadcast %164 : vector<1x32xf32> to vector<25x32xf32>
    %170 = arith.addf %168, %169 : vector<25x32xf32>
    %cst_123 = arith.constant dense<0.000000e+00> : vector<32xf32>
    %171 = vector.multi_reduction <add>, %167, %cst_123 [0] : vector<25x32xf32> to vector<32xf32>
    %172 = vector.shape_cast %171 : vector<32xf32> to vector<1x32xf32>
    %cst_124 = arith.constant dense<0.000000e+00> : vector<32xf32>
    %173 = vector.multi_reduction <add>, %170, %cst_124 [0] : vector<25x32xf32> to vector<32xf32>
    %174 = vector.shape_cast %173 : vector<32xf32> to vector<1x32xf32>
    %175 = arith.addf %172, %174 : vector<1x32xf32>
    %cst_125 = arith.constant 2.000000e-02 : f32
    %176 = vector.broadcast %cst_125 : f32 to vector<1x32xf32>
    %177 = arith.mulf %175, %176 : vector<1x32xf32>
    %178 = vector.broadcast %177 : vector<1x32xf32> to vector<25x32xf32>
    %179 = arith.subf %167, %178 : vector<25x32xf32>
    %180 = vector.broadcast %177 : vector<1x32xf32> to vector<25x32xf32>
    %181 = arith.subf %170, %180 : vector<25x32xf32>
    %182 = arith.mulf %179, %179 : vector<25x32xf32>
    %cst_126 = arith.constant dense<0.000000e+00> : vector<32xf32>
    %183 = vector.multi_reduction <add>, %182, %cst_126 [0] : vector<25x32xf32> to vector<32xf32>
    %184 = vector.shape_cast %183 : vector<32xf32> to vector<1x32xf32>
    %185 = arith.mulf %181, %181 : vector<25x32xf32>
    %cst_127 = arith.constant dense<0.000000e+00> : vector<32xf32>
    %186 = vector.multi_reduction <add>, %185, %cst_127 [0] : vector<25x32xf32> to vector<32xf32>
    %187 = vector.shape_cast %186 : vector<32xf32> to vector<1x32xf32>
    %188 = arith.addf %184, %187 : vector<1x32xf32>
    %cst_128 = arith.constant 2.000000e-02 : f32
    %189 = vector.broadcast %cst_128 : f32 to vector<1x32xf32>
    %190 = arith.mulf %188, %189 : vector<1x32xf32>
    %c5 = arith.constant 5 : index
    %c0_129 = arith.constant 0 : index
    %191 = vector.load %arg3[%c5, %c0_129] : memref<9x512xf32, #tpu.memory_space<vmem>>, vector<1x32xf32>
    %cst_130 = arith.constant 9.99999974E-6 : f32
    %192 = vector.broadcast %cst_130 : f32 to vector<1x32xf32>
    %193 = arith.addf %190, %192 : vector<1x32xf32>
    %194 = math.rsqrt %193 : vector<1x32xf32>
    %195 = arith.mulf %191, %194 : vector<1x32xf32>
    %c6 = arith.constant 6 : index
    %c0_131 = arith.constant 0 : index
    %196 = vector.load %arg3[%c6, %c0_131] : memref<9x512xf32, #tpu.memory_space<vmem>>, vector<1x32xf32>
    %197 = vector.broadcast %195 : vector<1x32xf32> to vector<25x32xf32>
    %198 = arith.mulf %179, %197 : vector<25x32xf32>
    %199 = vector.broadcast %196 : vector<1x32xf32> to vector<25x32xf32>
    %200 = arith.addf %198, %199 : vector<25x32xf32>
    %cst_132 = arith.constant 0.000000e+00 : f32
    %201 = vector.broadcast %cst_132 : f32 to vector<25x32xf32>
    %202 = arith.maximumf %200, %201 : vector<25x32xf32>
    %203 = vector.broadcast %195 : vector<1x32xf32> to vector<25x32xf32>
    %204 = arith.mulf %181, %203 : vector<25x32xf32>
    %205 = vector.broadcast %196 : vector<1x32xf32> to vector<25x32xf32>
    %206 = arith.addf %204, %205 : vector<25x32xf32>
    %cst_133 = arith.constant 0.000000e+00 : f32
    %207 = vector.broadcast %cst_133 : f32 to vector<25x32xf32>
    %208 = arith.maximumf %206, %207 : vector<25x32xf32>
    %c0_134 = arith.constant 0 : index
    %c0_135 = arith.constant 0 : index
    %209 = vector.load %arg9[%c0_134, %c0_135] : memref<81x128xi8, #tpu.memory_space<vmem>>, vector<81x128xi8>
    %210 = arith.sitofp %209 : vector<81x128xi8> to vector<81x128xf32>
    %211 = arith.truncf %202 : vector<25x32xf32> to vector<25x32xbf16>
    %c0_136 = arith.constant 0 : index
    %c0_137 = arith.constant 0 : index
    %212 = vector.load %arg8[%c0_136, %c0_137] : memref<32x64xbf16, #tpu.memory_space<vmem>>, vector<32x64xbf16>
    %cst_138 = arith.constant dense<0.000000e+00> : vector<25x64xf32>
    %213 = tpu.matmul %211, %212, %cst_138 {dimension_numbers = #tpu.dot_dimension_numbers<[1], [0], [0], [1], [0, 0, 1, 1], [], []>} : vector<25x32xbf16>, vector<32x64xbf16>, vector<25x64xf32> -> vector<25x64xf32>
    %214 = vector.extract_strided_slice %213 {offsets = [0, 0], sizes = [25, 16], strides = [1, 1]} : vector<25x64xf32> to vector<25x16xf32>
    %c0_139 = arith.constant 0 : index
    %c0_140 = arith.constant 0 : index
    %215 = vector.load %arg14[%c0_139, %c0_140] : memref<792x128xf32, #tpu.memory_space<vmem>>, vector<25x16xf32>
    tpu.vector_store %arg14[%c0_139, %c0_140], %214 {strides = array<i32>} : memref<792x128xf32, #tpu.memory_space<vmem>>, vector<25x16xf32>,
    %216 = vector.extract_strided_slice %213 {offsets = [0, 16], sizes = [25, 16], strides = [1, 1]} : vector<25x64xf32> to vector<25x16xf32>
    %c32_141 = arith.constant 32 : index
    %c0_142 = arith.constant 0 : index
    %217 = vector.load %arg14[%c32_141, %c0_142] : memref<792x128xf32, #tpu.memory_space<vmem>>, vector<25x16xf32>
    tpu.vector_store %arg14[%c32_141, %c0_142], %216 {strides = array<i32>} : memref<792x128xf32, #tpu.memory_space<vmem>>, vector<25x16xf32>,
    %218 = vector.extract_strided_slice %213 {offsets = [0, 32], sizes = [25, 16], strides = [1, 1]} : vector<25x64xf32> to vector<25x16xf32>
    %c64_143 = arith.constant 64 : index
    %c0_144 = arith.constant 0 : index
    %219 = vector.load %arg14[%c64_143, %c0_144] : memref<792x128xf32, #tpu.memory_space<vmem>>, vector<25x16xf32>
    tpu.vector_store %arg14[%c64_143, %c0_144], %218 {strides = array<i32>} : memref<792x128xf32, #tpu.memory_space<vmem>>, vector<25x16xf32>,
    %220 = vector.extract_strided_slice %213 {offsets = [0, 48], sizes = [25, 16], strides = [1, 1]} : vector<25x64xf32> to vector<25x16xf32>
    %c96_145 = arith.constant 96 : index
    %c0_146 = arith.constant 0 : index
    %221 = vector.load %arg14[%c96_145, %c0_146] : memref<792x128xf32, #tpu.memory_space<vmem>>, vector<25x16xf32>
    tpu.vector_store %arg14[%c96_145, %c0_146], %220 {strides = array<i32>} : memref<792x128xf32, #tpu.memory_space<vmem>>, vector<25x16xf32>,
    %222 = arith.truncf %208 : vector<25x32xf32> to vector<25x32xbf16>
    %c0_147 = arith.constant 0 : index
    %c0_148 = arith.constant 0 : index
    %223 = vector.load %arg8[%c0_147, %c0_148] : memref<32x64xbf16, #tpu.memory_space<vmem>>, vector<32x64xbf16>
    %cst_149 = arith.constant dense<0.000000e+00> : vector<25x64xf32>
    %224 = tpu.matmul %222, %223, %cst_149 {dimension_numbers = #tpu.dot_dimension_numbers<[1], [0], [0], [1], [0, 0, 1, 1], [], []>} : vector<25x32xbf16>, vector<32x64xbf16>, vector<25x64xf32> -> vector<25x64xf32>
    %225 = vector.extract_strided_slice %224 {offsets = [0, 0], sizes = [25, 16], strides = [1, 1]} : vector<25x64xf32> to vector<25x16xf32>
    %c0_150 = arith.constant 0 : index
    %c16_151 = arith.constant 16 : index
    %226 = vector.load %arg14[%c0_150, %c16_151] : memref<792x128xf32, #tpu.memory_space<vmem>>, vector<25x16xf32>
    tpu.vector_store %arg14[%c0_150, %c16_151], %225 {strides = array<i32>} : memref<792x128xf32, #tpu.memory_space<vmem>>, vector<25x16xf32>,
    %227 = vector.extract_strided_slice %224 {offsets = [0, 16], sizes = [25, 16], strides = [1, 1]} : vector<25x64xf32> to vector<25x16xf32>
    %c32_152 = arith.constant 32 : index
    %c16_153 = arith.constant 16 : index
    %228 = vector.load %arg14[%c32_152, %c16_153] : memref<792x128xf32, #tpu.memory_space<vmem>>, vector<25x16xf32>
    tpu.vector_store %arg14[%c32_152, %c16_153], %227 {strides = array<i32>} : memref<792x128xf32, #tpu.memory_space<vmem>>, vector<25x16xf32>,
    %229 = vector.extract_strided_slice %224 {offsets = [0, 32], sizes = [25, 16], strides = [1, 1]} : vector<25x64xf32> to vector<25x16xf32>
    %c64_154 = arith.constant 64 : index
    %c16_155 = arith.constant 16 : index
    %230 = vector.load %arg14[%c64_154, %c16_155] : memref<792x128xf32, #tpu.memory_space<vmem>>, vector<25x16xf32>
    tpu.vector_store %arg14[%c64_154, %c16_155], %229 {strides = array<i32>} : memref<792x128xf32, #tpu.memory_space<vmem>>, vector<25x16xf32>,
    %231 = vector.extract_strided_slice %224 {offsets = [0, 48], sizes = [25, 16], strides = [1, 1]} : vector<25x64xf32> to vector<25x16xf32>
    %c96_156 = arith.constant 96 : index
    %c16_157 = arith.constant 16 : index
    %232 = vector.load %arg14[%c96_156, %c16_157] : memref<792x128xf32, #tpu.memory_space<vmem>>, vector<25x16xf32>
    tpu.vector_store %arg14[%c96_156, %c16_157], %231 {strides = array<i32>} : memref<792x128xf32, #tpu.memory_space<vmem>>, vector<25x16xf32>,
    %c0_158 = arith.constant 0 : index
    %c0_159 = arith.constant 0 : index
    %233 = vector.load %arg14[%c0_158, %c0_159] : memref<792x128xf32, #tpu.memory_space<vmem>>, vector<128x32xf32>
    %cst_160 = arith.constant dense<0.000000e+00> : vector<81x32xf32>
    %234 = tpu.matmul %210, %233, %cst_160 {dimension_numbers = #tpu.dot_dimension_numbers<[1], [0], [0], [1], [0, 0, 1, 1], [], []>} : vector<81x128xf32>, vector<128x32xf32>, vector<81x32xf32> -> vector<81x32xf32>
    %c7 = arith.constant 7 : index
    %c0_161 = arith.constant 0 : index
    %235 = vector.load %arg3[%c7, %c0_161] : memref<9x512xf32, #tpu.memory_space<vmem>>, vector<1x16xf32>
    %236 = vector.extract_strided_slice %234 {offsets = [0, 0], sizes = [81, 16], strides = [1, 1]} : vector<81x32xf32> to vector<81x16xf32>
    %237 = vector.broadcast %235 : vector<1x16xf32> to vector<81x16xf32>
    %238 = arith.addf %236, %237 : vector<81x16xf32>
    %239 = vector.extract_strided_slice %234 {offsets = [0, 16], sizes = [81, 16], strides = [1, 1]} : vector<81x32xf32> to vector<81x16xf32>
    %240 = vector.broadcast %235 : vector<1x16xf32> to vector<81x16xf32>
    %241 = arith.addf %239, %240 : vector<81x16xf32>
    %242 = arith.negf %238 : vector<81x16xf32>
    %243 = math.exp %242 : vector<81x16xf32>
    %cst_162 = arith.constant 1.000000e+00 : f32
    %244 = vector.broadcast %cst_162 : f32 to vector<81x16xf32>
    %245 = arith.addf %244, %243 : vector<81x16xf32>
    %246 = arith.divf %244, %245 : vector<81x16xf32>
    %247 = arith.negf %241 : vector<81x16xf32>
    %248 = math.exp %247 : vector<81x16xf32>
    %cst_163 = arith.constant 1.000000e+00 : f32
    %249 = vector.broadcast %cst_163 : f32 to vector<81x16xf32>
    %250 = arith.addf %249, %248 : vector<81x16xf32>
    %251 = arith.divf %249, %250 : vector<81x16xf32>
    tpu.wait_dma2 semaphore(%arg16 : memref<!tpu.dma_semaphore, #tpu.memory_space<semaphore_mem>>) src(%arg11 : memref<289x792xi8, #tpu.memory_space<any>>) dst(%arg15 : memref<289x792xi8, #tpu.memory_space<vmem>>)
    %c0_164 = arith.constant 0 : index
    %c0_165 = arith.constant 0 : index
    %252 = vector.load %arg15[%c0_164, %c0_165] : memref<289x792xi8, #tpu.memory_space<vmem>>, vector<289x792xi8>
    %253 = arith.sitofp %252 : vector<289x792xi8> to vector<289x792xf32>
    %254 = arith.truncf %246 : vector<81x16xf32> to vector<81x16xbf16>
    %c0_166 = arith.constant 0 : index
    %c0_167 = arith.constant 0 : index
    %255 = vector.load %arg10[%c0_166, %c0_167] : memref<16x144xbf16, #tpu.memory_space<vmem>>, vector<16x144xbf16>
    %cst_168 = arith.constant dense<0.000000e+00> : vector<81x144xf32>
    %256 = tpu.matmul %254, %255, %cst_168 {dimension_numbers = #tpu.dot_dimension_numbers<[1], [0], [0], [1], [0, 0, 1, 1], [], []>} : vector<81x16xbf16>, vector<16x144xbf16>, vector<81x144xf32> -> vector<81x144xf32>
    %257 = vector.extract_strided_slice %256 {offsets = [0, 0], sizes = [81, 16], strides = [1, 1]} : vector<81x144xf32> to vector<81x16xf32>
    %c0_169 = arith.constant 0 : index
    %c0_170 = arith.constant 0 : index
    %258 = vector.load %arg14[%c0_169, %c0_170] : memref<792x128xf32, #tpu.memory_space<vmem>>, vector<81x16xf32>
    tpu.vector_store %arg14[%c0_169, %c0_170], %257 {strides = array<i32>} : memref<792x128xf32, #tpu.memory_space<vmem>>, vector<81x16xf32>,
    %259 = vector.extract_strided_slice %256 {offsets = [0, 16], sizes = [81, 16], strides = [1, 1]} : vector<81x144xf32> to vector<81x16xf32>
    %c88 = arith.constant 88 : index
    %c0_171 = arith.constant 0 : index
    %260 = vector.load %arg14[%c88, %c0_171] : memref<792x128xf32, #tpu.memory_space<vmem>>, vector<81x16xf32>
    tpu.vector_store %arg14[%c88, %c0_171], %259 {strides = array<i32>} : memref<792x128xf32, #tpu.memory_space<vmem>>, vector<81x16xf32>,
    %261 = vector.extract_strided_slice %256 {offsets = [0, 32], sizes = [81, 16], strides = [1, 1]} : vector<81x144xf32> to vector<81x16xf32>
    %c176 = arith.constant 176 : index
    %c0_172 = arith.constant 0 : index
    %262 = vector.load %arg14[%c176, %c0_172] : memref<792x128xf32, #tpu.memory_space<vmem>>, vector<81x16xf32>
    tpu.vector_store %arg14[%c176, %c0_172], %261 {strides = array<i32>} : memref<792x128xf32, #tpu.memory_space<vmem>>, vector<81x16xf32>,
    %263 = vector.extract_strided_slice %256 {offsets = [0, 48], sizes = [81, 16], strides = [1, 1]} : vector<81x144xf32> to vector<81x16xf32>
    %c264 = arith.constant 264 : index
    %c0_173 = arith.constant 0 : index
    %264 = vector.load %arg14[%c264, %c0_173] : memref<792x128xf32, #tpu.memory_space<vmem>>, vector<81x16xf32>
    tpu.vector_store %arg14[%c264, %c0_173], %263 {strides = array<i32>} : memref<792x128xf32, #tpu.memory_space<vmem>>, vector<81x16xf32>,
    %265 = vector.extract_strided_slice %256 {offsets = [0, 64], sizes = [81, 16], strides = [1, 1]} : vector<81x144xf32> to vector<81x16xf32>
    %c352 = arith.constant 352 : index
    %c0_174 = arith.constant 0 : index
    %266 = vector.load %arg14[%c352, %c0_174] : memref<792x128xf32, #tpu.memory_space<vmem>>, vector<81x16xf32>
    tpu.vector_store %arg14[%c352, %c0_174], %265 {strides = array<i32>} : memref<792x128xf32, #tpu.memory_space<vmem>>, vector<81x16xf32>,
    %267 = vector.extract_strided_slice %256 {offsets = [0, 80], sizes = [81, 16], strides = [1, 1]} : vector<81x144xf32> to vector<81x16xf32>
    %c440 = arith.constant 440 : index
    %c0_175 = arith.constant 0 : index
    %268 = vector.load %arg14[%c440, %c0_175] : memref<792x128xf32, #tpu.memory_space<vmem>>, vector<81x16xf32>
    tpu.vector_store %arg14[%c440, %c0_175], %267 {strides = array<i32>} : memref<792x128xf32, #tpu.memory_space<vmem>>, vector<81x16xf32>,
    %269 = vector.extract_strided_slice %256 {offsets = [0, 96], sizes = [81, 16], strides = [1, 1]} : vector<81x144xf32> to vector<81x16xf32>
    %c528 = arith.constant 528 : index
    %c0_176 = arith.constant 0 : index
    %270 = vector.load %arg14[%c528, %c0_176] : memref<792x128xf32, #tpu.memory_space<vmem>>, vector<81x16xf32>
    tpu.vector_store %arg14[%c528, %c0_176], %269 {strides = array<i32>} : memref<792x128xf32, #tpu.memory_space<vmem>>, vector<81x16xf32>,
    %271 = vector.extract_strided_slice %256 {offsets = [0, 112], sizes = [81, 16], strides = [1, 1]} : vector<81x144xf32> to vector<81x16xf32>
    %c616 = arith.constant 616 : index
    %c0_177 = arith.constant 0 : index
    %272 = vector.load %arg14[%c616, %c0_177] : memref<792x128xf32, #tpu.memory_space<vmem>>, vector<81x16xf32>
    tpu.vector_store %arg14[%c616, %c0_177], %271 {strides = array<i32>} : memref<792x128xf32, #tpu.memory_space<vmem>>, vector<81x16xf32>,
    %273 = vector.extract_strided_slice %256 {offsets = [0, 128], sizes = [81, 16], strides = [1, 1]} : vector<81x144xf32> to vector<81x16xf32>
    %c704 = arith.constant 704 : index
    %c0_178 = arith.constant 0 : index
    %274 = vector.load %arg14[%c704, %c0_178] : memref<792x128xf32, #tpu.memory_space<vmem>>, vector<81x16xf32>
    tpu.vector_store %arg14[%c704, %c0_178], %273 {strides = array<i32>} : memref<792x128xf32, #tpu.memory_space<vmem>>, vector<81x16xf32>,
    %275 = arith.truncf %251 : vector<81x16xf32> to vector<81x16xbf16>
    %c0_179 = arith.constant 0 : index
    %c0_180 = arith.constant 0 : index
    %276 = vector.load %arg10[%c0_179, %c0_180] : memref<16x144xbf16, #tpu.memory_space<vmem>>, vector<16x144xbf16>
    %cst_181 = arith.constant dense<0.000000e+00> : vector<81x144xf32>
    %277 = tpu.matmul %275, %276, %cst_181 {dimension_numbers = #tpu.dot_dimension_numbers<[1], [0], [0], [1], [0, 0, 1, 1], [], []>} : vector<81x16xbf16>, vector<16x144xbf16>, vector<81x144xf32> -> vector<81x144xf32>
    %278 = vector.extract_strided_slice %277 {offsets = [0, 0], sizes = [81, 16], strides = [1, 1]} : vector<81x144xf32> to vector<81x16xf32>
    %c0_182 = arith.constant 0 : index
    %c16_183 = arith.constant 16 : index
    %279 = vector.load %arg14[%c0_182, %c16_183] : memref<792x128xf32, #tpu.memory_space<vmem>>, vector<81x16xf32>
    tpu.vector_store %arg14[%c0_182, %c16_183], %278 {strides = array<i32>} : memref<792x128xf32, #tpu.memory_space<vmem>>, vector<81x16xf32>,
    %280 = vector.extract_strided_slice %277 {offsets = [0, 16], sizes = [81, 16], strides = [1, 1]} : vector<81x144xf32> to vector<81x16xf32>
    %c88_184 = arith.constant 88 : index
    %c16_185 = arith.constant 16 : index
    %281 = vector.load %arg14[%c88_184, %c16_185] : memref<792x128xf32, #tpu.memory_space<vmem>>, vector<81x16xf32>
    tpu.vector_store %arg14[%c88_184, %c16_185], %280 {strides = array<i32>} : memref<792x128xf32, #tpu.memory_space<vmem>>, vector<81x16xf32>,
    %282 = vector.extract_strided_slice %277 {offsets = [0, 32], sizes = [81, 16], strides = [1, 1]} : vector<81x144xf32> to vector<81x16xf32>
    %c176_186 = arith.constant 176 : index
    %c16_187 = arith.constant 16 : index
    %283 = vector.load %arg14[%c176_186, %c16_187] : memref<792x128xf32, #tpu.memory_space<vmem>>, vector<81x16xf32>
    tpu.vector_store %arg14[%c176_186, %c16_187], %282 {strides = array<i32>} : memref<792x128xf32, #tpu.memory_space<vmem>>, vector<81x16xf32>,
    %284 = vector.extract_strided_slice %277 {offsets = [0, 48], sizes = [81, 16], strides = [1, 1]} : vector<81x144xf32> to vector<81x16xf32>
    %c264_188 = arith.constant 264 : index
    %c16_189 = arith.constant 16 : index
    %285 = vector.load %arg14[%c264_188, %c16_189] : memref<792x128xf32, #tpu.memory_space<vmem>>, vector<81x16xf32>
    tpu.vector_store %arg14[%c264_188, %c16_189], %284 {strides = array<i32>} : memref<792x128xf32, #tpu.memory_space<vmem>>, vector<81x16xf32>,
    %286 = vector.extract_strided_slice %277 {offsets = [0, 64], sizes = [81, 16], strides = [1, 1]} : vector<81x144xf32> to vector<81x16xf32>
    %c352_190 = arith.constant 352 : index
    %c16_191 = arith.constant 16 : index
    %287 = vector.load %arg14[%c352_190, %c16_191] : memref<792x128xf32, #tpu.memory_space<vmem>>, vector<81x16xf32>
    tpu.vector_store %arg14[%c352_190, %c16_191], %286 {strides = array<i32>} : memref<792x128xf32, #tpu.memory_space<vmem>>, vector<81x16xf32>,
    %288 = vector.extract_strided_slice %277 {offsets = [0, 80], sizes = [81, 16], strides = [1, 1]} : vector<81x144xf32> to vector<81x16xf32>
    %c440_192 = arith.constant 440 : index
    %c16_193 = arith.constant 16 : index
    %289 = vector.load %arg14[%c440_192, %c16_193] : memref<792x128xf32, #tpu.memory_space<vmem>>, vector<81x16xf32>
    tpu.vector_store %arg14[%c440_192, %c16_193], %288 {strides = array<i32>} : memref<792x128xf32, #tpu.memory_space<vmem>>, vector<81x16xf32>,
    %290 = vector.extract_strided_slice %277 {offsets = [0, 96], sizes = [81, 16], strides = [1, 1]} : vector<81x144xf32> to vector<81x16xf32>
    %c528_194 = arith.constant 528 : index
    %c16_195 = arith.constant 16 : index
    %291 = vector.load %arg14[%c528_194, %c16_195] : memref<792x128xf32, #tpu.memory_space<vmem>>, vector<81x16xf32>
    tpu.vector_store %arg14[%c528_194, %c16_195], %290 {strides = array<i32>} : memref<792x128xf32, #tpu.memory_space<vmem>>, vector<81x16xf32>,
    %292 = vector.extract_strided_slice %277 {offsets = [0, 112], sizes = [81, 16], strides = [1, 1]} : vector<81x144xf32> to vector<81x16xf32>
    %c616_196 = arith.constant 616 : index
    %c16_197 = arith.constant 16 : index
    %293 = vector.load %arg14[%c616_196, %c16_197] : memref<792x128xf32, #tpu.memory_space<vmem>>, vector<81x16xf32>
    tpu.vector_store %arg14[%c616_196, %c16_197], %292 {strides = array<i32>} : memref<792x128xf32, #tpu.memory_space<vmem>>, vector<81x16xf32>,
    %294 = vector.extract_strided_slice %277 {offsets = [0, 128], sizes = [81, 16], strides = [1, 1]} : vector<81x144xf32> to vector<81x16xf32>
    %c704_198 = arith.constant 704 : index
    %c16_199 = arith.constant 16 : index
    %295 = vector.load %arg14[%c704_198, %c16_199] : memref<792x128xf32, #tpu.memory_space<vmem>>, vector<81x16xf32>
    tpu.vector_store %arg14[%c704_198, %c16_199], %294 {strides = array<i32>} : memref<792x128xf32, #tpu.memory_space<vmem>>, vector<81x16xf32>,
    %c0_200 = arith.constant 0 : index
    %c0_201 = arith.constant 0 : index
    %296 = vector.load %arg14[%c0_200, %c0_201] : memref<792x128xf32, #tpu.memory_space<vmem>>, vector<792x32xf32>
    %cst_202 = arith.constant dense<0.000000e+00> : vector<289x32xf32>
    %297 = tpu.matmul %253, %296, %cst_202 {dimension_numbers = #tpu.dot_dimension_numbers<[1], [0], [0], [1], [0, 0, 1, 1], [], []>} : vector<289x792xf32>, vector<792x32xf32>, vector<289x32xf32> -> vector<289x32xf32>
    %c8_203 = arith.constant 8 : index
    %c0_204 = arith.constant 0 : index
    %298 = vector.load %arg3[%c8_203, %c0_204] : memref<9x512xf32, #tpu.memory_space<vmem>>, vector<1x16xf32>
    %299 = vector.extract_strided_slice %297 {offsets = [0, 0], sizes = [289, 16], strides = [1, 1]} : vector<289x32xf32> to vector<289x16xf32>
    %300 = vector.broadcast %298 : vector<1x16xf32> to vector<289x16xf32>
    %301 = arith.addf %299, %300 : vector<289x16xf32>
    %302 = vector.extract_strided_slice %297 {offsets = [0, 16], sizes = [289, 16], strides = [1, 1]} : vector<289x32xf32> to vector<289x16xf32>
    %303 = vector.broadcast %298 : vector<1x16xf32> to vector<289x16xf32>
    %304 = arith.addf %302, %303 : vector<289x16xf32>
    %c0_205 = arith.constant 0 : index
    %c0_206 = arith.constant 0 : index
    %c0_207 = arith.constant 0 : index
    %305 = vector.load %arg12[%c0_205, %c0_206, %c0_207] : memref<2x289x16xf32, #tpu.memory_space<vmem>>, vector<1x289x16xf32>
    %306 = vector.shape_cast %305 : vector<1x289x16xf32> to vector<289x16xf32>
    %307 = vector.shape_cast %301 : vector<289x16xf32> to vector<1x289x16xf32>
    tpu.vector_store %arg12[%c0_205, %c0_206, %c0_207], %307 {strides = array<i32>} : memref<2x289x16xf32, #tpu.memory_space<vmem>>, vector<1x289x16xf32>,
    %c1_208 = arith.constant 1 : index
    %c0_209 = arith.constant 0 : index
    %c0_210 = arith.constant 0 : index
    %308 = vector.load %arg12[%c1_208, %c0_209, %c0_210] : memref<2x289x16xf32, #tpu.memory_space<vmem>>, vector<1x289x16xf32>
    %309 = vector.shape_cast %308 : vector<1x289x16xf32> to vector<289x16xf32>
    %310 = vector.shape_cast %304 : vector<289x16xf32> to vector<1x289x16xf32>
    tpu.vector_store %arg12[%c1_208, %c0_209, %c0_210], %310 {strides = array<i32>} : memref<2x289x16xf32, #tpu.memory_space<vmem>>, vector<1x289x16xf32>,
    return
  }
  func.func @transform_0(%arg0: i32) -> (i32, i32) {
    %c0_i32 = arith.constant 0 : i32
    %c0_i32_0 = arith.constant 0 : i32
    %c0_i32_1 = arith.constant 0 : i32
    return %c0_i32, %c0_i32_0 : i32, i32
  }
  func.func @transform_1(%arg0: i32) -> (i32, i32) {
    %c0_i32 = arith.constant 0 : i32
    %c0_i32_0 = arith.constant 0 : i32
    %c0_i32_1 = arith.constant 0 : i32
    return %c0_i32, %c0_i32_0 : i32, i32
  }
  func.func @transform_2(%arg0: i32) -> (i32, i32) {
    %c0_i32 = arith.constant 0 : i32
    %c0_i32_0 = arith.constant 0 : i32
    %c0_i32_1 = arith.constant 0 : i32
    return %c0_i32, %c0_i32_0 : i32, i32
  }
  func.func @transform_3(%arg0: i32) -> (i32, i32) {
    %c0_i32 = arith.constant 0 : i32
    %c0_i32_0 = arith.constant 0 : i32
    %c0_i32_1 = arith.constant 0 : i32
    return %c0_i32, %c0_i32_0 : i32, i32
  }
  func.func @transform_4(%arg0: i32) -> (i32, i32) {
    %c0_i32 = arith.constant 0 : i32
    %c0_i32_0 = arith.constant 0 : i32
    %c0_i32_1 = arith.constant 0 : i32
    return %c0_i32, %c0_i32_0 : i32, i32
  }
  func.func @transform_5(%arg0: i32) -> (i32, i32) {
    %c0_i32 = arith.constant 0 : i32
    %c0_i32_0 = arith.constant 0 : i32
    %c0_i32_1 = arith.constant 0 : i32
    return %c0_i32, %c0_i32_0 : i32, i32
  }
  func.func @transform_6(%arg0: i32) -> (i32, i32) {
    %c0_i32 = arith.constant 0 : i32
    %c0_i32_0 = arith.constant 0 : i32
    %c0_i32_1 = arith.constant 0 : i32
    return %c0_i32, %c0_i32_0 : i32, i32
  }
  func.func @transform_7(%arg0: i32) -> (i32, i32) {
    %c0_i32 = arith.constant 0 : i32
    %c0_i32_0 = arith.constant 0 : i32
    %c0_i32_1 = arith.constant 0 : i32
    return %c0_i32, %c0_i32_0 : i32, i32
  }
  func.func @transform_8(%arg0: i32) -> (i32, i32) {
    %c0_i32 = arith.constant 0 : i32
    %c0_i32_0 = arith.constant 0 : i32
    %c0_i32_1 = arith.constant 0 : i32
    return %c0_i32, %c0_i32_0 : i32, i32
  }
  func.func @transform_9(%arg0: i32) -> (i32, i32) {
    %c0_i32 = arith.constant 0 : i32
    %c0_i32_0 = arith.constant 0 : i32
    %c0_i32_1 = arith.constant 0 : i32
    return %c0_i32, %c0_i32_0 : i32, i32
  }
  func.func @transform_11(%arg0: i32) -> (i32, i32, i32) {
    %c0_i32 = arith.constant 0 : i32
    %c0_i32_0 = arith.constant 0 : i32
    %c0_i32_1 = arith.constant 0 : i32
    %c0_i32_2 = arith.constant 0 : i32
    return %c0_i32, %c0_i32_0, %c0_i32_1 : i32, i32, i32
  }
}

</mosaic_0001>

<llo_original>
// kernel: decoder_forward.1
$region0: #{decoder_forward.1}
  #allocation0 [shape = 'u32[]', space=smem, size = 0x4, offset = 0x4, fixed_abs, tag = 'smem constant byte address 0x4 - core index']
  #allocation1 [shape = 'u32[144,128]{1,0:T(1,128)}', space=vmem, size = 0x12000, scoped, tag = 'internal scratch']
  #allocation2 [shape = 'f32[8,256]{1,0:T(8,128)}', space=vmem, size = 0x2000, scoped, tag = 'scratch operand']
  #allocation3 [shape = 'f32[792,128]{1,0:T(8,128)}', space=vmem, size = 0x63000, scoped, tag = 'scratch operand']
  #allocation4 [shape = 's8[289,792]{1,0:T(8,128)(4,1)}', space=vmem, size = 0x40c00, scoped, tag = 'scratch operand']
  #allocation5 [shape = 's32[1]{0}', space=sflag, size = 0x4, scoped, tag = 'scratch operand']
  #allocation17 [shape = 's32[]', space=sflag, size = 0x4, offset = 0, fixed_abs, tag = 'sflag constant byte address 0x0 - dummy sync flag']
  %s0 = inlined_call_operand.hbm [shape: f32[2,512], index: 0, kind: input, shape index: {}]
  %s1 = inlined_call_operand.hbm [shape: bf16[512,512], index: 1, kind: input, shape index: {}]
  %s2 = inlined_call_operand.hbm [shape: f32[9,512], index: 2, kind: input, shape index: {}]
  %s3 = inlined_call_operand.vmem [shape: bf16[128,576], index: 3, kind: input, shape index: {}]
  %s4 = inlined_call_operand.hbm [shape: s8[9,72], index: 4, kind: input, shape index: {}]
  %s5 = inlined_call_operand.vmem [shape: bf16[64,288], index: 5, kind: input, shape index: {}]
  %s6 = inlined_call_operand.hbm [shape: s8[25,144], index: 6, kind: input, shape index: {}]
  %s7 = inlined_call_operand.vmem [shape: bf16[32,64], index: 7, kind: input, shape index: {}]
  %s8 = inlined_call_operand.hbm [shape: s8[81,128], index: 8, kind: input, shape index: {}]
  %s9 = inlined_call_operand.hbm [shape: bf16[16,144], index: 9, kind: input, shape index: {}]
  %s10 = inlined_call_operand.vmem [shape: s8[289,792], index: 10, kind: input, shape index: {}]
  %s11 = inlined_call_operand.vmem [shape: f32[2,289,16], index: 11, kind: output, shape index: {}]
  %s12 = sld [smem:[#allocation0]]
  $region115: #{decoder_forward.1} parent=0
    _
  %s14 = ssub.s32 1, %s12
  %s15 = scalar_select 0, %s14, %s12
  $region1: #{decoder_forward.1} parent=0
    #allocation6 [shape = 'u8[4096]{0}', space=vmem, size = 0x1000, scoped, tag = 'input window, operand 0, single buffered']
    #allocation7 [shape = 's32[1]{0}', space=sflag, size = 0x4, scoped, tag = 'scoped memory for decoder_forward.1']
    #allocation8 [shape = 'u8[524288]{0}', space=vmem, size = 0x80000, scoped, tag = 'input window, operand 1, single buffered']
    #allocation9 [shape = 's32[1]{0}', space=sflag, size = 0x4, scoped, tag = 'scoped memory for decoder_forward.1']
    #allocation10 [shape = 'u8[32768]{0}', space=vmem, size = 0x8000, scoped, tag = 'input window, operand 2, single buffered']
    #allocation11 [shape = 'u8[2048]{0}', space=vmem, size = 0x800, scoped, tag = 'input window, operand 4, single buffered']
    #allocation12 [shape = 's32[1]{0}', space=sflag, size = 0x4, scoped, tag = 'scoped memory for decoder_forward.1']
    #allocation13 [shape = 'u8[8192]{0}', space=vmem, size = 0x2000, scoped, tag = 'input window, operand 6, single buffered']
    #allocation14 [shape = 'u8[11264]{0}', space=vmem, size = 0x2c00, scoped, tag = 'input window, operand 8, single buffered']
    #allocation15 [shape = 's32[1]{0}', space=sflag, size = 0x4, scoped, tag = 'scoped memory for decoder_forward.1']
    #allocation16 [shape = 'u8[8192]{0}', space=vmem, size = 0x2000, scoped, tag = 'input window, operand 9, single buffered']
    %16 = vsyncpa [#allocation7], 0
    %17 = vsyncpa [#allocation9], 0
    %18 = vsyncpa [#allocation12], 0
    %19 = vsyncpa [#allocation15], 0
    // Predicated region
    $region2: #{decoder_forward.1} parent=1 // pred_check
      _
    $region3: #{decoder_forward.1} parent=1 // pred_check_branch
      %21 = sbr.rel (0) target = $region5
    $region4: #{decoder_forward.1} parent=1 // pred_region
      %s23 = ssub.s32 128, 128
      %24 = vsyncadd [#allocation7], %s23
      %s26 = sshll.u32 [#allocation6], 4
      %s27 = int_to_ptr.vmem [resolvable:$true] %s26
      %29 = dma.hbm_to_vmem [thread:$0]  %s0, 128, %s27, [#allocation7]
    $region5: #{decoder_forward.1} parent=1 // pred_fallthru
      _
    // Predicated region
    $region6: #{decoder_forward.1} parent=1 // pred_check
      _
    $region7: #{decoder_forward.1} parent=1 // pred_check_branch
      %31 = sbr.rel (0) target = $region9
    $region8: #{decoder_forward.1} parent=1 // pred_region
      %s33 = ssub.s32 16384, 16384
      %34 = vsyncadd [#allocation9], %s33
      %s35 = sshll.u32 [#allocation8], 4
      %s36 = int_to_ptr.vmem [resolvable:$true] %s35
      %41 = dma.hbm_to_vmem [thread:$0]  %s1, 16384, %s36, [#allocation9], 256, 256, 16
    $region9: #{decoder_forward.1} parent=1 // pred_fallthru
      _
    // Predicated region
    $region10: #{decoder_forward.1} parent=1 // pred_check
      _
    $region11: #{decoder_forward.1} parent=1 // pred_check_branch
      %43 = sbr.rel (0) target = $region13
    $region12: #{decoder_forward.1} parent=1 // pred_region
      %s45 = ssub.s32 1024, 1024
      %46 = vsyncadd [#allocation9], %s45
      %s47 = sshll.u32 [#allocation10], 4
      %s48 = int_to_ptr.vmem [resolvable:$true] %s47
      %53 = dma.hbm_to_vmem [thread:$0]  %s2, 1024, %s48, [#allocation9], 512, 512, 32
    $region13: #{decoder_forward.1} parent=1 // pred_fallthru
      _
    // Predicated region
    $region14: #{decoder_forward.1} parent=1 // pred_check
      _
    $region15: #{decoder_forward.1} parent=1 // pred_check_branch
      %55 = sbr.rel (0) target = $region17
    $region16: #{decoder_forward.1} parent=1 // pred_region
      _
    $region17: #{decoder_forward.1} parent=1 // pred_fallthru
      _
    // Predicated region
    $region18: #{decoder_forward.1} parent=1 // pred_check
      _
    $region19: #{decoder_forward.1} parent=1 // pred_check_branch
      %57 = sbr.rel (0) target = $region21
    $region20: #{decoder_forward.1} parent=1 // pred_region
      %s59 = ssub.s32 64, 64
      %60 = vsyncadd [#allocation12], %s59
      %s61 = sshll.u32 [#allocation11], 4
      %s62 = int_to_ptr.vmem [resolvable:$true] %s61
      %67 = dma.hbm_to_vmem [thread:$0]  %s4, 64, %s62, [#allocation12], 32, 32, 2
    $region21: #{decoder_forward.1} parent=1 // pred_fallthru
      _
    // Predicated region
    $region22: #{decoder_forward.1} parent=1 // pred_check
      _
    $region23: #{decoder_forward.1} parent=1 // pred_check_branch
      %69 = sbr.rel (0) target = $region25
    $region24: #{decoder_forward.1} parent=1 // pred_region
      _
    $region25: #{decoder_forward.1} parent=1 // pred_fallthru
      _
    // Predicated region
    $region26: #{decoder_forward.1} parent=1 // pred_check
      _
    $region27: #{decoder_forward.1} parent=1 // pred_check_branch
      %71 = sbr.rel (0) target = $region29
    $region28: #{decoder_forward.1} parent=1 // pred_region
      %s73 = ssub.s32 256, 256
      %74 = vsyncadd [#allocation12], %s73
      %s75 = sshll.u32 [#allocation13], 4
      %s76 = int_to_ptr.vmem [resolvable:$true] %s75
      %81 = dma.hbm_to_vmem [thread:$0]  %s6, 256, %s76, [#allocation12], 64, 64, 4
    $region29: #{decoder_forward.1} parent=1 // pred_fallthru
      _
    // Predicated region
    $region30: #{decoder_forward.1} parent=1 // pred_check
      _
    $region31: #{decoder_forward.1} parent=1 // pred_check_branch
      %83 = sbr.rel (0) target = $region33
    $region32: #{decoder_forward.1} parent=1 // pred_region
      _
    $region33: #{decoder_forward.1} parent=1 // pred_fallthru
      _
    // Predicated region
    $region34: #{decoder_forward.1} parent=1 // pred_check
      _
    $region35: #{decoder_forward.1} parent=1 // pred_check_branch
      %85 = sbr.rel (0) target = $region37
    $region36: #{decoder_forward.1} parent=1 // pred_region
      %s87 = ssub.s32 352, 352
      %88 = vsyncadd [#allocation15], %s87
      %s89 = sshll.u32 [#allocation14], 4
      %s90 = int_to_ptr.vmem [resolvable:$true] %s89
      %95 = dma.hbm_to_vmem [thread:$0]  %s8, 352, %s90, [#allocation15], 32, 32, 2
    $region37: #{decoder_forward.1} parent=1 // pred_fallthru
      _
    // Predicated region
    $region38: #{decoder_forward.1} parent=1 // pred_check
      _
    $region39: #{decoder_forward.1} parent=1 // pred_check_branch
      %97 = sbr.rel (0) target = $region41
    $region40: #{decoder_forward.1} parent=1 // pred_region
      %s99 = ssub.s32 256, 256
      %100 = vsyncadd [#allocation15], %s99
      %s101 = sshll.u32 [#allocation16], 4
      %s102 = int_to_ptr.vmem [resolvable:$true] %s101
      %107 = dma.hbm_to_vmem [thread:$0]  %s9, 256, %s102, [#allocation15], 128, 128, 8
    $region41: #{decoder_forward.1} parent=1 // pred_fallthru
      _
    // Predicated region
    $region42: #{decoder_forward.1} parent=1 // pred_check
      _
    $region43: #{decoder_forward.1} parent=1 // pred_check_branch
      %109 = sbr.rel (0) target = $region45
    $region44: #{decoder_forward.1} parent=1 // pred_region
      %110 = dma.done [#allocation7], 128
    $region45: #{decoder_forward.1} parent=1 // pred_fallthru
      _
    // Predicated region
    $region46: #{decoder_forward.1} parent=1 // pred_check
      _
    $region47: #{decoder_forward.1} parent=1 // pred_check_branch
      %112 = sbr.rel (0) target = $region49
    $region48: #{decoder_forward.1} parent=1 // pred_region
      %113 = dma.done [#allocation9], 16384
    $region49: #{decoder_forward.1} parent=1 // pred_fallthru
      _
    // Predicated region
    $region50: #{decoder_forward.1} parent=1 // pred_check
      _
    $region51: #{decoder_forward.1} parent=1 // pred_check_branch
      %115 = sbr.rel (0) target = $region53
    $region52: #{decoder_forward.1} parent=1 // pred_region
      %116 = dma.done [#allocation9], 1024
    $region53: #{decoder_forward.1} parent=1 // pred_fallthru
      _
    // Predicated region
    $region54: #{decoder_forward.1} parent=1 // pred_check
      _
    $region55: #{decoder_forward.1} parent=1 // pred_check_branch
      %118 = sbr.rel (0) target = $region57
    $region56: #{decoder_forward.1} parent=1 // pred_region
      %119 = dma.done [#allocation12], 64
    $region57: #{decoder_forward.1} parent=1 // pred_fallthru
      _
    // Predicated region
    $region58: #{decoder_forward.1} parent=1 // pred_check
      _
    $region59: #{decoder_forward.1} parent=1 // pred_check_branch
      %121 = sbr.rel (0) target = $region61
    $region60: #{decoder_forward.1} parent=1 // pred_region
      %122 = dma.done [#allocation12], 256
    $region61: #{decoder_forward.1} parent=1 // pred_fallthru
      _
    // Predicated region
    $region62: #{decoder_forward.1} parent=1 // pred_check
      _
    $region63: #{decoder_forward.1} parent=1 // pred_check_branch
      %124 = sbr.rel (0) target = $region65
    $region64: #{decoder_forward.1} parent=1 // pred_region
      %125 = dma.done [#allocation15], 352
    $region65: #{decoder_forward.1} parent=1 // pred_fallthru
      _
    // Predicated region
    $region66: #{decoder_forward.1} parent=1 // pred_check
      _
    $region67: #{decoder_forward.1} parent=1 // pred_check_branch
      %127 = sbr.rel (0) target = $region69
    $region68: #{decoder_forward.1} parent=1 // pred_region
      %128 = dma.done [#allocation15], 256
    $region69: #{decoder_forward.1} parent=1 // pred_fallthru
      _
    %p131 = scmp.lt.u32.totalorder 518, 8
    %p132 = pneg %p131
    // Predicated region
    $region70: #{decoder_forward.1} parent=1 // pred_check
      _
    $region71: #{decoder_forward.1} parent=1 // pred_check_branch
      %134 = sbr.rel (%p131) target = $region73
    $region72: #{decoder_forward.1} parent=1 // pred_region
      %s149 = sand.u32 518, 7
      %p150 = scmp.eq.s32.totalorder %s149, 0
      %p151 = pneg %p150
      // Predicated region
      $region85: #{decoder_forward.1} parent=72 // pred_check
        _
      $region86: #{decoder_forward.1} parent=72 // pred_check_branch
        %153 = sbr.rel (%p150) target = $region88
      $region87: #{decoder_forward.1} parent=72 // pred_region
        %s154 = sand.u32 518, 7
        %s155 = ssub.s32 518, %s154
        %s156 = scalar_lea.vmem %s10, %s155
        %s157 = ssub.s32 518, %s154
        %s158 = scalar_lea.vmem [#allocation4], %s157
        loop: start=0, step=1, limit=1
        $region89: #{decoder_forward.1} parent=87 // loop_pre_header
          _
        $region90: #{decoder_forward.1} parent=87 // loop_header
          %s160 = sphi 0, %s164
          %p161 = scmp.ge.s32.totalorder %s160, 1
          %s165 = sphi %s10, %s10
          %s166 = sphi [#allocation4], [#allocation4]
        $region91: #{decoder_forward.1} parent=87 // loop_header_branch
          %163 = sbr.rel (%p161) target = $region95
        $region92: #{decoder_forward.1} parent=87 // loop_body
          %v167 = vld [vmem:[%s165] sm:$0xff]
          %168 = vst [vmem:[%s166] sm:$0xff] %v167
          %v169 = vld [vmem:[%s165 + $0x8] sm:$0xff]
          %170 = vst [vmem:[%s166 + $0x8] sm:$0xff] %v169
          %v171 = vld [vmem:[%s165 + $0x10] sm:$0xff]
          %172 = vst [vmem:[%s166 + $0x10] sm:$0xff] %v171
          %v173 = vld [vmem:[%s165 + $0x18] sm:$0xff]
          %174 = vst [vmem:[%s166 + $0x18] sm:$0xff] %v173
          %v175 = vld [vmem:[%s165 + $0x20] sm:$0xff]
          %176 = vst [vmem:[%s166 + $0x20] sm:$0xff] %v175
          %v177 = vld [vmem:[%s165 + $0x28] sm:$0xff]
          %178 = vst [vmem:[%s166 + $0x28] sm:$0xff] %v177
          %v179 = vld [vmem:[%s165 + $0x30] sm:$0xff]
          %180 = vst [vmem:[%s166 + $0x30] sm:$0xff] %v179
          %v181 = vld [vmem:[%s165 + $0x38] sm:$0xff]
          %182 = vst [vmem:[%s166 + $0x38] sm:$0xff] %v181
          %v183 = vld [vmem:[%s165 + $0x40] sm:$0xff]
          %184 = vst [vmem:[%s166 + $0x40] sm:$0xff] %v183
          %v185 = vld [vmem:[%s165 + $0x48] sm:$0xff]
          %186 = vst [vmem:[%s166 + $0x48] sm:$0xff] %v185
          %v187 = vld [vmem:[%s165 + $0x50] sm:$0xff]
          %188 = vst [vmem:[%s166 + $0x50] sm:$0xff] %v187
          %v189 = vld [vmem:[%s165 + $0x58] sm:$0xff]
          %190 = vst [vmem:[%s166 + $0x58] sm:$0xff] %v189
          %v191 = vld [vmem:[%s165 + $0x60] sm:$0xff]
          %192 = vst [vmem:[%s166 + $0x60] sm:$0xff] %v191
          %v193 = vld [vmem:[%s165 + $0x68] sm:$0xff]
          %194 = vst [vmem:[%s166 + $0x68] sm:$0xff] %v193
          %v195 = vld [vmem:[%s165 + $0x70] sm:$0xff]
          %196 = vst [vmem:[%s166 + $0x70] sm:$0xff] %v195
          %v197 = vld [vmem:[%s165 + $0x78] sm:$0xff]
          %198 = vst [vmem:[%s166 + $0x78] sm:$0xff] %v197
          %v199 = vld [vmem:[%s165 + $0x80] sm:$0xff]
          %200 = vst [vmem:[%s166 + $0x80] sm:$0xff] %v199
          %v201 = vld [vmem:[%s165 + $0x88] sm:$0xff]
          %202 = vst [vmem:[%s166 + $0x88] sm:$0xff] %v201
          %v203 = vld [vmem:[%s165 + $0x90] sm:$0xff]
          %204 = vst [vmem:[%s166 + $0x90] sm:$0xff] %v203
          %v205 = vld [vmem:[%s165 + $0x98] sm:$0xff]
          %206 = vst [vmem:[%s166 + $0x98] sm:$0xff] %v205
          %v207 = vld [vmem:[%s165 + $0xa0] sm:$0xff]
          %208 = vst [vmem:[%s166 + $0xa0] sm:$0xff] %v207
          %v209 = vld [vmem:[%s165 + $0xa8] sm:$0xff]
          %210 = vst [vmem:[%s166 + $0xa8] sm:$0xff] %v209
          %v211 = vld [vmem:[%s165 + $0xb0] sm:$0xff]
          %212 = vst [vmem:[%s166 + $0xb0] sm:$0xff] %v211
          %v213 = vld [vmem:[%s165 + $0xb8] sm:$0xff]
          %214 = vst [vmem:[%s166 + $0xb8] sm:$0xff] %v213
          %v215 = vld [vmem:[%s165 + $0xc0] sm:$0xff]
          %216 = vst [vmem:[%s166 + $0xc0] sm:$0xff] %v215
          %v217 = vld [vmem:[%s165 + $0xc8] sm:$0xff]
          %218 = vst [vmem:[%s166 + $0xc8] sm:$0xff] %v217
          %v219 = vld [vmem:[%s165 + $0xd0] sm:$0xff]
          %220 = vst [vmem:[%s166 + $0xd0] sm:$0xff] %v219
          %v221 = vld [vmem:[%s165 + $0xd8] sm:$0xff]
          %222 = vst [vmem:[%s166 + $0xd8] sm:$0xff] %v221
          %v223 = vld [vmem:[%s165 + $0xe0] sm:$0xff]
          %224 = vst [vmem:[%s166 + $0xe0] sm:$0xff] %v223
          %v225 = vld [vmem:[%s165 + $0xe8] sm:$0xff]
          %226 = vst [vmem:[%s166 + $0xe8] sm:$0xff] %v225
          %v227 = vld [vmem:[%s165 + $0xf0] sm:$0xff]
          %228 = vst [vmem:[%s166 + $0xf0] sm:$0xff] %v227
          %v229 = vld [vmem:[%s165 + $0xf8] sm:$0xff]
          %230 = vst [vmem:[%s166 + $0xf8] sm:$0xff] %v229
          %v231 = vld [vmem:[%s165 + $0x100] sm:$0xff]
          %232 = vst [vmem:[%s166 + $0x100] sm:$0xff] %v231
          %v233 = vld [vmem:[%s165 + $0x108] sm:$0xff]
          %234 = vst [vmem:[%s166 + $0x108] sm:$0xff] %v233
          %v235 = vld [vmem:[%s165 + $0x110] sm:$0xff]
          %236 = vst [vmem:[%s166 + $0x110] sm:$0xff] %v235
          %v237 = vld [vmem:[%s165 + $0x118] sm:$0xff]
          %238 = vst [vmem:[%s166 + $0x118] sm:$0xff] %v237
          %v239 = vld [vmem:[%s165 + $0x120] sm:$0xff]
          %240 = vst [vmem:[%s166 + $0x120] sm:$0xff] %v239
          %v241 = vld [vmem:[%s165 + $0x128] sm:$0xff]
          %242 = vst [vmem:[%s166 + $0x128] sm:$0xff] %v241
          %v243 = vld [vmem:[%s165 + $0x130] sm:$0xff]
          %244 = vst [vmem:[%s166 + $0x130] sm:$0xff] %v243
          %v245 = vld [vmem:[%s165 + $0x138] sm:$0xff]
          %246 = vst [vmem:[%s166 + $0x138] sm:$0xff] %v245
          %v247 = vld [vmem:[%s165 + $0x140] sm:$0xff]
          %248 = vst [vmem:[%s166 + $0x140] sm:$0xff] %v247
          %v249 = vld [vmem:[%s165 + $0x148] sm:$0xff]
          %250 = vst [vmem:[%s166 + $0x148] sm:$0xff] %v249
          %v251 = vld [vmem:[%s165 + $0x150] sm:$0xff]
          %252 = vst [vmem:[%s166 + $0x150] sm:$0xff] %v251
          %v253 = vld [vmem:[%s165 + $0x158] sm:$0xff]
          %254 = vst [vmem:[%s166 + $0x158] sm:$0xff] %v253
          %v255 = vld [vmem:[%s165 + $0x160] sm:$0xff]
          %256 = vst [vmem:[%s166 + $0x160] sm:$0xff] %v255
          %v257 = vld [vmem:[%s165 + $0x168] sm:$0xff]
          %258 = vst [vmem:[%s166 + $0x168] sm:$0xff] %v257
          %v259 = vld [vmem:[%s165 + $0x170] sm:$0xff]
          %260 = vst [vmem:[%s166 + $0x170] sm:$0xff] %v259
          %v261 = vld [vmem:[%s165 + $0x178] sm:$0xff]
          %262 = vst [vmem:[%s166 + $0x178] sm:$0xff] %v261
          %v263 = vld [vmem:[%s165 + $0x180] sm:$0xff]
          %264 = vst [vmem:[%s166 + $0x180] sm:$0xff] %v263
          %v265 = vld [vmem:[%s165 + $0x188] sm:$0xff]
          %266 = vst [vmem:[%s166 + $0x188] sm:$0xff] %v265
          %v267 = vld [vmem:[%s165 + $0x190] sm:$0xff]
          %268 = vst [vmem:[%s166 + $0x190] sm:$0xff] %v267
          %v269 = vld [vmem:[%s165 + $0x198] sm:$0xff]
          %270 = vst [vmem:[%s166 + $0x198] sm:$0xff] %v269
          %v271 = vld [vmem:[%s165 + $0x1a0] sm:$0xff]
          %272 = vst [vmem:[%s166 + $0x1a0] sm:$0xff] %v271
          %v273 = vld [vmem:[%s165 + $0x1a8] sm:$0xff]
          %274 = vst [vmem:[%s166 + $0x1a8] sm:$0xff] %v273
          %v275 = vld [vmem:[%s165 + $0x1b0] sm:$0xff]
          %276 = vst [vmem:[%s166 + $0x1b0] sm:$0xff] %v275
          %v277 = vld [vmem:[%s165 + $0x1b8] sm:$0xff]
          %278 = vst [vmem:[%s166 + $0x1b8] sm:$0xff] %v277
          %v279 = vld [vmem:[%s165 + $0x1c0] sm:$0xff]
          %280 = vst [vmem:[%s166 + $0x1c0] sm:$0xff] %v279
          %v281 = vld [vmem:[%s165 + $0x1c8] sm:$0xff]
          %282 = vst [vmem:[%s166 + $0x1c8] sm:$0xff] %v281
          %v283 = vld [vmem:[%s165 + $0x1d0] sm:$0xff]
          %284 = vst [vmem:[%s166 + $0x1d0] sm:$0xff] %v283
          %v285 = vld [vmem:[%s165 + $0x1d8] sm:$0xff]
          %286 = vst [vmem:[%s166 + $0x1d8] sm:$0xff] %v285
          %v287 = vld [vmem:[%s165 + $0x1e0] sm:$0xff]
          %288 = vst [vmem:[%s166 + $0x1e0] sm:$0xff] %v287
          %v289 = vld [vmem:[%s165 + $0x1e8] sm:$0xff]
          %290 = vst [vmem:[%s166 + $0x1e8] sm:$0xff] %v289
          %v291 = vld [vmem:[%s165 + $0x1f0] sm:$0xff]
          %292 = vst [vmem:[%s166 + $0x1f0] sm:$0xff] %v291
          %v293 = vld [vmem:[%s165 + $0x1f8] sm:$0xff]
          %294 = vst [vmem:[%s166 + $0x1f8] sm:$0xff] %v293
        $region93: #{decoder_forward.1} parent=87 // loop_footer
          %s164 = sadd.s32 1, %s160
        $region94: #{decoder_forward.1} parent=87 // loop_footer_branch
          %159 = sbr.rel target = $region90
        $region95: #{decoder_forward.1} parent=87 // loop_exit
          _
        %s295 = sshllo.u32 0, %s154
        loop: start=0, step=1, limit=1
        $region96: #{decoder_forward.1} parent=87 // loop_pre_header
          _
        $region97: #{decoder_forward.1} parent=87 // loop_header
          %s297 = sphi 0, %s301
          %p298 = scmp.ge.s32.totalorder %s297, 1
          %s302 = sphi %s156, %s156
          %s303 = sphi %s158, %s158
        $region98: #{decoder_forward.1} parent=87 // loop_header_branch
          %300 = sbr.rel (%p298) target = $region102
        $region99: #{decoder_forward.1} parent=87 // loop_body
          %v304 = vld [vmem:[%s302] sm:%s295]
          %305 = vst [vmem:[%s303] sm:%s295] %v304
        $region100: #{decoder_forward.1} parent=87 // loop_footer
          %s301 = sadd.s32 1, %s297
        $region101: #{decoder_forward.1} parent=87 // loop_footer_branch
          %296 = sbr.rel target = $region97
        $region102: #{decoder_forward.1} parent=87 // loop_exit
          _
      $region88: #{decoder_forward.1} parent=72 // pred_fallthru
        _
    $region73: #{decoder_forward.1} parent=1 // pred_fallthru
      _
    // Predicated region
    $region74: #{decoder_forward.1} parent=1 // pred_check
      %p135 = pneg %p131
    $region75: #{decoder_forward.1} parent=1 // pred_check_branch
      %137 = sbr.rel (%p135) target = $region77
    $region76: #{decoder_forward.1} parent=1 // pred_region
      %s138 = sshllo.u32 0, 518
      loop: start=0, step=1, limit=1
      $region78: #{decoder_forward.1} parent=76 // loop_pre_header
        _
      $region79: #{decoder_forward.1} parent=76 // loop_header
        %s140 = sphi 0, %s144
        %p141 = scmp.ge.s32.totalorder %s140, 1
        %s145 = sphi %s10, %s10
        %s146 = sphi [#allocation4], [#allocation4]
      $region80: #{decoder_forward.1} parent=76 // loop_header_branch
        %143 = sbr.rel (%p141) target = $region84
      $region81: #{decoder_forward.1} parent=76 // loop_body
        %v147 = vld [vmem:[%s145] sm:%s138]
        %148 = vst [vmem:[%s146] sm:%s138] %v147
      $region82: #{decoder_forward.1} parent=76 // loop_footer
        %s144 = sadd.s32 1, %s140
      $region83: #{decoder_forward.1} parent=76 // loop_footer_branch
        %139 = sbr.rel target = $region79
      $region84: #{decoder_forward.1} parent=76 // loop_exit
        _
    $region77: #{decoder_forward.1} parent=1 // pred_fallthru
      _
    // Predicated region
    $region103: #{decoder_forward.1} parent=1 // pred_check
      _
    $region104: #{decoder_forward.1} parent=1 // pred_check_branch
      %308 = sbr.rel (0) target = $region106
    $region105: #{decoder_forward.1} parent=1 // pred_region
      %309 = vsyncadd [#allocation5], 8288
    $region106: #{decoder_forward.1} parent=1 // pred_fallthru
      _
    %310 = vst [vmem:[#allocation3] sm:$0xff] 0.0
    %311 = vst [vmem:[#allocation3 + $0x8] sm:$0xff] 0.0
    %312 = vst [vmem:[#allocation3 + $0x10] sm:$0xff] 0.0
    %313 = vst [vmem:[#allocation3 + $0x18] sm:$0xff] 0.0
    %314 = vst [vmem:[#allocation3 + $0x20] sm:$0xff] 0.0
    %315 = vst [vmem:[#allocation3 + $0x28] sm:$0xff] 0.0
    %316 = vst [vmem:[#allocation3 + $0x30] sm:$0xff] 0.0
    %317 = vst [vmem:[#allocation3 + $0x38] sm:$0xff] 0.0
    %318 = vst [vmem:[#allocation3 + $0x40] sm:$0xff] 0.0
    %319 = vst [vmem:[#allocation3 + $0x48] sm:$0xff] 0.0
    %320 = vst [vmem:[#allocation3 + $0x50] sm:$0xff] 0.0
    %321 = vst [vmem:[#allocation3 + $0x58] sm:$0xff] 0.0
    %322 = vst [vmem:[#allocation3 + $0x60] sm:$0xff] 0.0
    %323 = vst [vmem:[#allocation3 + $0x68] sm:$0xff] 0.0
    %324 = vst [vmem:[#allocation3 + $0x70] sm:$0xff] 0.0
    %325 = vst [vmem:[#allocation3 + $0x78] sm:$0xff] 0.0
    %326 = vst [vmem:[#allocation3 + $0x80] sm:$0xff] 0.0
    %327 = vst [vmem:[#allocation3 + $0x88] sm:$0xff] 0.0
    %328 = vst [vmem:[#allocation3 + $0x90] sm:$0xff] 0.0
    %329 = vst [vmem:[#allocation3 + $0x98] sm:$0xff] 0.0
    %330 = vst [vmem:[#allocation3 + $0xa0] sm:$0xff] 0.0
    %331 = vst [vmem:[#allocation3 + $0xa8] sm:$0xff] 0.0
    %332 = vst [vmem:[#allocation3 + $0xb0] sm:$0xff] 0.0
    %333 = vst [vmem:[#allocation3 + $0xb8] sm:$0xff] 0.0
    %334 = vst [vmem:[#allocation3 + $0xc0] sm:$0xff] 0.0
    %335 = vst [vmem:[#allocation3 + $0xc8] sm:$0xff] 0.0
    %336 = vst [vmem:[#allocation3 + $0xd0] sm:$0xff] 0.0
    %337 = vst [vmem:[#allocation3 + $0xd8] sm:$0xff] 0.0
    %338 = vst [vmem:[#allocation3 + $0xe0] sm:$0xff] 0.0
    %339 = vst [vmem:[#allocation3 + $0xe8] sm:$0xff] 0.0
    %340 = vst [vmem:[#allocation3 + $0xf0] sm:$0xff] 0.0
    %341 = vst [vmem:[#allocation3 + $0xf8] sm:$0xff] 0.0
    %342 = vst [vmem:[#allocation3 + $0x100] sm:$0xff] 0.0
    %343 = vst [vmem:[#allocation3 + $0x108] sm:$0xff] 0.0
    %344 = vst [vmem:[#allocation3 + $0x110] sm:$0xff] 0.0
    %345 = vst [vmem:[#allocation3 + $0x118] sm:$0xff] 0.0
    %346 = vst [vmem:[#allocation3 + $0x120] sm:$0xff] 0.0
    %347 = vst [vmem:[#allocation3 + $0x128] sm:$0xff] 0.0
    %348 = vst [vmem:[#allocation3 + $0x130] sm:$0xff] 0.0
    %349 = vst [vmem:[#allocation3 + $0x138] sm:$0xff] 0.0
    %350 = vst [vmem:[#allocation3 + $0x140] sm:$0xff] 0.0
    %351 = vst [vmem:[#allocation3 + $0x148] sm:$0xff] 0.0
    %352 = vst [vmem:[#allocation3 + $0x150] sm:$0xff] 0.0
    %353 = vst [vmem:[#allocation3 + $0x158] sm:$0xff] 0.0
    %354 = vst [vmem:[#allocation3 + $0x160] sm:$0xff] 0.0
    %355 = vst [vmem:[#allocation3 + $0x168] sm:$0xff] 0.0
    %356 = vst [vmem:[#allocation3 + $0x170] sm:$0xff] 0.0
    %357 = vst [vmem:[#allocation3 + $0x178] sm:$0xff] 0.0
    %358 = vst [vmem:[#allocation3 + $0x180] sm:$0xff] 0.0
    %359 = vst [vmem:[#allocation3 + $0x188] sm:$0xff] 0.0
    %360 = vst [vmem:[#allocation3 + $0x190] sm:$0xff] 0.0
    %361 = vst [vmem:[#allocation3 + $0x198] sm:$0xff] 0.0
    %362 = vst [vmem:[#allocation3 + $0x1a0] sm:$0xff] 0.0
    %363 = vst [vmem:[#allocation3 + $0x1a8] sm:$0xff] 0.0
    %364 = vst [vmem:[#allocation3 + $0x1b0] sm:$0xff] 0.0
    %365 = vst [vmem:[#allocation3 + $0x1b8] sm:$0xff] 0.0
    %366 = vst [vmem:[#allocation3 + $0x1c0] sm:$0xff] 0.0
    %367 = vst [vmem:[#allocation3 + $0x1c8] sm:$0xff] 0.0
    %368 = vst [vmem:[#allocation3 + $0x1d0] sm:$0xff] 0.0
    %369 = vst [vmem:[#allocation3 + $0x1d8] sm:$0xff] 0.0
    %370 = vst [vmem:[#allocation3 + $0x1e0] sm:$0xff] 0.0
    %371 = vst [vmem:[#allocation3 + $0x1e8] sm:$0xff] 0.0
    %372 = vst [vmem:[#allocation3 + $0x1f0] sm:$0xff] 0.0
    %373 = vst [vmem:[#allocation3 + $0x1f8] sm:$0xff] 0.0
    %374 = vst [vmem:[#allocation3 + $0x200] sm:$0xff] 0.0
    %375 = vst [vmem:[#allocation3 + $0x208] sm:$0xff] 0.0
    %376 = vst [vmem:[#allocation3 + $0x210] sm:$0xff] 0.0
    %377 = vst [vmem:[#allocation3 + $0x218] sm:$0xff] 0.0
    %378 = vst [vmem:[#allocation3 + $0x220] sm:$0xff] 0.0
    %379 = vst [vmem:[#allocation3 + $0x228] sm:$0xff] 0.0
    %380 = vst [vmem:[#allocation3 + $0x230] sm:$0xff] 0.0
    %381 = vst [vmem:[#allocation3 + $0x238] sm:$0xff] 0.0
    %382 = vst [vmem:[#allocation3 + $0x240] sm:$0xff] 0.0
    %383 = vst [vmem:[#allocation3 + $0x248] sm:$0xff] 0.0
    %384 = vst [vmem:[#allocation3 + $0x250] sm:$0xff] 0.0
    %385 = vst [vmem:[#allocation3 + $0x258] sm:$0xff] 0.0
    %386 = vst [vmem:[#allocation3 + $0x260] sm:$0xff] 0.0
    %387 = vst [vmem:[#allocation3 + $0x268] sm:$0xff] 0.0
    %388 = vst [vmem:[#allocation3 + $0x270] sm:$0xff] 0.0
    %389 = vst [vmem:[#allocation3 + $0x278] sm:$0xff] 0.0
    %390 = vst [vmem:[#allocation3 + $0x280] sm:$0xff] 0.0
    %391 = vst [vmem:[#allocation3 + $0x288] sm:$0xff] 0.0
    %392 = vst [vmem:[#allocation3 + $0x290] sm:$0xff] 0.0
    %393 = vst [vmem:[#allocation3 + $0x298] sm:$0xff] 0.0
    %394 = vst [vmem:[#allocation3 + $0x2a0] sm:$0xff] 0.0
    %395 = vst [vmem:[#allocation3 + $0x2a8] sm:$0xff] 0.0
    %396 = vst [vmem:[#allocation3 + $0x2b0] sm:$0xff] 0.0
    %397 = vst [vmem:[#allocation3 + $0x2b8] sm:$0xff] 0.0
    %398 = vst [vmem:[#allocation3 + $0x2c0] sm:$0xff] 0.0
    %399 = vst [vmem:[#allocation3 + $0x2c8] sm:$0xff] 0.0
    %400 = vst [vmem:[#allocation3 + $0x2d0] sm:$0xff] 0.0
    %401 = vst [vmem:[#allocation3 + $0x2d8] sm:$0xff] 0.0
    %402 = vst [vmem:[#allocation3 + $0x2e0] sm:$0xff] 0.0
    %403 = vst [vmem:[#allocation3 + $0x2e8] sm:$0xff] 0.0
    %404 = vst [vmem:[#allocation3 + $0x2f0] sm:$0xff] 0.0
    %405 = vst [vmem:[#allocation3 + $0x2f8] sm:$0xff] 0.0
    %406 = vst [vmem:[#allocation3 + $0x300] sm:$0xff] 0.0
    %407 = vst [vmem:[#allocation3 + $0x308] sm:$0xff] 0.0
    %408 = vst [vmem:[#allocation3 + $0x310] sm:$0xff] 0.0
    %v409 = vld [vmem:[#allocation6] sm:$0xff]
    %v411 = vcombine.high %v409, %v409
    %v413 = vunpack.c.l.s4 1983009808
    %v414 = vunpack.c.0.s8 %v413
    %v415 = vlaneseq
    %v416 = vshrl.u32 %v415, 7
    %v417 = vsub.s32 %v414, %v416
    %v418 = vrot.slane %v409, %v417
    %v420 = vunpack.c.l.s4 1983009808
    %v421 = vunpack.c.0.s8 %v420
    %v422 = vlaneseq
    %v423 = vshrl.u32 %v422, 7
    %v424 = vsub.s32 %v421, %v423
    %v425 = vrot.slane %v411, %v424
    %v426 = vcombine.high %v418, %v418
    %v427 = vcombine.high %v425, %v425
    %v432 = vpack.c.bf16 %v418, %v418
    %v433 = vpack.c.bf16 %v426, %v426
    %v434 = vpack.c.bf16 %v425, %v425
    %v435 = vpack.c.bf16 %v427, %v427
    %v436 = vld [vmem:[#allocation8] sm:$0xff]
    %v437 = vld [vmem:[#allocation8 + $0x8] sm:$0xff]
    %v438 = vld [vmem:[#allocation8 + $0x10] sm:$0xff]
    %v439 = vld [vmem:[#allocation8 + $0x18] sm:$0xff]
    %v440 = vld [vmem:[#allocation8 + $0x20] sm:$0xff]
    %v441 = vld [vmem:[#allocation8 + $0x28] sm:$0xff]
    %v442 = vld [vmem:[#allocation8 + $0x30] sm:$0xff]
    %v443 = vld [vmem:[#allocation8 + $0x38] sm:$0xff]
    %v444 = vld [vmem:[#allocation8 + $0x40] sm:$0xff]
    %v445 = vld [vmem:[#allocation8 + $0x48] sm:$0xff]
    %v446 = vld [vmem:[#allocation8 + $0x50] sm:$0xff]
    %v447 = vld [vmem:[#allocation8 + $0x58] sm:$0xff]
    %v448 = vld [vmem:[#allocation8 + $0x60] sm:$0xff]
    %v449 = vld [vmem:[#allocation8 + $0x68] sm:$0xff]
    %v450 = vld [vmem:[#allocation8 + $0x70] sm:$0xff]
    %v451 = vld [vmem:[#allocation8 + $0x78] sm:$0xff]
    %v452 = vld [vmem:[#allocation8 + $0x80] sm:$0xff]
    %v453 = vld [vmem:[#allocation8 + $0x88] sm:$0xff]
    %v454 = vld [vmem:[#allocation8 + $0x90] sm:$0xff]
    %v455 = vld [vmem:[#allocation8 + $0x98] sm:$0xff]
    %v456 = vld [vmem:[#allocation8 + $0xa0] sm:$0xff]
    %v457 = vld [vmem:[#allocation8 + $0xa8] sm:$0xff]
    %v458 = vld [vmem:[#allocation8 + $0xb0] sm:$0xff]
    %v459 = vld [vmem:[#allocation8 + $0xb8] sm:$0xff]
    %v460 = vld [vmem:[#allocation8 + $0xc0] sm:$0xff]
    %v461 = vld [vmem:[#allocation8 + $0xc8] sm:$0xff]
    %v462 = vld [vmem:[#allocation8 + $0xd0] sm:$0xff]
    %v463 = vld [vmem:[#allocation8 + $0xd8] sm:$0xff]
    %v464 = vld [vmem:[#allocation8 + $0xe0] sm:$0xff]
    %v465 = vld [vmem:[#allocation8 + $0xe8] sm:$0xff]
    %v466 = vld [vmem:[#allocation8 + $0xf0] sm:$0xff]
    %v467 = vld [vmem:[#allocation8 + $0xf8] sm:$0xff]
    %v468 = vld [vmem:[#allocation8 + $0x100] sm:$0xff]
    %v469 = vld [vmem:[#allocation8 + $0x108] sm:$0xff]
    %v470 = vld [vmem:[#allocation8 + $0x110] sm:$0xff]
    %v471 = vld [vmem:[#allocation8 + $0x118] sm:$0xff]
    %v472 = vld [vmem:[#allocation8 + $0x120] sm:$0xff]
    %v473 = vld [vmem:[#allocation8 + $0x128] sm:$0xff]
    %v474 = vld [vmem:[#allocation8 + $0x130] sm:$0xff]
    %v475 = vld [vmem:[#allocation8 + $0x138] sm:$0xff]
    %v476 = vld [vmem:[#allocation8 + $0x140] sm:$0xff]
    %v477 = vld [vmem:[#allocation8 + $0x148] sm:$0xff]
    %v478 = vld [vmem:[#allocation8 + $0x150] sm:$0xff]
    %v479 = vld [vmem:[#allocation8 + $0x158] sm:$0xff]
    %v480 = vld [vmem:[#allocation8 + $0x160] sm:$0xff]
    %v481 = vld [vmem:[#allocation8 + $0x168] sm:$0xff]
    %v482 = vld [vmem:[#allocation8 + $0x170] sm:$0xff]
    %v483 = vld [vmem:[#allocation8 + $0x178] sm:$0xff]
    %v484 = vld [vmem:[#allocation8 + $0x180] sm:$0xff]
    %v485 = vld [vmem:[#allocation8 + $0x188] sm:$0xff]
    %v486 = vld [vmem:[#allocation8 + $0x190] sm:$0xff]
    %v487 = vld [vmem:[#allocation8 + $0x198] sm:$0xff]
    %v488 = vld [vmem:[#allocation8 + $0x1a0] sm:$0xff]
    %v489 = vld [vmem:[#allocation8 + $0x1a8] sm:$0xff]
    %v490 = vld [vmem:[#allocation8 + $0x1b0] sm:$0xff]
    %v491 = vld [vmem:[#allocation8 + $0x1b8] sm:$0xff]
    %v492 = vld [vmem:[#allocation8 + $0x1c0] sm:$0xff]
    %v493 = vld [vmem:[#allocation8 + $0x1c8] sm:$0xff]
    %v494 = vld [vmem:[#allocation8 + $0x1d0] sm:$0xff]
    %v495 = vld [vmem:[#allocation8 + $0x1d8] sm:$0xff]
    %v496 = vld [vmem:[#allocation8 + $0x1e0] sm:$0xff]
    %v497 = vld [vmem:[#allocation8 + $0x1e8] sm:$0xff]
    %v498 = vld [vmem:[#allocation8 + $0x1f0] sm:$0xff]
    %v499 = vld [vmem:[#allocation8 + $0x1f8] sm:$0xff]
    %v500 = vld [vmem:[#allocation8 + $0x200] sm:$0xff]
    %v501 = vld [vmem:[#allocation8 + $0x208] sm:$0xff]
    %v502 = vld [vmem:[#allocation8 + $0x210] sm:$0xff]
    %v503 = vld [vmem:[#allocation8 + $0x218] sm:$0xff]
    %v504 = vld [vmem:[#allocation8 + $0x220] sm:$0xff]
    %v505 = vld [vmem:[#allocation8 + $0x228] sm:$0xff]
    %v506 = vld [vmem:[#allocation8 + $0x230] sm:$0xff]
    %v507 = vld [vmem:[#allocation8 + $0x238] sm:$0xff]
    %v508 = vld [vmem:[#allocation8 + $0x240] sm:$0xff]
    %v509 = vld [vmem:[#allocation8 + $0x248] sm:$0xff]
    %v510 = vld [vmem:[#allocation8 + $0x250] sm:$0xff]
    %v511 = vld [vmem:[#allocation8 + $0x258] sm:$0xff]
    %v512 = vld [vmem:[#allocation8 + $0x260] sm:$0xff]
    %v513 = vld [vmem:[#allocation8 + $0x268] sm:$0xff]
    %v514 = vld [vmem:[#allocation8 + $0x270] sm:$0xff]
    %v515 = vld [vmem:[#allocation8 + $0x278] sm:$0xff]
    %v516 = vld [vmem:[#allocation8 + $0x280] sm:$0xff]
    %v517 = vld [vmem:[#allocation8 + $0x288] sm:$0xff]
    %v518 = vld [vmem:[#allocation8 + $0x290] sm:$0xff]
    %v519 = vld [vmem:[#allocation8 + $0x298] sm:$0xff]
    %v520 = vld [vmem:[#allocation8 + $0x2a0] sm:$0xff]
    %v521 = vld [vmem:[#allocation8 + $0x2a8] sm:$0xff]
    %v522 = vld [vmem:[#allocation8 + $0x2b0] sm:$0xff]
    %v523 = vld [vmem:[#allocation8 + $0x2b8] sm:$0xff]
    %v524 = vld [vmem:[#allocation8 + $0x2c0] sm:$0xff]
    %v525 = vld [vmem:[#allocation8 + $0x2c8] sm:$0xff]
    %v526 = vld [vmem:[#allocation8 + $0x2d0] sm:$0xff]
    %v527 = vld [vmem:[#allocation8 + $0x2d8] sm:$0xff]
    %v528 = vld [vmem:[#allocation8 + $0x2e0] sm:$0xff]
    %v529 = vld [vmem:[#allocation8 + $0x2e8] sm:$0xff]
    %v530 = vld [vmem:[#allocation8 + $0x2f0] sm:$0xff]
    %v531 = vld [vmem:[#allocation8 + $0x2f8] sm:$0xff]
    %v532 = vld [vmem:[#allocation8 + $0x300] sm:$0xff]
    %v533 = vld [vmem:[#allocation8 + $0x308] sm:$0xff]
    %v534 = vld [vmem:[#allocation8 + $0x310] sm:$0xff]
    %v535 = vld [vmem:[#allocation8 + $0x318] sm:$0xff]
    %v536 = vld [vmem:[#allocation8 + $0x320] sm:$0xff]
    %v537 = vld [vmem:[#allocation8 + $0x328] sm:$0xff]
    %v538 = vld [vmem:[#allocation8 + $0x330] sm:$0xff]
    %v539 = vld [vmem:[#allocation8 + $0x338] sm:$0xff]
    %v540 = vld [vmem:[#allocation8 + $0x340] sm:$0xff]
    %v541 = vld [vmem:[#allocation8 + $0x348] sm:$0xff]
    %v542 = vld [vmem:[#allocation8 + $0x350] sm:$0xff]
    %v543 = vld [vmem:[#allocation8 + $0x358] sm:$0xff]
    %v544 = vld [vmem:[#allocation8 + $0x360] sm:$0xff]
    %v545 = vld [vmem:[#allocation8 + $0x368] sm:$0xff]
    %v546 = vld [vmem:[#allocation8 + $0x370] sm:$0xff]
    %v547 = vld [vmem:[#allocation8 + $0x378] sm:$0xff]
    %v548 = vld [vmem:[#allocation8 + $0x380] sm:$0xff]
    %v549 = vld [vmem:[#allocation8 + $0x388] sm:$0xff]
    %v550 = vld [vmem:[#allocation8 + $0x390] sm:$0xff]
    %v551 = vld [vmem:[#allocation8 + $0x398] sm:$0xff]
    %v552 = vld [vmem:[#allocation8 + $0x3a0] sm:$0xff]
    %v553 = vld [vmem:[#allocation8 + $0x3a8] sm:$0xff]
    %v554 = vld [vmem:[#allocation8 + $0x3b0] sm:$0xff]
    %v555 = vld [vmem:[#allocation8 + $0x3b8] sm:$0xff]
    %v556 = vld [vmem:[#allocation8 + $0x3c0] sm:$0xff]
    %v557 = vld [vmem:[#allocation8 + $0x3c8] sm:$0xff]
    %v558 = vld [vmem:[#allocation8 + $0x3d0] sm:$0xff]
    %v559 = vld [vmem:[#allocation8 + $0x3d8] sm:$0xff]
    %v560 = vld [vmem:[#allocation8 + $0x3e0] sm:$0xff]
    %v561 = vld [vmem:[#allocation8 + $0x3e8] sm:$0xff]
    %v562 = vld [vmem:[#allocation8 + $0x3f0] sm:$0xff]
    %v563 = vld [vmem:[#allocation8 + $0x3f8] sm:$0xff]
    %v564 = vld [vmem:[#allocation10] ss:$8 sm:$0xf]
    %v566 = vlaneseq
    %v567 = vshrl.u32 %v566, 7
    %v568 = vsub.s32 0, %v567
    %v569 = vrot.slane %v564, %v568
    %v570 = vlaneseq
    %v571 = vshrl.u32 %v570, 7
    %v572 = vsub.s32 1, %v571
    %v573 = vrot.slane %v564, %v572
    %v574 = vlaneseq
    %v575 = vshrl.u32 %v574, 7
    %v576 = vsub.s32 2, %v575
    %v577 = vrot.slane %v564, %v576
    %v578 = vlaneseq
    %v579 = vshrl.u32 %v578, 7
    %v580 = vsub.s32 3, %v579
    %v581 = vrot.slane %v564, %v580
    %v714 = vunpack.c.l.b16 %v436
    %v715 = vunpack.c.h.b16 %v436
    %v716 = vunpack.c.l.b16 %v437
    %v717 = vunpack.c.h.b16 %v437
    %v718 = vunpack.c.l.b16 %v438
    %v719 = vunpack.c.h.b16 %v438
    %v720 = vunpack.c.l.b16 %v439
    %v721 = vunpack.c.h.b16 %v439
    %v722 = vunpack.c.l.b16 %v440
    %v723 = vunpack.c.h.b16 %v440
    %v724 = vunpack.c.l.b16 %v441
    %v725 = vunpack.c.h.b16 %v441
    %v726 = vunpack.c.l.b16 %v442
    %v727 = vunpack.c.h.b16 %v442
    %v728 = vunpack.c.l.b16 %v443
    %v729 = vunpack.c.h.b16 %v443
    %v730 = vunpack.c.l.b16 %v444
    %v731 = vunpack.c.h.b16 %v444
    %v732 = vunpack.c.l.b16 %v445
    %v733 = vunpack.c.h.b16 %v445
    %v734 = vunpack.c.l.b16 %v446
    %v735 = vunpack.c.h.b16 %v446
    %v736 = vunpack.c.l.b16 %v447
    %v737 = vunpack.c.h.b16 %v447
    %v738 = vunpack.c.l.b16 %v448
    %v739 = vunpack.c.h.b16 %v448
    %v740 = vunpack.c.l.b16 %v449
    %v741 = vunpack.c.h.b16 %v449
    %v742 = vunpack.c.l.b16 %v450
    %v743 = vunpack.c.h.b16 %v450
    %v744 = vunpack.c.l.b16 %v451
    %v745 = vunpack.c.h.b16 %v451
    %v746 = vunpack.c.l.b16 %v452
    %v747 = vunpack.c.h.b16 %v452
    %v748 = vunpack.c.l.b16 %v453
    %v749 = vunpack.c.h.b16 %v453
    %v750 = vunpack.c.l.b16 %v454
    %v751 = vunpack.c.h.b16 %v454
    %v752 = vunpack.c.l.b16 %v455
    %v753 = vunpack.c.h.b16 %v455
    %v754 = vunpack.c.l.b16 %v456
    %v755 = vunpack.c.h.b16 %v456
    %v756 = vunpack.c.l.b16 %v457
    %v757 = vunpack.c.h.b16 %v457
    %v758 = vunpack.c.l.b16 %v458
    %v759 = vunpack.c.h.b16 %v458
    %v760 = vunpack.c.l.b16 %v459
    %v761 = vunpack.c.h.b16 %v459
    %v762 = vunpack.c.l.b16 %v460
    %v763 = vunpack.c.h.b16 %v460
    %v764 = vunpack.c.l.b16 %v461
    %v765 = vunpack.c.h.b16 %v461
    %v766 = vunpack.c.l.b16 %v462
    %v767 = vunpack.c.h.b16 %v462
    %v768 = vunpack.c.l.b16 %v463
    %v769 = vunpack.c.h.b16 %v463
    %v770 = vunpack.c.l.b16 %v464
    %v771 = vunpack.c.h.b16 %v464
    %v772 = vunpack.c.l.b16 %v465
    %v773 = vunpack.c.h.b16 %v465
    %v774 = vunpack.c.l.b16 %v466
    %v775 = vunpack.c.h.b16 %v466
    %v776 = vunpack.c.l.b16 %v467
    %v777 = vunpack.c.h.b16 %v467
    %v778 = vunpack.c.l.b16 %v468
    %v779 = vunpack.c.h.b16 %v468
    %v780 = vunpack.c.l.b16 %v469
    %v781 = vunpack.c.h.b16 %v469
    %v782 = vunpack.c.l.b16 %v470
    %v783 = vunpack.c.h.b16 %v470
    %v784 = vunpack.c.l.b16 %v471
    %v785 = vunpack.c.h.b16 %v471
    %v786 = vunpack.c.l.b16 %v472
    %v787 = vunpack.c.h.b16 %v472
    %v788 = vunpack.c.l.b16 %v473
    %v789 = vunpack.c.h.b16 %v473
    %v790 = vunpack.c.l.b16 %v474
    %v791 = vunpack.c.h.b16 %v474
    %v792 = vunpack.c.l.b16 %v475
    %v793 = vunpack.c.h.b16 %v475
    %v794 = vunpack.c.l.b16 %v476
    %v795 = vunpack.c.h.b16 %v476
    %v796 = vunpack.c.l.b16 %v477
    %v797 = vunpack.c.h.b16 %v477
    %v798 = vunpack.c.l.b16 %v478
    %v799 = vunpack.c.h.b16 %v478
    %v800 = vunpack.c.l.b16 %v479
    %v801 = vunpack.c.h.b16 %v479
    %v802 = vunpack.c.l.b16 %v480
    %v803 = vunpack.c.h.b16 %v480
    %v804 = vunpack.c.l.b16 %v481
    %v805 = vunpack.c.h.b16 %v481
    %v806 = vunpack.c.l.b16 %v482
    %v807 = vunpack.c.h.b16 %v482
    %v808 = vunpack.c.l.b16 %v483
    %v809 = vunpack.c.h.b16 %v483
    %v810 = vunpack.c.l.b16 %v484
    %v811 = vunpack.c.h.b16 %v484
    %v812 = vunpack.c.l.b16 %v485
    %v813 = vunpack.c.h.b16 %v485
    %v814 = vunpack.c.l.b16 %v486
    %v815 = vunpack.c.h.b16 %v486
    %v816 = vunpack.c.l.b16 %v487
    %v817 = vunpack.c.h.b16 %v487
    %v818 = vunpack.c.l.b16 %v488
    %v819 = vunpack.c.h.b16 %v488
    %v820 = vunpack.c.l.b16 %v489
    %v821 = vunpack.c.h.b16 %v489
    %v822 = vunpack.c.l.b16 %v490
    %v823 = vunpack.c.h.b16 %v490
    %v824 = vunpack.c.l.b16 %v491
    %v825 = vunpack.c.h.b16 %v491
    %v826 = vunpack.c.l.b16 %v492
    %v827 = vunpack.c.h.b16 %v492
    %v828 = vunpack.c.l.b16 %v493
    %v829 = vunpack.c.h.b16 %v493
    %v830 = vunpack.c.l.b16 %v494
    %v831 = vunpack.c.h.b16 %v494
    %v832 = vunpack.c.l.b16 %v495
    %v833 = vunpack.c.h.b16 %v495
    %v834 = vunpack.c.l.b16 %v496
    %v835 = vunpack.c.h.b16 %v496
    %v836 = vunpack.c.l.b16 %v497
    %v837 = vunpack.c.h.b16 %v497
    %v838 = vunpack.c.l.b16 %v498
    %v839 = vunpack.c.h.b16 %v498
    %v840 = vunpack.c.l.b16 %v499
    %v841 = vunpack.c.h.b16 %v499
    %v842 = vunpack.c.l.b16 %v500
    %v843 = vunpack.c.h.b16 %v500
    %v844 = vunpack.c.l.b16 %v501
    %v845 = vunpack.c.h.b16 %v501
    %v846 = vunpack.c.l.b16 %v502
    %v847 = vunpack.c.h.b16 %v502
    %v848 = vunpack.c.l.b16 %v503
    %v849 = vunpack.c.h.b16 %v503
    %v850 = vunpack.c.l.b16 %v504
    %v851 = vunpack.c.h.b16 %v504
    %v852 = vunpack.c.l.b16 %v505
    %v853 = vunpack.c.h.b16 %v505
    %v854 = vunpack.c.l.b16 %v506
    %v855 = vunpack.c.h.b16 %v506
    %v856 = vunpack.c.l.b16 %v507
    %v857 = vunpack.c.h.b16 %v507
    %v858 = vunpack.c.l.b16 %v508
    %v859 = vunpack.c.h.b16 %v508
    %v860 = vunpack.c.l.b16 %v509
    %v861 = vunpack.c.h.b16 %v509
    %v862 = vunpack.c.l.b16 %v510
    %v863 = vunpack.c.h.b16 %v510
    %v864 = vunpack.c.l.b16 %v511
    %v865 = vunpack.c.h.b16 %v511
    %v866 = vunpack.c.l.b16 %v512
    %v867 = vunpack.c.h.b16 %v512
    %v868 = vunpack.c.l.b16 %v513
    %v869 = vunpack.c.h.b16 %v513
    %v870 = vunpack.c.l.b16 %v514
    %v871 = vunpack.c.h.b16 %v514
    %v872 = vunpack.c.l.b16 %v515
    %v873 = vunpack.c.h.b16 %v515
    %v874 = vunpack.c.l.b16 %v516
    %v875 = vunpack.c.h.b16 %v516
    %v876 = vunpack.c.l.b16 %v517
    %v877 = vunpack.c.h.b16 %v517
    %v878 = vunpack.c.l.b16 %v518
    %v879 = vunpack.c.h.b16 %v518
    %v880 = vunpack.c.l.b16 %v519
    %v881 = vunpack.c.h.b16 %v519
    %v882 = vunpack.c.l.b16 %v520
    %v883 = vunpack.c.h.b16 %v520
    %v884 = vunpack.c.l.b16 %v521
    %v885 = vunpack.c.h.b16 %v521
    %v886 = vunpack.c.l.b16 %v522
    %v887 = vunpack.c.h.b16 %v522
    %v888 = vunpack.c.l.b16 %v523
    %v889 = vunpack.c.h.b16 %v523
    %v890 = vunpack.c.l.b16 %v524
    %v891 = vunpack.c.h.b16 %v524
    %v892 = vunpack.c.l.b16 %v525
    %v893 = vunpack.c.h.b16 %v525
    %v894 = vunpack.c.l.b16 %v526
    %v895 = vunpack.c.h.b16 %v526
    %v896 = vunpack.c.l.b16 %v527
    %v897 = vunpack.c.h.b16 %v527
    %v898 = vunpack.c.l.b16 %v528
    %v899 = vunpack.c.h.b16 %v528
    %v900 = vunpack.c.l.b16 %v529
    %v901 = vunpack.c.h.b16 %v529
    %v902 = vunpack.c.l.b16 %v530
    %v903 = vunpack.c.h.b16 %v530
    %v904 = vunpack.c.l.b16 %v531
    %v905 = vunpack.c.h.b16 %v531
    %v906 = vunpack.c.l.b16 %v532
    %v907 = vunpack.c.h.b16 %v532
    %v908 = vunpack.c.l.b16 %v533
    %v909 = vunpack.c.h.b16 %v533
    %v910 = vunpack.c.l.b16 %v534
    %v911 = vunpack.c.h.b16 %v534
    %v912 = vunpack.c.l.b16 %v535
    %v913 = vunpack.c.h.b16 %v535
    %v914 = vunpack.c.l.b16 %v536
    %v915 = vunpack.c.h.b16 %v536
    %v916 = vunpack.c.l.b16 %v537
    %v917 = vunpack.c.h.b16 %v537
    %v918 = vunpack.c.l.b16 %v538
    %v919 = vunpack.c.h.b16 %v538
    %v920 = vunpack.c.l.b16 %v539
    %v921 = vunpack.c.h.b16 %v539
    %v922 = vunpack.c.l.b16 %v540
    %v923 = vunpack.c.h.b16 %v540
    %v924 = vunpack.c.l.b16 %v541
    %v925 = vunpack.c.h.b16 %v541
    %v926 = vunpack.c.l.b16 %v542
    %v927 = vunpack.c.h.b16 %v542
    %v928 = vunpack.c.l.b16 %v543
    %v929 = vunpack.c.h.b16 %v543
    %v930 = vunpack.c.l.b16 %v544
    %v931 = vunpack.c.h.b16 %v544
    %v932 = vunpack.c.l.b16 %v545
    %v933 = vunpack.c.h.b16 %v545
    %v934 = vunpack.c.l.b16 %v546
    %v935 = vunpack.c.h.b16 %v546
    %v936 = vunpack.c.l.b16 %v547
    %v937 = vunpack.c.h.b16 %v547
    %v938 = vunpack.c.l.b16 %v548
    %v939 = vunpack.c.h.b16 %v548
    %v940 = vunpack.c.l.b16 %v549
    %v941 = vunpack.c.h.b16 %v549
    %v942 = vunpack.c.l.b16 %v550
    %v943 = vunpack.c.h.b16 %v550
    %v944 = vunpack.c.l.b16 %v551
    %v945 = vunpack.c.h.b16 %v551
    %v946 = vunpack.c.l.b16 %v552
    %v947 = vunpack.c.h.b16 %v552
    %v948 = vunpack.c.l.b16 %v553
    %v949 = vunpack.c.h.b16 %v553
    %v950 = vunpack.c.l.b16 %v554
    %v951 = vunpack.c.h.b16 %v554
    %v952 = vunpack.c.l.b16 %v555
    %v953 = vunpack.c.h.b16 %v555
    %v954 = vunpack.c.l.b16 %v556
    %v955 = vunpack.c.h.b16 %v556
    %v956 = vunpack.c.l.b16 %v557
    %v957 = vunpack.c.h.b16 %v557
    %v958 = vunpack.c.l.b16 %v558
    %v959 = vunpack.c.h.b16 %v558
    %v960 = vunpack.c.l.b16 %v559
    %v961 = vunpack.c.h.b16 %v559
    %v962 = vunpack.c.l.b16 %v560
    %v963 = vunpack.c.h.b16 %v560
    %v964 = vunpack.c.l.b16 %v561
    %v965 = vunpack.c.h.b16 %v561
    %v966 = vunpack.c.l.b16 %v562
    %v967 = vunpack.c.h.b16 %v562
    %v968 = vunpack.c.l.b16 %v563
    %v969 = vunpack.c.h.b16 %v563
    %v970 = vpack.c.b16 %v718, %v714
    %v971 = vpack.c.b16 %v719, %v715
    %v972 = vpack.c.b16 %v720, %v716
    %v973 = vpack.c.b16 %v721, %v717
    %v974 = vpack.c.b16 %v726, %v722
    %v975 = vpack.c.b16 %v727, %v723
    %v976 = vpack.c.b16 %v728, %v724
    %v977 = vpack.c.b16 %v729, %v725
    %v978 = vpack.c.b16 %v734, %v730
    %v979 = vpack.c.b16 %v735, %v731
    %v980 = vpack.c.b16 %v736, %v732
    %v981 = vpack.c.b16 %v737, %v733
    %v982 = vpack.c.b16 %v742, %v738
    %v983 = vpack.c.b16 %v743, %v739
    %v984 = vpack.c.b16 %v744, %v740
    %v985 = vpack.c.b16 %v745, %v741
    %v986 = vpack.c.b16 %v750, %v746
    %v987 = vpack.c.b16 %v751, %v747
    %v988 = vpack.c.b16 %v752, %v748
    %v989 = vpack.c.b16 %v753, %v749
    %v990 = vpack.c.b16 %v758, %v754
    %v991 = vpack.c.b16 %v759, %v755
    %v992 = vpack.c.b16 %v760, %v756
    %v993 = vpack.c.b16 %v761, %v757
    %v994 = vpack.c.b16 %v766, %v762
    %v995 = vpack.c.b16 %v767, %v763
    %v996 = vpack.c.b16 %v768, %v764
    %v997 = vpack.c.b16 %v769, %v765
    %v998 = vpack.c.b16 %v774, %v770
    %v999 = vpack.c.b16 %v775, %v771
    %v1000 = vpack.c.b16 %v776, %v772
    %v1001 = vpack.c.b16 %v777, %v773
    %v1002 = vpack.c.b16 %v782, %v778
    %v1003 = vpack.c.b16 %v783, %v779
    %v1004 = vpack.c.b16 %v784, %v780
    %v1005 = vpack.c.b16 %v785, %v781
    %v1006 = vpack.c.b16 %v790, %v786
    %v1007 = vpack.c.b16 %v791, %v787
    %v1008 = vpack.c.b16 %v792, %v788
    %v1009 = vpack.c.b16 %v793, %v789
    %v1010 = vpack.c.b16 %v798, %v794
    %v1011 = vpack.c.b16 %v799, %v795
    %v1012 = vpack.c.b16 %v800, %v796
    %v1013 = vpack.c.b16 %v801, %v797
    %v1014 = vpack.c.b16 %v806, %v802
    %v1015 = vpack.c.b16 %v807, %v803
    %v1016 = vpack.c.b16 %v808, %v804
    %v1017 = vpack.c.b16 %v809, %v805
    %v1018 = vpack.c.b16 %v814, %v810
    %v1019 = vpack.c.b16 %v815, %v811
    %v1020 = vpack.c.b16 %v816, %v812
    %v1021 = vpack.c.b16 %v817, %v813
    %v1022 = vpack.c.b16 %v822, %v818
    %v1023 = vpack.c.b16 %v823, %v819
    %v1024 = vpack.c.b16 %v824, %v820
    %v1025 = vpack.c.b16 %v825, %v821
    %v1026 = vpack.c.b16 %v830, %v826
    %v1027 = vpack.c.b16 %v831, %v827
    %v1028 = vpack.c.b16 %v832, %v828
    %v1029 = vpack.c.b16 %v833, %v829
    %v1030 = vpack.c.b16 %v838, %v834
    %v1031 = vpack.c.b16 %v839, %v835
    %v1032 = vpack.c.b16 %v840, %v836
    %v1033 = vpack.c.b16 %v841, %v837
    %v1034 = vpack.c.b16 %v846, %v842
    %v1035 = vpack.c.b16 %v847, %v843
    %v1036 = vpack.c.b16 %v848, %v844
    %v1037 = vpack.c.b16 %v849, %v845
    %v1038 = vpack.c.b16 %v854, %v850
    %v1039 = vpack.c.b16 %v855, %v851
    %v1040 = vpack.c.b16 %v856, %v852
    %v1041 = vpack.c.b16 %v857, %v853
    %v1042 = vpack.c.b16 %v862, %v858
    %v1043 = vpack.c.b16 %v863, %v859
    %v1044 = vpack.c.b16 %v864, %v860
    %v1045 = vpack.c.b16 %v865, %v861
    %v1046 = vpack.c.b16 %v870, %v866
    %v1047 = vpack.c.b16 %v871, %v867
    %v1048 = vpack.c.b16 %v872, %v868
    %v1049 = vpack.c.b16 %v873, %v869
    %v1050 = vpack.c.b16 %v878, %v874
    %v1051 = vpack.c.b16 %v879, %v875
    %v1052 = vpack.c.b16 %v880, %v876
    %v1053 = vpack.c.b16 %v881, %v877
    %v1054 = vpack.c.b16 %v886, %v882
    %v1055 = vpack.c.b16 %v887, %v883
    %v1056 = vpack.c.b16 %v888, %v884
    %v1057 = vpack.c.b16 %v889, %v885
    %v1058 = vpack.c.b16 %v894, %v890
    %v1059 = vpack.c.b16 %v895, %v891
    %v1060 = vpack.c.b16 %v896, %v892
    %v1061 = vpack.c.b16 %v897, %v893
    %v1062 = vpack.c.b16 %v902, %v898
    %v1063 = vpack.c.b16 %v903, %v899
    %v1064 = vpack.c.b16 %v904, %v900
    %v1065 = vpack.c.b16 %v905, %v901
    %v1066 = vpack.c.b16 %v910, %v906
    %v1067 = vpack.c.b16 %v911, %v907
    %v1068 = vpack.c.b16 %v912, %v908
    %v1069 = vpack.c.b16 %v913, %v909
    %v1070 = vpack.c.b16 %v918, %v914
    %v1071 = vpack.c.b16 %v919, %v915
    %v1072 = vpack.c.b16 %v920, %v916
    %v1073 = vpack.c.b16 %v921, %v917
    %v1074 = vpack.c.b16 %v926, %v922
    %v1075 = vpack.c.b16 %v927, %v923
    %v1076 = vpack.c.b16 %v928, %v924
    %v1077 = vpack.c.b16 %v929, %v925
    %v1078 = vpack.c.b16 %v934, %v930
    %v1079 = vpack.c.b16 %v935, %v931
    %v1080 = vpack.c.b16 %v936, %v932
    %v1081 = vpack.c.b16 %v937, %v933
    %v1082 = vpack.c.b16 %v942, %v938
    %v1083 = vpack.c.b16 %v943, %v939
    %v1084 = vpack.c.b16 %v944, %v940
    %v1085 = vpack.c.b16 %v945, %v941
    %v1086 = vpack.c.b16 %v950, %v946
    %v1087 = vpack.c.b16 %v951, %v947
    %v1088 = vpack.c.b16 %v952, %v948
    %v1089 = vpack.c.b16 %v953, %v949
    %v1090 = vpack.c.b16 %v958, %v954
    %v1091 = vpack.c.b16 %v959, %v955
    %v1092 = vpack.c.b16 %v960, %v956
    %v1093 = vpack.c.b16 %v961, %v957
    %v1094 = vpack.c.b16 %v966, %v962
    %v1095 = vpack.c.b16 %v967, %v963
    %v1096 = vpack.c.b16 %v968, %v964
    %v1097 = vpack.c.b16 %v969, %v965
    %1226 = vmatprep.subr.bf16.mxu0 %v971
    %1227 = vmatpush1.bf16.msra.mxu0 %v970
    %1228 = vmatprep.subr.bf16.mxu0 %v975
    %1229 = vmatpush1.bf16.msra.mxu0 %v974
    %1230 = vmatprep.subr.bf16.mxu0 %v979
    %1231 = vmatpush1.bf16.msra.mxu0 %v978
    %1232 = vmatprep.subr.bf16.mxu0 %v983
    %1233 = vmatpush1.bf16.msra.mxu0 %v982
    %1234 = vmatprep.subr.bf16.mxu0 %v987
    %1235 = vmatpush1.bf16.msra.mxu0 %v986
    %1236 = vmatprep.subr.bf16.mxu0 %v991
    %1237 = vmatpush1.bf16.msra.mxu0 %v990
    %1238 = vmatprep.subr.bf16.mxu0 %v995
    %1239 = vmatpush1.bf16.msra.mxu0 %v994
    %1240 = vmatprep.subr.bf16.mxu0 %v999
    %1241 = vmatpush1.bf16.msra.mxu0 %v998
    %1242 = vmatprep.subr.bf16.mxu0 %v1003
    %1243 = vmatpush1.bf16.msra.mxu0 %v1002
    %1244 = vmatprep.subr.bf16.mxu0 %v1007
    %1245 = vmatpush1.bf16.msra.mxu0 %v1006
    %1246 = vmatprep.subr.bf16.mxu0 %v1011
    %1247 = vmatpush1.bf16.msra.mxu0 %v1010
    %1248 = vmatprep.subr.bf16.mxu0 %v1015
    %1249 = vmatpush1.bf16.msra.mxu0 %v1014
    %1250 = vmatprep.subr.bf16.mxu0 %v1019
    %1251 = vmatpush1.bf16.msra.mxu0 %v1018
    %1252 = vmatprep.subr.bf16.mxu0 %v1023
    %1253 = vmatpush1.bf16.msra.mxu0 %v1022
    %1254 = vmatprep.subr.bf16.mxu0 %v1027
    %1255 = vmatpush1.bf16.msra.mxu0 %v1026
    %1256 = vmatprep.subr.bf16.mxu0 %v1031
    %1257 = vmatpush1.bf16.msra.mxu0 %v1030
    %1258 = vmatprep.mubr.bf16.mxu0 %v433
    %1259 = vmatmul.mubr.bf16.gmra.mrb[0].mxu0 %v432
    %v1260 = vpop.f32.mrb[0].mxu0
    %v1261 = vadd.f32 %v569, %v1260
    %v1262 = vpop.f32.mrb[0].mxu0
    %v1263 = vadd.f32 %v573, %v1262
    %v1264 = vpop.f32.mrb[0].mxu0
    %v1265 = vpop.f32.mrb[0].mxu0
    %1266 = vdwg.mxu0
    %1267 = vmatprep.subr.bf16.mxu0 %v1035
    %1268 = vmatpush1.bf16.msra.mxu0 %v1034
    %1269 = vmatprep.subr.bf16.mxu0 %v1039
    %1270 = vmatpush1.bf16.msra.mxu0 %v1038
    %1271 = vmatprep.subr.bf16.mxu0 %v1043
    %1272 = vmatpush1.bf16.msra.mxu0 %v1042
    %1273 = vmatprep.subr.bf16.mxu0 %v1047
    %1274 = vmatpush1.bf16.msra.mxu0 %v1046
    %1275 = vmatprep.subr.bf16.mxu0 %v1051
    %1276 = vmatpush1.bf16.msra.mxu0 %v1050
    %1277 = vmatprep.subr.bf16.mxu0 %v1055
    %1278 = vmatpush1.bf16.msra.mxu0 %v1054
    %1279 = vmatprep.subr.bf16.mxu0 %v1059
    %1280 = vmatpush1.bf16.msra.mxu0 %v1058
    %1281 = vmatprep.subr.bf16.mxu0 %v1063
    %1282 = vmatpush1.bf16.msra.mxu0 %v1062
    %1283 = vmatprep.subr.bf16.mxu0 %v1067
    %1284 = vmatpush1.bf16.msra.mxu0 %v1066
    %1285 = vmatprep.subr.bf16.mxu0 %v1071
    %1286 = vmatpush1.bf16.msra.mxu0 %v1070
    %1287 = vmatprep.subr.bf16.mxu0 %v1075
    %1288 = vmatpush1.bf16.msra.mxu0 %v1074
    %1289 = vmatprep.subr.bf16.mxu0 %v1079
    %1290 = vmatpush1.bf16.msra.mxu0 %v1078
    %1291 = vmatprep.subr.bf16.mxu0 %v1083
    %1292 = vmatpush1.bf16.msra.mxu0 %v1082
    %1293 = vmatprep.subr.bf16.mxu0 %v1087
    %1294 = vmatpush1.bf16.msra.mxu0 %v1086
    %1295 = vmatprep.subr.bf16.mxu0 %v1091
    %1296 = vmatpush1.bf16.msra.mxu0 %v1090
    %1297 = vmatprep.subr.bf16.mxu0 %v1095
    %1298 = vmatpush1.bf16.msra.mxu0 %v1094
    %1299 = vmatprep.mubr.bf16.mxu0 %v435
    %1300 = vmatmul.mubr.bf16.gmra.mrb[0].mxu0 %v434
    %v1301 = vpop.f32.mrb[0].mxu0
    %v1302 = vadd.f32 %v1261, %v1301
    %v1303 = vpop.f32.mrb[0].mxu0
    %v1304 = vadd.f32 %v1263, %v1303
    %v1305 = vpop.f32.mrb[0].mxu0
    %v1306 = vpop.f32.mrb[0].mxu0
    %1307 = vdwg.mxu0
    %1308 = vmatprep.subr.bf16.mxu0 %v973
    %1309 = vmatpush1.bf16.msra.mxu0 %v972
    %1310 = vmatprep.subr.bf16.mxu0 %v977
    %1311 = vmatpush1.bf16.msra.mxu0 %v976
    %1312 = vmatprep.subr.bf16.mxu0 %v981
    %1313 = vmatpush1.bf16.msra.mxu0 %v980
    %1314 = vmatprep.subr.bf16.mxu0 %v985
    %1315 = vmatpush1.bf16.msra.mxu0 %v984
    %1316 = vmatprep.subr.bf16.mxu0 %v989
    %1317 = vmatpush1.bf16.msra.mxu0 %v988
    %1318 = vmatprep.subr.bf16.mxu0 %v993
    %1319 = vmatpush1.bf16.msra.mxu0 %v992
    %1320 = vmatprep.subr.bf16.mxu0 %v997
    %1321 = vmatpush1.bf16.msra.mxu0 %v996
    %1322 = vmatprep.subr.bf16.mxu0 %v1001
    %1323 = vmatpush1.bf16.msra.mxu0 %v1000
    %1324 = vmatprep.subr.bf16.mxu0 %v1005
    %1325 = vmatpush1.bf16.msra.mxu0 %v1004
    %1326 = vmatprep.subr.bf16.mxu0 %v1009
    %1327 = vmatpush1.bf16.msra.mxu0 %v1008
    %1328 = vmatprep.subr.bf16.mxu0 %v1013
    %1329 = vmatpush1.bf16.msra.mxu0 %v1012
    %1330 = vmatprep.subr.bf16.mxu0 %v1017
    %1331 = vmatpush1.bf16.msra.mxu0 %v1016
    %1332 = vmatprep.subr.bf16.mxu0 %v1021
    %1333 = vmatpush1.bf16.msra.mxu0 %v1020
    %1334 = vmatprep.subr.bf16.mxu0 %v1025
    %1335 = vmatpush1.bf16.msra.mxu0 %v1024
    %1336 = vmatprep.subr.bf16.mxu0 %v1029
    %1337 = vmatpush1.bf16.msra.mxu0 %v1028
    %1338 = vmatprep.subr.bf16.mxu0 %v1033
    %1339 = vmatpush1.bf16.msra.mxu0 %v1032
    %1340 = vmatprep.mubr.bf16.mxu0 %v433
    %1341 = vmatmul.mubr.bf16.gmra.mrb[0].mxu0 %v432
    %v1342 = vpop.f32.mrb[0].mxu0
    %v1343 = vadd.f32 %v577, %v1342
    %v1344 = vpop.f32.mrb[0].mxu0
    %v1345 = vadd.f32 %v581, %v1344
    %v1346 = vpop.f32.mrb[0].mxu0
    %v1347 = vpop.f32.mrb[0].mxu0
    %1348 = vdwg.mxu0
    %1349 = vmatprep.subr.bf16.mxu0 %v1037
    %1350 = vmatpush1.bf16.msra.mxu0 %v1036
    %1351 = vmatprep.subr.bf16.mxu0 %v1041
    %1352 = vmatpush1.bf16.msra.mxu0 %v1040
    %1353 = vmatprep.subr.bf16.mxu0 %v1045
    %1354 = vmatpush1.bf16.msra.mxu0 %v1044
    %1355 = vmatprep.subr.bf16.mxu0 %v1049
    %1356 = vmatpush1.bf16.msra.mxu0 %v1048
    %1357 = vmatprep.subr.bf16.mxu0 %v1053
    %1358 = vmatpush1.bf16.msra.mxu0 %v1052
    %1359 = vmatprep.subr.bf16.mxu0 %v1057
    %1360 = vmatpush1.bf16.msra.mxu0 %v1056
    %1361 = vmatprep.subr.bf16.mxu0 %v1061
    %1362 = vmatpush1.bf16.msra.mxu0 %v1060
    %1363 = vmatprep.subr.bf16.mxu0 %v1065
    %1364 = vmatpush1.bf16.msra.mxu0 %v1064
    %1365 = vmatprep.subr.bf16.mxu0 %v1069
    %1366 = vmatpush1.bf16.msra.mxu0 %v1068
    %1367 = vmatprep.subr.bf16.mxu0 %v1073
    %1368 = vmatpush1.bf16.msra.mxu0 %v1072
    %1369 = vmatprep.subr.bf16.mxu0 %v1077
    %1370 = vmatpush1.bf16.msra.mxu0 %v1076
    %1371 = vmatprep.subr.bf16.mxu0 %v1081
    %1372 = vmatpush1.bf16.msra.mxu0 %v1080
    %1373 = vmatprep.subr.bf16.mxu0 %v1085
    %1374 = vmatpush1.bf16.msra.mxu0 %v1084
    %1375 = vmatprep.subr.bf16.mxu0 %v1089
    %1376 = vmatpush1.bf16.msra.mxu0 %v1088
    %1377 = vmatprep.subr.bf16.mxu0 %v1093
    %1378 = vmatpush1.bf16.msra.mxu0 %v1092
    %1379 = vmatprep.subr.bf16.mxu0 %v1097
    %1380 = vmatpush1.bf16.msra.mxu0 %v1096
    %1381 = vmatprep.mubr.bf16.mxu0 %v435
    %1382 = vmatmul.mubr.bf16.gmra.mrb[0].mxu0 %v434
    %v1383 = vpop.f32.mrb[0].mxu0
    %v1384 = vadd.f32 %v1343, %v1383
    %v1385 = vpop.f32.mrb[0].mxu0
    %v1386 = vadd.f32 %v1345, %v1385
    %v1387 = vpop.f32.mrb[0].mxu0
    %v1388 = vpop.f32.mrb[0].mxu0
    %1389 = vdwg.mxu0
    %1390 = vst [vmem:[#allocation2] sm:$0x1] %v1302
    %1391 = vst [vmem:[#allocation2 + $0x1] sm:$0x1] %v1304
    %1392 = vst [vmem:[#allocation2 + $0x2] sm:$0x1] %v1384
    %1393 = vst [vmem:[#allocation2 + $0x3] sm:$0x1] %v1386
    %v1395 = vrot.slane %v1302, 1
    %1397 = vst [vmem:[#allocation2 + $0x8] sm:$0x1] %v1395
    %v1399 = vrot.slane %v1304, 1
    %1401 = vst [vmem:[#allocation2 + $0x9] sm:$0x1] %v1399
    %v1403 = vrot.slane %v1384, 1
    %1405 = vst [vmem:[#allocation2 + $0xa] sm:$0x1] %v1403
    %v1407 = vrot.slane %v1386, 1
    %1409 = vst [vmem:[#allocation2 + $0xb] sm:$0x1] %v1407
    %v1410 = vld [vmem:[#allocation2] sm:$0xf]
    %v1411 = vld [vmem:[#allocation2 + $0x8] sm:$0xf]
    %v1412 = vld [vmem:[#allocation11] sm:$0x3]
    %v1413 = vld [vmem:[#allocation11 + $0x2] sm:$0x1]
    %v1414 = vunpack.c.0.s8 %v1412
    %v1415 = vunpack.c.0.s8 %v1413
    %v1416 = vcvt.s32.f32 %v1414
    %v1417 = vcvt.s32.f32 %v1415
    %v1418 = vpack.c.bf16 %v1410, %v1410
    %v1419 = vld [vmem:[%s3] sm:$0xff]
    %v1420 = vld [vmem:[%s3 + $0x8] sm:$0xff]
    %v1421 = vld [vmem:[%s3 + $0x10] sm:$0xf]
    %v1422 = vld [vmem:[%s3 + $0x14] sm:$0xff]
    %v1423 = vld [vmem:[%s3 + $0x1c] sm:$0xff]
    %v1424 = vld [vmem:[%s3 + $0x24] sm:$0xf]
    %v1425 = vld [vmem:[%s3 + $0x28] sm:$0xff]
    %v1426 = vld [vmem:[%s3 + $0x30] sm:$0xff]
    %v1427 = vld [vmem:[%s3 + $0x38] sm:$0xf]
    %v1428 = vld [vmem:[%s3 + $0x3c] sm:$0xff]
    %v1429 = vld [vmem:[%s3 + $0x44] sm:$0xff]
    %v1430 = vld [vmem:[%s3 + $0x4c] sm:$0xf]
    %v1431 = vld [vmem:[%s3 + $0x50] sm:$0xff]
    %v1432 = vld [vmem:[%s3 + $0x58] sm:$0xff]
    %v1433 = vld [vmem:[%s3 + $0x60] sm:$0xf]
    %v1434 = vld [vmem:[%s3 + $0x64] sm:$0xff]
    %v1435 = vld [vmem:[%s3 + $0x6c] sm:$0xff]
    %v1436 = vld [vmem:[%s3 + $0x74] sm:$0xf]
    %v1437 = vld [vmem:[%s3 + $0x78] sm:$0xff]
    %v1438 = vld [vmem:[%s3 + $0x80] sm:$0xff]
    %v1439 = vld [vmem:[%s3 + $0x88] sm:$0xf]
    %v1440 = vld [vmem:[%s3 + $0x8c] sm:$0xff]
    %v1441 = vld [vmem:[%s3 + $0x94] sm:$0xff]
    %v1442 = vld [vmem:[%s3 + $0x9c] sm:$0xf]
    %v1443 = vld [vmem:[%s3 + $0xa0] sm:$0xff]
    %v1444 = vld [vmem:[%s3 + $0xa8] sm:$0xff]
    %v1445 = vld [vmem:[%s3 + $0xb0] sm:$0xf]
    %v1446 = vld [vmem:[%s3 + $0xb4] sm:$0xff]
    %v1447 = vld [vmem:[%s3 + $0xbc] sm:$0xff]
    %v1448 = vld [vmem:[%s3 + $0xc4] sm:$0xf]
    %v1449 = vld [vmem:[%s3 + $0xc8] sm:$0xff]
    %v1450 = vld [vmem:[%s3 + $0xd0] sm:$0xff]
    %v1451 = vld [vmem:[%s3 + $0xd8] sm:$0xf]
    %v1452 = vld [vmem:[%s3 + $0xdc] sm:$0xff]
    %v1453 = vld [vmem:[%s3 + $0xe4] sm:$0xff]
    %v1454 = vld [vmem:[%s3 + $0xec] sm:$0xf]
    %v1455 = vld [vmem:[%s3 + $0xf0] sm:$0xff]
    %v1456 = vld [vmem:[%s3 + $0xf8] sm:$0xff]
    %v1457 = vld [vmem:[%s3 + $0x100] sm:$0xf]
    %v1458 = vld [vmem:[%s3 + $0x104] sm:$0xff]
    %v1459 = vld [vmem:[%s3 + $0x10c] sm:$0xff]
    %v1460 = vld [vmem:[%s3 + $0x114] sm:$0xf]
    %v1461 = vld [vmem:[%s3 + $0x118] sm:$0xff]
    %v1462 = vld [vmem:[%s3 + $0x120] sm:$0xff]
    %v1463 = vld [vmem:[%s3 + $0x128] sm:$0xf]
    %v1464 = vld [vmem:[%s3 + $0x12c] sm:$0xff]
    %v1465 = vld [vmem:[%s3 + $0x134] sm:$0xff]
    %v1466 = vld [vmem:[%s3 + $0x13c] sm:$0xf]
    %v1515 = vunpack.c.l.b16 %v1419
    %v1516 = vunpack.c.h.b16 %v1419
    %v1517 = vunpack.c.l.b16 %v1420
    %v1518 = vunpack.c.h.b16 %v1420
    %v1519 = vunpack.c.l.b16 %v1421
    %v1520 = vunpack.c.l.b16 %v1422
    %v1521 = vunpack.c.h.b16 %v1422
    %v1522 = vunpack.c.l.b16 %v1423
    %v1523 = vunpack.c.h.b16 %v1423
    %v1524 = vunpack.c.l.b16 %v1424
    %v1525 = vunpack.c.l.b16 %v1425
    %v1526 = vunpack.c.h.b16 %v1425
    %v1527 = vunpack.c.l.b16 %v1426
    %v1528 = vunpack.c.h.b16 %v1426
    %v1529 = vunpack.c.l.b16 %v1427
    %v1530 = vunpack.c.l.b16 %v1428
    %v1531 = vunpack.c.h.b16 %v1428
    %v1532 = vunpack.c.l.b16 %v1429
    %v1533 = vunpack.c.h.b16 %v1429
    %v1534 = vunpack.c.l.b16 %v1430
    %v1535 = vunpack.c.l.b16 %v1431
    %v1536 = vunpack.c.h.b16 %v1431
    %v1537 = vunpack.c.l.b16 %v1432
    %v1538 = vunpack.c.h.b16 %v1432
    %v1539 = vunpack.c.l.b16 %v1433
    %v1540 = vunpack.c.l.b16 %v1434
    %v1541 = vunpack.c.h.b16 %v1434
    %v1542 = vunpack.c.l.b16 %v1435
    %v1543 = vunpack.c.h.b16 %v1435
    %v1544 = vunpack.c.l.b16 %v1436
    %v1545 = vunpack.c.l.b16 %v1437
    %v1546 = vunpack.c.h.b16 %v1437
    %v1547 = vunpack.c.l.b16 %v1438
    %v1548 = vunpack.c.h.b16 %v1438
    %v1549 = vunpack.c.l.b16 %v1439
    %v1550 = vunpack.c.l.b16 %v1440
    %v1551 = vunpack.c.h.b16 %v1440
    %v1552 = vunpack.c.l.b16 %v1441
    %v1553 = vunpack.c.h.b16 %v1441
    %v1554 = vunpack.c.l.b16 %v1442
    %v1555 = vunpack.c.l.b16 %v1443
    %v1556 = vunpack.c.h.b16 %v1443
    %v1557 = vunpack.c.l.b16 %v1444
    %v1558 = vunpack.c.h.b16 %v1444
    %v1559 = vunpack.c.l.b16 %v1445
    %v1560 = vunpack.c.l.b16 %v1446
    %v1561 = vunpack.c.h.b16 %v1446
    %v1562 = vunpack.c.l.b16 %v1447
    %v1563 = vunpack.c.h.b16 %v1447
    %v1564 = vunpack.c.l.b16 %v1448
    %v1565 = vunpack.c.l.b16 %v1449
    %v1566 = vunpack.c.h.b16 %v1449
    %v1567 = vunpack.c.l.b16 %v1450
    %v1568 = vunpack.c.h.b16 %v1450
    %v1569 = vunpack.c.l.b16 %v1451
    %v1570 = vunpack.c.l.b16 %v1452
    %v1571 = vunpack.c.h.b16 %v1452
    %v1572 = vunpack.c.l.b16 %v1453
    %v1573 = vunpack.c.h.b16 %v1453
    %v1574 = vunpack.c.l.b16 %v1454
    %v1575 = vunpack.c.l.b16 %v1455
    %v1576 = vunpack.c.h.b16 %v1455
    %v1577 = vunpack.c.l.b16 %v1456
    %v1578 = vunpack.c.h.b16 %v1456
    %v1579 = vunpack.c.l.b16 %v1457
    %v1580 = vunpack.c.l.b16 %v1458
    %v1581 = vunpack.c.h.b16 %v1458
    %v1582 = vunpack.c.l.b16 %v1459
    %v1583 = vunpack.c.h.b16 %v1459
    %v1584 = vunpack.c.l.b16 %v1460
    %v1585 = vunpack.c.l.b16 %v1461
    %v1586 = vunpack.c.h.b16 %v1461
    %v1587 = vunpack.c.l.b16 %v1462
    %v1588 = vunpack.c.h.b16 %v1462
    %v1589 = vunpack.c.l.b16 %v1463
    %v1590 = vunpack.c.l.b16 %v1464
    %v1591 = vunpack.c.h.b16 %v1464
    %v1592 = vunpack.c.l.b16 %v1465
    %v1593 = vunpack.c.h.b16 %v1465
    %v1594 = vunpack.c.l.b16 %v1466
    %v1595 = vpack.c.b16 %v1520, %v1515
    %v1596 = vpack.c.b16 %v1521, %v1516
    %v1597 = vpack.c.b16 %v1522, %v1517
    %v1598 = vpack.c.b16 %v1523, %v1518
    %v1599 = vpack.c.b16 %v1524, %v1519
    %v1600 = vpack.c.b16 %v1530, %v1525
    %v1601 = vpack.c.b16 %v1531, %v1526
    %v1602 = vpack.c.b16 %v1532, %v1527
    %v1603 = vpack.c.b16 %v1533, %v1528
    %v1604 = vpack.c.b16 %v1534, %v1529
    %v1605 = vpack.c.b16 %v1540, %v1535
    %v1606 = vpack.c.b16 %v1541, %v1536
    %v1607 = vpack.c.b16 %v1542, %v1537
    %v1608 = vpack.c.b16 %v1543, %v1538
    %v1609 = vpack.c.b16 %v1544, %v1539
    %v1610 = vpack.c.b16 %v1550, %v1545
    %v1611 = vpack.c.b16 %v1551, %v1546
    %v1612 = vpack.c.b16 %v1552, %v1547
    %v1613 = vpack.c.b16 %v1553, %v1548
    %v1614 = vpack.c.b16 %v1554, %v1549
    %v1615 = vpack.c.b16 %v1560, %v1555
    %v1616 = vpack.c.b16 %v1561, %v1556
    %v1617 = vpack.c.b16 %v1562, %v1557
    %v1618 = vpack.c.b16 %v1563, %v1558
    %v1619 = vpack.c.b16 %v1564, %v1559
    %v1620 = vpack.c.b16 %v1570, %v1565
    %v1621 = vpack.c.b16 %v1571, %v1566
    %v1622 = vpack.c.b16 %v1572, %v1567
    %v1623 = vpack.c.b16 %v1573, %v1568
    %v1624 = vpack.c.b16 %v1574, %v1569
    %v1625 = vpack.c.b16 %v1580, %v1575
    %v1626 = vpack.c.b16 %v1581, %v1576
    %v1627 = vpack.c.b16 %v1582, %v1577
    %v1628 = vpack.c.b16 %v1583, %v1578
    %v1629 = vpack.c.b16 %v1584, %v1579
    %v1630 = vpack.c.b16 %v1590, %v1585
    %v1631 = vpack.c.b16 %v1591, %v1586
    %v1632 = vpack.c.b16 %v1592, %v1587
    %v1633 = vpack.c.b16 %v1593, %v1588
    %v1634 = vpack.c.b16 %v1594, %v1589
    %1675 = vmatprep.subr.bf16.mxu0 %v1596
    %1676 = vmatpush1.bf16.msra.mxu0 %v1595
    %1677 = vmatprep.subr.bf16.mxu0 %v1601
    %1678 = vmatpush1.bf16.msra.mxu0 %v1600
    %1679 = vmatprep.subr.bf16.mxu0 %v1606
    %1680 = vmatpush1.bf16.msra.mxu0 %v1605
    %1681 = vmatprep.subr.bf16.mxu0 %v1611
    %1682 = vmatpush1.bf16.msra.mxu0 %v1610
    %1683 = vmatprep.subr.bf16.mxu0 %v1616
    %1684 = vmatpush1.bf16.msra.mxu0 %v1615
    %1685 = vmatprep.subr.bf16.mxu0 %v1621
    %1686 = vmatpush1.bf16.msra.mxu0 %v1620
    %1687 = vmatprep.subr.bf16.mxu0 %v1626
    %1688 = vmatpush1.bf16.msra.mxu0 %v1625
    %1689 = vmatprep.subr.bf16.mxu0 %v1631
    %1690 = vmatpush1.bf16.msra.mxu0 %v1630
    %1691 = vmatprep.subr.bf16.mxu0 0
    %1692 = vmatpush1.bf16.msra.mxu0 0
    %1693 = vmatprep.subr.bf16.mxu0 0
    %1694 = vmatpush1.bf16.msra.mxu0 0
    %1695 = vmatprep.subr.bf16.mxu0 0
    %1696 = vmatpush1.bf16.msra.mxu0 0
    %1697 = vmatprep.subr.bf16.mxu0 0
    %1698 = vmatpush1.bf16.msra.mxu0 0
    %1699 = vmatprep.subr.bf16.mxu0 0
    %1700 = vmatpush1.bf16.msra.mxu0 0
    %1701 = vmatprep.subr.bf16.mxu0 0
    %1702 = vmatpush1.bf16.msra.mxu0 0
    %1703 = vmatprep.subr.bf16.mxu0 0
    %1704 = vmatpush1.bf16.msra.mxu0 0
    %1705 = vmatprep.subr.bf16.mxu0 0
    %1706 = vmatpush1.bf16.msra.mxu0 0
    %1707 = vmatprep.mubr.bf16.mxu0 0
    %1708 = vmatmul.mubr.bf16.gmra.mrb[0].mxu0 %v1418
    %v1709 = vpop.f32.mrb[0].mxu0
    %v1710 = vadd.f32 0.0, %v1709
    %v1711 = vpop.f32.mrb[0].mxu0
    %v1712 = vadd.f32 0.0, %v1711
    %v1713 = vpop.f32.mrb[0].mxu0
    %v1714 = vpop.f32.mrb[0].mxu0
    %1715 = vdwg.mxu0
    %1716 = vmatprep.subr.bf16.mxu0 %v1598
    %1717 = vmatpush1.bf16.msra.mxu0 %v1597
    %1718 = vmatprep.subr.bf16.mxu0 %v1603
    %1719 = vmatpush1.bf16.msra.mxu0 %v1602
    %1720 = vmatprep.subr.bf16.mxu0 %v1608
    %1721 = vmatpush1.bf16.msra.mxu0 %v1607
    %1722 = vmatprep.subr.bf16.mxu0 %v1613
    %1723 = vmatpush1.bf16.msra.mxu0 %v1612
    %1724 = vmatprep.subr.bf16.mxu0 %v1618
    %1725 = vmatpush1.bf16.msra.mxu0 %v1617
    %1726 = vmatprep.subr.bf16.mxu0 %v1623
    %1727 = vmatpush1.bf16.msra.mxu0 %v1622
    %1728 = vmatprep.subr.bf16.mxu0 %v1628
    %1729 = vmatpush1.bf16.msra.mxu0 %v1627
    %1730 = vmatprep.subr.bf16.mxu0 %v1633
    %1731 = vmatpush1.bf16.msra.mxu0 %v1632
    %1732 = vmatprep.subr.bf16.mxu0 0
    %1733 = vmatpush1.bf16.msra.mxu0 0
    %1734 = vmatprep.subr.bf16.mxu0 0
    %1735 = vmatpush1.bf16.msra.mxu0 0
    %1736 = vmatprep.subr.bf16.mxu0 0
    %1737 = vmatpush1.bf16.msra.mxu0 0
    %1738 = vmatprep.subr.bf16.mxu0 0
    %1739 = vmatpush1.bf16.msra.mxu0 0
    %1740 = vmatprep.subr.bf16.mxu0 0
    %1741 = vmatpush1.bf16.msra.mxu0 0
    %1742 = vmatprep.subr.bf16.mxu0 0
    %1743 = vmatpush1.bf16.msra.mxu0 0
    %1744 = vmatprep.subr.bf16.mxu0 0
    %1745 = vmatpush1.bf16.msra.mxu0 0
    %1746 = vmatprep.subr.bf16.mxu0 0
    %1747 = vmatpush1.bf16.msra.mxu0 0
    %1748 = vmatprep.mubr.bf16.mxu0 0
    %1749 = vmatmul.mubr.bf16.gmra.mrb[0].mxu0 %v1418
    %v1750 = vpop.f32.mrb[0].mxu0
    %v1751 = vadd.f32 0.0, %v1750
    %v1752 = vpop.f32.mrb[0].mxu0
    %v1753 = vadd.f32 0.0, %v1752
    %v1754 = vpop.f32.mrb[0].mxu0
    %v1755 = vpop.f32.mrb[0].mxu0
    %1756 = vdwg.mxu0
    %1757 = vmatprep.subr.bf16.mxu0 0
    %1758 = vmatpush1.bf16.msra.mxu0 %v1599
    %1759 = vmatprep.subr.bf16.mxu0 0
    %1760 = vmatpush1.bf16.msra.mxu0 %v1604
    %1761 = vmatprep.subr.bf16.mxu0 0
    %1762 = vmatpush1.bf16.msra.mxu0 %v1609
    %1763 = vmatprep.subr.bf16.mxu0 0
    %1764 = vmatpush1.bf16.msra.mxu0 %v1614
    %1765 = vmatprep.subr.bf16.mxu0 0
    %1766 = vmatpush1.bf16.msra.mxu0 %v1619
    %1767 = vmatprep.subr.bf16.mxu0 0
    %1768 = vmatpush1.bf16.msra.mxu0 %v1624
    %1769 = vmatprep.subr.bf16.mxu0 0
    %1770 = vmatpush1.bf16.msra.mxu0 %v1629
    %1771 = vmatprep.subr.bf16.mxu0 0
    %1772 = vmatpush1.bf16.msra.mxu0 %v1634
    %1773 = vmatprep.subr.bf16.mxu0 0
    %1774 = vmatpush1.bf16.msra.mxu0 0
    %1775 = vmatprep.subr.bf16.mxu0 0
    %1776 = vmatpush1.bf16.msra.mxu0 0
    %1777 = vmatprep.subr.bf16.mxu0 0
    %1778 = vmatpush1.bf16.msra.mxu0 0
    %1779 = vmatprep.subr.bf16.mxu0 0
    %1780 = vmatpush1.bf16.msra.mxu0 0
    %1781 = vmatprep.subr.bf16.mxu0 0
    %1782 = vmatpush1.bf16.msra.mxu0 0
    %1783 = vmatprep.subr.bf16.mxu0 0
    %1784 = vmatpush1.bf16.msra.mxu0 0
    %1785 = vmatprep.subr.bf16.mxu0 0
    %1786 = vmatpush1.bf16.msra.mxu0 0
    %1787 = vmatprep.subr.bf16.mxu0 0
    %1788 = vmatpush1.bf16.msra.mxu0 0
    %1789 = vmatprep.mubr.bf16.mxu0 0
    %1790 = vmatmul.mubr.bf16.gmra.mrb[0].mxu0 %v1418
    %v1791 = vpop.f32.mrb[0].mxu0
    %v1792 = vadd.f32 0.0, %v1791
    %v1793 = vpop.f32.mrb[0].mxu0
    %v1794 = vpop.f32.mrb[0].mxu0
    %v1795 = vpop.f32.mrb[0].mxu0
    %1796 = vdwg.mxu0
    %vm1797 = vcmask 519168
    %1798 = vst.msk [vmem:[#allocation3] sm:$0xf] %vm1797, %v1710
    %1800 = vrot.lane.b32.xlu0 %v1710, 64
    %v1801 = vpop.permute.xlu0 %1800
    %1803 = vst.msk [vmem:[#allocation3 + $0x8] sm:$0xf] %vm1797, %v1801
    %1804 = vst.msk [vmem:[#allocation3 + $0x10] sm:$0xf] %vm1797, %v1712
    %1806 = vrot.lane.b32.xlu0 %v1712, 64
    %v1807 = vpop.permute.xlu0 %1806
    %1809 = vst.msk [vmem:[#allocation3 + $0x18] sm:$0xf] %vm1797, %v1807
    %1810 = vst.msk [vmem:[#allocation3 + $0x20] sm:$0xf] %vm1797, %v1751
    %1812 = vrot.lane.b32.xlu0 %v1751, 64
    %v1813 = vpop.permute.xlu0 %1812
    %1815 = vst.msk [vmem:[#allocation3 + $0x28] sm:$0xf] %vm1797, %v1813
    %1816 = vst.msk [vmem:[#allocation3 + $0x30] sm:$0xf] %vm1797, %v1753
    %1818 = vrot.lane.b32.xlu0 %v1753, 64
    %v1819 = vpop.permute.xlu0 %1818
    %1821 = vst.msk [vmem:[#allocation3 + $0x38] sm:$0xf] %vm1797, %v1819
    %1822 = vst.msk [vmem:[#allocation3 + $0x40] sm:$0xf] %vm1797, %v1792
    %v1823 = vpack.c.bf16 %v1411, %v1411
    %v1824 = vld [vmem:[%s3] sm:$0xff]
    %v1825 = vld [vmem:[%s3 + $0x8] sm:$0xff]
    %v1826 = vld [vmem:[%s3 + $0x10] sm:$0xf]
    %v1827 = vld [vmem:[%s3 + $0x14] sm:$0xff]
    %v1828 = vld [vmem:[%s3 + $0x1c] sm:$0xff]
    %v1829 = vld [vmem:[%s3 + $0x24] sm:$0xf]
    %v1830 = vld [vmem:[%s3 + $0x28] sm:$0xff]
    %v1831 = vld [vmem:[%s3 + $0x30] sm:$0xff]
    %v1832 = vld [vmem:[%s3 + $0x38] sm:$0xf]
    %v1833 = vld [vmem:[%s3 + $0x3c] sm:$0xff]
    %v1834 = vld [vmem:[%s3 + $0x44] sm:$0xff]
    %v1835 = vld [vmem:[%s3 + $0x4c] sm:$0xf]
    %v1836 = vld [vmem:[%s3 + $0x50] sm:$0xff]
    %v1837 = vld [vmem:[%s3 + $0x58] sm:$0xff]
    %v1838 = vld [vmem:[%s3 + $0x60] sm:$0xf]
    %v1839 = vld [vmem:[%s3 + $0x64] sm:$0xff]
    %v1840 = vld [vmem:[%s3 + $0x6c] sm:$0xff]
    %v1841 = vld [vmem:[%s3 + $0x74] sm:$0xf]
    %v1842 = vld [vmem:[%s3 + $0x78] sm:$0xff]
    %v1843 = vld [vmem:[%s3 + $0x80] sm:$0xff]
    %v1844 = vld [vmem:[%s3 + $0x88] sm:$0xf]
    %v1845 = vld [vmem:[%s3 + $0x8c] sm:$0xff]
    %v1846 = vld [vmem:[%s3 + $0x94] sm:$0xff]
    %v1847 = vld [vmem:[%s3 + $0x9c] sm:$0xf]
    %v1848 = vld [vmem:[%s3 + $0xa0] sm:$0xff]
    %v1849 = vld [vmem:[%s3 + $0xa8] sm:$0xff]
    %v1850 = vld [vmem:[%s3 + $0xb0] sm:$0xf]
    %v1851 = vld [vmem:[%s3 + $0xb4] sm:$0xff]
    %v1852 = vld [vmem:[%s3 + $0xbc] sm:$0xff]
    %v1853 = vld [vmem:[%s3 + $0xc4] sm:$0xf]
    %v1854 = vld [vmem:[%s3 + $0xc8] sm:$0xff]
    %v1855 = vld [vmem:[%s3 + $0xd0] sm:$0xff]
    %v1856 = vld [vmem:[%s3 + $0xd8] sm:$0xf]
    %v1857 = vld [vmem:[%s3 + $0xdc] sm:$0xff]
    %v1858 = vld [vmem:[%s3 + $0xe4] sm:$0xff]
    %v1859 = vld [vmem:[%s3 + $0xec] sm:$0xf]
    %v1860 = vld [vmem:[%s3 + $0xf0] sm:$0xff]
    %v1861 = vld [vmem:[%s3 + $0xf8] sm:$0xff]
    %v1862 = vld [vmem:[%s3 + $0x100] sm:$0xf]
    %v1863 = vld [vmem:[%s3 + $0x104] sm:$0xff]
    %v1864 = vld [vmem:[%s3 + $0x10c] sm:$0xff]
    %v1865 = vld [vmem:[%s3 + $0x114] sm:$0xf]
    %v1866 = vld [vmem:[%s3 + $0x118] sm:$0xff]
    %v1867 = vld [vmem:[%s3 + $0x120] sm:$0xff]
    %v1868 = vld [vmem:[%s3 + $0x128] sm:$0xf]
    %v1869 = vld [vmem:[%s3 + $0x12c] sm:$0xff]
    %v1870 = vld [vmem:[%s3 + $0x134] sm:$0xff]
    %v1871 = vld [vmem:[%s3 + $0x13c] sm:$0xf]
    %v1920 = vunpack.c.l.b16 %v1824
    %v1921 = vunpack.c.h.b16 %v1824
    %v1922 = vunpack.c.l.b16 %v1825
    %v1923 = vunpack.c.h.b16 %v1825
    %v1924 = vunpack.c.l.b16 %v1826
    %v1925 = vunpack.c.l.b16 %v1827
    %v1926 = vunpack.c.h.b16 %v1827
    %v1927 = vunpack.c.l.b16 %v1828
    %v1928 = vunpack.c.h.b16 %v1828
    %v1929 = vunpack.c.l.b16 %v1829
    %v1930 = vunpack.c.l.b16 %v1830
    %v1931 = vunpack.c.h.b16 %v1830
    %v1932 = vunpack.c.l.b16 %v1831
    %v1933 = vunpack.c.h.b16 %v1831
    %v1934 = vunpack.c.l.b16 %v1832
    %v1935 = vunpack.c.l.b16 %v1833
    %v1936 = vunpack.c.h.b16 %v1833
    %v1937 = vunpack.c.l.b16 %v1834
    %v1938 = vunpack.c.h.b16 %v1834
    %v1939 = vunpack.c.l.b16 %v1835
    %v1940 = vunpack.c.l.b16 %v1836
    %v1941 = vunpack.c.h.b16 %v1836
    %v1942 = vunpack.c.l.b16 %v1837
    %v1943 = vunpack.c.h.b16 %v1837
    %v1944 = vunpack.c.l.b16 %v1838
    %v1945 = vunpack.c.l.b16 %v1839
    %v1946 = vunpack.c.h.b16 %v1839
    %v1947 = vunpack.c.l.b16 %v1840
    %v1948 = vunpack.c.h.b16 %v1840
    %v1949 = vunpack.c.l.b16 %v1841
    %v1950 = vunpack.c.l.b16 %v1842
    %v1951 = vunpack.c.h.b16 %v1842
    %v1952 = vunpack.c.l.b16 %v1843
    %v1953 = vunpack.c.h.b16 %v1843
    %v1954 = vunpack.c.l.b16 %v1844
    %v1955 = vunpack.c.l.b16 %v1845
    %v1956 = vunpack.c.h.b16 %v1845
    %v1957 = vunpack.c.l.b16 %v1846
    %v1958 = vunpack.c.h.b16 %v1846
    %v1959 = vunpack.c.l.b16 %v1847
    %v1960 = vunpack.c.l.b16 %v1848
    %v1961 = vunpack.c.h.b16 %v1848
    %v1962 = vunpack.c.l.b16 %v1849
    %v1963 = vunpack.c.h.b16 %v1849
    %v1964 = vunpack.c.l.b16 %v1850
    %v1965 = vunpack.c.l.b16 %v1851
    %v1966 = vunpack.c.h.b16 %v1851
    %v1967 = vunpack.c.l.b16 %v1852
    %v1968 = vunpack.c.h.b16 %v1852
    %v1969 = vunpack.c.l.b16 %v1853
    %v1970 = vunpack.c.l.b16 %v1854
    %v1971 = vunpack.c.h.b16 %v1854
    %v1972 = vunpack.c.l.b16 %v1855
    %v1973 = vunpack.c.h.b16 %v1855
    %v1974 = vunpack.c.l.b16 %v1856
    %v1975 = vunpack.c.l.b16 %v1857
    %v1976 = vunpack.c.h.b16 %v1857
    %v1977 = vunpack.c.l.b16 %v1858
    %v1978 = vunpack.c.h.b16 %v1858
    %v1979 = vunpack.c.l.b16 %v1859
    %v1980 = vunpack.c.l.b16 %v1860
    %v1981 = vunpack.c.h.b16 %v1860
    %v1982 = vunpack.c.l.b16 %v1861
    %v1983 = vunpack.c.h.b16 %v1861
    %v1984 = vunpack.c.l.b16 %v1862
    %v1985 = vunpack.c.l.b16 %v1863
    %v1986 = vunpack.c.h.b16 %v1863
    %v1987 = vunpack.c.l.b16 %v1864
    %v1988 = vunpack.c.h.b16 %v1864
    %v1989 = vunpack.c.l.b16 %v1865
    %v1990 = vunpack.c.l.b16 %v1866
    %v1991 = vunpack.c.h.b16 %v1866
    %v1992 = vunpack.c.l.b16 %v1867
    %v1993 = vunpack.c.h.b16 %v1867
    %v1994 = vunpack.c.l.b16 %v1868
    %v1995 = vunpack.c.l.b16 %v1869
    %v1996 = vunpack.c.h.b16 %v1869
    %v1997 = vunpack.c.l.b16 %v1870
    %v1998 = vunpack.c.h.b16 %v1870
    %v1999 = vunpack.c.l.b16 %v1871
    %v2000 = vpack.c.b16 %v1925, %v1920
    %v2001 = vpack.c.b16 %v1926, %v1921
    %v2002 = vpack.c.b16 %v1927, %v1922
    %v2003 = vpack.c.b16 %v1928, %v1923
    %v2004 = vpack.c.b16 %v1929, %v1924
    %v2005 = vpack.c.b16 %v1935, %v1930
    %v2006 = vpack.c.b16 %v1936, %v1931
    %v2007 = vpack.c.b16 %v1937, %v1932
    %v2008 = vpack.c.b16 %v1938, %v1933
    %v2009 = vpack.c.b16 %v1939, %v1934
    %v2010 = vpack.c.b16 %v1945, %v1940
    %v2011 = vpack.c.b16 %v1946, %v1941
    %v2012 = vpack.c.b16 %v1947, %v1942
    %v2013 = vpack.c.b16 %v1948, %v1943
    %v2014 = vpack.c.b16 %v1949, %v1944
    %v2015 = vpack.c.b16 %v1955, %v1950
    %v2016 = vpack.c.b16 %v1956, %v1951
    %v2017 = vpack.c.b16 %v1957, %v1952
    %v2018 = vpack.c.b16 %v1958, %v1953
    %v2019 = vpack.c.b16 %v1959, %v1954
    %v2020 = vpack.c.b16 %v1965, %v1960
    %v2021 = vpack.c.b16 %v1966, %v1961
    %v2022 = vpack.c.b16 %v1967, %v1962
    %v2023 = vpack.c.b16 %v1968, %v1963
    %v2024 = vpack.c.b16 %v1969, %v1964
    %v2025 = vpack.c.b16 %v1975, %v1970
    %v2026 = vpack.c.b16 %v1976, %v1971
    %v2027 = vpack.c.b16 %v1977, %v1972
    %v2028 = vpack.c.b16 %v1978, %v1973
    %v2029 = vpack.c.b16 %v1979, %v1974
    %v2030 = vpack.c.b16 %v1985, %v1980
    %v2031 = vpack.c.b16 %v1986, %v1981
    %v2032 = vpack.c.b16 %v1987, %v1982
    %v2033 = vpack.c.b16 %v1988, %v1983
    %v2034 = vpack.c.b16 %v1989, %v1984
    %v2035 = vpack.c.b16 %v1995, %v1990
    %v2036 = vpack.c.b16 %v1996, %v1991
    %v2037 = vpack.c.b16 %v1997, %v1992
    %v2038 = vpack.c.b16 %v1998, %v1993
    %v2039 = vpack.c.b16 %v1999, %v1994
    %2080 = vmatprep.subr.bf16.mxu0 %v2001
    %2081 = vmatpush1.bf16.msra.mxu0 %v2000
    %2082 = vmatprep.subr.bf16.mxu0 %v2006
    %2083 = vmatpush1.bf16.msra.mxu0 %v2005
    %2084 = vmatprep.subr.bf16.mxu0 %v2011
    %2085 = vmatpush1.bf16.msra.mxu0 %v2010
    %2086 = vmatprep.subr.bf16.mxu0 %v2016
    %2087 = vmatpush1.bf16.msra.mxu0 %v2015
    %2088 = vmatprep.subr.bf16.mxu0 %v2021
    %2089 = vmatpush1.bf16.msra.mxu0 %v2020
    %2090 = vmatprep.subr.bf16.mxu0 %v2026
    %2091 = vmatpush1.bf16.msra.mxu0 %v2025
    %2092 = vmatprep.subr.bf16.mxu0 %v2031
    %2093 = vmatpush1.bf16.msra.mxu0 %v2030
    %2094 = vmatprep.subr.bf16.mxu0 %v2036
    %2095 = vmatpush1.bf16.msra.mxu0 %v2035
    %2096 = vmatprep.subr.bf16.mxu0 0
    %2097 = vmatpush1.bf16.msra.mxu0 0
    %2098 = vmatprep.subr.bf16.mxu0 0
    %2099 = vmatpush1.bf16.msra.mxu0 0
    %2100 = vmatprep.subr.bf16.mxu0 0
    %2101 = vmatpush1.bf16.msra.mxu0 0
    %2102 = vmatprep.subr.bf16.mxu0 0
    %2103 = vmatpush1.bf16.msra.mxu0 0
    %2104 = vmatprep.subr.bf16.mxu0 0
    %2105 = vmatpush1.bf16.msra.mxu0 0
    %2106 = vmatprep.subr.bf16.mxu0 0
    %2107 = vmatpush1.bf16.msra.mxu0 0
    %2108 = vmatprep.subr.bf16.mxu0 0
    %2109 = vmatpush1.bf16.msra.mxu0 0
    %2110 = vmatprep.subr.bf16.mxu0 0
    %2111 = vmatpush1.bf16.msra.mxu0 0
    %2112 = vmatprep.mubr.bf16.mxu0 0
    %2113 = vmatmul.mubr.bf16.gmra.mrb[0].mxu0 %v1823
    %v2114 = vpop.f32.mrb[0].mxu0
    %v2115 = vadd.f32 0.0, %v2114
    %v2116 = vpop.f32.mrb[0].mxu0
    %v2117 = vadd.f32 0.0, %v2116
    %v2118 = vpop.f32.mrb[0].mxu0
    %v2119 = vpop.f32.mrb[0].mxu0
    %2120 = vdwg.mxu0
    %2121 = vmatprep.subr.bf16.mxu0 %v2003
    %2122 = vmatpush1.bf16.msra.mxu0 %v2002
    %2123 = vmatprep.subr.bf16.mxu0 %v2008
    %2124 = vmatpush1.bf16.msra.mxu0 %v2007
    %2125 = vmatprep.subr.bf16.mxu0 %v2013
    %2126 = vmatpush1.bf16.msra.mxu0 %v2012
    %2127 = vmatprep.subr.bf16.mxu0 %v2018
    %2128 = vmatpush1.bf16.msra.mxu0 %v2017
    %2129 = vmatprep.subr.bf16.mxu0 %v2023
    %2130 = vmatpush1.bf16.msra.mxu0 %v2022
    %2131 = vmatprep.subr.bf16.mxu0 %v2028
    %2132 = vmatpush1.bf16.msra.mxu0 %v2027
    %2133 = vmatprep.subr.bf16.mxu0 %v2033
    %2134 = vmatpush1.bf16.msra.mxu0 %v2032
    %2135 = vmatprep.subr.bf16.mxu0 %v2038
    %2136 = vmatpush1.bf16.msra.mxu0 %v2037
    %2137 = vmatprep.subr.bf16.mxu0 0
    %2138 = vmatpush1.bf16.msra.mxu0 0
    %2139 = vmatprep.subr.bf16.mxu0 0
    %2140 = vmatpush1.bf16.msra.mxu0 0
    %2141 = vmatprep.subr.bf16.mxu0 0
    %2142 = vmatpush1.bf16.msra.mxu0 0
    %2143 = vmatprep.subr.bf16.mxu0 0
    %2144 = vmatpush1.bf16.msra.mxu0 0
    %2145 = vmatprep.subr.bf16.mxu0 0
    %2146 = vmatpush1.bf16.msra.mxu0 0
    %2147 = vmatprep.subr.bf16.mxu0 0
    %2148 = vmatpush1.bf16.msra.mxu0 0
    %2149 = vmatprep.subr.bf16.mxu0 0
    %2150 = vmatpush1.bf16.msra.mxu0 0
    %2151 = vmatprep.subr.bf16.mxu0 0
    %2152 = vmatpush1.bf16.msra.mxu0 0
    %2153 = vmatprep.mubr.bf16.mxu0 0
    %2154 = vmatmul.mubr.bf16.gmra.mrb[0].mxu0 %v1823
    %v2155 = vpop.f32.mrb[0].mxu0
    %v2156 = vadd.f32 0.0, %v2155
    %v2157 = vpop.f32.mrb[0].mxu0
    %v2158 = vadd.f32 0.0, %v2157
    %v2159 = vpop.f32.mrb[0].mxu0
    %v2160 = vpop.f32.mrb[0].mxu0
    %2161 = vdwg.mxu0
    %2162 = vmatprep.subr.bf16.mxu0 0
    %2163 = vmatpush1.bf16.msra.mxu0 %v2004
    %2164 = vmatprep.subr.bf16.mxu0 0
    %2165 = vmatpush1.bf16.msra.mxu0 %v2009
    %2166 = vmatprep.subr.bf16.mxu0 0
    %2167 = vmatpush1.bf16.msra.mxu0 %v2014
    %2168 = vmatprep.subr.bf16.mxu0 0
    %2169 = vmatpush1.bf16.msra.mxu0 %v2019
    %2170 = vmatprep.subr.bf16.mxu0 0
    %2171 = vmatpush1.bf16.msra.mxu0 %v2024
    %2172 = vmatprep.subr.bf16.mxu0 0
    %2173 = vmatpush1.bf16.msra.mxu0 %v2029
    %2174 = vmatprep.subr.bf16.mxu0 0
    %2175 = vmatpush1.bf16.msra.mxu0 %v2034
    %2176 = vmatprep.subr.bf16.mxu0 0
    %2177 = vmatpush1.bf16.msra.mxu0 %v2039
    %2178 = vmatprep.subr.bf16.mxu0 0
    %2179 = vmatpush1.bf16.msra.mxu0 0
    %2180 = vmatprep.subr.bf16.mxu0 0
    %2181 = vmatpush1.bf16.msra.mxu0 0
    %2182 = vmatprep.subr.bf16.mxu0 0
    %2183 = vmatpush1.bf16.msra.mxu0 0
    %2184 = vmatprep.subr.bf16.mxu0 0
    %2185 = vmatpush1.bf16.msra.mxu0 0
    %2186 = vmatprep.subr.bf16.mxu0 0
    %2187 = vmatpush1.bf16.msra.mxu0 0
    %2188 = vmatprep.subr.bf16.mxu0 0
    %2189 = vmatpush1.bf16.msra.mxu0 0
    %2190 = vmatprep.subr.bf16.mxu0 0
    %2191 = vmatpush1.bf16.msra.mxu0 0
    %2192 = vmatprep.subr.bf16.mxu0 0
    %2193 = vmatpush1.bf16.msra.mxu0 0
    %2194 = vmatprep.mubr.bf16.mxu0 0
    %2195 = vmatmul.mubr.bf16.gmra.mrb[0].mxu0 %v1823
    %v2196 = vpop.f32.mrb[0].mxu0
    %v2197 = vadd.f32 0.0, %v2196
    %v2198 = vpop.f32.mrb[0].mxu0
    %v2199 = vpop.f32.mrb[0].mxu0
    %v2200 = vpop.f32.mrb[0].mxu0
    %2201 = vdwg.mxu0
    %2203 = vrot.lane.b32.xlu0 %v2115, 64
    %v2204 = vpop.permute.xlu0 %2203
    %vm2206 = vcmask 1043968
    %2207 = vst.msk [vmem:[#allocation3] sm:$0xf] %vm2206, %v2204
    %2208 = vst.msk [vmem:[#allocation3 + $0x8] sm:$0xf] %vm2206, %v2115
    %2210 = vrot.lane.b32.xlu0 %v2117, 64
    %v2211 = vpop.permute.xlu0 %2210
    %2213 = vst.msk [vmem:[#allocation3 + $0x10] sm:$0xf] %vm2206, %v2211
    %2214 = vst.msk [vmem:[#allocation3 + $0x18] sm:$0xf] %vm2206, %v2117
    %2216 = vrot.lane.b32.xlu0 %v2156, 64
    %v2217 = vpop.permute.xlu0 %2216
    %2219 = vst.msk [vmem:[#allocation3 + $0x20] sm:$0xf] %vm2206, %v2217
    %2220 = vst.msk [vmem:[#allocation3 + $0x28] sm:$0xf] %vm2206, %v2156
    %2222 = vrot.lane.b32.xlu0 %v2158, 64
    %v2223 = vpop.permute.xlu0 %2222
    %2225 = vst.msk [vmem:[#allocation3 + $0x30] sm:$0xf] %vm2206, %v2223
    %2226 = vst.msk [vmem:[#allocation3 + $0x38] sm:$0xf] %vm2206, %v2158
    %2228 = vrot.lane.b32.xlu0 %v2197, 64
    %v2229 = vpop.permute.xlu0 %2228
    %2231 = vst.msk [vmem:[#allocation3 + $0x40] sm:$0xf] %vm2206, %v2229
    %v2232 = vld [vmem:[#allocation3] sm:$0xff]
    %v2233 = vld [vmem:[#allocation3 + $0x8] sm:$0xff]
    %v2234 = vld [vmem:[#allocation3 + $0x10] sm:$0xff]
    %v2235 = vld [vmem:[#allocation3 + $0x18] sm:$0xff]
    %v2236 = vld [vmem:[#allocation3 + $0x20] sm:$0xff]
    %v2237 = vld [vmem:[#allocation3 + $0x28] sm:$0xff]
    %v2238 = vld [vmem:[#allocation3 + $0x30] sm:$0xff]
    %v2239 = vld [vmem:[#allocation3 + $0x38] sm:$0xff]
    %v2240 = vld [vmem:[#allocation3 + $0x40] sm:$0xff]
    %vm2241 = vcmask 588800
    %v2243 = vsel %vm2241, %v1416, 0
    %v2246 = vsel %vm2241, %v1417, 0
    %2248 = vmatprep.subr.mxu0 0.0
    %2249 = vmatpush1.msra.mxu0 %v2232
    %2250 = vmatprep.subr.mxu0 0.0
    %2251 = vmatpush1.msra.mxu0 %v2233
    %2252 = vmatprep.subr.mxu0 0.0
    %2253 = vmatpush1.msra.mxu0 %v2234
    %2254 = vmatprep.subr.mxu0 0.0
    %2255 = vmatpush1.msra.mxu0 %v2235
    %2256 = vmatprep.subr.mxu0 0.0
    %2257 = vmatpush1.msra.mxu0 %v2236
    %2258 = vmatprep.subr.mxu0 0.0
    %2259 = vmatpush1.msra.mxu0 %v2237
    %2260 = vmatprep.subr.mxu0 0.0
    %2261 = vmatpush1.msra.mxu0 %v2238
    %2262 = vmatprep.subr.mxu0 0.0
    %2263 = vmatpush1.msra.mxu0 %v2239
    %2264 = vmatprep.subr.mxu0 0.0
    %2265 = vmatpush1.msra.mxu0 %v2240
    %2266 = vmatprep.subr.mxu0 0.0
    %2267 = vmatpush1.msra.mxu0 0.0
    %2268 = vmatprep.subr.mxu0 0.0
    %2269 = vmatpush1.msra.mxu0 0.0
    %2270 = vmatprep.subr.mxu0 0.0
    %2271 = vmatpush1.msra.mxu0 0.0
    %2272 = vmatprep.subr.mxu0 0.0
    %2273 = vmatpush1.msra.mxu0 0.0
    %2274 = vmatprep.subr.mxu0 0.0
    %2275 = vmatpush1.msra.mxu0 0.0
    %2276 = vmatprep.subr.mxu0 0.0
    %2277 = vmatpush1.msra.mxu0 0.0
    %2278 = vmatprep.subr.mxu0 0.0
    %2279 = vmatpush1.msra.mxu0 0.0
    %2280 = vmatprep.subr.mxu0 0.0
    %2281 = vmatpush1.msra.mxu0 0.0
    %2282 = vmatprep.subr.mxu0 0.0
    %2283 = vmatpush1.msra.mxu0 0.0
    %2284 = vmatprep.subr.mxu0 0.0
    %2285 = vmatpush1.msra.mxu0 0.0
    %2286 = vmatprep.subr.mxu0 0.0
    %2287 = vmatpush1.msra.mxu0 0.0
    %2288 = vmatprep.subr.mxu0 0.0
    %2289 = vmatpush1.msra.mxu0 0.0
    %2290 = vmatprep.subr.mxu0 0.0
    %2291 = vmatpush1.msra.mxu0 0.0
    %2292 = vmatprep.subr.mxu0 0.0
    %2293 = vmatpush1.msra.mxu0 0.0
    %2294 = vmatprep.subr.mxu0 0.0
    %2295 = vmatpush1.msra.mxu0 0.0
    %2296 = vmatprep.subr.mxu0 0.0
    %2297 = vmatpush1.msra.mxu0 0.0
    %2298 = vmatprep.subr.mxu0 0.0
    %2299 = vmatpush1.msra.mxu0 0.0
    %2300 = vmatprep.subr.mxu0 0.0
    %2301 = vmatpush1.msra.mxu0 0.0
    %2302 = vmatprep.subr.mxu0 0.0
    %2303 = vmatpush1.msra.mxu0 0.0
    %2304 = vmatprep.subr.mxu0 0.0
    %2305 = vmatpush1.msra.mxu0 0.0
    %2306 = vmatprep.subr.mxu0 0.0
    %2307 = vmatpush1.msra.mxu0 0.0
    %2308 = vmatprep.subr.mxu0 0.0
    %2309 = vmatpush1.msra.mxu0 0.0
    %2310 = vmatprep.subr.mxu0 0.0
    %2311 = vmatpush1.msra.mxu0 0.0
    %2312 = vmatprep.mubr.f32.mxu0 0.0
    %2313 = vmatmul.mubr.f32.gmra.mrb[0].mxu0 %v2243
    %v2314 = vpop.f32.mrb[0].mxu0
    %v2315 = vadd.f32 0.0, %v2314
    %v2316 = vpop.f32.mrb[0].mxu0
    %2317 = vmatprep.mubr.f32.mxu0 0.0
    %2318 = vmatmul.mubr.f32.gmra.mrb[0].mxu0 %v2246
    %v2319 = vpop.f32.mrb[0].mxu0
    %v2320 = vadd.f32 0.0, %v2319
    %v2321 = vpop.f32.mrb[0].mxu0
    %2322 = vdwg.mxu0
    %v2323 = vld [vmem:[#allocation10 + $0x1] ss:$0 sm:$0xff]
    %v2324 = vadd.f32 %v2315, %v2323
    %v2325 = vadd.f32 %v2320, %v2323
    %2327 = vrot.lane.b32.xlu0 %v2323, 64
    %v2328 = vpop.permute.xlu0 %2327
    %v2330 = vadd.f32 %v2315, %v2328
    %v2331 = vadd.f32 %v2320, %v2328
    %vm2332 = vcmask 523264
    %v2333 = vsel %vm2332, %v2324, 0.0
    %vm2334 = vcmask 516096
    %v2335 = vsel %vm2334, %v2325, 0.0
    %v2336 = vadd.f32 %v2333, %v2335
    %v2337 = vrot.slane %v2336, 4
    %v2338 = vadd.f32 %v2336, %v2337
    %v2339 = vrot.slane %v2338, 2
    %v2340 = vadd.f32 %v2338, %v2339
    %v2341 = vrot.slane %v2340, 1
    %v2342 = vadd.f32 %v2340, %v2341
    %vm2343 = vcmask 1048064
    %v2344 = vsel %vm2343, %v2330, 0.0
    %vm2345 = vcmask 1040896
    %v2346 = vsel %vm2345, %v2331, 0.0
    %v2347 = vadd.f32 %v2344, %v2346
    %v2348 = vrot.slane %v2347, 4
    %v2349 = vadd.f32 %v2347, %v2348
    %v2350 = vrot.slane %v2349, 2
    %v2351 = vadd.f32 %v2349, %v2350
    %v2352 = vrot.slane %v2351, 1
    %v2353 = vadd.f32 %v2351, %v2352
    %2355 = vrot.lane.b32.xlu0 %v2353, 64
    %v2356 = vpop.permute.xlu0 %2355
    %v2358 = vadd.f32 %v2342, %v2356
    %v2359 = vmul.f32 %v2358, 0.055555556
    %v2360 = vlaneseq
    %v2361 = vshrl.u32 %v2360, 7
    %v2362 = vsub.s32 0, %v2361
    %v2363 = vrot.slane %v2359, %v2362
    %v2364 = vsub.f32 %v2324, %v2363
    %v2365 = vsub.f32 %v2325, %v2363
    %2367 = vrot.lane.b32.xlu0 %v2363, 64
    %v2368 = vpop.permute.xlu0 %2367
    %v2370 = vsub.f32 %v2330, %v2368
    %v2371 = vsub.f32 %v2331, %v2368
    %v2372 = vmul.f32 %v2364, %v2364
    %v2373 = vmul.f32 %v2365, %v2365
    %v2374 = vsel %vm2332, %v2372, 0.0
    %v2375 = vsel %vm2334, %v2373, 0.0
    %v2376 = vadd.f32 %v2374, %v2375
    %v2377 = vrot.slane %v2376, 4
    %v2378 = vadd.f32 %v2376, %v2377
    %v2379 = vrot.slane %v2378, 2
    %v2380 = vadd.f32 %v2378, %v2379
    %v2381 = vrot.slane %v2380, 1
    %v2382 = vadd.f32 %v2380, %v2381
    %v2383 = vmul.f32 %v2370, %v2370
    %v2384 = vmul.f32 %v2371, %v2371
    %v2385 = vsel %vm2343, %v2383, 0.0
    %v2386 = vsel %vm2345, %v2384, 0.0
    %v2387 = vadd.f32 %v2385, %v2386
    %v2388 = vrot.slane %v2387, 4
    %v2389 = vadd.f32 %v2387, %v2388
    %v2390 = vrot.slane %v2389, 2
    %v2391 = vadd.f32 %v2389, %v2390
    %v2392 = vrot.slane %v2391, 1
    %v2393 = vadd.f32 %v2391, %v2392
    %2395 = vrot.lane.b32.xlu0 %v2393, 64
    %v2396 = vpop.permute.xlu0 %2395
    %v2398 = vadd.f32 %v2382, %v2396
    %v2399 = vmul.f32 %v2398, 0.055555556
    %v2400 = vld [vmem:[#allocation10 + $0x2] ss:$0 sm:$0xff]
    %v2401 = vadd.f32 %v2399, 1e-05
    %v2402 = vrsqrt.pop %v2401
    %v2403 = vmul.f32 %v2400, %v2402
    %v2404 = vld [vmem:[#allocation10 + $0x3] ss:$0 sm:$0xff]
    %v2405 = vlaneseq
    %v2406 = vshrl.u32 %v2405, 7
    %v2407 = vsub.s32 0, %v2406
    %v2408 = vrot.slane %v2403, %v2407
    %v2409 = vmul.f32 %v2364, %v2408
    %v2410 = vmul.f32 %v2365, %v2408
    %v2411 = vadd.f32 %v2409, %v2404
    %v2412 = vadd.f32 %v2410, %v2404
    %v2413 = vmax.f32 %v2411, 0.0
    %v2414 = vmax.f32 %v2412, 0.0
    %2416 = vrot.lane.b32.xlu0 %v2408, 64
    %v2417 = vpop.permute.xlu0 %2416
    %v2419 = vmul.f32 %v2370, %v2417
    %v2420 = vmul.f32 %v2371, %v2417
    %2422 = vrot.lane.b32.xlu0 %v2404, 64
    %v2423 = vpop.permute.xlu0 %2422
    %v2425 = vadd.f32 %v2419, %v2423
    %v2426 = vadd.f32 %v2420, %v2423
    %v2427 = vmax.f32 %v2425, 0.0
    %v2428 = vmax.f32 %v2426, 0.0
    %v2429 = vld [vmem:[#allocation13] sm:$0xf]
    %v2430 = vld [vmem:[#allocation13 + $0x4] sm:$0xf]
    %v2431 = vld [vmem:[#allocation13 + $0x8] sm:$0xf]
    %v2432 = vld [vmem:[#allocation13 + $0xc] sm:$0x5]
    %v2433 = vunpack.c.0.s8 %v2429
    %v2434 = vunpack.c.1.s8 %v2429
    %v2435 = vunpack.c.0.s8 %v2430
    %v2436 = vunpack.c.1.s8 %v2430
    %v2437 = vunpack.c.0.s8 %v2431
    %v2438 = vunpack.c.1.s8 %v2431
    %v2439 = vunpack.c.0.s8 %v2432
    %v2440 = vunpack.c.1.s8 %v2432
    %v2441 = vcvt.s32.f32 %v2433
    %v2442 = vcvt.s32.f32 %v2434
    %v2443 = vcvt.s32.f32 %v2435
    %v2444 = vcvt.s32.f32 %v2436
    %v2445 = vcvt.s32.f32 %v2437
    %v2446 = vcvt.s32.f32 %v2438
    %v2447 = vcvt.s32.f32 %v2439
    %v2448 = vcvt.s32.f32 %v2440
    %v2449 = vpack.c.bf16 %v2414, %v2413
    %v2450 = vld [vmem:[%s5] sm:$0xff]
    %v2451 = vld [vmem:[%s5 + $0x8] sm:$0xf]
    %v2452 = vld [vmem:[%s5 + $0xc] sm:$0xff]
    %v2453 = vld [vmem:[%s5 + $0x14] sm:$0xf]
    %v2454 = vld [vmem:[%s5 + $0x18] sm:$0xff]
    %v2455 = vld [vmem:[%s5 + $0x20] sm:$0xf]
    %v2456 = vld [vmem:[%s5 + $0x24] sm:$0xff]
    %v2457 = vld [vmem:[%s5 + $0x2c] sm:$0xf]
    %v2458 = vld [vmem:[%s5 + $0x30] sm:$0xff]
    %v2459 = vld [vmem:[%s5 + $0x38] sm:$0xf]
    %v2460 = vld [vmem:[%s5 + $0x3c] sm:$0xff]
    %v2461 = vld [vmem:[%s5 + $0x44] sm:$0xf]
    %v2462 = vld [vmem:[%s5 + $0x48] sm:$0xff]
    %v2463 = vld [vmem:[%s5 + $0x50] sm:$0xf]
    %v2464 = vld [vmem:[%s5 + $0x54] sm:$0xff]
    %v2465 = vld [vmem:[%s5 + $0x5c] sm:$0xf]
    %v2482 = vunpack.c.l.b16 %v2450
    %v2483 = vunpack.c.h.b16 %v2450
    %v2484 = vunpack.c.l.b16 %v2451
    %v2485 = vunpack.c.l.b16 %v2452
    %v2486 = vunpack.c.h.b16 %v2452
    %v2487 = vunpack.c.l.b16 %v2453
    %v2488 = vunpack.c.l.b16 %v2454
    %v2489 = vunpack.c.h.b16 %v2454
    %v2490 = vunpack.c.l.b16 %v2455
    %v2491 = vunpack.c.l.b16 %v2456
    %v2492 = vunpack.c.h.b16 %v2456
    %v2493 = vunpack.c.l.b16 %v2457
    %v2494 = vunpack.c.l.b16 %v2458
    %v2495 = vunpack.c.h.b16 %v2458
    %v2496 = vunpack.c.l.b16 %v2459
    %v2497 = vunpack.c.l.b16 %v2460
    %v2498 = vunpack.c.h.b16 %v2460
    %v2499 = vunpack.c.l.b16 %v2461
    %v2500 = vunpack.c.l.b16 %v2462
    %v2501 = vunpack.c.h.b16 %v2462
    %v2502 = vunpack.c.l.b16 %v2463
    %v2503 = vunpack.c.l.b16 %v2464
    %v2504 = vunpack.c.h.b16 %v2464
    %v2505 = vunpack.c.l.b16 %v2465
    %v2506 = vpack.c.b16 %v2485, %v2482
    %v2507 = vpack.c.b16 %v2486, %v2483
    %v2508 = vpack.c.b16 %v2487, %v2484
    %v2509 = vpack.c.b16 %v2491, %v2488
    %v2510 = vpack.c.b16 %v2492, %v2489
    %v2511 = vpack.c.b16 %v2493, %v2490
    %v2512 = vpack.c.b16 %v2497, %v2494
    %v2513 = vpack.c.b16 %v2498, %v2495
    %v2514 = vpack.c.b16 %v2499, %v2496
    %v2515 = vpack.c.b16 %v2503, %v2500
    %v2516 = vpack.c.b16 %v2504, %v2501
    %v2517 = vpack.c.b16 %v2505, %v2502
    %v2531 = vsel %vm2332, %v2449, 0
    %2533 = vmatprep.subr.bf16.mxu0 %v2507
    %2534 = vmatpush1.bf16.msra.mxu0 %v2506
    %2535 = vmatprep.subr.bf16.mxu0 %v2510
    %2536 = vmatpush1.bf16.msra.mxu0 %v2509
    %2537 = vmatprep.subr.bf16.mxu0 %v2513
    %2538 = vmatpush1.bf16.msra.mxu0 %v2512
    %2539 = vmatprep.subr.bf16.mxu0 %v2516
    %2540 = vmatpush1.bf16.msra.mxu0 %v2515
    %2541 = vmatprep.subr.bf16.mxu0 0
    %2542 = vmatpush1.bf16.msra.mxu0 0
    %2543 = vmatprep.subr.bf16.mxu0 0
    %2544 = vmatpush1.bf16.msra.mxu0 0
    %2545 = vmatprep.subr.bf16.mxu0 0
    %2546 = vmatpush1.bf16.msra.mxu0 0
    %2547 = vmatprep.subr.bf16.mxu0 0
    %2548 = vmatpush1.bf16.msra.mxu0 0
    %2549 = vmatprep.subr.bf16.mxu0 0
    %2550 = vmatpush1.bf16.msra.mxu0 0
    %2551 = vmatprep.subr.bf16.mxu0 0
    %2552 = vmatpush1.bf16.msra.mxu0 0
    %2553 = vmatprep.subr.bf16.mxu0 0
    %2554 = vmatpush1.bf16.msra.mxu0 0
    %2555 = vmatprep.subr.bf16.mxu0 0
    %2556 = vmatpush1.bf16.msra.mxu0 0
    %2557 = vmatprep.subr.bf16.mxu0 0
    %2558 = vmatpush1.bf16.msra.mxu0 0
    %2559 = vmatprep.subr.bf16.mxu0 0
    %2560 = vmatpush1.bf16.msra.mxu0 0
    %2561 = vmatprep.subr.bf16.mxu0 0
    %2562 = vmatpush1.bf16.msra.mxu0 0
    %2563 = vmatprep.subr.bf16.mxu0 0
    %2564 = vmatpush1.bf16.msra.mxu0 0
    %2565 = vmatprep.mubr.bf16.mxu0 0
    %2566 = vmatmul.mubr.bf16.gmra.mrb[0].mxu0 %v2531
    %v2567 = vpop.f32.mrb[0].mxu0
    %v2568 = vadd.f32 0.0, %v2567
    %v2569 = vpop.f32.mrb[0].mxu0
    %v2570 = vadd.f32 0.0, %v2569
    %v2571 = vpop.f32.mrb[0].mxu0
    %v2572 = vadd.f32 0.0, %v2571
    %v2573 = vpop.f32.mrb[0].mxu0
    %v2574 = vadd.f32 0.0, %v2573
    %2575 = vdwg.mxu0
    %2576 = vmatprep.subr.bf16.mxu0 0
    %2577 = vmatpush1.bf16.msra.mxu0 %v2508
    %2578 = vmatprep.subr.bf16.mxu0 0
    %2579 = vmatpush1.bf16.msra.mxu0 %v2511
    %2580 = vmatprep.subr.bf16.mxu0 0
    %2581 = vmatpush1.bf16.msra.mxu0 %v2514
    %2582 = vmatprep.subr.bf16.mxu0 0
    %2583 = vmatpush1.bf16.msra.mxu0 %v2517
    %2584 = vmatprep.subr.bf16.mxu0 0
    %2585 = vmatpush1.bf16.msra.mxu0 0
    %2586 = vmatprep.subr.bf16.mxu0 0
    %2587 = vmatpush1.bf16.msra.mxu0 0
    %2588 = vmatprep.subr.bf16.mxu0 0
    %2589 = vmatpush1.bf16.msra.mxu0 0
    %2590 = vmatprep.subr.bf16.mxu0 0
    %2591 = vmatpush1.bf16.msra.mxu0 0
    %2592 = vmatprep.subr.bf16.mxu0 0
    %2593 = vmatpush1.bf16.msra.mxu0 0
    %2594 = vmatprep.subr.bf16.mxu0 0
    %2595 = vmatpush1.bf16.msra.mxu0 0
    %2596 = vmatprep.subr.bf16.mxu0 0
    %2597 = vmatpush1.bf16.msra.mxu0 0
    %2598 = vmatprep.subr.bf16.mxu0 0
    %2599 = vmatpush1.bf16.msra.mxu0 0
    %2600 = vmatprep.subr.bf16.mxu0 0
    %2601 = vmatpush1.bf16.msra.mxu0 0
    %2602 = vmatprep.subr.bf16.mxu0 0
    %2603 = vmatpush1.bf16.msra.mxu0 0
    %2604 = vmatprep.subr.bf16.mxu0 0
    %2605 = vmatpush1.bf16.msra.mxu0 0
    %2606 = vmatprep.subr.bf16.mxu0 0
    %2607 = vmatpush1.bf16.msra.mxu0 0
    %2608 = vmatprep.mubr.bf16.mxu0 0
    %2609 = vmatmul.mubr.bf16.gmra.mrb[0].mxu0 %v2531
    %v2610 = vpop.f32.mrb[0].mxu0
    %v2611 = vadd.f32 0.0, %v2610
    %v2612 = vpop.f32.mrb[0].mxu0
    %v2613 = vpop.f32.mrb[0].mxu0
    %v2614 = vadd.f32 0.0, %v2613
    %v2615 = vpop.f32.mrb[0].mxu0
    %2616 = vdwg.mxu0
    %vm2617 = vcmask 261120
    %2618 = vst.msk [vmem:[#allocation3] sm:$0xff] %vm2617, %v2568
    %vm2619 = vcmask 253952
    %2620 = vst.msk [vmem:[#allocation3 + $0x8] sm:$0x1] %vm2619, %v2572
    %2623 = vrot.lane.b32.xlu0 %v2568, 96
    %v2624 = vpop.permute.xlu0 %2623
    %2625 = vrot.lane.b32.xlu0 %v2572, 96
    %v2626 = vpop.permute.xlu0 %2625
    %2629 = vst.msk [vmem:[#allocation3 + $0x10] sm:$0xff] %vm2617, %v2624
    %2630 = vst.msk [vmem:[#allocation3 + $0x18] sm:$0x1] %vm2619, %v2626
    %2631 = vrot.lane.b32.xlu0 %v2568, 64
    %v2632 = vpop.permute.xlu0 %2631
    %2633 = vrot.lane.b32.xlu0 %v2572, 64
    %v2634 = vpop.permute.xlu0 %2633
    %2637 = vst.msk [vmem:[#allocation3 + $0x20] sm:$0xff] %vm2617, %v2632
    %2638 = vst.msk [vmem:[#allocation3 + $0x28] sm:$0x1] %vm2619, %v2634
    %2639 = vrot.lane.b32.xlu0 %v2568, 32
    %v2640 = vpop.permute.xlu0 %2639
    %2641 = vrot.lane.b32.xlu0 %v2572, 32
    %v2642 = vpop.permute.xlu0 %2641
    %2645 = vst.msk [vmem:[#allocation3 + $0x30] sm:$0xff] %vm2617, %v2640
    %2646 = vst.msk [vmem:[#allocation3 + $0x38] sm:$0x1] %vm2619, %v2642
    %2647 = vst.msk [vmem:[#allocation3 + $0x40] sm:$0xff] %vm2617, %v2570
    %2648 = vst.msk [vmem:[#allocation3 + $0x48] sm:$0x1] %vm2619, %v2574
    %2651 = vrot.lane.b32.xlu0 %v2570, 96
    %v2652 = vpop.permute.xlu0 %2651
    %2653 = vrot.lane.b32.xlu0 %v2574, 96
    %v2654 = vpop.permute.xlu0 %2653
    %2657 = vst.msk [vmem:[#allocation3 + $0x50] sm:$0xff] %vm2617, %v2652
    %2658 = vst.msk [vmem:[#allocation3 + $0x58] sm:$0x1] %vm2619, %v2654
    %2659 = vrot.lane.b32.xlu0 %v2570, 64
    %v2660 = vpop.permute.xlu0 %2659
    %2661 = vrot.lane.b32.xlu0 %v2574, 64
    %v2662 = vpop.permute.xlu0 %2661
    %2665 = vst.msk [vmem:[#allocation3 + $0x60] sm:$0xff] %vm2617, %v2660
    %2666 = vst.msk [vmem:[#allocation3 + $0x68] sm:$0x1] %vm2619, %v2662
    %2667 = vrot.lane.b32.xlu0 %v2570, 32
    %v2668 = vpop.permute.xlu0 %2667
    %2669 = vrot.lane.b32.xlu0 %v2574, 32
    %v2670 = vpop.permute.xlu0 %2669
    %2673 = vst.msk [vmem:[#allocation3 + $0x70] sm:$0xff] %vm2617, %v2668
    %2674 = vst.msk [vmem:[#allocation3 + $0x78] sm:$0x1] %vm2619, %v2670
    %2675 = vst.msk [vmem:[#allocation3 + $0x80] sm:$0xff] %vm2617, %v2611
    %2676 = vst.msk [vmem:[#allocation3 + $0x88] sm:$0x1] %vm2619, %v2614
    %v2677 = vpack.c.bf16 %v2428, %v2427
    %v2678 = vld [vmem:[%s5] sm:$0xff]
    %v2679 = vld [vmem:[%s5 + $0x8] sm:$0xf]
    %v2680 = vld [vmem:[%s5 + $0xc] sm:$0xff]
    %v2681 = vld [vmem:[%s5 + $0x14] sm:$0xf]
    %v2682 = vld [vmem:[%s5 + $0x18] sm:$0xff]
    %v2683 = vld [vmem:[%s5 + $0x20] sm:$0xf]
    %v2684 = vld [vmem:[%s5 + $0x24] sm:$0xff]
    %v2685 = vld [vmem:[%s5 + $0x2c] sm:$0xf]
    %v2686 = vld [vmem:[%s5 + $0x30] sm:$0xff]
    %v2687 = vld [vmem:[%s5 + $0x38] sm:$0xf]
    %v2688 = vld [vmem:[%s5 + $0x3c] sm:$0xff]
    %v2689 = vld [vmem:[%s5 + $0x44] sm:$0xf]
    %v2690 = vld [vmem:[%s5 + $0x48] sm:$0xff]
    %v2691 = vld [vmem:[%s5 + $0x50] sm:$0xf]
    %v2692 = vld [vmem:[%s5 + $0x54] sm:$0xff]
    %v2693 = vld [vmem:[%s5 + $0x5c] sm:$0xf]
    %2695 = vrot.lane.b32.xlu0 %v2677, 64
    %v2696 = vpop.permute.xlu0 %2695
    %v2713 = vunpack.c.l.b16 %v2678
    %v2714 = vunpack.c.h.b16 %v2678
    %v2715 = vunpack.c.l.b16 %v2679
    %v2716 = vunpack.c.l.b16 %v2680
    %v2717 = vunpack.c.h.b16 %v2680
    %v2718 = vunpack.c.l.b16 %v2681
    %v2719 = vunpack.c.l.b16 %v2682
    %v2720 = vunpack.c.h.b16 %v2682
    %v2721 = vunpack.c.l.b16 %v2683
    %v2722 = vunpack.c.l.b16 %v2684
    %v2723 = vunpack.c.h.b16 %v2684
    %v2724 = vunpack.c.l.b16 %v2685
    %v2725 = vunpack.c.l.b16 %v2686
    %v2726 = vunpack.c.h.b16 %v2686
    %v2727 = vunpack.c.l.b16 %v2687
    %v2728 = vunpack.c.l.b16 %v2688
    %v2729 = vunpack.c.h.b16 %v2688
    %v2730 = vunpack.c.l.b16 %v2689
    %v2731 = vunpack.c.l.b16 %v2690
    %v2732 = vunpack.c.h.b16 %v2690
    %v2733 = vunpack.c.l.b16 %v2691
    %v2734 = vunpack.c.l.b16 %v2692
    %v2735 = vunpack.c.h.b16 %v2692
    %v2736 = vunpack.c.l.b16 %v2693
    %v2737 = vpack.c.b16 %v2716, %v2713
    %v2738 = vpack.c.b16 %v2717, %v2714
    %v2739 = vpack.c.b16 %v2718, %v2715
    %v2740 = vpack.c.b16 %v2722, %v2719
    %v2741 = vpack.c.b16 %v2723, %v2720
    %v2742 = vpack.c.b16 %v2724, %v2721
    %v2743 = vpack.c.b16 %v2728, %v2725
    %v2744 = vpack.c.b16 %v2729, %v2726
    %v2745 = vpack.c.b16 %v2730, %v2727
    %v2746 = vpack.c.b16 %v2734, %v2731
    %v2747 = vpack.c.b16 %v2735, %v2732
    %v2748 = vpack.c.b16 %v2736, %v2733
    %v2762 = vsel %vm2332, %v2696, 0
    %2764 = vmatprep.subr.bf16.mxu0 %v2738
    %2765 = vmatpush1.bf16.msra.mxu0 %v2737
    %2766 = vmatprep.subr.bf16.mxu0 %v2741
    %2767 = vmatpush1.bf16.msra.mxu0 %v2740
    %2768 = vmatprep.subr.bf16.mxu0 %v2744
    %2769 = vmatpush1.bf16.msra.mxu0 %v2743
    %2770 = vmatprep.subr.bf16.mxu0 %v2747
    %2771 = vmatpush1.bf16.msra.mxu0 %v2746
    %2772 = vmatprep.subr.bf16.mxu0 0
    %2773 = vmatpush1.bf16.msra.mxu0 0
    %2774 = vmatprep.subr.bf16.mxu0 0
    %2775 = vmatpush1.bf16.msra.mxu0 0
    %2776 = vmatprep.subr.bf16.mxu0 0
    %2777 = vmatpush1.bf16.msra.mxu0 0
    %2778 = vmatprep.subr.bf16.mxu0 0
    %2779 = vmatpush1.bf16.msra.mxu0 0
    %2780 = vmatprep.subr.bf16.mxu0 0
    %2781 = vmatpush1.bf16.msra.mxu0 0
    %2782 = vmatprep.subr.bf16.mxu0 0
    %2783 = vmatpush1.bf16.msra.mxu0 0
    %2784 = vmatprep.subr.bf16.mxu0 0
    %2785 = vmatpush1.bf16.msra.mxu0 0
    %2786 = vmatprep.subr.bf16.mxu0 0
    %2787 = vmatpush1.bf16.msra.mxu0 0
    %2788 = vmatprep.subr.bf16.mxu0 0
    %2789 = vmatpush1.bf16.msra.mxu0 0
    %2790 = vmatprep.subr.bf16.mxu0 0
    %2791 = vmatpush1.bf16.msra.mxu0 0
    %2792 = vmatprep.subr.bf16.mxu0 0
    %2793 = vmatpush1.bf16.msra.mxu0 0
    %2794 = vmatprep.subr.bf16.mxu0 0
    %2795 = vmatpush1.bf16.msra.mxu0 0
    %2796 = vmatprep.mubr.bf16.mxu0 0
    %2797 = vmatmul.mubr.bf16.gmra.mrb[0].mxu0 %v2762
    %v2798 = vpop.f32.mrb[0].mxu0
    %v2799 = vadd.f32 0.0, %v2798
    %v2800 = vpop.f32.mrb[0].mxu0
    %v2801 = vadd.f32 0.0, %v2800
    %v2802 = vpop.f32.mrb[0].mxu0
    %v2803 = vadd.f32 0.0, %v2802
    %v2804 = vpop.f32.mrb[0].mxu0
    %v2805 = vadd.f32 0.0, %v2804
    %2806 = vdwg.mxu0
    %2807 = vmatprep.subr.bf16.mxu0 0
    %2808 = vmatpush1.bf16.msra.mxu0 %v2739
    %2809 = vmatprep.subr.bf16.mxu0 0
    %2810 = vmatpush1.bf16.msra.mxu0 %v2742
    %2811 = vmatprep.subr.bf16.mxu0 0
    %2812 = vmatpush1.bf16.msra.mxu0 %v2745
    %2813 = vmatprep.subr.bf16.mxu0 0
    %2814 = vmatpush1.bf16.msra.mxu0 %v2748
    %2815 = vmatprep.subr.bf16.mxu0 0
    %2816 = vmatpush1.bf16.msra.mxu0 0
    %2817 = vmatprep.subr.bf16.mxu0 0
    %2818 = vmatpush1.bf16.msra.mxu0 0
    %2819 = vmatprep.subr.bf16.mxu0 0
    %2820 = vmatpush1.bf16.msra.mxu0 0
    %2821 = vmatprep.subr.bf16.mxu0 0
    %2822 = vmatpush1.bf16.msra.mxu0 0
    %2823 = vmatprep.subr.bf16.mxu0 0
    %2824 = vmatpush1.bf16.msra.mxu0 0
    %2825 = vmatprep.subr.bf16.mxu0 0
    %2826 = vmatpush1.bf16.msra.mxu0 0
    %2827 = vmatprep.subr.bf16.mxu0 0
    %2828 = vmatpush1.bf16.msra.mxu0 0
    %2829 = vmatprep.subr.bf16.mxu0 0
    %2830 = vmatpush1.bf16.msra.mxu0 0
    %2831 = vmatprep.subr.bf16.mxu0 0
    %2832 = vmatpush1.bf16.msra.mxu0 0
    %2833 = vmatprep.subr.bf16.mxu0 0
    %2834 = vmatpush1.bf16.msra.mxu0 0
    %2835 = vmatprep.subr.bf16.mxu0 0
    %2836 = vmatpush1.bf16.msra.mxu0 0
    %2837 = vmatprep.subr.bf16.mxu0 0
    %2838 = vmatpush1.bf16.msra.mxu0 0
    %2839 = vmatprep.mubr.bf16.mxu0 0
    %2840 = vmatmul.mubr.bf16.gmra.mrb[0].mxu0 %v2762
    %v2841 = vpop.f32.mrb[0].mxu0
    %v2842 = vadd.f32 0.0, %v2841
    %v2843 = vpop.f32.mrb[0].mxu0
    %v2844 = vpop.f32.mrb[0].mxu0
    %v2845 = vadd.f32 0.0, %v2844
    %v2846 = vpop.f32.mrb[0].mxu0
    %2847 = vdwg.mxu0
    %2850 = vrot.lane.b32.xlu0 %v2799, 32
    %v2851 = vpop.permute.xlu0 %2850
    %2852 = vrot.lane.b32.xlu0 %v2803, 32
    %v2853 = vpop.permute.xlu0 %2852
    %vm2856 = vcmask 523520
    %2857 = vst.msk [vmem:[#allocation3] sm:$0xff] %vm2856, %v2851
    %vm2858 = vcmask 516352
    %2859 = vst.msk [vmem:[#allocation3 + $0x8] sm:$0x1] %vm2858, %v2853
    %2860 = vst.msk [vmem:[#allocation3 + $0x10] sm:$0xff] %vm2856, %v2799
    %2861 = vst.msk [vmem:[#allocation3 + $0x18] sm:$0x1] %vm2858, %v2803
    %2862 = vrot.lane.b32.xlu0 %v2799, 96
    %v2863 = vpop.permute.xlu0 %2862
    %2864 = vrot.lane.b32.xlu0 %v2803, 96
    %v2865 = vpop.permute.xlu0 %2864
    %2868 = vst.msk [vmem:[#allocation3 + $0x20] sm:$0xff] %vm2856, %v2863
    %2869 = vst.msk [vmem:[#allocation3 + $0x28] sm:$0x1] %vm2858, %v2865
    %2870 = vrot.lane.b32.xlu0 %v2799, 64
    %v2871 = vpop.permute.xlu0 %2870
    %2872 = vrot.lane.b32.xlu0 %v2803, 64
    %v2873 = vpop.permute.xlu0 %2872
    %2876 = vst.msk [vmem:[#allocation3 + $0x30] sm:$0xff] %vm2856, %v2871
    %2877 = vst.msk [vmem:[#allocation3 + $0x38] sm:$0x1] %vm2858, %v2873
    %2880 = vrot.lane.b32.xlu0 %v2801, 32
    %v2881 = vpop.permute.xlu0 %2880
    %2882 = vrot.lane.b32.xlu0 %v2805, 32
    %v2883 = vpop.permute.xlu0 %2882
    %2886 = vst.msk [vmem:[#allocation3 + $0x40] sm:$0xff] %vm2856, %v2881
    %2887 = vst.msk [vmem:[#allocation3 + $0x48] sm:$0x1] %vm2858, %v2883
    %2888 = vst.msk [vmem:[#allocation3 + $0x50] sm:$0xff] %vm2856, %v2801
    %2889 = vst.msk [vmem:[#allocation3 + $0x58] sm:$0x1] %vm2858, %v2805
    %2890 = vrot.lane.b32.xlu0 %v2801, 96
    %v2891 = vpop.permute.xlu0 %2890
    %2892 = vrot.lane.b32.xlu0 %v2805, 96
    %v2893 = vpop.permute.xlu0 %2892
    %2896 = vst.msk [vmem:[#allocation3 + $0x60] sm:$0xff] %vm2856, %v2891
    %2897 = vst.msk [vmem:[#allocation3 + $0x68] sm:$0x1] %vm2858, %v2893
    %2898 = vrot.lane.b32.xlu0 %v2801, 64
    %v2899 = vpop.permute.xlu0 %2898
    %2900 = vrot.lane.b32.xlu0 %v2805, 64
    %v2901 = vpop.permute.xlu0 %2900
    %2904 = vst.msk [vmem:[#allocation3 + $0x70] sm:$0xff] %vm2856, %v2899
    %2905 = vst.msk [vmem:[#allocation3 + $0x78] sm:$0x1] %vm2858, %v2901
    %2908 = vrot.lane.b32.xlu0 %v2842, 32
    %v2909 = vpop.permute.xlu0 %2908
    %2910 = vrot.lane.b32.xlu0 %v2845, 32
    %v2911 = vpop.permute.xlu0 %2910
    %2914 = vst.msk [vmem:[#allocation3 + $0x80] sm:$0xff] %vm2856, %v2909
    %2915 = vst.msk [vmem:[#allocation3 + $0x88] sm:$0x1] %vm2858, %v2911
    %v2916 = vld [vmem:[#allocation3] sm:$0xff]
    %v2917 = vld [vmem:[#allocation3 + $0x8] sm:$0xff]
    %v2918 = vld [vmem:[#allocation3 + $0x10] sm:$0xff]
    %v2919 = vld [vmem:[#allocation3 + $0x18] sm:$0xff]
    %v2920 = vld [vmem:[#allocation3 + $0x20] sm:$0xff]
    %v2921 = vld [vmem:[#allocation3 + $0x28] sm:$0xff]
    %v2922 = vld [vmem:[#allocation3 + $0x30] sm:$0xff]
    %v2923 = vld [vmem:[#allocation3 + $0x38] sm:$0xff]
    %v2924 = vld [vmem:[#allocation3 + $0x40] sm:$0xff]
    %v2925 = vld [vmem:[#allocation3 + $0x48] sm:$0xff]
    %v2926 = vld [vmem:[#allocation3 + $0x50] sm:$0xff]
    %v2927 = vld [vmem:[#allocation3 + $0x58] sm:$0xff]
    %v2928 = vld [vmem:[#allocation3 + $0x60] sm:$0xff]
    %v2929 = vld [vmem:[#allocation3 + $0x68] sm:$0xff]
    %v2930 = vld [vmem:[#allocation3 + $0x70] sm:$0xff]
    %v2931 = vld [vmem:[#allocation3 + $0x78] sm:$0xff]
    %v2932 = vld [vmem:[#allocation3 + $0x80] sm:$0xff]
    %v2933 = vld [vmem:[#allocation3 + $0x88] sm:$0xff]
    %vm2934 = vcmask 130048
    %v2936 = vsel %vm2934, %v2442, 0
    %v2939 = vsel %vm2934, %v2444, 0
    %v2942 = vsel %vm2934, %v2446, 0
    %v2945 = vsel %vm2934, %v2448, 0
    %2947 = vmatprep.subr.mxu0 0.0
    %2948 = vmatpush1.msra.mxu0 %v2916
    %2949 = vmatprep.subr.mxu0 0.0
    %2950 = vmatpush1.msra.mxu0 %v2917
    %2951 = vmatprep.subr.mxu0 0.0
    %2952 = vmatpush1.msra.mxu0 %v2918
    %2953 = vmatprep.subr.mxu0 0.0
    %2954 = vmatpush1.msra.mxu0 %v2919
    %2955 = vmatprep.subr.mxu0 0.0
    %2956 = vmatpush1.msra.mxu0 %v2920
    %2957 = vmatprep.subr.mxu0 0.0
    %2958 = vmatpush1.msra.mxu0 %v2921
    %2959 = vmatprep.subr.mxu0 0.0
    %2960 = vmatpush1.msra.mxu0 %v2922
    %2961 = vmatprep.subr.mxu0 0.0
    %2962 = vmatpush1.msra.mxu0 %v2923
    %2963 = vmatprep.subr.mxu0 0.0
    %2964 = vmatpush1.msra.mxu0 %v2924
    %2965 = vmatprep.subr.mxu0 0.0
    %2966 = vmatpush1.msra.mxu0 %v2925
    %2967 = vmatprep.subr.mxu0 0.0
    %2968 = vmatpush1.msra.mxu0 %v2926
    %2969 = vmatprep.subr.mxu0 0.0
    %2970 = vmatpush1.msra.mxu0 %v2927
    %2971 = vmatprep.subr.mxu0 0.0
    %2972 = vmatpush1.msra.mxu0 %v2928
    %2973 = vmatprep.subr.mxu0 0.0
    %2974 = vmatpush1.msra.mxu0 %v2929
    %2975 = vmatprep.subr.mxu0 0.0
    %2976 = vmatpush1.msra.mxu0 %v2930
    %2977 = vmatprep.subr.mxu0 0.0
    %2978 = vmatpush1.msra.mxu0 %v2931
    %2979 = vmatprep.subr.mxu0 0.0
    %2980 = vmatpush1.msra.mxu0 %v2932
    %2981 = vmatprep.subr.mxu0 0.0
    %2982 = vmatpush1.msra.mxu0 %v2933
    %2983 = vmatprep.subr.mxu0 0.0
    %2984 = vmatpush1.msra.mxu0 0.0
    %2985 = vmatprep.subr.mxu0 0.0
    %2986 = vmatpush1.msra.mxu0 0.0
    %2987 = vmatprep.subr.mxu0 0.0
    %2988 = vmatpush1.msra.mxu0 0.0
    %2989 = vmatprep.subr.mxu0 0.0
    %2990 = vmatpush1.msra.mxu0 0.0
    %2991 = vmatprep.subr.mxu0 0.0
    %2992 = vmatpush1.msra.mxu0 0.0
    %2993 = vmatprep.subr.mxu0 0.0
    %2994 = vmatpush1.msra.mxu0 0.0
    %2995 = vmatprep.subr.mxu0 0.0
    %2996 = vmatpush1.msra.mxu0 0.0
    %2997 = vmatprep.subr.mxu0 0.0
    %2998 = vmatpush1.msra.mxu0 0.0
    %2999 = vmatprep.subr.mxu0 0.0
    %3000 = vmatpush1.msra.mxu0 0.0
    %3001 = vmatprep.subr.mxu0 0.0
    %3002 = vmatpush1.msra.mxu0 0.0
    %3003 = vmatprep.subr.mxu0 0.0
    %3004 = vmatpush1.msra.mxu0 0.0
    %3005 = vmatprep.subr.mxu0 0.0
    %3006 = vmatpush1.msra.mxu0 0.0
    %3007 = vmatprep.subr.mxu0 0.0
    %3008 = vmatpush1.msra.mxu0 0.0
    %3009 = vmatprep.subr.mxu0 0.0
    %3010 = vmatpush1.msra.mxu0 0.0
    %3011 = vmatprep.mubr.f32.mxu0 %v2936
    %3012 = vmatmul.mubr.f32.gmra.mrb[0].mxu0 %v2441
    %v3013 = vpop.f32.mrb[0].mxu0
    %v3014 = vadd.f32 0.0, %v3013
    %v3015 = vpop.f32.mrb[0].mxu0
    %3016 = vmatprep.mubr.f32.mxu0 %v2939
    %3017 = vmatmul.mubr.f32.gmra.mrb[0].mxu0 %v2443
    %v3018 = vpop.f32.mrb[0].mxu0
    %v3019 = vadd.f32 0.0, %v3018
    %v3020 = vpop.f32.mrb[0].mxu0
    %3021 = vmatprep.mubr.f32.mxu0 %v2942
    %3022 = vmatmul.mubr.f32.gmra.mrb[0].mxu0 %v2445
    %v3023 = vpop.f32.mrb[0].mxu0
    %v3024 = vadd.f32 0.0, %v3023
    %v3025 = vpop.f32.mrb[0].mxu0
    %3026 = vmatprep.mubr.f32.mxu0 %v2945
    %3027 = vmatmul.mubr.f32.gmra.mrb[0].mxu0 %v2447
    %v3028 = vpop.f32.mrb[0].mxu0
    %v3029 = vadd.f32 0.0, %v3028
    %v3030 = vpop.f32.mrb[0].mxu0
    %3031 = vdwg.mxu0
    %v3032 = vld [vmem:[#allocation10 + $0x4] ss:$0 sm:$0xff]
    %v3033 = vadd.f32 %v3014, %v3032
    %v3034 = vadd.f32 %v3019, %v3032
    %v3035 = vadd.f32 %v3024, %v3032
    %v3036 = vadd.f32 %v3029, %v3032
    %3038 = vrot.lane.b32.xlu0 %v3032, 32
    %v3039 = vpop.permute.xlu0 %3038
    %v3041 = vadd.f32 %v3014, %v3039
    %v3042 = vadd.f32 %v3019, %v3039
    %v3043 = vadd.f32 %v3024, %v3039
    %v3044 = vadd.f32 %v3029, %v3039
    %v3045 = vsel %vm2617, %v3033, 0.0
    %v3046 = vsel %vm2617, %v3034, 0.0
    %v3047 = vadd.f32 %v3045, %v3046
    %v3048 = vsel %vm2617, %v3035, 0.0
    %v3049 = vadd.f32 %v3047, %v3048
    %v3050 = vsel %vm2619, %v3036, 0.0
    %v3051 = vadd.f32 %v3049, %v3050
    %v3052 = vrot.slane %v3051, 4
    %v3053 = vadd.f32 %v3051, %v3052
    %v3054 = vrot.slane %v3053, 2
    %v3055 = vadd.f32 %v3053, %v3054
    %v3056 = vrot.slane %v3055, 1
    %v3057 = vadd.f32 %v3055, %v3056
    %v3058 = vsel %vm2856, %v3041, 0.0
    %v3059 = vsel %vm2856, %v3042, 0.0
    %v3060 = vadd.f32 %v3058, %v3059
    %v3061 = vsel %vm2856, %v3043, 0.0
    %v3062 = vadd.f32 %v3060, %v3061
    %v3063 = vsel %vm2858, %v3044, 0.0
    %v3064 = vadd.f32 %v3062, %v3063
    %v3065 = vrot.slane %v3064, 4
    %v3066 = vadd.f32 %v3064, %v3065
    %v3067 = vrot.slane %v3066, 2
    %v3068 = vadd.f32 %v3066, %v3067
    %v3069 = vrot.slane %v3068, 1
    %v3070 = vadd.f32 %v3068, %v3069
    %3072 = vrot.lane.b32.xlu0 %v3070, 96
    %v3073 = vpop.permute.xlu0 %3072
    %v3075 = vadd.f32 %v3057, %v3073
    %v3076 = vmul.f32 %v3075, 0.02
    %v3077 = vlaneseq
    %v3078 = vshrl.u32 %v3077, 7
    %v3079 = vsub.s32 0, %v3078
    %v3080 = vrot.slane %v3076, %v3079
    %v3081 = vsub.f32 %v3033, %v3080
    %v3082 = vsub.f32 %v3034, %v3080
    %v3083 = vsub.f32 %v3035, %v3080
    %v3084 = vsub.f32 %v3036, %v3080
    %3086 = vrot.lane.b32.xlu0 %v3080, 32
    %v3087 = vpop.permute.xlu0 %3086
    %v3089 = vsub.f32 %v3041, %v3087
    %v3090 = vsub.f32 %v3042, %v3087
    %v3091 = vsub.f32 %v3043, %v3087
    %v3092 = vsub.f32 %v3044, %v3087
    %v3093 = vmul.f32 %v3081, %v3081
    %v3094 = vmul.f32 %v3082, %v3082
    %v3095 = vmul.f32 %v3083, %v3083
    %v3096 = vmul.f32 %v3084, %v3084
    %v3097 = vsel %vm2617, %v3093, 0.0
    %v3098 = vsel %vm2617, %v3094, 0.0
    %v3099 = vadd.f32 %v3097, %v3098
    %v3100 = vsel %vm2617, %v3095, 0.0
    %v3101 = vadd.f32 %v3099, %v3100
    %v3102 = vsel %vm2619, %v3096, 0.0
    %v3103 = vadd.f32 %v3101, %v3102
    %v3104 = vrot.slane %v3103, 4
    %v3105 = vadd.f32 %v3103, %v3104
    %v3106 = vrot.slane %v3105, 2
    %v3107 = vadd.f32 %v3105, %v3106
    %v3108 = vrot.slane %v3107, 1
    %v3109 = vadd.f32 %v3107, %v3108
    %v3110 = vmul.f32 %v3089, %v3089
    %v3111 = vmul.f32 %v3090, %v3090
    %v3112 = vmul.f32 %v3091, %v3091
    %v3113 = vmul.f32 %v3092, %v3092
    %v3114 = vsel %vm2856, %v3110, 0.0
    %v3115 = vsel %vm2856, %v3111, 0.0
    %v3116 = vadd.f32 %v3114, %v3115
    %v3117 = vsel %vm2856, %v3112, 0.0
    %v3118 = vadd.f32 %v3116, %v3117
    %v3119 = vsel %vm2858, %v3113, 0.0
    %v3120 = vadd.f32 %v3118, %v3119
    %v3121 = vrot.slane %v3120, 4
    %v3122 = vadd.f32 %v3120, %v3121
    %v3123 = vrot.slane %v3122, 2
    %v3124 = vadd.f32 %v3122, %v3123
    %v3125 = vrot.slane %v3124, 1
    %v3126 = vadd.f32 %v3124, %v3125
    %3128 = vrot.lane.b32.xlu0 %v3126, 96
    %v3129 = vpop.permute.xlu0 %3128
    %v3131 = vadd.f32 %v3109, %v3129
    %v3132 = vmul.f32 %v3131, 0.02
    %v3133 = vld [vmem:[#allocation10 + $0x5] ss:$0 sm:$0xff]
    %v3134 = vadd.f32 %v3132, 1e-05
    %v3135 = vrsqrt.pop %v3134
    %v3136 = vmul.f32 %v3133, %v3135
    %v3137 = vld [vmem:[#allocation10 + $0x6] ss:$0 sm:$0xff]
    %v3138 = vlaneseq
    %v3139 = vshrl.u32 %v3138, 7
    %v3140 = vsub.s32 0, %v3139
    %v3141 = vrot.slane %v3136, %v3140
    %v3142 = vmul.f32 %v3081, %v3141
    %v3143 = vmul.f32 %v3082, %v3141
    %v3144 = vmul.f32 %v3083, %v3141
    %v3145 = vmul.f32 %v3084, %v3141
    %v3146 = vadd.f32 %v3142, %v3137
    %v3147 = vadd.f32 %v3143, %v3137
    %v3148 = vadd.f32 %v3144, %v3137
    %v3149 = vadd.f32 %v3145, %v3137
    %v3150 = vmax.f32 %v3146, 0.0
    %v3151 = vmax.f32 %v3147, 0.0
    %v3152 = vmax.f32 %v3148, 0.0
    %v3153 = vmax.f32 %v3149, 0.0
    %3155 = vrot.lane.b32.xlu0 %v3141, 32
    %v3156 = vpop.permute.xlu0 %3155
    %v3158 = vmul.f32 %v3089, %v3156
    %v3159 = vmul.f32 %v3090, %v3156
    %v3160 = vmul.f32 %v3091, %v3156
    %v3161 = vmul.f32 %v3092, %v3156
    %3163 = vrot.lane.b32.xlu0 %v3137, 32
    %v3164 = vpop.permute.xlu0 %3163
    %v3166 = vadd.f32 %v3158, %v3164
    %v3167 = vadd.f32 %v3159, %v3164
    %v3168 = vadd.f32 %v3160, %v3164
    %v3169 = vadd.f32 %v3161, %v3164
    %v3170 = vmax.f32 %v3166, 0.0
    %v3171 = vmax.f32 %v3167, 0.0
    %v3172 = vmax.f32 %v3168, 0.0
    %v3173 = vmax.f32 %v3169, 0.0
    %v3174 = vld [vmem:[#allocation14] sm:$0x3]
    %v3175 = vld [vmem:[#allocation14 + $0x2] sm:$0x3]
    %v3176 = vld [vmem:[#allocation14 + $0x4] sm:$0x3]
    %v3177 = vld [vmem:[#allocation14 + $0x6] sm:$0x3]
    %v3178 = vld [vmem:[#allocation14 + $0x8] sm:$0x3]
    %v3179 = vld [vmem:[#allocation14 + $0xa] sm:$0x3]
    %v3180 = vld [vmem:[#allocation14 + $0xc] sm:$0x3]
    %v3181 = vld [vmem:[#allocation14 + $0xe] sm:$0x3]
    %v3182 = vld [vmem:[#allocation14 + $0x10] sm:$0x3]
    %v3183 = vld [vmem:[#allocation14 + $0x12] sm:$0x3]
    %v3184 = vld [vmem:[#allocation14 + $0x14] sm:$0x1]
    %v3185 = vunpack.c.0.s8 %v3174
    %v3186 = vunpack.c.0.s8 %v3175
    %v3187 = vunpack.c.0.s8 %v3176
    %v3188 = vunpack.c.0.s8 %v3177
    %v3189 = vunpack.c.0.s8 %v3178
    %v3190 = vunpack.c.0.s8 %v3179
    %v3191 = vunpack.c.0.s8 %v3180
    %v3192 = vunpack.c.0.s8 %v3181
    %v3193 = vunpack.c.0.s8 %v3182
    %v3194 = vunpack.c.0.s8 %v3183
    %v3195 = vunpack.c.0.s8 %v3184
    %v3196 = vcvt.s32.f32 %v3185
    %v3197 = vcvt.s32.f32 %v3186
    %v3198 = vcvt.s32.f32 %v3187
    %v3199 = vcvt.s32.f32 %v3188
    %v3200 = vcvt.s32.f32 %v3189
    %v3201 = vcvt.s32.f32 %v3190
    %v3202 = vcvt.s32.f32 %v3191
    %v3203 = vcvt.s32.f32 %v3192
    %v3204 = vcvt.s32.f32 %v3193
    %v3205 = vcvt.s32.f32 %v3194
    %v3206 = vcvt.s32.f32 %v3195
    %v3207 = vpack.c.bf16 %v3151, %v3150
    %v3208 = vpack.c.bf16 %v3153, %v3152
    %v3209 = vld [vmem:[%s7] sm:$0xf]
    %v3210 = vld [vmem:[%s7 + $0x4] sm:$0xf]
    %v3211 = vld [vmem:[%s7 + $0x8] sm:$0xf]
    %v3212 = vld [vmem:[%s7 + $0xc] sm:$0xf]
    %v3217 = vunpack.c.l.b16 %v3209
    %v3218 = vunpack.c.l.b16 %v3210
    %v3219 = vunpack.c.l.b16 %v3211
    %v3220 = vunpack.c.l.b16 %v3212
    %v3221 = vpack.c.b16 %v3218, %v3217
    %v3222 = vpack.c.b16 %v3220, %v3219
    %v3226 = vsel %vm2617, %v3207, 0
    %v3229 = vsel %vm2617, %v3208, 0
    %3231 = vmatprep.subr.bf16.mxu0 0
    %3232 = vmatpush1.bf16.msra.mxu0 %v3221
    %3233 = vmatprep.subr.bf16.mxu0 0
    %3234 = vmatpush1.bf16.msra.mxu0 %v3222
    %3235 = vmatprep.subr.bf16.mxu0 0
    %3236 = vmatpush1.bf16.msra.mxu0 0
    %3237 = vmatprep.subr.bf16.mxu0 0
    %3238 = vmatpush1.bf16.msra.mxu0 0
    %3239 = vmatprep.subr.bf16.mxu0 0
    %3240 = vmatpush1.bf16.msra.mxu0 0
    %3241 = vmatprep.subr.bf16.mxu0 0
    %3242 = vmatpush1.bf16.msra.mxu0 0
    %3243 = vmatprep.subr.bf16.mxu0 0
    %3244 = vmatpush1.bf16.msra.mxu0 0
    %3245 = vmatprep.subr.bf16.mxu0 0
    %3246 = vmatpush1.bf16.msra.mxu0 0
    %3247 = vmatprep.subr.bf16.mxu0 0
    %3248 = vmatpush1.bf16.msra.mxu0 0
    %3249 = vmatprep.subr.bf16.mxu0 0
    %3250 = vmatpush1.bf16.msra.mxu0 0
    %3251 = vmatprep.subr.bf16.mxu0 0
    %3252 = vmatpush1.bf16.msra.mxu0 0
    %3253 = vmatprep.subr.bf16.mxu0 0
    %3254 = vmatpush1.bf16.msra.mxu0 0
    %3255 = vmatprep.subr.bf16.mxu0 0
    %3256 = vmatpush1.bf16.msra.mxu0 0
    %3257 = vmatprep.subr.bf16.mxu0 0
    %3258 = vmatpush1.bf16.msra.mxu0 0
    %3259 = vmatprep.subr.bf16.mxu0 0
    %3260 = vmatpush1.bf16.msra.mxu0 0
    %3261 = vmatprep.subr.bf16.mxu0 0
    %3262 = vmatpush1.bf16.msra.mxu0 0
    %3263 = vmatprep.mubr.bf16.mxu0 0
    %3264 = vmatmul.mubr.bf16.gmra.mrb[0].mxu0 %v3226
    %v3265 = vpop.f32.mrb[0].mxu0
    %v3266 = vadd.f32 0.0, %v3265
    %v3267 = vpop.f32.mrb[0].mxu0
    %v3268 = vpop.f32.mrb[0].mxu0
    %v3269 = vadd.f32 0.0, %v3268
    %v3270 = vpop.f32.mrb[0].mxu0
    %3271 = vmatprep.mubr.bf16.mxu0 0
    %3272 = vmatmul.mubr.bf16.gmra.mrb[0].mxu0 %v3229
    %v3273 = vpop.f32.mrb[0].mxu0
    %v3274 = vadd.f32 0.0, %v3273
    %v3275 = vpop.f32.mrb[0].mxu0
    %v3276 = vpop.f32.mrb[0].mxu0
    %v3277 = vadd.f32 0.0, %v3276
    %v3278 = vpop.f32.mrb[0].mxu0
    %3279 = vdwg.mxu0
    %3280 = vst.msk [vmem:[#allocation3] sm:$0xff] %vm2934, %v3266
    %3281 = vst.msk [vmem:[#allocation3 + $0x8] sm:$0xff] %vm2934, %v3269
    %3282 = vst.msk [vmem:[#allocation3 + $0x10] sm:$0xff] %vm2934, %v3274
    %vm3283 = vcmask 122880
    %3284 = vst.msk [vmem:[#allocation3 + $0x18] sm:$0x1] %vm3283, %v3277
    %3289 = vrot.lane.b32.xlu0 %v3266, 112
    %v3290 = vpop.permute.xlu0 %3289
    %3291 = vrot.lane.b32.xlu0 %v3269, 112
    %v3292 = vpop.permute.xlu0 %3291
    %3293 = vrot.lane.b32.xlu0 %v3274, 112
    %v3294 = vpop.permute.xlu0 %3293
    %3295 = vrot.lane.b32.xlu0 %v3277, 112
    %v3296 = vpop.permute.xlu0 %3295
    %3301 = vst.msk [vmem:[#allocation3 + $0x20] sm:$0xff] %vm2934, %v3290
    %3302 = vst.msk [vmem:[#allocation3 + $0x28] sm:$0xff] %vm2934, %v3292
    %3303 = vst.msk [vmem:[#allocation3 + $0x30] sm:$0xff] %vm2934, %v3294
    %3304 = vst.msk [vmem:[#allocation3 + $0x38] sm:$0x1] %vm3283, %v3296
    %3305 = vrot.lane.b32.xlu0 %v3266, 96
    %v3306 = vpop.permute.xlu0 %3305
    %3307 = vrot.lane.b32.xlu0 %v3269, 96
    %v3308 = vpop.permute.xlu0 %3307
    %3309 = vrot.lane.b32.xlu0 %v3274, 96
    %v3310 = vpop.permute.xlu0 %3309
    %3311 = vrot.lane.b32.xlu0 %v3277, 96
    %v3312 = vpop.permute.xlu0 %3311
    %3317 = vst.msk [vmem:[#allocation3 + $0x40] sm:$0xff] %vm2934, %v3306
    %3318 = vst.msk [vmem:[#allocation3 + $0x48] sm:$0xff] %vm2934, %v3308
    %3319 = vst.msk [vmem:[#allocation3 + $0x50] sm:$0xff] %vm2934, %v3310
    %3320 = vst.msk [vmem:[#allocation3 + $0x58] sm:$0x1] %vm3283, %v3312
    %3321 = vrot.lane.b32.xlu0 %v3266, 80
    %v3322 = vpop.permute.xlu0 %3321
    %3323 = vrot.lane.b32.xlu0 %v3269, 80
    %v3324 = vpop.permute.xlu0 %3323
    %3325 = vrot.lane.b32.xlu0 %v3274, 80
    %v3326 = vpop.permute.xlu0 %3325
    %3327 = vrot.lane.b32.xlu0 %v3277, 80
    %v3328 = vpop.permute.xlu0 %3327
    %3333 = vst.msk [vmem:[#allocation3 + $0x60] sm:$0xff] %vm2934, %v3322
    %3334 = vst.msk [vmem:[#allocation3 + $0x68] sm:$0xff] %vm2934, %v3324
    %3335 = vst.msk [vmem:[#allocation3 + $0x70] sm:$0xff] %vm2934, %v3326
    %3336 = vst.msk [vmem:[#allocation3 + $0x78] sm:$0x1] %vm3283, %v3328
    %v3337 = vpack.c.bf16 %v3171, %v3170
    %v3338 = vpack.c.bf16 %v3173, %v3172
    %v3339 = vld [vmem:[%s7] sm:$0xf]
    %v3340 = vld [vmem:[%s7 + $0x4] sm:$0xf]
    %v3341 = vld [vmem:[%s7 + $0x8] sm:$0xf]
    %v3342 = vld [vmem:[%s7 + $0xc] sm:$0xf]
    %3345 = vrot.lane.b32.xlu0 %v3337, 96
    %v3346 = vpop.permute.xlu0 %3345
    %3347 = vrot.lane.b32.xlu0 %v3338, 96
    %v3348 = vpop.permute.xlu0 %3347
    %v3353 = vunpack.c.l.b16 %v3339
    %v3354 = vunpack.c.l.b16 %v3340
    %v3355 = vunpack.c.l.b16 %v3341
    %v3356 = vunpack.c.l.b16 %v3342
    %v3357 = vpack.c.b16 %v3354, %v3353
    %v3358 = vpack.c.b16 %v3356, %v3355
    %v3362 = vsel %vm2617, %v3346, 0
    %v3365 = vsel %vm2617, %v3348, 0
    %3367 = vmatprep.subr.bf16.mxu0 0
    %3368 = vmatpush1.bf16.msra.mxu0 %v3357
    %3369 = vmatprep.subr.bf16.mxu0 0
    %3370 = vmatpush1.bf16.msra.mxu0 %v3358
    %3371 = vmatprep.subr.bf16.mxu0 0
    %3372 = vmatpush1.bf16.msra.mxu0 0
    %3373 = vmatprep.subr.bf16.mxu0 0
    %3374 = vmatpush1.bf16.msra.mxu0 0
    %3375 = vmatprep.subr.bf16.mxu0 0
    %3376 = vmatpush1.bf16.msra.mxu0 0
    %3377 = vmatprep.subr.bf16.mxu0 0
    %3378 = vmatpush1.bf16.msra.mxu0 0
    %3379 = vmatprep.subr.bf16.mxu0 0
    %3380 = vmatpush1.bf16.msra.mxu0 0
    %3381 = vmatprep.subr.bf16.mxu0 0
    %3382 = vmatpush1.bf16.msra.mxu0 0
    %3383 = vmatprep.subr.bf16.mxu0 0
    %3384 = vmatpush1.bf16.msra.mxu0 0
    %3385 = vmatprep.subr.bf16.mxu0 0
    %3386 = vmatpush1.bf16.msra.mxu0 0
    %3387 = vmatprep.subr.bf16.mxu0 0
    %3388 = vmatpush1.bf16.msra.mxu0 0
    %3389 = vmatprep.subr.bf16.mxu0 0
    %3390 = vmatpush1.bf16.msra.mxu0 0
    %3391 = vmatprep.subr.bf16.mxu0 0
    %3392 = vmatpush1.bf16.msra.mxu0 0
    %3393 = vmatprep.subr.bf16.mxu0 0
    %3394 = vmatpush1.bf16.msra.mxu0 0
    %3395 = vmatprep.subr.bf16.mxu0 0
    %3396 = vmatpush1.bf16.msra.mxu0 0
    %3397 = vmatprep.subr.bf16.mxu0 0
    %3398 = vmatpush1.bf16.msra.mxu0 0
    %3399 = vmatprep.mubr.bf16.mxu0 0
    %3400 = vmatmul.mubr.bf16.gmra.mrb[0].mxu0 %v3362
    %v3401 = vpop.f32.mrb[0].mxu0
    %v3402 = vadd.f32 0.0, %v3401
    %v3403 = vpop.f32.mrb[0].mxu0
    %v3404 = vpop.f32.mrb[0].mxu0
    %v3405 = vadd.f32 0.0, %v3404
    %v3406 = vpop.f32.mrb[0].mxu0
    %3407 = vmatprep.mubr.bf16.mxu0 0
    %3408 = vmatmul.mubr.bf16.gmra.mrb[0].mxu0 %v3365
    %v3409 = vpop.f32.mrb[0].mxu0
    %v3410 = vadd.f32 0.0, %v3409
    %v3411 = vpop.f32.mrb[0].mxu0
    %v3412 = vpop.f32.mrb[0].mxu0
    %v3413 = vadd.f32 0.0, %v3412
    %v3414 = vpop.f32.mrb[0].mxu0
    %3415 = vdwg.mxu0
    %3420 = vrot.lane.b32.xlu0 %v3402, 16
    %v3421 = vpop.permute.xlu0 %3420
    %3422 = vrot.lane.b32.xlu0 %v3405, 16
    %v3423 = vpop.permute.xlu0 %3422
    %3424 = vrot.lane.b32.xlu0 %v3410, 16
    %v3425 = vpop.permute.xlu0 %3424
    %3426 = vrot.lane.b32.xlu0 %v3413, 16
    %v3427 = vpop.permute.xlu0 %3426
    %vm3432 = vcmask 261248
    %3433 = vst.msk [vmem:[#allocation3] sm:$0xff] %vm3432, %v3421
    %3434 = vst.msk [vmem:[#allocation3 + $0x8] sm:$0xff] %vm3432, %v3423
    %3435 = vst.msk [vmem:[#allocation3 + $0x10] sm:$0xff] %vm3432, %v3425
    %vm3436 = vcmask 254080
    %3437 = vst.msk [vmem:[#allocation3 + $0x18] sm:$0x1] %vm3436, %v3427
    %3438 = vst.msk [vmem:[#allocation3 + $0x20] sm:$0xff] %vm3432, %v3402
    %3439 = vst.msk [vmem:[#allocation3 + $0x28] sm:$0xff] %vm3432, %v3405
    %3440 = vst.msk [vmem:[#allocation3 + $0x30] sm:$0xff] %vm3432, %v3410
    %3441 = vst.msk [vmem:[#allocation3 + $0x38] sm:$0x1] %vm3436, %v3413
    %3442 = vrot.lane.b32.xlu0 %v3402, 112
    %v3443 = vpop.permute.xlu0 %3442
    %3444 = vrot.lane.b32.xlu0 %v3405, 112
    %v3445 = vpop.permute.xlu0 %3444
    %3446 = vrot.lane.b32.xlu0 %v3410, 112
    %v3447 = vpop.permute.xlu0 %3446
    %3448 = vrot.lane.b32.xlu0 %v3413, 112
    %v3449 = vpop.permute.xlu0 %3448
    %3454 = vst.msk [vmem:[#allocation3 + $0x40] sm:$0xff] %vm3432, %v3443
    %3455 = vst.msk [vmem:[#allocation3 + $0x48] sm:$0xff] %vm3432, %v3445
    %3456 = vst.msk [vmem:[#allocation3 + $0x50] sm:$0xff] %vm3432, %v3447
    %3457 = vst.msk [vmem:[#allocation3 + $0x58] sm:$0x1] %vm3436, %v3449
    %3458 = vrot.lane.b32.xlu0 %v3402, 96
    %v3459 = vpop.permute.xlu0 %3458
    %3460 = vrot.lane.b32.xlu0 %v3405, 96
    %v3461 = vpop.permute.xlu0 %3460
    %3462 = vrot.lane.b32.xlu0 %v3410, 96
    %v3463 = vpop.permute.xlu0 %3462
    %3464 = vrot.lane.b32.xlu0 %v3413, 96
    %v3465 = vpop.permute.xlu0 %3464
    %3470 = vst.msk [vmem:[#allocation3 + $0x60] sm:$0xff] %vm3432, %v3459
    %3471 = vst.msk [vmem:[#allocation3 + $0x68] sm:$0xff] %vm3432, %v3461
    %3472 = vst.msk [vmem:[#allocation3 + $0x70] sm:$0xff] %vm3432, %v3463
    %3473 = vst.msk [vmem:[#allocation3 + $0x78] sm:$0x1] %vm3436, %v3465
    %v3474 = vld [vmem:[#allocation3] sm:$0xff]
    %v3475 = vld [vmem:[#allocation3 + $0x8] sm:$0xff]
    %v3476 = vld [vmem:[#allocation3 + $0x10] sm:$0xff]
    %v3477 = vld [vmem:[#allocation3 + $0x18] sm:$0xff]
    %v3478 = vld [vmem:[#allocation3 + $0x20] sm:$0xff]
    %v3479 = vld [vmem:[#allocation3 + $0x28] sm:$0xff]
    %v3480 = vld [vmem:[#allocation3 + $0x30] sm:$0xff]
    %v3481 = vld [vmem:[#allocation3 + $0x38] sm:$0xff]
    %v3482 = vld [vmem:[#allocation3 + $0x40] sm:$0xff]
    %v3483 = vld [vmem:[#allocation3 + $0x48] sm:$0xff]
    %v3484 = vld [vmem:[#allocation3 + $0x50] sm:$0xff]
    %v3485 = vld [vmem:[#allocation3 + $0x58] sm:$0xff]
    %v3486 = vld [vmem:[#allocation3 + $0x60] sm:$0xff]
    %v3487 = vld [vmem:[#allocation3 + $0x68] sm:$0xff]
    %v3488 = vld [vmem:[#allocation3 + $0x70] sm:$0xff]
    %v3489 = vld [vmem:[#allocation3 + $0x78] sm:$0xff]
    %3490 = vmatprep.subr.mxu0 0.0
    %3491 = vmatpush1.msra.mxu0 %v3474
    %3492 = vmatprep.subr.mxu0 0.0
    %3493 = vmatpush1.msra.mxu0 %v3475
    %3494 = vmatprep.subr.mxu0 0.0
    %3495 = vmatpush1.msra.mxu0 %v3476
    %3496 = vmatprep.subr.mxu0 0.0
    %3497 = vmatpush1.msra.mxu0 %v3477
    %3498 = vmatprep.subr.mxu0 0.0
    %3499 = vmatpush1.msra.mxu0 %v3478
    %3500 = vmatprep.subr.mxu0 0.0
    %3501 = vmatpush1.msra.mxu0 %v3479
    %3502 = vmatprep.subr.mxu0 0.0
    %3503 = vmatpush1.msra.mxu0 %v3480
    %3504 = vmatprep.subr.mxu0 0.0
    %3505 = vmatpush1.msra.mxu0 %v3481
    %3506 = vmatprep.subr.mxu0 0.0
    %3507 = vmatpush1.msra.mxu0 %v3482
    %3508 = vmatprep.subr.mxu0 0.0
    %3509 = vmatpush1.msra.mxu0 %v3483
    %3510 = vmatprep.subr.mxu0 0.0
    %3511 = vmatpush1.msra.mxu0 %v3484
    %3512 = vmatprep.subr.mxu0 0.0
    %3513 = vmatpush1.msra.mxu0 %v3485
    %3514 = vmatprep.subr.mxu0 0.0
    %3515 = vmatpush1.msra.mxu0 %v3486
    %3516 = vmatprep.subr.mxu0 0.0
    %3517 = vmatpush1.msra.mxu0 %v3487
    %3518 = vmatprep.subr.mxu0 0.0
    %3519 = vmatpush1.msra.mxu0 %v3488
    %3520 = vmatprep.subr.mxu0 0.0
    %3521 = vmatpush1.msra.mxu0 %v3489
    %3522 = vmatprep.subr.mxu0 0.0
    %3523 = vmatpush1.msra.mxu0 0.0
    %3524 = vmatprep.subr.mxu0 0.0
    %3525 = vmatpush1.msra.mxu0 0.0
    %3526 = vmatprep.subr.mxu0 0.0
    %3527 = vmatpush1.msra.mxu0 0.0
    %3528 = vmatprep.subr.mxu0 0.0
    %3529 = vmatpush1.msra.mxu0 0.0
    %3530 = vmatprep.subr.mxu0 0.0
    %3531 = vmatpush1.msra.mxu0 0.0
    %3532 = vmatprep.subr.mxu0 0.0
    %3533 = vmatpush1.msra.mxu0 0.0
    %3534 = vmatprep.subr.mxu0 0.0
    %3535 = vmatpush1.msra.mxu0 0.0
    %3536 = vmatprep.subr.mxu0 0.0
    %3537 = vmatpush1.msra.mxu0 0.0
    %3538 = vmatprep.subr.mxu0 0.0
    %3539 = vmatpush1.msra.mxu0 0.0
    %3540 = vmatprep.subr.mxu0 0.0
    %3541 = vmatpush1.msra.mxu0 0.0
    %3542 = vmatprep.subr.mxu0 0.0
    %3543 = vmatpush1.msra.mxu0 0.0
    %3544 = vmatprep.subr.mxu0 0.0
    %3545 = vmatpush1.msra.mxu0 0.0
    %3546 = vmatprep.subr.mxu0 0.0
    %3547 = vmatpush1.msra.mxu0 0.0
    %3548 = vmatprep.subr.mxu0 0.0
    %3549 = vmatpush1.msra.mxu0 0.0
    %3550 = vmatprep.subr.mxu0 0.0
    %3551 = vmatpush1.msra.mxu0 0.0
    %3552 = vmatprep.subr.mxu0 0.0
    %3553 = vmatpush1.msra.mxu0 0.0
    %3554 = vmatprep.mubr.f32.mxu0 0.0
    %3555 = vmatmul.mubr.f32.gmra.mrb[0].mxu0 %v3196
    %v3556 = vpop.f32.mrb[0].mxu0
    %v3557 = vadd.f32 0.0, %v3556
    %v3558 = vpop.f32.mrb[0].mxu0
    %3559 = vmatprep.mubr.f32.mxu0 0.0
    %3560 = vmatmul.mubr.f32.gmra.mrb[0].mxu0 %v3197
    %v3561 = vpop.f32.mrb[0].mxu0
    %v3562 = vadd.f32 0.0, %v3561
    %v3563 = vpop.f32.mrb[0].mxu0
    %3564 = vmatprep.mubr.f32.mxu0 0.0
    %3565 = vmatmul.mubr.f32.gmra.mrb[0].mxu0 %v3198
    %v3566 = vpop.f32.mrb[0].mxu0
    %v3567 = vadd.f32 0.0, %v3566
    %v3568 = vpop.f32.mrb[0].mxu0
    %3569 = vmatprep.mubr.f32.mxu0 0.0
    %3570 = vmatmul.mubr.f32.gmra.mrb[0].mxu0 %v3199
    %v3571 = vpop.f32.mrb[0].mxu0
    %v3572 = vadd.f32 0.0, %v3571
    %v3573 = vpop.f32.mrb[0].mxu0
    %3574 = vmatprep.mubr.f32.mxu0 0.0
    %3575 = vmatmul.mubr.f32.gmra.mrb[0].mxu0 %v3200
    %v3576 = vpop.f32.mrb[0].mxu0
    %v3577 = vadd.f32 0.0, %v3576
    %v3578 = vpop.f32.mrb[0].mxu0
    %3579 = vmatprep.mubr.f32.mxu0 0.0
    %3580 = vmatmul.mubr.f32.gmra.mrb[0].mxu0 %v3201
    %v3581 = vpop.f32.mrb[0].mxu0
    %v3582 = vadd.f32 0.0, %v3581
    %v3583 = vpop.f32.mrb[0].mxu0
    %3584 = vmatprep.mubr.f32.mxu0 0.0
    %3585 = vmatmul.mubr.f32.gmra.mrb[0].mxu0 %v3202
    %v3586 = vpop.f32.mrb[0].mxu0
    %v3587 = vadd.f32 0.0, %v3586
    %v3588 = vpop.f32.mrb[0].mxu0
    %3589 = vmatprep.mubr.f32.mxu0 0.0
    %3590 = vmatmul.mubr.f32.gmra.mrb[0].mxu0 %v3203
    %v3591 = vpop.f32.mrb[0].mxu0
    %v3592 = vadd.f32 0.0, %v3591
    %v3593 = vpop.f32.mrb[0].mxu0
    %3594 = vmatprep.mubr.f32.mxu0 0.0
    %3595 = vmatmul.mubr.f32.gmra.mrb[0].mxu0 %v3204
    %v3596 = vpop.f32.mrb[0].mxu0
    %v3597 = vadd.f32 0.0, %v3596
    %v3598 = vpop.f32.mrb[0].mxu0
    %3599 = vmatprep.mubr.f32.mxu0 0.0
    %3600 = vmatmul.mubr.f32.gmra.mrb[0].mxu0 %v3205
    %v3601 = vpop.f32.mrb[0].mxu0
    %v3602 = vadd.f32 0.0, %v3601
    %v3603 = vpop.f32.mrb[0].mxu0
    %3604 = vmatprep.mubr.f32.mxu0 0.0
    %3605 = vmatmul.mubr.f32.gmra.mrb[0].mxu0 %v3206
    %v3606 = vpop.f32.mrb[0].mxu0
    %v3607 = vadd.f32 0.0, %v3606
    %v3608 = vpop.f32.mrb[0].mxu0
    %3609 = vdwg.mxu0
    %v3610 = vld [vmem:[#allocation10 + $0x7] ss:$0 sm:$0xff]
    %v3611 = vadd.f32 %v3557, %v3610
    %v3612 = vadd.f32 %v3562, %v3610
    %v3613 = vadd.f32 %v3567, %v3610
    %v3614 = vadd.f32 %v3572, %v3610
    %v3615 = vadd.f32 %v3577, %v3610
    %v3616 = vadd.f32 %v3582, %v3610
    %v3617 = vadd.f32 %v3587, %v3610
    %v3618 = vadd.f32 %v3592, %v3610
    %v3619 = vadd.f32 %v3597, %v3610
    %v3620 = vadd.f32 %v3602, %v3610
    %v3621 = vadd.f32 %v3607, %v3610
    %3623 = vrot.lane.b32.xlu0 %v3610, 16
    %v3624 = vpop.permute.xlu0 %3623
    %v3626 = vadd.f32 %v3557, %v3624
    %v3627 = vadd.f32 %v3562, %v3624
    %v3628 = vadd.f32 %v3567, %v3624
    %v3629 = vadd.f32 %v3572, %v3624
    %v3630 = vadd.f32 %v3577, %v3624
    %v3631 = vadd.f32 %v3582, %v3624
    %v3632 = vadd.f32 %v3587, %v3624
    %v3633 = vadd.f32 %v3592, %v3624
    %v3634 = vadd.f32 %v3597, %v3624
    %v3635 = vadd.f32 %v3602, %v3624
    %v3636 = vadd.f32 %v3607, %v3624
    %v3637 = vxor.u32 %v3611, 2147483648
    %v3638 = vxor.u32 %v3612, 2147483648
    %v3639 = vxor.u32 %v3613, 2147483648
    %v3640 = vxor.u32 %v3614, 2147483648
    %v3641 = vxor.u32 %v3615, 2147483648
    %v3642 = vxor.u32 %v3616, 2147483648
    %v3643 = vxor.u32 %v3617, 2147483648
    %v3644 = vxor.u32 %v3618, 2147483648
    %v3645 = vxor.u32 %v3619, 2147483648
    %v3646 = vxor.u32 %v3620, 2147483648
    %v3647 = vxor.u32 %v3621, 2147483648
    %v3648 = vmul.f32 %v3637, 1.442695
    %v3649 = vpow.pop %v3648
    %v3650 = vmul.f32 %v3638, 1.442695
    %v3651 = vpow.pop %v3650
    %v3652 = vmul.f32 %v3639, 1.442695
    %v3653 = vpow.pop %v3652
    %v3654 = vmul.f32 %v3640, 1.442695
    %v3655 = vpow.pop %v3654
    %v3656 = vmul.f32 %v3641, 1.442695
    %v3657 = vpow.pop %v3656
    %v3658 = vmul.f32 %v3642, 1.442695
    %v3659 = vpow.pop %v3658
    %v3660 = vmul.f32 %v3643, 1.442695
    %v3661 = vpow.pop %v3660
    %v3662 = vmul.f32 %v3644, 1.442695
    %v3663 = vpow.pop %v3662
    %v3664 = vmul.f32 %v3645, 1.442695
    %v3665 = vpow.pop %v3664
    %v3666 = vmul.f32 %v3646, 1.442695
    %v3667 = vpow.pop %v3666
    %v3668 = vmul.f32 %v3647, 1.442695
    %v3669 = vpow.pop %v3668
    %v3670 = vadd.f32 %v3649, 1.0
    %v3671 = vadd.f32 %v3651, 1.0
    %v3672 = vadd.f32 %v3653, 1.0
    %v3673 = vadd.f32 %v3655, 1.0
    %v3674 = vadd.f32 %v3657, 1.0
    %v3675 = vadd.f32 %v3659, 1.0
    %v3676 = vadd.f32 %v3661, 1.0
    %v3677 = vadd.f32 %v3663, 1.0
    %v3678 = vadd.f32 %v3665, 1.0
    %v3679 = vadd.f32 %v3667, 1.0
    %v3680 = vadd.f32 %v3669, 1.0
    %v3681 = vrcp.pop %v3670
    %v3682 = vmul.f32 1.0, %v3681
    %v3683 = vrcp.pop %v3671
    %v3684 = vmul.f32 1.0, %v3683
    %v3685 = vrcp.pop %v3672
    %v3686 = vmul.f32 1.0, %v3685
    %v3687 = vrcp.pop %v3673
    %v3688 = vmul.f32 1.0, %v3687
    %v3689 = vrcp.pop %v3674
    %v3690 = vmul.f32 1.0, %v3689
    %v3691 = vrcp.pop %v3675
    %v3692 = vmul.f32 1.0, %v3691
    %v3693 = vrcp.pop %v3676
    %v3694 = vmul.f32 1.0, %v3693
    %v3695 = vrcp.pop %v3677
    %v3696 = vmul.f32 1.0, %v3695
    %v3697 = vrcp.pop %v3678
    %v3698 = vmul.f32 1.0, %v3697
    %v3699 = vrcp.pop %v3679
    %v3700 = vmul.f32 1.0, %v3699
    %v3701 = vrcp.pop %v3680
    %v3702 = vmul.f32 1.0, %v3701
    %v3703 = vxor.u32 %v3626, 2147483648
    %v3704 = vxor.u32 %v3627, 2147483648
    %v3705 = vxor.u32 %v3628, 2147483648
    %v3706 = vxor.u32 %v3629, 2147483648
    %v3707 = vxor.u32 %v3630, 2147483648
    %v3708 = vxor.u32 %v3631, 2147483648
    %v3709 = vxor.u32 %v3632, 2147483648
    %v3710 = vxor.u32 %v3633, 2147483648
    %v3711 = vxor.u32 %v3634, 2147483648
    %v3712 = vxor.u32 %v3635, 2147483648
    %v3713 = vxor.u32 %v3636, 2147483648
    %v3714 = vmul.f32 %v3703, 1.442695
    %v3715 = vpow.pop %v3714
    %v3716 = vmul.f32 %v3704, 1.442695
    %v3717 = vpow.pop %v3716
    %v3718 = vmul.f32 %v3705, 1.442695
    %v3719 = vpow.pop %v3718
    %v3720 = vmul.f32 %v3706, 1.442695
    %v3721 = vpow.pop %v3720
    %v3722 = vmul.f32 %v3707, 1.442695
    %v3723 = vpow.pop %v3722
    %v3724 = vmul.f32 %v3708, 1.442695
    %v3725 = vpow.pop %v3724
    %v3726 = vmul.f32 %v3709, 1.442695
    %v3727 = vpow.pop %v3726
    %v3728 = vmul.f32 %v3710, 1.442695
    %v3729 = vpow.pop %v3728
    %v3730 = vmul.f32 %v3711, 1.442695
    %v3731 = vpow.pop %v3730
    %v3732 = vmul.f32 %v3712, 1.442695
    %v3733 = vpow.pop %v3732
    %v3734 = vmul.f32 %v3713, 1.442695
    %v3735 = vpow.pop %v3734
    %v3736 = vadd.f32 %v3715, 1.0
    %v3737 = vadd.f32 %v3717, 1.0
    %v3738 = vadd.f32 %v3719, 1.0
    %v3739 = vadd.f32 %v3721, 1.0
    %v3740 = vadd.f32 %v3723, 1.0
    %v3741 = vadd.f32 %v3725, 1.0
    %v3742 = vadd.f32 %v3727, 1.0
    %v3743 = vadd.f32 %v3729, 1.0
    %v3744 = vadd.f32 %v3731, 1.0
    %v3745 = vadd.f32 %v3733, 1.0
    %v3746 = vadd.f32 %v3735, 1.0
    %v3747 = vrcp.pop %v3736
    %v3748 = vmul.f32 1.0, %v3747
    %v3749 = vrcp.pop %v3737
    %v3750 = vmul.f32 1.0, %v3749
    %v3751 = vrcp.pop %v3738
    %v3752 = vmul.f32 1.0, %v3751
    %v3753 = vrcp.pop %v3739
    %v3754 = vmul.f32 1.0, %v3753
    %v3755 = vrcp.pop %v3740
    %v3756 = vmul.f32 1.0, %v3755
    %v3757 = vrcp.pop %v3741
    %v3758 = vmul.f32 1.0, %v3757
    %v3759 = vrcp.pop %v3742
    %v3760 = vmul.f32 1.0, %v3759
    %v3761 = vrcp.pop %v3743
    %v3762 = vmul.f32 1.0, %v3761
    %v3763 = vrcp.pop %v3744
    %v3764 = vmul.f32 1.0, %v3763
    %v3765 = vrcp.pop %v3745
    %v3766 = vmul.f32 1.0, %v3765
    %v3767 = vrcp.pop %v3746
    %v3768 = vmul.f32 1.0, %v3767
    %s3769 = smul.u32 2, 37
    %s3770 = smul.u32 %s3769, 7
    %s3771 = sshll.u32 %s3770, 4
    %3772 = dma.done [#allocation5], %s3771
    %v3773 = vld [vmem:[#allocation4] sm:$0xff]
    %v3774 = vld [vmem:[#allocation4 + $0x8] sm:$0x3f]
    %v3775 = vld [vmem:[#allocation4 + $0xe] sm:$0xff]
    %v3776 = vld [vmem:[#allocation4 + $0x16] sm:$0x3f]
    %v3777 = vld [vmem:[#allocation4 + $0x1c] sm:$0xff]
    %v3778 = vld [vmem:[#allocation4 + $0x24] sm:$0x3f]
    %v3779 = vld [vmem:[#allocation4 + $0x2a] sm:$0xff]
    %v3780 = vld [vmem:[#allocation4 + $0x32] sm:$0x3f]
    %v3781 = vld [vmem:[#allocation4 + $0x38] sm:$0xff]
    %v3782 = vld [vmem:[#allocation4 + $0x40] sm:$0x3f]
    %v3783 = vld [vmem:[#allocation4 + $0x46] sm:$0xff]
    %v3784 = vld [vmem:[#allocation4 + $0x4e] sm:$0x3f]
    %v3785 = vld [vmem:[#allocation4 + $0x54] sm:$0xff]
    %v3786 = vld [vmem:[#allocation4 + $0x5c] sm:$0x3f]
    %v3787 = vld [vmem:[#allocation4 + $0x62] sm:$0xff]
    %v3788 = vld [vmem:[#allocation4 + $0x6a] sm:$0x3f]
    %v3789 = vld [vmem:[#allocation4 + $0x70] sm:$0xff]
    %v3790 = vld [vmem:[#allocation4 + $0x78] sm:$0x3f]
    %v3791 = vld [vmem:[#allocation4 + $0x7e] sm:$0xff]
    %v3792 = vld [vmem:[#allocation4 + $0x86] sm:$0x3f]
    %v3793 = vld [vmem:[#allocation4 + $0x8c] sm:$0xff]
    %v3794 = vld [vmem:[#allocation4 + $0x94] sm:$0x3f]
    %v3795 = vld [vmem:[#allocation4 + $0x9a] sm:$0xff]
    %v3796 = vld [vmem:[#allocation4 + $0xa2] sm:$0x3f]
    %v3797 = vld [vmem:[#allocation4 + $0xa8] sm:$0xff]
    %v3798 = vld [vmem:[#allocation4 + $0xb0] sm:$0x3f]
    %v3799 = vld [vmem:[#allocation4 + $0xb6] sm:$0xff]
    %v3800 = vld [vmem:[#allocation4 + $0xbe] sm:$0x3f]
    %v3801 = vld [vmem:[#allocation4 + $0xc4] sm:$0xff]
    %v3802 = vld [vmem:[#allocation4 + $0xcc] sm:$0x3f]
    %v3803 = vld [vmem:[#allocation4 + $0xd2] sm:$0xff]
    %v3804 = vld [vmem:[#allocation4 + $0xda] sm:$0x3f]
    %v3805 = vld [vmem:[#allocation4 + $0xe0] sm:$0xff]
    %v3806 = vld [vmem:[#allocation4 + $0xe8] sm:$0x3f]
    %v3807 = vld [vmem:[#allocation4 + $0xee] sm:$0xff]
    %v3808 = vld [vmem:[#allocation4 + $0xf6] sm:$0x3f]
    %v3809 = vld [vmem:[#allocation4 + $0xfc] sm:$0xff]
    %v3810 = vld [vmem:[#allocation4 + $0x104] sm:$0x3f]
    %v3811 = vld [vmem:[#allocation4 + $0x10a] sm:$0xff]
    %v3812 = vld [vmem:[#allocation4 + $0x112] sm:$0x3f]
    %v3813 = vld [vmem:[#allocation4 + $0x118] sm:$0xff]
    %v3814 = vld [vmem:[#allocation4 + $0x120] sm:$0x3f]
    %v3815 = vld [vmem:[#allocation4 + $0x126] sm:$0xff]
    %v3816 = vld [vmem:[#allocation4 + $0x12e] sm:$0x3f]
    %v3817 = vld [vmem:[#allocation4 + $0x134] sm:$0xff]
    %v3818 = vld [vmem:[#allocation4 + $0x13c] sm:$0x3f]
    %v3819 = vld [vmem:[#allocation4 + $0x142] sm:$0xff]
    %v3820 = vld [vmem:[#allocation4 + $0x14a] sm:$0x3f]
    %v3821 = vld [vmem:[#allocation4 + $0x150] sm:$0xff]
    %v3822 = vld [vmem:[#allocation4 + $0x158] sm:$0x3f]
    %v3823 = vld [vmem:[#allocation4 + $0x15e] sm:$0xff]
    %v3824 = vld [vmem:[#allocation4 + $0x166] sm:$0x3f]
    %v3825 = vld [vmem:[#allocation4 + $0x16c] sm:$0xff]
    %v3826 = vld [vmem:[#allocation4 + $0x174] sm:$0x3f]
    %v3827 = vld [vmem:[#allocation4 + $0x17a] sm:$0xff]
    %v3828 = vld [vmem:[#allocation4 + $0x182] sm:$0x3f]
    %v3829 = vld [vmem:[#allocation4 + $0x188] sm:$0xff]
    %v3830 = vld [vmem:[#allocation4 + $0x190] sm:$0x3f]
    %v3831 = vld [vmem:[#allocation4 + $0x196] sm:$0xff]
    %v3832 = vld [vmem:[#allocation4 + $0x19e] sm:$0x3f]
    %v3833 = vld [vmem:[#allocation4 + $0x1a4] sm:$0xff]
    %v3834 = vld [vmem:[#allocation4 + $0x1ac] sm:$0x3f]
    %v3835 = vld [vmem:[#allocation4 + $0x1b2] sm:$0xff]
    %v3836 = vld [vmem:[#allocation4 + $0x1ba] sm:$0x3f]
    %v3837 = vld [vmem:[#allocation4 + $0x1c0] sm:$0xff]
    %v3838 = vld [vmem:[#allocation4 + $0x1c8] sm:$0x3f]
    %v3839 = vld [vmem:[#allocation4 + $0x1ce] sm:$0xff]
    %v3840 = vld [vmem:[#allocation4 + $0x1d6] sm:$0x3f]
    %v3841 = vld [vmem:[#allocation4 + $0x1dc] sm:$0xff]
    %v3842 = vld [vmem:[#allocation4 + $0x1e4] sm:$0x3f]
    %v3843 = vld [vmem:[#allocation4 + $0x1ea] sm:$0xff]
    %v3844 = vld [vmem:[#allocation4 + $0x1f2] sm:$0x3f]
    %v3845 = vld [vmem:[#allocation4 + $0x1f8] sm:$0x55]
    %v3846 = vld [vmem:[#allocation4 + $0x200] sm:$0x15]
    %v3847 = vunpack.c.0.s8 %v3773
    %v3848 = vunpack.c.1.s8 %v3773
    %v3849 = vunpack.c.2.s8 %v3773
    %v3850 = vunpack.c.3.s8 %v3773
    %v3851 = vunpack.c.0.s8 %v3774
    %v3852 = vunpack.c.1.s8 %v3774
    %v3853 = vunpack.c.2.s8 %v3774
    %v3854 = vunpack.c.0.s8 %v3775
    %v3855 = vunpack.c.1.s8 %v3775
    %v3856 = vunpack.c.2.s8 %v3775
    %v3857 = vunpack.c.3.s8 %v3775
    %v3858 = vunpack.c.0.s8 %v3776
    %v3859 = vunpack.c.1.s8 %v3776
    %v3860 = vunpack.c.2.s8 %v3776
    %v3861 = vunpack.c.0.s8 %v3777
    %v3862 = vunpack.c.1.s8 %v3777
    %v3863 = vunpack.c.2.s8 %v3777
    %v3864 = vunpack.c.3.s8 %v3777
    %v3865 = vunpack.c.0.s8 %v3778
    %v3866 = vunpack.c.1.s8 %v3778
    %v3867 = vunpack.c.2.s8 %v3778
    %v3868 = vunpack.c.0.s8 %v3779
    %v3869 = vunpack.c.1.s8 %v3779
    %v3870 = vunpack.c.2.s8 %v3779
    %v3871 = vunpack.c.3.s8 %v3779
    %v3872 = vunpack.c.0.s8 %v3780
    %v3873 = vunpack.c.1.s8 %v3780
    %v3874 = vunpack.c.2.s8 %v3780
    %v3875 = vunpack.c.0.s8 %v3781
    %v3876 = vunpack.c.1.s8 %v3781
    %v3877 = vunpack.c.2.s8 %v3781
    %v3878 = vunpack.c.3.s8 %v3781
    %v3879 = vunpack.c.0.s8 %v3782
    %v3880 = vunpack.c.1.s8 %v3782
    %v3881 = vunpack.c.2.s8 %v3782
    %v3882 = vunpack.c.0.s8 %v3783
    %v3883 = vunpack.c.1.s8 %v3783
    %v3884 = vunpack.c.2.s8 %v3783
    %v3885 = vunpack.c.3.s8 %v3783
    %v3886 = vunpack.c.0.s8 %v3784
    %v3887 = vunpack.c.1.s8 %v3784
    %v3888 = vunpack.c.2.s8 %v3784
    %v3889 = vunpack.c.0.s8 %v3785
    %v3890 = vunpack.c.1.s8 %v3785
    %v3891 = vunpack.c.2.s8 %v3785
    %v3892 = vunpack.c.3.s8 %v3785
    %v3893 = vunpack.c.0.s8 %v3786
    %v3894 = vunpack.c.1.s8 %v3786
    %v3895 = vunpack.c.2.s8 %v3786
    %v3896 = vunpack.c.0.s8 %v3787
    %v3897 = vunpack.c.1.s8 %v3787
    %v3898 = vunpack.c.2.s8 %v3787
    %v3899 = vunpack.c.3.s8 %v3787
    %v3900 = vunpack.c.0.s8 %v3788
    %v3901 = vunpack.c.1.s8 %v3788
    %v3902 = vunpack.c.2.s8 %v3788
    %v3903 = vunpack.c.0.s8 %v3789
    %v3904 = vunpack.c.1.s8 %v3789
    %v3905 = vunpack.c.2.s8 %v3789
    %v3906 = vunpack.c.3.s8 %v3789
    %v3907 = vunpack.c.0.s8 %v3790
    %v3908 = vunpack.c.1.s8 %v3790
    %v3909 = vunpack.c.2.s8 %v3790
    %v3910 = vunpack.c.0.s8 %v3791
    %v3911 = vunpack.c.1.s8 %v3791
    %v3912 = vunpack.c.2.s8 %v3791
    %v3913 = vunpack.c.3.s8 %v3791
    %v3914 = vunpack.c.0.s8 %v3792
    %v3915 = vunpack.c.1.s8 %v3792
    %v3916 = vunpack.c.2.s8 %v3792
    %v3917 = vunpack.c.0.s8 %v3793
    %v3918 = vunpack.c.1.s8 %v3793
    %v3919 = vunpack.c.2.s8 %v3793
    %v3920 = vunpack.c.3.s8 %v3793
    %v3921 = vunpack.c.0.s8 %v3794
    %v3922 = vunpack.c.1.s8 %v3794
    %v3923 = vunpack.c.2.s8 %v3794
    %v3924 = vunpack.c.0.s8 %v3795
    %v3925 = vunpack.c.1.s8 %v3795
    %v3926 = vunpack.c.2.s8 %v3795
    %v3927 = vunpack.c.3.s8 %v3795
    %v3928 = vunpack.c.0.s8 %v3796
    %v3929 = vunpack.c.1.s8 %v3796
    %v3930 = vunpack.c.2.s8 %v3796
    %v3931 = vunpack.c.0.s8 %v3797
    %v3932 = vunpack.c.1.s8 %v3797
    %v3933 = vunpack.c.2.s8 %v3797
    %v3934 = vunpack.c.3.s8 %v3797
    %v3935 = vunpack.c.0.s8 %v3798
    %v3936 = vunpack.c.1.s8 %v3798
    %v3937 = vunpack.c.2.s8 %v3798
    %v3938 = vunpack.c.0.s8 %v3799
    %v3939 = vunpack.c.1.s8 %v3799
    %v3940 = vunpack.c.2.s8 %v3799
    %v3941 = vunpack.c.3.s8 %v3799
    %v3942 = vunpack.c.0.s8 %v3800
    %v3943 = vunpack.c.1.s8 %v3800
    %v3944 = vunpack.c.2.s8 %v3800
    %v3945 = vunpack.c.0.s8 %v3801
    %v3946 = vunpack.c.1.s8 %v3801
    %v3947 = vunpack.c.2.s8 %v3801
    %v3948 = vunpack.c.3.s8 %v3801
    %v3949 = vunpack.c.0.s8 %v3802
    %v3950 = vunpack.c.1.s8 %v3802
    %v3951 = vunpack.c.2.s8 %v3802
    %v3952 = vunpack.c.0.s8 %v3803
    %v3953 = vunpack.c.1.s8 %v3803
    %v3954 = vunpack.c.2.s8 %v3803
    %v3955 = vunpack.c.3.s8 %v3803
    %v3956 = vunpack.c.0.s8 %v3804
    %v3957 = vunpack.c.1.s8 %v3804
    %v3958 = vunpack.c.2.s8 %v3804
    %v3959 = vunpack.c.0.s8 %v3805
    %v3960 = vunpack.c.1.s8 %v3805
    %v3961 = vunpack.c.2.s8 %v3805
    %v3962 = vunpack.c.3.s8 %v3805
    %v3963 = vunpack.c.0.s8 %v3806
    %v3964 = vunpack.c.1.s8 %v3806
    %v3965 = vunpack.c.2.s8 %v3806
    %v3966 = vunpack.c.0.s8 %v3807
    %v3967 = vunpack.c.1.s8 %v3807
    %v3968 = vunpack.c.2.s8 %v3807
    %v3969 = vunpack.c.3.s8 %v3807
    %v3970 = vunpack.c.0.s8 %v3808
    %v3971 = vunpack.c.1.s8 %v3808
    %v3972 = vunpack.c.2.s8 %v3808
    %v3973 = vunpack.c.0.s8 %v3809
    %v3974 = vunpack.c.1.s8 %v3809
    %v3975 = vunpack.c.2.s8 %v3809
    %v3976 = vunpack.c.3.s8 %v3809
    %v3977 = vunpack.c.0.s8 %v3810
    %v3978 = vunpack.c.1.s8 %v3810
    %v3979 = vunpack.c.2.s8 %v3810
    %v3980 = vunpack.c.0.s8 %v3811
    %v3981 = vunpack.c.1.s8 %v3811
    %v3982 = vunpack.c.2.s8 %v3811
    %v3983 = vunpack.c.3.s8 %v3811
    %v3984 = vunpack.c.0.s8 %v3812
    %v3985 = vunpack.c.1.s8 %v3812
    %v3986 = vunpack.c.2.s8 %v3812
    %v3987 = vunpack.c.0.s8 %v3813
    %v3988 = vunpack.c.1.s8 %v3813
    %v3989 = vunpack.c.2.s8 %v3813
    %v3990 = vunpack.c.3.s8 %v3813
    %v3991 = vunpack.c.0.s8 %v3814
    %v3992 = vunpack.c.1.s8 %v3814
    %v3993 = vunpack.c.2.s8 %v3814
    %v3994 = vunpack.c.0.s8 %v3815
    %v3995 = vunpack.c.1.s8 %v3815
    %v3996 = vunpack.c.2.s8 %v3815
    %v3997 = vunpack.c.3.s8 %v3815
    %v3998 = vunpack.c.0.s8 %v3816
    %v3999 = vunpack.c.1.s8 %v3816
    %v4000 = vunpack.c.2.s8 %v3816
    %v4001 = vunpack.c.0.s8 %v3817
    %v4002 = vunpack.c.1.s8 %v3817
    %v4003 = vunpack.c.2.s8 %v3817
    %v4004 = vunpack.c.3.s8 %v3817
    %v4005 = vunpack.c.0.s8 %v3818
    %v4006 = vunpack.c.1.s8 %v3818
    %v4007 = vunpack.c.2.s8 %v3818
    %v4008 = vunpack.c.0.s8 %v3819
    %v4009 = vunpack.c.1.s8 %v3819
    %v4010 = vunpack.c.2.s8 %v3819
    %v4011 = vunpack.c.3.s8 %v3819
    %v4012 = vunpack.c.0.s8 %v3820
    %v4013 = vunpack.c.1.s8 %v3820
    %v4014 = vunpack.c.2.s8 %v3820
    %v4015 = vunpack.c.0.s8 %v3821
    %v4016 = vunpack.c.1.s8 %v3821
    %v4017 = vunpack.c.2.s8 %v3821
    %v4018 = vunpack.c.3.s8 %v3821
    %v4019 = vunpack.c.0.s8 %v3822
    %v4020 = vunpack.c.1.s8 %v3822
    %v4021 = vunpack.c.2.s8 %v3822
    %v4022 = vunpack.c.0.s8 %v3823
    %v4023 = vunpack.c.1.s8 %v3823
    %v4024 = vunpack.c.2.s8 %v3823
    %v4025 = vunpack.c.3.s8 %v3823
    %v4026 = vunpack.c.0.s8 %v3824
    %v4027 = vunpack.c.1.s8 %v3824
    %v4028 = vunpack.c.2.s8 %v3824
    %v4029 = vunpack.c.0.s8 %v3825
    %v4030 = vunpack.c.1.s8 %v3825
    %v4031 = vunpack.c.2.s8 %v3825
    %v4032 = vunpack.c.3.s8 %v3825
    %v4033 = vunpack.c.0.s8 %v3826
    %v4034 = vunpack.c.1.s8 %v3826
    %v4035 = vunpack.c.2.s8 %v3826
    %v4036 = vunpack.c.0.s8 %v3827
    %v4037 = vunpack.c.1.s8 %v3827
    %v4038 = vunpack.c.2.s8 %v3827
    %v4039 = vunpack.c.3.s8 %v3827
    %v4040 = vunpack.c.0.s8 %v3828
    %v4041 = vunpack.c.1.s8 %v3828
    %v4042 = vunpack.c.2.s8 %v3828
    %v4043 = vunpack.c.0.s8 %v3829
    %v4044 = vunpack.c.1.s8 %v3829
    %v4045 = vunpack.c.2.s8 %v3829
    %v4046 = vunpack.c.3.s8 %v3829
    %v4047 = vunpack.c.0.s8 %v3830
    %v4048 = vunpack.c.1.s8 %v3830
    %v4049 = vunpack.c.2.s8 %v3830
    %v4050 = vunpack.c.0.s8 %v3831
    %v4051 = vunpack.c.1.s8 %v3831
    %v4052 = vunpack.c.2.s8 %v3831
    %v4053 = vunpack.c.3.s8 %v3831
    %v4054 = vunpack.c.0.s8 %v3832
    %v4055 = vunpack.c.1.s8 %v3832
    %v4056 = vunpack.c.2.s8 %v3832
    %v4057 = vunpack.c.0.s8 %v3833
    %v4058 = vunpack.c.1.s8 %v3833
    %v4059 = vunpack.c.2.s8 %v3833
    %v4060 = vunpack.c.3.s8 %v3833
    %v4061 = vunpack.c.0.s8 %v3834
    %v4062 = vunpack.c.1.s8 %v3834
    %v4063 = vunpack.c.2.s8 %v3834
    %v4064 = vunpack.c.0.s8 %v3835
    %v4065 = vunpack.c.1.s8 %v3835
    %v4066 = vunpack.c.2.s8 %v3835
    %v4067 = vunpack.c.3.s8 %v3835
    %v4068 = vunpack.c.0.s8 %v3836
    %v4069 = vunpack.c.1.s8 %v3836
    %v4070 = vunpack.c.2.s8 %v3836
    %v4071 = vunpack.c.0.s8 %v3837
    %v4072 = vunpack.c.1.s8 %v3837
    %v4073 = vunpack.c.2.s8 %v3837
    %v4074 = vunpack.c.3.s8 %v3837
    %v4075 = vunpack.c.0.s8 %v3838
    %v4076 = vunpack.c.1.s8 %v3838
    %v4077 = vunpack.c.2.s8 %v3838
    %v4078 = vunpack.c.0.s8 %v3839
    %v4079 = vunpack.c.1.s8 %v3839
    %v4080 = vunpack.c.2.s8 %v3839
    %v4081 = vunpack.c.3.s8 %v3839
    %v4082 = vunpack.c.0.s8 %v3840
    %v4083 = vunpack.c.1.s8 %v3840
    %v4084 = vunpack.c.2.s8 %v3840
    %v4085 = vunpack.c.0.s8 %v3841
    %v4086 = vunpack.c.1.s8 %v3841
    %v4087 = vunpack.c.2.s8 %v3841
    %v4088 = vunpack.c.3.s8 %v3841
    %v4089 = vunpack.c.0.s8 %v3842
    %v4090 = vunpack.c.1.s8 %v3842
    %v4091 = vunpack.c.2.s8 %v3842
    %v4092 = vunpack.c.0.s8 %v3843
    %v4093 = vunpack.c.1.s8 %v3843
    %v4094 = vunpack.c.2.s8 %v3843
    %v4095 = vunpack.c.3.s8 %v3843
    %v4096 = vunpack.c.0.s8 %v3844
    %v4097 = vunpack.c.1.s8 %v3844
    %v4098 = vunpack.c.2.s8 %v3844
    %v4099 = vunpack.c.0.s8 %v3845
    %v4100 = vunpack.c.1.s8 %v3845
    %v4101 = vunpack.c.2.s8 %v3845
    %v4102 = vunpack.c.3.s8 %v3845
    %v4103 = vunpack.c.0.s8 %v3846
    %v4104 = vunpack.c.1.s8 %v3846
    %v4105 = vunpack.c.2.s8 %v3846
    %v4106 = vcvt.s32.f32 %v3847
    %v4107 = vcvt.s32.f32 %v3848
    %v4108 = vcvt.s32.f32 %v3849
    %v4109 = vcvt.s32.f32 %v3850
    %v4110 = vcvt.s32.f32 %v3851
    %v4111 = vcvt.s32.f32 %v3852
    %v4112 = vcvt.s32.f32 %v3853
    %v4113 = vcvt.s32.f32 %v3854
    %v4114 = vcvt.s32.f32 %v3855
    %v4115 = vcvt.s32.f32 %v3856
    %v4116 = vcvt.s32.f32 %v3857
    %v4117 = vcvt.s32.f32 %v3858
    %v4118 = vcvt.s32.f32 %v3859
    %v4119 = vcvt.s32.f32 %v3860
    %v4120 = vcvt.s32.f32 %v3861
    %v4121 = vcvt.s32.f32 %v3862
    %v4122 = vcvt.s32.f32 %v3863
    %v4123 = vcvt.s32.f32 %v3864
    %v4124 = vcvt.s32.f32 %v3865
    %v4125 = vcvt.s32.f32 %v3866
    %v4126 = vcvt.s32.f32 %v3867
    %v4127 = vcvt.s32.f32 %v3868
    %v4128 = vcvt.s32.f32 %v3869
    %v4129 = vcvt.s32.f32 %v3870
    %v4130 = vcvt.s32.f32 %v3871
    %v4131 = vcvt.s32.f32 %v3872
    %v4132 = vcvt.s32.f32 %v3873
    %v4133 = vcvt.s32.f32 %v3874
    %v4134 = vcvt.s32.f32 %v3875
    %v4135 = vcvt.s32.f32 %v3876
    %v4136 = vcvt.s32.f32 %v3877
    %v4137 = vcvt.s32.f32 %v3878
    %v4138 = vcvt.s32.f32 %v3879
    %v4139 = vcvt.s32.f32 %v3880
    %v4140 = vcvt.s32.f32 %v3881
    %v4141 = vcvt.s32.f32 %v3882
    %v4142 = vcvt.s32.f32 %v3883
    %v4143 = vcvt.s32.f32 %v3884
    %v4144 = vcvt.s32.f32 %v3885
    %v4145 = vcvt.s32.f32 %v3886
    %v4146 = vcvt.s32.f32 %v3887
    %v4147 = vcvt.s32.f32 %v3888
    %v4148 = vcvt.s32.f32 %v3889
    %v4149 = vcvt.s32.f32 %v3890
    %v4150 = vcvt.s32.f32 %v3891
    %v4151 = vcvt.s32.f32 %v3892
    %v4152 = vcvt.s32.f32 %v3893
    %v4153 = vcvt.s32.f32 %v3894
    %v4154 = vcvt.s32.f32 %v3895
    %v4155 = vcvt.s32.f32 %v3896
    %v4156 = vcvt.s32.f32 %v3897
    %v4157 = vcvt.s32.f32 %v3898
    %v4158 = vcvt.s32.f32 %v3899
    %v4159 = vcvt.s32.f32 %v3900
    %v4160 = vcvt.s32.f32 %v3901
    %v4161 = vcvt.s32.f32 %v3902
    %v4162 = vcvt.s32.f32 %v3903
    %v4163 = vcvt.s32.f32 %v3904
    %v4164 = vcvt.s32.f32 %v3905
    %v4165 = vcvt.s32.f32 %v3906
    %v4166 = vcvt.s32.f32 %v3907
    %v4167 = vcvt.s32.f32 %v3908
    %v4168 = vcvt.s32.f32 %v3909
    %v4169 = vcvt.s32.f32 %v3910
    %v4170 = vcvt.s32.f32 %v3911
    %v4171 = vcvt.s32.f32 %v3912
    %v4172 = vcvt.s32.f32 %v3913
    %v4173 = vcvt.s32.f32 %v3914
    %v4174 = vcvt.s32.f32 %v3915
    %v4175 = vcvt.s32.f32 %v3916
    %v4176 = vcvt.s32.f32 %v3917
    %v4177 = vcvt.s32.f32 %v3918
    %v4178 = vcvt.s32.f32 %v3919
    %v4179 = vcvt.s32.f32 %v3920
    %v4180 = vcvt.s32.f32 %v3921
    %v4181 = vcvt.s32.f32 %v3922
    %v4182 = vcvt.s32.f32 %v3923
    %v4183 = vcvt.s32.f32 %v3924
    %v4184 = vcvt.s32.f32 %v3925
    %v4185 = vcvt.s32.f32 %v3926
    %v4186 = vcvt.s32.f32 %v3927
    %v4187 = vcvt.s32.f32 %v3928
    %v4188 = vcvt.s32.f32 %v3929
    %v4189 = vcvt.s32.f32 %v3930
    %v4190 = vcvt.s32.f32 %v3931
    %v4191 = vcvt.s32.f32 %v3932
    %v4192 = vcvt.s32.f32 %v3933
    %v4193 = vcvt.s32.f32 %v3934
    %v4194 = vcvt.s32.f32 %v3935
    %v4195 = vcvt.s32.f32 %v3936
    %v4196 = vcvt.s32.f32 %v3937
    %v4197 = vcvt.s32.f32 %v3938
    %v4198 = vcvt.s32.f32 %v3939
    %v4199 = vcvt.s32.f32 %v3940
    %v4200 = vcvt.s32.f32 %v3941
    %v4201 = vcvt.s32.f32 %v3942
    %v4202 = vcvt.s32.f32 %v3943
    %v4203 = vcvt.s32.f32 %v3944
    %v4204 = vcvt.s32.f32 %v3945
    %v4205 = vcvt.s32.f32 %v3946
    %v4206 = vcvt.s32.f32 %v3947
    %v4207 = vcvt.s32.f32 %v3948
    %v4208 = vcvt.s32.f32 %v3949
    %v4209 = vcvt.s32.f32 %v3950
    %v4210 = vcvt.s32.f32 %v3951
    %v4211 = vcvt.s32.f32 %v3952
    %v4212 = vcvt.s32.f32 %v3953
    %v4213 = vcvt.s32.f32 %v3954
    %v4214 = vcvt.s32.f32 %v3955
    %v4215 = vcvt.s32.f32 %v3956
    %v4216 = vcvt.s32.f32 %v3957
    %v4217 = vcvt.s32.f32 %v3958
    %v4218 = vcvt.s32.f32 %v3959
    %v4219 = vcvt.s32.f32 %v3960
    %v4220 = vcvt.s32.f32 %v3961
    %v4221 = vcvt.s32.f32 %v3962
    %v4222 = vcvt.s32.f32 %v3963
    %v4223 = vcvt.s32.f32 %v3964
    %v4224 = vcvt.s32.f32 %v3965
    %v4225 = vcvt.s32.f32 %v3966
    %v4226 = vcvt.s32.f32 %v3967
    %v4227 = vcvt.s32.f32 %v3968
    %v4228 = vcvt.s32.f32 %v3969
    %v4229 = vcvt.s32.f32 %v3970
    %v4230 = vcvt.s32.f32 %v3971
    %v4231 = vcvt.s32.f32 %v3972
    %v4232 = vcvt.s32.f32 %v3973
    %v4233 = vcvt.s32.f32 %v3974
    %v4234 = vcvt.s32.f32 %v3975
    %v4235 = vcvt.s32.f32 %v3976
    %v4236 = vcvt.s32.f32 %v3977
    %v4237 = vcvt.s32.f32 %v3978
    %v4238 = vcvt.s32.f32 %v3979
    %v4239 = vcvt.s32.f32 %v3980
    %v4240 = vcvt.s32.f32 %v3981
    %v4241 = vcvt.s32.f32 %v3982
    %v4242 = vcvt.s32.f32 %v3983
    %v4243 = vcvt.s32.f32 %v3984
    %v4244 = vcvt.s32.f32 %v3985
    %v4245 = vcvt.s32.f32 %v3986
    %v4246 = vcvt.s32.f32 %v3987
    %v4247 = vcvt.s32.f32 %v3988
    %v4248 = vcvt.s32.f32 %v3989
    %v4249 = vcvt.s32.f32 %v3990
    %v4250 = vcvt.s32.f32 %v3991
    %v4251 = vcvt.s32.f32 %v3992
    %v4252 = vcvt.s32.f32 %v3993
    %v4253 = vcvt.s32.f32 %v3994
    %v4254 = vcvt.s32.f32 %v3995
    %v4255 = vcvt.s32.f32 %v3996
    %v4256 = vcvt.s32.f32 %v3997
    %v4257 = vcvt.s32.f32 %v3998
    %v4258 = vcvt.s32.f32 %v3999
    %v4259 = vcvt.s32.f32 %v4000
    %v4260 = vcvt.s32.f32 %v4001
    %v4261 = vcvt.s32.f32 %v4002
    %v4262 = vcvt.s32.f32 %v4003
    %v4263 = vcvt.s32.f32 %v4004
    %v4264 = vcvt.s32.f32 %v4005
    %v4265 = vcvt.s32.f32 %v4006
    %v4266 = vcvt.s32.f32 %v4007
    %v4267 = vcvt.s32.f32 %v4008
    %v4268 = vcvt.s32.f32 %v4009
    %v4269 = vcvt.s32.f32 %v4010
    %v4270 = vcvt.s32.f32 %v4011
    %v4271 = vcvt.s32.f32 %v4012
    %v4272 = vcvt.s32.f32 %v4013
    %v4273 = vcvt.s32.f32 %v4014
    %v4274 = vcvt.s32.f32 %v4015
    %v4275 = vcvt.s32.f32 %v4016
    %v4276 = vcvt.s32.f32 %v4017
    %v4277 = vcvt.s32.f32 %v4018
    %v4278 = vcvt.s32.f32 %v4019
    %v4279 = vcvt.s32.f32 %v4020
    %v4280 = vcvt.s32.f32 %v4021
    %v4281 = vcvt.s32.f32 %v4022
    %v4282 = vcvt.s32.f32 %v4023
    %v4283 = vcvt.s32.f32 %v4024
    %v4284 = vcvt.s32.f32 %v4025
    %v4285 = vcvt.s32.f32 %v4026
    %v4286 = vcvt.s32.f32 %v4027
    %v4287 = vcvt.s32.f32 %v4028
    %v4288 = vcvt.s32.f32 %v4029
    %v4289 = vcvt.s32.f32 %v4030
    %v4290 = vcvt.s32.f32 %v4031
    %v4291 = vcvt.s32.f32 %v4032
    %v4292 = vcvt.s32.f32 %v4033
    %v4293 = vcvt.s32.f32 %v4034
    %v4294 = vcvt.s32.f32 %v4035
    %v4295 = vcvt.s32.f32 %v4036
    %v4296 = vcvt.s32.f32 %v4037
    %v4297 = vcvt.s32.f32 %v4038
    %v4298 = vcvt.s32.f32 %v4039
    %v4299 = vcvt.s32.f32 %v4040
    %v4300 = vcvt.s32.f32 %v4041
    %v4301 = vcvt.s32.f32 %v4042
    %v4302 = vcvt.s32.f32 %v4043
    %v4303 = vcvt.s32.f32 %v4044
    %v4304 = vcvt.s32.f32 %v4045
    %v4305 = vcvt.s32.f32 %v4046
    %v4306 = vcvt.s32.f32 %v4047
    %v4307 = vcvt.s32.f32 %v4048
    %v4308 = vcvt.s32.f32 %v4049
    %v4309 = vcvt.s32.f32 %v4050
    %v4310 = vcvt.s32.f32 %v4051
    %v4311 = vcvt.s32.f32 %v4052
    %v4312 = vcvt.s32.f32 %v4053
    %v4313 = vcvt.s32.f32 %v4054
    %v4314 = vcvt.s32.f32 %v4055
    %v4315 = vcvt.s32.f32 %v4056
    %v4316 = vcvt.s32.f32 %v4057
    %v4317 = vcvt.s32.f32 %v4058
    %v4318 = vcvt.s32.f32 %v4059
    %v4319 = vcvt.s32.f32 %v4060
    %v4320 = vcvt.s32.f32 %v4061
    %v4321 = vcvt.s32.f32 %v4062
    %v4322 = vcvt.s32.f32 %v4063
    %v4323 = vcvt.s32.f32 %v4064
    %v4324 = vcvt.s32.f32 %v4065
    %v4325 = vcvt.s32.f32 %v4066
    %v4326 = vcvt.s32.f32 %v4067
    %v4327 = vcvt.s32.f32 %v4068
    %v4328 = vcvt.s32.f32 %v4069
    %v4329 = vcvt.s32.f32 %v4070
    %v4330 = vcvt.s32.f32 %v4071
    %v4331 = vcvt.s32.f32 %v4072
    %v4332 = vcvt.s32.f32 %v4073
    %v4333 = vcvt.s32.f32 %v4074
    %v4334 = vcvt.s32.f32 %v4075
    %v4335 = vcvt.s32.f32 %v4076
    %v4336 = vcvt.s32.f32 %v4077
    %v4337 = vcvt.s32.f32 %v4078
    %v4338 = vcvt.s32.f32 %v4079
    %v4339 = vcvt.s32.f32 %v4080
    %v4340 = vcvt.s32.f32 %v4081
    %v4341 = vcvt.s32.f32 %v4082
    %v4342 = vcvt.s32.f32 %v4083
    %v4343 = vcvt.s32.f32 %v4084
    %v4344 = vcvt.s32.f32 %v4085
    %v4345 = vcvt.s32.f32 %v4086
    %v4346 = vcvt.s32.f32 %v4087
    %v4347 = vcvt.s32.f32 %v4088
    %v4348 = vcvt.s32.f32 %v4089
    %v4349 = vcvt.s32.f32 %v4090
    %v4350 = vcvt.s32.f32 %v4091
    %v4351 = vcvt.s32.f32 %v4092
    %v4352 = vcvt.s32.f32 %v4093
    %v4353 = vcvt.s32.f32 %v4094
    %v4354 = vcvt.s32.f32 %v4095
    %v4355 = vcvt.s32.f32 %v4096
    %v4356 = vcvt.s32.f32 %v4097
    %v4357 = vcvt.s32.f32 %v4098
    %v4358 = vcvt.s32.f32 %v4099
    %v4359 = vcvt.s32.f32 %v4100
    %v4360 = vcvt.s32.f32 %v4101
    %v4361 = vcvt.s32.f32 %v4102
    %v4362 = vcvt.s32.f32 %v4103
    %v4363 = vcvt.s32.f32 %v4104
    %v4364 = vcvt.s32.f32 %v4105
    %v4365 = vpack.c.bf16 %v3684, %v3682
    %v4366 = vpack.c.bf16 %v3688, %v3686
    %v4367 = vpack.c.bf16 %v3692, %v3690
    %v4368 = vpack.c.bf16 %v3696, %v3694
    %v4369 = vpack.c.bf16 %v3700, %v3698
    %v4370 = vpack.c.bf16 %v3702, %v3702
    %v4371 = vld [vmem:[#allocation16] sm:$0xff]
    %v4372 = vld [vmem:[#allocation16 + $0x8] sm:$0xff]
    %v4375 = vunpack.c.l.b16 %v4371
    %v4376 = vunpack.c.h.b16 %v4371
    %v4377 = vunpack.c.l.b16 %v4372
    %v4378 = vunpack.c.h.b16 %v4372
    %v4379 = vpack.c.b16 %v4377, %v4375
    %v4380 = vpack.c.b16 %v4378, %v4376
    %v4384 = vsel %vm2934, %v4365, 0
    %v4387 = vsel %vm2934, %v4366, 0
    %v4390 = vsel %vm2934, %v4367, 0
    %v4393 = vsel %vm2934, %v4368, 0
    %v4396 = vsel %vm2934, %v4369, 0
    %v4399 = vsel %vm2934, %v4370, 0
    %4401 = vmatprep.subr.bf16.mxu0 %v4380
    %4402 = vmatpush1.bf16.msra.mxu0 %v4379
    %4403 = vmatprep.subr.bf16.mxu0 0
    %4404 = vmatpush1.bf16.msra.mxu0 0
    %4405 = vmatprep.subr.bf16.mxu0 0
    %4406 = vmatpush1.bf16.msra.mxu0 0
    %4407 = vmatprep.subr.bf16.mxu0 0
    %4408 = vmatpush1.bf16.msra.mxu0 0
    %4409 = vmatprep.subr.bf16.mxu0 0
    %4410 = vmatpush1.bf16.msra.mxu0 0
    %4411 = vmatprep.subr.bf16.mxu0 0
    %4412 = vmatpush1.bf16.msra.mxu0 0
    %4413 = vmatprep.subr.bf16.mxu0 0
    %4414 = vmatpush1.bf16.msra.mxu0 0
    %4415 = vmatprep.subr.bf16.mxu0 0
    %4416 = vmatpush1.bf16.msra.mxu0 0
    %4417 = vmatprep.subr.bf16.mxu0 0
    %4418 = vmatpush1.bf16.msra.mxu0 0
    %4419 = vmatprep.subr.bf16.mxu0 0
    %4420 = vmatpush1.bf16.msra.mxu0 0
    %4421 = vmatprep.subr.bf16.mxu0 0
    %4422 = vmatpush1.bf16.msra.mxu0 0
    %4423 = vmatprep.subr.bf16.mxu0 0
    %4424 = vmatpush1.bf16.msra.mxu0 0
    %4425 = vmatprep.subr.bf16.mxu0 0
    %4426 = vmatpush1.bf16.msra.mxu0 0
    %4427 = vmatprep.subr.bf16.mxu0 0
    %4428 = vmatpush1.bf16.msra.mxu0 0
    %4429 = vmatprep.subr.bf16.mxu0 0
    %4430 = vmatpush1.bf16.msra.mxu0 0
    %4431 = vmatprep.subr.bf16.mxu0 0
    %4432 = vmatpush1.bf16.msra.mxu0 0
    %4433 = vmatprep.mubr.bf16.mxu0 0
    %4434 = vmatmul.mubr.bf16.gmra.mrb[0].mxu0 %v4384
    %v4435 = vpop.f32.mrb[0].mxu0
    %v4436 = vadd.f32 0.0, %v4435
    %v4437 = vpop.f32.mrb[0].mxu0
    %v4438 = vadd.f32 0.0, %v4437
    %v4439 = vpop.f32.mrb[0].mxu0
    %v4440 = vadd.f32 0.0, %v4439
    %v4441 = vpop.f32.mrb[0].mxu0
    %v4442 = vadd.f32 0.0, %v4441
    %4443 = vmatprep.mubr.bf16.mxu0 0
    %4444 = vmatmul.mubr.bf16.gmra.mrb[0].mxu0 %v4387
    %v4445 = vpop.f32.mrb[0].mxu0
    %v4446 = vadd.f32 0.0, %v4445
    %v4447 = vpop.f32.mrb[0].mxu0
    %v4448 = vadd.f32 0.0, %v4447
    %v4449 = vpop.f32.mrb[0].mxu0
    %v4450 = vadd.f32 0.0, %v4449
    %v4451 = vpop.f32.mrb[0].mxu0
    %v4452 = vadd.f32 0.0, %v4451
    %4453 = vmatprep.mubr.bf16.mxu0 0
    %4454 = vmatmul.mubr.bf16.gmra.mrb[0].mxu0 %v4390
    %v4455 = vpop.f32.mrb[0].mxu0
    %v4456 = vadd.f32 0.0, %v4455
    %v4457 = vpop.f32.mrb[0].mxu0
    %v4458 = vadd.f32 0.0, %v4457
    %v4459 = vpop.f32.mrb[0].mxu0
    %v4460 = vadd.f32 0.0, %v4459
    %v4461 = vpop.f32.mrb[0].mxu0
    %v4462 = vadd.f32 0.0, %v4461
    %4463 = vmatprep.mubr.bf16.mxu0 0
    %4464 = vmatmul.mubr.bf16.gmra.mrb[0].mxu0 %v4393
    %v4465 = vpop.f32.mrb[0].mxu0
    %v4466 = vadd.f32 0.0, %v4465
    %v4467 = vpop.f32.mrb[0].mxu0
    %v4468 = vadd.f32 0.0, %v4467
    %v4469 = vpop.f32.mrb[0].mxu0
    %v4470 = vadd.f32 0.0, %v4469
    %v4471 = vpop.f32.mrb[0].mxu0
    %v4472 = vadd.f32 0.0, %v4471
    %4473 = vmatprep.mubr.bf16.mxu0 0
    %4474 = vmatmul.mubr.bf16.gmra.mrb[0].mxu0 %v4396
    %v4475 = vpop.f32.mrb[0].mxu0
    %v4476 = vadd.f32 0.0, %v4475
    %v4477 = vpop.f32.mrb[0].mxu0
    %v4478 = vadd.f32 0.0, %v4477
    %v4479 = vpop.f32.mrb[0].mxu0
    %v4480 = vadd.f32 0.0, %v4479
    %v4481 = vpop.f32.mrb[0].mxu0
    %v4482 = vadd.f32 0.0, %v4481
    %4483 = vmatprep.mubr.bf16.mxu0 0
    %4484 = vmatmul.mubr.bf16.gmra.mrb[0].mxu0 %v4399
    %v4485 = vpop.f32.mrb[0].mxu0
    %v4486 = vadd.f32 0.0, %v4485
    %v4487 = vpop.f32.mrb[0].mxu0
    %v4488 = vadd.f32 0.0, %v4487
    %v4489 = vpop.f32.mrb[0].mxu0
    %v4490 = vpop.f32.mrb[0].mxu0
    %4491 = vdwg.mxu0
    %4492 = vst.msk [vmem:[#allocation3] sm:$0xff] %vm2934, %v4436
    %4493 = vst.msk [vmem:[#allocation3 + $0x8] sm:$0xff] %vm2934, %v4440
    %4494 = vst.msk [vmem:[#allocation3 + $0x10] sm:$0xff] %vm2934, %v4446
    %4495 = vst.msk [vmem:[#allocation3 + $0x18] sm:$0xff] %vm2934, %v4450
    %4496 = vst.msk [vmem:[#allocation3 + $0x20] sm:$0xff] %vm2934, %v4456
    %4497 = vst.msk [vmem:[#allocation3 + $0x28] sm:$0xff] %vm2934, %v4460
    %4498 = vst.msk [vmem:[#allocation3 + $0x30] sm:$0xff] %vm2934, %v4466
    %4499 = vst.msk [vmem:[#allocation3 + $0x38] sm:$0xff] %vm2934, %v4470
    %4500 = vst.msk [vmem:[#allocation3 + $0x40] sm:$0xff] %vm2934, %v4476
    %4501 = vst.msk [vmem:[#allocation3 + $0x48] sm:$0xff] %vm2934, %v4480
    %4502 = vst.msk [vmem:[#allocation3 + $0x50] sm:$0x1] %vm3283, %v4486
    %4514 = vrot.lane.b32.xlu0 %v4436, 112
    %v4515 = vpop.permute.xlu0 %4514
    %4516 = vrot.lane.b32.xlu0 %v4440, 112
    %v4517 = vpop.permute.xlu0 %4516
    %4518 = vrot.lane.b32.xlu0 %v4446, 112
    %v4519 = vpop.permute.xlu0 %4518
    %4520 = vrot.lane.b32.xlu0 %v4450, 112
    %v4521 = vpop.permute.xlu0 %4520
    %4522 = vrot.lane.b32.xlu0 %v4456, 112
    %v4523 = vpop.permute.xlu0 %4522
    %4524 = vrot.lane.b32.xlu0 %v4460, 112
    %v4525 = vpop.permute.xlu0 %4524
    %4526 = vrot.lane.b32.xlu0 %v4466, 112
    %v4527 = vpop.permute.xlu0 %4526
    %4528 = vrot.lane.b32.xlu0 %v4470, 112
    %v4529 = vpop.permute.xlu0 %4528
    %4530 = vrot.lane.b32.xlu0 %v4476, 112
    %v4531 = vpop.permute.xlu0 %4530
    %4532 = vrot.lane.b32.xlu0 %v4480, 112
    %v4533 = vpop.permute.xlu0 %4532
    %4534 = vrot.lane.b32.xlu0 %v4486, 112
    %v4535 = vpop.permute.xlu0 %4534
    %4547 = vst.msk [vmem:[#allocation3 + $0x58] sm:$0xff] %vm2934, %v4515
    %4548 = vst.msk [vmem:[#allocation3 + $0x60] sm:$0xff] %vm2934, %v4517
    %4549 = vst.msk [vmem:[#allocation3 + $0x68] sm:$0xff] %vm2934, %v4519
    %4550 = vst.msk [vmem:[#allocation3 + $0x70] sm:$0xff] %vm2934, %v4521
    %4551 = vst.msk [vmem:[#allocation3 + $0x78] sm:$0xff] %vm2934, %v4523
    %4552 = vst.msk [vmem:[#allocation3 + $0x80] sm:$0xff] %vm2934, %v4525
    %4553 = vst.msk [vmem:[#allocation3 + $0x88] sm:$0xff] %vm2934, %v4527
    %4554 = vst.msk [vmem:[#allocation3 + $0x90] sm:$0xff] %vm2934, %v4529
    %4555 = vst.msk [vmem:[#allocation3 + $0x98] sm:$0xff] %vm2934, %v4531
    %4556 = vst.msk [vmem:[#allocation3 + $0xa0] sm:$0xff] %vm2934, %v4533
    %4557 = vst.msk [vmem:[#allocation3 + $0xa8] sm:$0x1] %vm3283, %v4535
    %4558 = vrot.lane.b32.xlu0 %v4436, 96
    %v4559 = vpop.permute.xlu0 %4558
    %4560 = vrot.lane.b32.xlu0 %v4440, 96
    %v4561 = vpop.permute.xlu0 %4560
    %4562 = vrot.lane.b32.xlu0 %v4446, 96
    %v4563 = vpop.permute.xlu0 %4562
    %4564 = vrot.lane.b32.xlu0 %v4450, 96
    %v4565 = vpop.permute.xlu0 %4564
    %4566 = vrot.lane.b32.xlu0 %v4456, 96
    %v4567 = vpop.permute.xlu0 %4566
    %4568 = vrot.lane.b32.xlu0 %v4460, 96
    %v4569 = vpop.permute.xlu0 %4568
    %4570 = vrot.lane.b32.xlu0 %v4466, 96
    %v4571 = vpop.permute.xlu0 %4570
    %4572 = vrot.lane.b32.xlu0 %v4470, 96
    %v4573 = vpop.permute.xlu0 %4572
    %4574 = vrot.lane.b32.xlu0 %v4476, 96
    %v4575 = vpop.permute.xlu0 %4574
    %4576 = vrot.lane.b32.xlu0 %v4480, 96
    %v4577 = vpop.permute.xlu0 %4576
    %4578 = vrot.lane.b32.xlu0 %v4486, 96
    %v4579 = vpop.permute.xlu0 %4578
    %4591 = vst.msk [vmem:[#allocation3 + $0xb0] sm:$0xff] %vm2934, %v4559
    %4592 = vst.msk [vmem:[#allocation3 + $0xb8] sm:$0xff] %vm2934, %v4561
    %4593 = vst.msk [vmem:[#allocation3 + $0xc0] sm:$0xff] %vm2934, %v4563
    %4594 = vst.msk [vmem:[#allocation3 + $0xc8] sm:$0xff] %vm2934, %v4565
    %4595 = vst.msk [vmem:[#allocation3 + $0xd0] sm:$0xff] %vm2934, %v4567
    %4596 = vst.msk [vmem:[#allocation3 + $0xd8] sm:$0xff] %vm2934, %v4569
    %4597 = vst.msk [vmem:[#allocation3 + $0xe0] sm:$0xff] %vm2934, %v4571
    %4598 = vst.msk [vmem:[#allocation3 + $0xe8] sm:$0xff] %vm2934, %v4573
    %4599 = vst.msk [vmem:[#allocation3 + $0xf0] sm:$0xff] %vm2934, %v4575
    %4600 = vst.msk [vmem:[#allocation3 + $0xf8] sm:$0xff] %vm2934, %v4577
    %4601 = vst.msk [vmem:[#allocation3 + $0x100] sm:$0x1] %vm3283, %v4579
    %4602 = vrot.lane.b32.xlu0 %v4436, 80
    %v4603 = vpop.permute.xlu0 %4602
    %4604 = vrot.lane.b32.xlu0 %v4440, 80
    %v4605 = vpop.permute.xlu0 %4604
    %4606 = vrot.lane.b32.xlu0 %v4446, 80
    %v4607 = vpop.permute.xlu0 %4606
    %4608 = vrot.lane.b32.xlu0 %v4450, 80
    %v4609 = vpop.permute.xlu0 %4608
    %4610 = vrot.lane.b32.xlu0 %v4456, 80
    %v4611 = vpop.permute.xlu0 %4610
    %4612 = vrot.lane.b32.xlu0 %v4460, 80
    %v4613 = vpop.permute.xlu0 %4612
    %4614 = vrot.lane.b32.xlu0 %v4466, 80
    %v4615 = vpop.permute.xlu0 %4614
    %4616 = vrot.lane.b32.xlu0 %v4470, 80
    %v4617 = vpop.permute.xlu0 %4616
    %4618 = vrot.lane.b32.xlu0 %v4476, 80
    %v4619 = vpop.permute.xlu0 %4618
    %4620 = vrot.lane.b32.xlu0 %v4480, 80
    %v4621 = vpop.permute.xlu0 %4620
    %4622 = vrot.lane.b32.xlu0 %v4486, 80
    %v4623 = vpop.permute.xlu0 %4622
    %4635 = vst.msk [vmem:[#allocation3 + $0x108] sm:$0xff] %vm2934, %v4603
    %4636 = vst.msk [vmem:[#allocation3 + $0x110] sm:$0xff] %vm2934, %v4605
    %4637 = vst.msk [vmem:[#allocation3 + $0x118] sm:$0xff] %vm2934, %v4607
    %4638 = vst.msk [vmem:[#allocation3 + $0x120] sm:$0xff] %vm2934, %v4609
    %4639 = vst.msk [vmem:[#allocation3 + $0x128] sm:$0xff] %vm2934, %v4611
    %4640 = vst.msk [vmem:[#allocation3 + $0x130] sm:$0xff] %vm2934, %v4613
    %4641 = vst.msk [vmem:[#allocation3 + $0x138] sm:$0xff] %vm2934, %v4615
    %4642 = vst.msk [vmem:[#allocation3 + $0x140] sm:$0xff] %vm2934, %v4617
    %4643 = vst.msk [vmem:[#allocation3 + $0x148] sm:$0xff] %vm2934, %v4619
    %4644 = vst.msk [vmem:[#allocation3 + $0x150] sm:$0xff] %vm2934, %v4621
    %4645 = vst.msk [vmem:[#allocation3 + $0x158] sm:$0x1] %vm3283, %v4623
    %4646 = vrot.lane.b32.xlu0 %v4436, 64
    %v4647 = vpop.permute.xlu0 %4646
    %4648 = vrot.lane.b32.xlu0 %v4440, 64
    %v4649 = vpop.permute.xlu0 %4648
    %4650 = vrot.lane.b32.xlu0 %v4446, 64
    %v4651 = vpop.permute.xlu0 %4650
    %4652 = vrot.lane.b32.xlu0 %v4450, 64
    %v4653 = vpop.permute.xlu0 %4652
    %4654 = vrot.lane.b32.xlu0 %v4456, 64
    %v4655 = vpop.permute.xlu0 %4654
    %4656 = vrot.lane.b32.xlu0 %v4460, 64
    %v4657 = vpop.permute.xlu0 %4656
    %4658 = vrot.lane.b32.xlu0 %v4466, 64
    %v4659 = vpop.permute.xlu0 %4658
    %4660 = vrot.lane.b32.xlu0 %v4470, 64
    %v4661 = vpop.permute.xlu0 %4660
    %4662 = vrot.lane.b32.xlu0 %v4476, 64
    %v4663 = vpop.permute.xlu0 %4662
    %4664 = vrot.lane.b32.xlu0 %v4480, 64
    %v4665 = vpop.permute.xlu0 %4664
    %4666 = vrot.lane.b32.xlu0 %v4486, 64
    %v4667 = vpop.permute.xlu0 %4666
    %4679 = vst.msk [vmem:[#allocation3 + $0x160] sm:$0xff] %vm2934, %v4647
    %4680 = vst.msk [vmem:[#allocation3 + $0x168] sm:$0xff] %vm2934, %v4649
    %4681 = vst.msk [vmem:[#allocation3 + $0x170] sm:$0xff] %vm2934, %v4651
    %4682 = vst.msk [vmem:[#allocation3 + $0x178] sm:$0xff] %vm2934, %v4653
    %4683 = vst.msk [vmem:[#allocation3 + $0x180] sm:$0xff] %vm2934, %v4655
    %4684 = vst.msk [vmem:[#allocation3 + $0x188] sm:$0xff] %vm2934, %v4657
    %4685 = vst.msk [vmem:[#allocation3 + $0x190] sm:$0xff] %vm2934, %v4659
    %4686 = vst.msk [vmem:[#allocation3 + $0x198] sm:$0xff] %vm2934, %v4661
    %4687 = vst.msk [vmem:[#allocation3 + $0x1a0] sm:$0xff] %vm2934, %v4663
    %4688 = vst.msk [vmem:[#allocation3 + $0x1a8] sm:$0xff] %vm2934, %v4665
    %4689 = vst.msk [vmem:[#allocation3 + $0x1b0] sm:$0x1] %vm3283, %v4667
    %4690 = vrot.lane.b32.xlu0 %v4436, 48
    %v4691 = vpop.permute.xlu0 %4690
    %4692 = vrot.lane.b32.xlu0 %v4440, 48
    %v4693 = vpop.permute.xlu0 %4692
    %4694 = vrot.lane.b32.xlu0 %v4446, 48
    %v4695 = vpop.permute.xlu0 %4694
    %4696 = vrot.lane.b32.xlu0 %v4450, 48
    %v4697 = vpop.permute.xlu0 %4696
    %4698 = vrot.lane.b32.xlu0 %v4456, 48
    %v4699 = vpop.permute.xlu0 %4698
    %4700 = vrot.lane.b32.xlu0 %v4460, 48
    %v4701 = vpop.permute.xlu0 %4700
    %4702 = vrot.lane.b32.xlu0 %v4466, 48
    %v4703 = vpop.permute.xlu0 %4702
    %4704 = vrot.lane.b32.xlu0 %v4470, 48
    %v4705 = vpop.permute.xlu0 %4704
    %4706 = vrot.lane.b32.xlu0 %v4476, 48
    %v4707 = vpop.permute.xlu0 %4706
    %4708 = vrot.lane.b32.xlu0 %v4480, 48
    %v4709 = vpop.permute.xlu0 %4708
    %4710 = vrot.lane.b32.xlu0 %v4486, 48
    %v4711 = vpop.permute.xlu0 %4710
    %4723 = vst.msk [vmem:[#allocation3 + $0x1b8] sm:$0xff] %vm2934, %v4691
    %4724 = vst.msk [vmem:[#allocation3 + $0x1c0] sm:$0xff] %vm2934, %v4693
    %4725 = vst.msk [vmem:[#allocation3 + $0x1c8] sm:$0xff] %vm2934, %v4695
    %4726 = vst.msk [vmem:[#allocation3 + $0x1d0] sm:$0xff] %vm2934, %v4697
    %4727 = vst.msk [vmem:[#allocation3 + $0x1d8] sm:$0xff] %vm2934, %v4699
    %4728 = vst.msk [vmem:[#allocation3 + $0x1e0] sm:$0xff] %vm2934, %v4701
    %4729 = vst.msk [vmem:[#allocation3 + $0x1e8] sm:$0xff] %vm2934, %v4703
    %4730 = vst.msk [vmem:[#allocation3 + $0x1f0] sm:$0xff] %vm2934, %v4705
    %4731 = vst.msk [vmem:[#allocation3 + $0x1f8] sm:$0xff] %vm2934, %v4707
    %4732 = vst.msk [vmem:[#allocation3 + $0x200] sm:$0xff] %vm2934, %v4709
    %4733 = vst.msk [vmem:[#allocation3 + $0x208] sm:$0x1] %vm3283, %v4711
    %4734 = vrot.lane.b32.xlu0 %v4436, 32
    %v4735 = vpop.permute.xlu0 %4734
    %4736 = vrot.lane.b32.xlu0 %v4440, 32
    %v4737 = vpop.permute.xlu0 %4736
    %4738 = vrot.lane.b32.xlu0 %v4446, 32
    %v4739 = vpop.permute.xlu0 %4738
    %4740 = vrot.lane.b32.xlu0 %v4450, 32
    %v4741 = vpop.permute.xlu0 %4740
    %4742 = vrot.lane.b32.xlu0 %v4456, 32
    %v4743 = vpop.permute.xlu0 %4742
    %4744 = vrot.lane.b32.xlu0 %v4460, 32
    %v4745 = vpop.permute.xlu0 %4744
    %4746 = vrot.lane.b32.xlu0 %v4466, 32
    %v4747 = vpop.permute.xlu0 %4746
    %4748 = vrot.lane.b32.xlu0 %v4470, 32
    %v4749 = vpop.permute.xlu0 %4748
    %4750 = vrot.lane.b32.xlu0 %v4476, 32
    %v4751 = vpop.permute.xlu0 %4750
    %4752 = vrot.lane.b32.xlu0 %v4480, 32
    %v4753 = vpop.permute.xlu0 %4752
    %4754 = vrot.lane.b32.xlu0 %v4486, 32
    %v4755 = vpop.permute.xlu0 %4754
    %4767 = vst.msk [vmem:[#allocation3 + $0x210] sm:$0xff] %vm2934, %v4735
    %4768 = vst.msk [vmem:[#allocation3 + $0x218] sm:$0xff] %vm2934, %v4737
    %4769 = vst.msk [vmem:[#allocation3 + $0x220] sm:$0xff] %vm2934, %v4739
    %4770 = vst.msk [vmem:[#allocation3 + $0x228] sm:$0xff] %vm2934, %v4741
    %4771 = vst.msk [vmem:[#allocation3 + $0x230] sm:$0xff] %vm2934, %v4743
    %4772 = vst.msk [vmem:[#allocation3 + $0x238] sm:$0xff] %vm2934, %v4745
    %4773 = vst.msk [vmem:[#allocation3 + $0x240] sm:$0xff] %vm2934, %v4747
    %4774 = vst.msk [vmem:[#allocation3 + $0x248] sm:$0xff] %vm2934, %v4749
    %4775 = vst.msk [vmem:[#allocation3 + $0x250] sm:$0xff] %vm2934, %v4751
    %4776 = vst.msk [vmem:[#allocation3 + $0x258] sm:$0xff] %vm2934, %v4753
    %4777 = vst.msk [vmem:[#allocation3 + $0x260] sm:$0x1] %vm3283, %v4755
    %4778 = vrot.lane.b32.xlu0 %v4436, 16
    %v4779 = vpop.permute.xlu0 %4778
    %4780 = vrot.lane.b32.xlu0 %v4440, 16
    %v4781 = vpop.permute.xlu0 %4780
    %4782 = vrot.lane.b32.xlu0 %v4446, 16
    %v4783 = vpop.permute.xlu0 %4782
    %4784 = vrot.lane.b32.xlu0 %v4450, 16
    %v4785 = vpop.permute.xlu0 %4784
    %4786 = vrot.lane.b32.xlu0 %v4456, 16
    %v4787 = vpop.permute.xlu0 %4786
    %4788 = vrot.lane.b32.xlu0 %v4460, 16
    %v4789 = vpop.permute.xlu0 %4788
    %4790 = vrot.lane.b32.xlu0 %v4466, 16
    %v4791 = vpop.permute.xlu0 %4790
    %4792 = vrot.lane.b32.xlu0 %v4470, 16
    %v4793 = vpop.permute.xlu0 %4792
    %4794 = vrot.lane.b32.xlu0 %v4476, 16
    %v4795 = vpop.permute.xlu0 %4794
    %4796 = vrot.lane.b32.xlu0 %v4480, 16
    %v4797 = vpop.permute.xlu0 %4796
    %4798 = vrot.lane.b32.xlu0 %v4486, 16
    %v4799 = vpop.permute.xlu0 %4798
    %4811 = vst.msk [vmem:[#allocation3 + $0x268] sm:$0xff] %vm2934, %v4779
    %4812 = vst.msk [vmem:[#allocation3 + $0x270] sm:$0xff] %vm2934, %v4781
    %4813 = vst.msk [vmem:[#allocation3 + $0x278] sm:$0xff] %vm2934, %v4783
    %4814 = vst.msk [vmem:[#allocation3 + $0x280] sm:$0xff] %vm2934, %v4785
    %4815 = vst.msk [vmem:[#allocation3 + $0x288] sm:$0xff] %vm2934, %v4787
    %4816 = vst.msk [vmem:[#allocation3 + $0x290] sm:$0xff] %vm2934, %v4789
    %4817 = vst.msk [vmem:[#allocation3 + $0x298] sm:$0xff] %vm2934, %v4791
    %4818 = vst.msk [vmem:[#allocation3 + $0x2a0] sm:$0xff] %vm2934, %v4793
    %4819 = vst.msk [vmem:[#allocation3 + $0x2a8] sm:$0xff] %vm2934, %v4795
    %4820 = vst.msk [vmem:[#allocation3 + $0x2b0] sm:$0xff] %vm2934, %v4797
    %4821 = vst.msk [vmem:[#allocation3 + $0x2b8] sm:$0x1] %vm3283, %v4799
    %4822 = vst.msk [vmem:[#allocation3 + $0x2c0] sm:$0xff] %vm2934, %v4438
    %4823 = vst.msk [vmem:[#allocation3 + $0x2c8] sm:$0xff] %vm2934, %v4442
    %4824 = vst.msk [vmem:[#allocation3 + $0x2d0] sm:$0xff] %vm2934, %v4448
    %4825 = vst.msk [vmem:[#allocation3 + $0x2d8] sm:$0xff] %vm2934, %v4452
    %4826 = vst.msk [vmem:[#allocation3 + $0x2e0] sm:$0xff] %vm2934, %v4458
    %4827 = vst.msk [vmem:[#allocation3 + $0x2e8] sm:$0xff] %vm2934, %v4462
    %4828 = vst.msk [vmem:[#allocation3 + $0x2f0] sm:$0xff] %vm2934, %v4468
    %4829 = vst.msk [vmem:[#allocation3 + $0x2f8] sm:$0xff] %vm2934, %v4472
    %4830 = vst.msk [vmem:[#allocation3 + $0x300] sm:$0xff] %vm2934, %v4478
    %4831 = vst.msk [vmem:[#allocation3 + $0x308] sm:$0xff] %vm2934, %v4482
    %4832 = vst.msk [vmem:[#allocation3 + $0x310] sm:$0x1] %vm3283, %v4488
    %v4833 = vpack.c.bf16 %v3750, %v3748
    %v4834 = vpack.c.bf16 %v3754, %v3752
    %v4835 = vpack.c.bf16 %v3758, %v3756
    %v4836 = vpack.c.bf16 %v3762, %v3760
    %v4837 = vpack.c.bf16 %v3766, %v3764
    %v4838 = vpack.c.bf16 %v3768, %v3768
    %v4839 = vld [vmem:[#allocation16] sm:$0xff]
    %v4840 = vld [vmem:[#allocation16 + $0x8] sm:$0xff]
    %4847 = vrot.lane.b32.xlu0 %v4833, 112
    %v4848 = vpop.permute.xlu0 %4847
    %4849 = vrot.lane.b32.xlu0 %v4834, 112
    %v4850 = vpop.permute.xlu0 %4849
    %4851 = vrot.lane.b32.xlu0 %v4835, 112
    %v4852 = vpop.permute.xlu0 %4851
    %4853 = vrot.lane.b32.xlu0 %v4836, 112
    %v4854 = vpop.permute.xlu0 %4853
    %4855 = vrot.lane.b32.xlu0 %v4837, 112
    %v4856 = vpop.permute.xlu0 %4855
    %4857 = vrot.lane.b32.xlu0 %v4838, 112
    %v4858 = vpop.permute.xlu0 %4857
    %v4861 = vunpack.c.l.b16 %v4839
    %v4862 = vunpack.c.h.b16 %v4839
    %v4863 = vunpack.c.l.b16 %v4840
    %v4864 = vunpack.c.h.b16 %v4840
    %v4865 = vpack.c.b16 %v4863, %v4861
    %v4866 = vpack.c.b16 %v4864, %v4862
    %v4870 = vsel %vm2934, %v4848, 0
    %v4873 = vsel %vm2934, %v4850, 0
    %v4876 = vsel %vm2934, %v4852, 0
    %v4879 = vsel %vm2934, %v4854, 0
    %v4882 = vsel %vm2934, %v4856, 0
    %v4885 = vsel %vm2934, %v4858, 0
    %4887 = vmatprep.subr.bf16.mxu0 %v4866
    %4888 = vmatpush1.bf16.msra.mxu0 %v4865
    %4889 = vmatprep.subr.bf16.mxu0 0
    %4890 = vmatpush1.bf16.msra.mxu0 0
    %4891 = vmatprep.subr.bf16.mxu0 0
    %4892 = vmatpush1.bf16.msra.mxu0 0
    %4893 = vmatprep.subr.bf16.mxu0 0
    %4894 = vmatpush1.bf16.msra.mxu0 0
    %4895 = vmatprep.subr.bf16.mxu0 0
    %4896 = vmatpush1.bf16.msra.mxu0 0
    %4897 = vmatprep.subr.bf16.mxu0 0
    %4898 = vmatpush1.bf16.msra.mxu0 0
    %4899 = vmatprep.subr.bf16.mxu0 0
    %4900 = vmatpush1.bf16.msra.mxu0 0
    %4901 = vmatprep.subr.bf16.mxu0 0
    %4902 = vmatpush1.bf16.msra.mxu0 0
    %4903 = vmatprep.subr.bf16.mxu0 0
    %4904 = vmatpush1.bf16.msra.mxu0 0
    %4905 = vmatprep.subr.bf16.mxu0 0
    %4906 = vmatpush1.bf16.msra.mxu0 0
    %4907 = vmatprep.subr.bf16.mxu0 0
    %4908 = vmatpush1.bf16.msra.mxu0 0
    %4909 = vmatprep.subr.bf16.mxu0 0
    %4910 = vmatpush1.bf16.msra.mxu0 0
    %4911 = vmatprep.subr.bf16.mxu0 0
    %4912 = vmatpush1.bf16.msra.mxu0 0
    %4913 = vmatprep.subr.bf16.mxu0 0
    %4914 = vmatpush1.bf16.msra.mxu0 0
    %4915 = vmatprep.subr.bf16.mxu0 0
    %4916 = vmatpush1.bf16.msra.mxu0 0
    %4917 = vmatprep.subr.bf16.mxu0 0
    %4918 = vmatpush1.bf16.msra.mxu0 0
    %4919 = vmatprep.mubr.bf16.mxu0 0
    %4920 = vmatmul.mubr.bf16.gmra.mrb[0].mxu0 %v4870
    %v4921 = vpop.f32.mrb[0].mxu0
    %v4922 = vadd.f32 0.0, %v4921
    %v4923 = vpop.f32.mrb[0].mxu0
    %v4924 = vadd.f32 0.0, %v4923
    %v4925 = vpop.f32.mrb[0].mxu0
    %v4926 = vadd.f32 0.0, %v4925
    %v4927 = vpop.f32.mrb[0].mxu0
    %v4928 = vadd.f32 0.0, %v4927
    %4929 = vmatprep.mubr.bf16.mxu0 0
    %4930 = vmatmul.mubr.bf16.gmra.mrb[0].mxu0 %v4873
    %v4931 = vpop.f32.mrb[0].mxu0
    %v4932 = vadd.f32 0.0, %v4931
    %v4933 = vpop.f32.mrb[0].mxu0
    %v4934 = vadd.f32 0.0, %v4933
    %v4935 = vpop.f32.mrb[0].mxu0
    %v4936 = vadd.f32 0.0, %v4935
    %v4937 = vpop.f32.mrb[0].mxu0
    %v4938 = vadd.f32 0.0, %v4937
    %4939 = vmatprep.mubr.bf16.mxu0 0
    %4940 = vmatmul.mubr.bf16.gmra.mrb[0].mxu0 %v4876
    %v4941 = vpop.f32.mrb[0].mxu0
    %v4942 = vadd.f32 0.0, %v4941
    %v4943 = vpop.f32.mrb[0].mxu0
    %v4944 = vadd.f32 0.0, %v4943
    %v4945 = vpop.f32.mrb[0].mxu0
    %v4946 = vadd.f32 0.0, %v4945
    %v4947 = vpop.f32.mrb[0].mxu0
    %v4948 = vadd.f32 0.0, %v4947
    %4949 = vmatprep.mubr.bf16.mxu0 0
    %4950 = vmatmul.mubr.bf16.gmra.mrb[0].mxu0 %v4879
    %v4951 = vpop.f32.mrb[0].mxu0
    %v4952 = vadd.f32 0.0, %v4951
    %v4953 = vpop.f32.mrb[0].mxu0
    %v4954 = vadd.f32 0.0, %v4953
    %v4955 = vpop.f32.mrb[0].mxu0
    %v4956 = vadd.f32 0.0, %v4955
    %v4957 = vpop.f32.mrb[0].mxu0
    %v4958 = vadd.f32 0.0, %v4957
    %4959 = vmatprep.mubr.bf16.mxu0 0
    %4960 = vmatmul.mubr.bf16.gmra.mrb[0].mxu0 %v4882
    %v4961 = vpop.f32.mrb[0].mxu0
    %v4962 = vadd.f32 0.0, %v4961
    %v4963 = vpop.f32.mrb[0].mxu0
    %v4964 = vadd.f32 0.0, %v4963
    %v4965 = vpop.f32.mrb[0].mxu0
    %v4966 = vadd.f32 0.0, %v4965
    %v4967 = vpop.f32.mrb[0].mxu0
    %v4968 = vadd.f32 0.0, %v4967
    %4969 = vmatprep.mubr.bf16.mxu0 0
    %4970 = vmatmul.mubr.bf16.gmra.mrb[0].mxu0 %v4885
    %v4971 = vpop.f32.mrb[0].mxu0
    %v4972 = vadd.f32 0.0, %v4971
    %v4973 = vpop.f32.mrb[0].mxu0
    %v4974 = vadd.f32 0.0, %v4973
    %v4975 = vpop.f32.mrb[0].mxu0
    %v4976 = vpop.f32.mrb[0].mxu0
    %4977 = vdwg.mxu0
    %4989 = vrot.lane.b32.xlu0 %v4922, 16
    %v4990 = vpop.permute.xlu0 %4989
    %4991 = vrot.lane.b32.xlu0 %v4926, 16
    %v4992 = vpop.permute.xlu0 %4991
    %4993 = vrot.lane.b32.xlu0 %v4932, 16
    %v4994 = vpop.permute.xlu0 %4993
    %4995 = vrot.lane.b32.xlu0 %v4936, 16
    %v4996 = vpop.permute.xlu0 %4995
    %4997 = vrot.lane.b32.xlu0 %v4942, 16
    %v4998 = vpop.permute.xlu0 %4997
    %4999 = vrot.lane.b32.xlu0 %v4946, 16
    %v5000 = vpop.permute.xlu0 %4999
    %5001 = vrot.lane.b32.xlu0 %v4952, 16
    %v5002 = vpop.permute.xlu0 %5001
    %5003 = vrot.lane.b32.xlu0 %v4956, 16
    %v5004 = vpop.permute.xlu0 %5003
    %5005 = vrot.lane.b32.xlu0 %v4962, 16
    %v5006 = vpop.permute.xlu0 %5005
    %5007 = vrot.lane.b32.xlu0 %v4966, 16
    %v5008 = vpop.permute.xlu0 %5007
    %5009 = vrot.lane.b32.xlu0 %v4972, 16
    %v5010 = vpop.permute.xlu0 %5009
    %5022 = vst.msk [vmem:[#allocation3] sm:$0xff] %vm3432, %v4990
    %5023 = vst.msk [vmem:[#allocation3 + $0x8] sm:$0xff] %vm3432, %v4992
    %5024 = vst.msk [vmem:[#allocation3 + $0x10] sm:$0xff] %vm3432, %v4994
    %5025 = vst.msk [vmem:[#allocation3 + $0x18] sm:$0xff] %vm3432, %v4996
    %5026 = vst.msk [vmem:[#allocation3 + $0x20] sm:$0xff] %vm3432, %v4998
    %5027 = vst.msk [vmem:[#allocation3 + $0x28] sm:$0xff] %vm3432, %v5000
    %5028 = vst.msk [vmem:[#allocation3 + $0x30] sm:$0xff] %vm3432, %v5002
    %5029 = vst.msk [vmem:[#allocation3 + $0x38] sm:$0xff] %vm3432, %v5004
    %5030 = vst.msk [vmem:[#allocation3 + $0x40] sm:$0xff] %vm3432, %v5006
    %5031 = vst.msk [vmem:[#allocation3 + $0x48] sm:$0xff] %vm3432, %v5008
    %5032 = vst.msk [vmem:[#allocation3 + $0x50] sm:$0x1] %vm3436, %v5010
    %5033 = vst.msk [vmem:[#allocation3 + $0x58] sm:$0xff] %vm3432, %v4922
    %5034 = vst.msk [vmem:[#allocation3 + $0x60] sm:$0xff] %vm3432, %v4926
    %5035 = vst.msk [vmem:[#allocation3 + $0x68] sm:$0xff] %vm3432, %v4932
    %5036 = vst.msk [vmem:[#allocation3 + $0x70] sm:$0xff] %vm3432, %v4936
    %5037 = vst.msk [vmem:[#allocation3 + $0x78] sm:$0xff] %vm3432, %v4942
    %5038 = vst.msk [vmem:[#allocation3 + $0x80] sm:$0xff] %vm3432, %v4946
    %5039 = vst.msk [vmem:[#allocation3 + $0x88] sm:$0xff] %vm3432, %v4952
    %5040 = vst.msk [vmem:[#allocation3 + $0x90] sm:$0xff] %vm3432, %v4956
    %5041 = vst.msk [vmem:[#allocation3 + $0x98] sm:$0xff] %vm3432, %v4962
    %5042 = vst.msk [vmem:[#allocation3 + $0xa0] sm:$0xff] %vm3432, %v4966
    %5043 = vst.msk [vmem:[#allocation3 + $0xa8] sm:$0x1] %vm3436, %v4972
    %5044 = vrot.lane.b32.xlu0 %v4922, 112
    %v5045 = vpop.permute.xlu0 %5044
    %5046 = vrot.lane.b32.xlu0 %v4926, 112
    %v5047 = vpop.permute.xlu0 %5046
    %5048 = vrot.lane.b32.xlu0 %v4932, 112
    %v5049 = vpop.permute.xlu0 %5048
    %5050 = vrot.lane.b32.xlu0 %v4936, 112
    %v5051 = vpop.permute.xlu0 %5050
    %5052 = vrot.lane.b32.xlu0 %v4942, 112
    %v5053 = vpop.permute.xlu0 %5052
    %5054 = vrot.lane.b32.xlu0 %v4946, 112
    %v5055 = vpop.permute.xlu0 %5054
    %5056 = vrot.lane.b32.xlu0 %v4952, 112
    %v5057 = vpop.permute.xlu0 %5056
    %5058 = vrot.lane.b32.xlu0 %v4956, 112
    %v5059 = vpop.permute.xlu0 %5058
    %5060 = vrot.lane.b32.xlu0 %v4962, 112
    %v5061 = vpop.permute.xlu0 %5060
    %5062 = vrot.lane.b32.xlu0 %v4966, 112
    %v5063 = vpop.permute.xlu0 %5062
    %5064 = vrot.lane.b32.xlu0 %v4972, 112
    %v5065 = vpop.permute.xlu0 %5064
    %5077 = vst.msk [vmem:[#allocation3 + $0xb0] sm:$0xff] %vm3432, %v5045
    %5078 = vst.msk [vmem:[#allocation3 + $0xb8] sm:$0xff] %vm3432, %v5047
    %5079 = vst.msk [vmem:[#allocation3 + $0xc0] sm:$0xff] %vm3432, %v5049
    %5080 = vst.msk [vmem:[#allocation3 + $0xc8] sm:$0xff] %vm3432, %v5051
    %5081 = vst.msk [vmem:[#allocation3 + $0xd0] sm:$0xff] %vm3432, %v5053
    %5082 = vst.msk [vmem:[#allocation3 + $0xd8] sm:$0xff] %vm3432, %v5055
    %5083 = vst.msk [vmem:[#allocation3 + $0xe0] sm:$0xff] %vm3432, %v5057
    %5084 = vst.msk [vmem:[#allocation3 + $0xe8] sm:$0xff] %vm3432, %v5059
    %5085 = vst.msk [vmem:[#allocation3 + $0xf0] sm:$0xff] %vm3432, %v5061
    %5086 = vst.msk [vmem:[#allocation3 + $0xf8] sm:$0xff] %vm3432, %v5063
    %5087 = vst.msk [vmem:[#allocation3 + $0x100] sm:$0x1] %vm3436, %v5065
    %5088 = vrot.lane.b32.xlu0 %v4922, 96
    %v5089 = vpop.permute.xlu0 %5088
    %5090 = vrot.lane.b32.xlu0 %v4926, 96
    %v5091 = vpop.permute.xlu0 %5090
    %5092 = vrot.lane.b32.xlu0 %v4932, 96
    %v5093 = vpop.permute.xlu0 %5092
    %5094 = vrot.lane.b32.xlu0 %v4936, 96
    %v5095 = vpop.permute.xlu0 %5094
    %5096 = vrot.lane.b32.xlu0 %v4942, 96
    %v5097 = vpop.permute.xlu0 %5096
    %5098 = vrot.lane.b32.xlu0 %v4946, 96
    %v5099 = vpop.permute.xlu0 %5098
    %5100 = vrot.lane.b32.xlu0 %v4952, 96
    %v5101 = vpop.permute.xlu0 %5100
    %5102 = vrot.lane.b32.xlu0 %v4956, 96
    %v5103 = vpop.permute.xlu0 %5102
    %5104 = vrot.lane.b32.xlu0 %v4962, 96
    %v5105 = vpop.permute.xlu0 %5104
    %5106 = vrot.lane.b32.xlu0 %v4966, 96
    %v5107 = vpop.permute.xlu0 %5106
    %5108 = vrot.lane.b32.xlu0 %v4972, 96
    %v5109 = vpop.permute.xlu0 %5108
    %5121 = vst.msk [vmem:[#allocation3 + $0x108] sm:$0xff] %vm3432, %v5089
    %5122 = vst.msk [vmem:[#allocation3 + $0x110] sm:$0xff] %vm3432, %v5091
    %5123 = vst.msk [vmem:[#allocation3 + $0x118] sm:$0xff] %vm3432, %v5093
    %5124 = vst.msk [vmem:[#allocation3 + $0x120] sm:$0xff] %vm3432, %v5095
    %5125 = vst.msk [vmem:[#allocation3 + $0x128] sm:$0xff] %vm3432, %v5097
    %5126 = vst.msk [vmem:[#allocation3 + $0x130] sm:$0xff] %vm3432, %v5099
    %5127 = vst.msk [vmem:[#allocation3 + $0x138] sm:$0xff] %vm3432, %v5101
    %5128 = vst.msk [vmem:[#allocation3 + $0x140] sm:$0xff] %vm3432, %v5103
    %5129 = vst.msk [vmem:[#allocation3 + $0x148] sm:$0xff] %vm3432, %v5105
    %5130 = vst.msk [vmem:[#allocation3 + $0x150] sm:$0xff] %vm3432, %v5107
    %5131 = vst.msk [vmem:[#allocation3 + $0x158] sm:$0x1] %vm3436, %v5109
    %5132 = vrot.lane.b32.xlu0 %v4922, 80
    %v5133 = vpop.permute.xlu0 %5132
    %5134 = vrot.lane.b32.xlu0 %v4926, 80
    %v5135 = vpop.permute.xlu0 %5134
    %5136 = vrot.lane.b32.xlu0 %v4932, 80
    %v5137 = vpop.permute.xlu0 %5136
    %5138 = vrot.lane.b32.xlu0 %v4936, 80
    %v5139 = vpop.permute.xlu0 %5138
    %5140 = vrot.lane.b32.xlu0 %v4942, 80
    %v5141 = vpop.permute.xlu0 %5140
    %5142 = vrot.lane.b32.xlu0 %v4946, 80
    %v5143 = vpop.permute.xlu0 %5142
    %5144 = vrot.lane.b32.xlu0 %v4952, 80
    %v5145 = vpop.permute.xlu0 %5144
    %5146 = vrot.lane.b32.xlu0 %v4956, 80
    %v5147 = vpop.permute.xlu0 %5146
    %5148 = vrot.lane.b32.xlu0 %v4962, 80
    %v5149 = vpop.permute.xlu0 %5148
    %5150 = vrot.lane.b32.xlu0 %v4966, 80
    %v5151 = vpop.permute.xlu0 %5150
    %5152 = vrot.lane.b32.xlu0 %v4972, 80
    %v5153 = vpop.permute.xlu0 %5152
    %5165 = vst.msk [vmem:[#allocation3 + $0x160] sm:$0xff] %vm3432, %v5133
    %5166 = vst.msk [vmem:[#allocation3 + $0x168] sm:$0xff] %vm3432, %v5135
    %5167 = vst.msk [vmem:[#allocation3 + $0x170] sm:$0xff] %vm3432, %v5137
    %5168 = vst.msk [vmem:[#allocation3 + $0x178] sm:$0xff] %vm3432, %v5139
    %5169 = vst.msk [vmem:[#allocation3 + $0x180] sm:$0xff] %vm3432, %v5141
    %5170 = vst.msk [vmem:[#allocation3 + $0x188] sm:$0xff] %vm3432, %v5143
    %5171 = vst.msk [vmem:[#allocation3 + $0x190] sm:$0xff] %vm3432, %v5145
    %5172 = vst.msk [vmem:[#allocation3 + $0x198] sm:$0xff] %vm3432, %v5147
    %5173 = vst.msk [vmem:[#allocation3 + $0x1a0] sm:$0xff] %vm3432, %v5149
    %5174 = vst.msk [vmem:[#allocation3 + $0x1a8] sm:$0xff] %vm3432, %v5151
    %5175 = vst.msk [vmem:[#allocation3 + $0x1b0] sm:$0x1] %vm3436, %v5153
    %5176 = vrot.lane.b32.xlu0 %v4922, 64
    %v5177 = vpop.permute.xlu0 %5176
    %5178 = vrot.lane.b32.xlu0 %v4926, 64
    %v5179 = vpop.permute.xlu0 %5178
    %5180 = vrot.lane.b32.xlu0 %v4932, 64
    %v5181 = vpop.permute.xlu0 %5180
    %5182 = vrot.lane.b32.xlu0 %v4936, 64
    %v5183 = vpop.permute.xlu0 %5182
    %5184 = vrot.lane.b32.xlu0 %v4942, 64
    %v5185 = vpop.permute.xlu0 %5184
    %5186 = vrot.lane.b32.xlu0 %v4946, 64
    %v5187 = vpop.permute.xlu0 %5186
    %5188 = vrot.lane.b32.xlu0 %v4952, 64
    %v5189 = vpop.permute.xlu0 %5188
    %5190 = vrot.lane.b32.xlu0 %v4956, 64
    %v5191 = vpop.permute.xlu0 %5190
    %5192 = vrot.lane.b32.xlu0 %v4962, 64
    %v5193 = vpop.permute.xlu0 %5192
    %5194 = vrot.lane.b32.xlu0 %v4966, 64
    %v5195 = vpop.permute.xlu0 %5194
    %5196 = vrot.lane.b32.xlu0 %v4972, 64
    %v5197 = vpop.permute.xlu0 %5196
    %5209 = vst.msk [vmem:[#allocation3 + $0x1b8] sm:$0xff] %vm3432, %v5177
    %5210 = vst.msk [vmem:[#allocation3 + $0x1c0] sm:$0xff] %vm3432, %v5179
    %5211 = vst.msk [vmem:[#allocation3 + $0x1c8] sm:$0xff] %vm3432, %v5181
    %5212 = vst.msk [vmem:[#allocation3 + $0x1d0] sm:$0xff] %vm3432, %v5183
    %5213 = vst.msk [vmem:[#allocation3 + $0x1d8] sm:$0xff] %vm3432, %v5185
    %5214 = vst.msk [vmem:[#allocation3 + $0x1e0] sm:$0xff] %vm3432, %v5187
    %5215 = vst.msk [vmem:[#allocation3 + $0x1e8] sm:$0xff] %vm3432, %v5189
    %5216 = vst.msk [vmem:[#allocation3 + $0x1f0] sm:$0xff] %vm3432, %v5191
    %5217 = vst.msk [vmem:[#allocation3 + $0x1f8] sm:$0xff] %vm3432, %v5193
    %5218 = vst.msk [vmem:[#allocation3 + $0x200] sm:$0xff] %vm3432, %v5195
    %5219 = vst.msk [vmem:[#allocation3 + $0x208] sm:$0x1] %vm3436, %v5197
    %5220 = vrot.lane.b32.xlu0 %v4922, 48
    %v5221 = vpop.permute.xlu0 %5220
    %5222 = vrot.lane.b32.xlu0 %v4926, 48
    %v5223 = vpop.permute.xlu0 %5222
    %5224 = vrot.lane.b32.xlu0 %v4932, 48
    %v5225 = vpop.permute.xlu0 %5224
    %5226 = vrot.lane.b32.xlu0 %v4936, 48
    %v5227 = vpop.permute.xlu0 %5226
    %5228 = vrot.lane.b32.xlu0 %v4942, 48
    %v5229 = vpop.permute.xlu0 %5228
    %5230 = vrot.lane.b32.xlu0 %v4946, 48
    %v5231 = vpop.permute.xlu0 %5230
    %5232 = vrot.lane.b32.xlu0 %v4952, 48
    %v5233 = vpop.permute.xlu0 %5232
    %5234 = vrot.lane.b32.xlu0 %v4956, 48
    %v5235 = vpop.permute.xlu0 %5234
    %5236 = vrot.lane.b32.xlu0 %v4962, 48
    %v5237 = vpop.permute.xlu0 %5236
    %5238 = vrot.lane.b32.xlu0 %v4966, 48
    %v5239 = vpop.permute.xlu0 %5238
    %5240 = vrot.lane.b32.xlu0 %v4972, 48
    %v5241 = vpop.permute.xlu0 %5240
    %5253 = vst.msk [vmem:[#allocation3 + $0x210] sm:$0xff] %vm3432, %v5221
    %5254 = vst.msk [vmem:[#allocation3 + $0x218] sm:$0xff] %vm3432, %v5223
    %5255 = vst.msk [vmem:[#allocation3 + $0x220] sm:$0xff] %vm3432, %v5225
    %5256 = vst.msk [vmem:[#allocation3 + $0x228] sm:$0xff] %vm3432, %v5227
    %5257 = vst.msk [vmem:[#allocation3 + $0x230] sm:$0xff] %vm3432, %v5229
    %5258 = vst.msk [vmem:[#allocation3 + $0x238] sm:$0xff] %vm3432, %v5231
    %5259 = vst.msk [vmem:[#allocation3 + $0x240] sm:$0xff] %vm3432, %v5233
    %5260 = vst.msk [vmem:[#allocation3 + $0x248] sm:$0xff] %vm3432, %v5235
    %5261 = vst.msk [vmem:[#allocation3 + $0x250] sm:$0xff] %vm3432, %v5237
    %5262 = vst.msk [vmem:[#allocation3 + $0x258] sm:$0xff] %vm3432, %v5239
    %5263 = vst.msk [vmem:[#allocation3 + $0x260] sm:$0x1] %vm3436, %v5241
    %5264 = vrot.lane.b32.xlu0 %v4922, 32
    %v5265 = vpop.permute.xlu0 %5264
    %5266 = vrot.lane.b32.xlu0 %v4926, 32
    %v5267 = vpop.permute.xlu0 %5266
    %5268 = vrot.lane.b32.xlu0 %v4932, 32
    %v5269 = vpop.permute.xlu0 %5268
    %5270 = vrot.lane.b32.xlu0 %v4936, 32
    %v5271 = vpop.permute.xlu0 %5270
    %5272 = vrot.lane.b32.xlu0 %v4942, 32
    %v5273 = vpop.permute.xlu0 %5272
    %5274 = vrot.lane.b32.xlu0 %v4946, 32
    %v5275 = vpop.permute.xlu0 %5274
    %5276 = vrot.lane.b32.xlu0 %v4952, 32
    %v5277 = vpop.permute.xlu0 %5276
    %5278 = vrot.lane.b32.xlu0 %v4956, 32
    %v5279 = vpop.permute.xlu0 %5278
    %5280 = vrot.lane.b32.xlu0 %v4962, 32
    %v5281 = vpop.permute.xlu0 %5280
    %5282 = vrot.lane.b32.xlu0 %v4966, 32
    %v5283 = vpop.permute.xlu0 %5282
    %5284 = vrot.lane.b32.xlu0 %v4972, 32
    %v5285 = vpop.permute.xlu0 %5284
    %5297 = vst.msk [vmem:[#allocation3 + $0x268] sm:$0xff] %vm3432, %v5265
    %5298 = vst.msk [vmem:[#allocation3 + $0x270] sm:$0xff] %vm3432, %v5267
    %5299 = vst.msk [vmem:[#allocation3 + $0x278] sm:$0xff] %vm3432, %v5269
    %5300 = vst.msk [vmem:[#allocation3 + $0x280] sm:$0xff] %vm3432, %v5271
    %5301 = vst.msk [vmem:[#allocation3 + $0x288] sm:$0xff] %vm3432, %v5273
    %5302 = vst.msk [vmem:[#allocation3 + $0x290] sm:$0xff] %vm3432, %v5275
    %5303 = vst.msk [vmem:[#allocation3 + $0x298] sm:$0xff] %vm3432, %v5277
    %5304 = vst.msk [vmem:[#allocation3 + $0x2a0] sm:$0xff] %vm3432, %v5279
    %5305 = vst.msk [vmem:[#allocation3 + $0x2a8] sm:$0xff] %vm3432, %v5281
    %5306 = vst.msk [vmem:[#allocation3 + $0x2b0] sm:$0xff] %vm3432, %v5283
    %5307 = vst.msk [vmem:[#allocation3 + $0x2b8] sm:$0x1] %vm3436, %v5285
    %5319 = vrot.lane.b32.xlu0 %v4924, 16
    %v5320 = vpop.permute.xlu0 %5319
    %5321 = vrot.lane.b32.xlu0 %v4928, 16
    %v5322 = vpop.permute.xlu0 %5321
    %5323 = vrot.lane.b32.xlu0 %v4934, 16
    %v5324 = vpop.permute.xlu0 %5323
    %5325 = vrot.lane.b32.xlu0 %v4938, 16
    %v5326 = vpop.permute.xlu0 %5325
    %5327 = vrot.lane.b32.xlu0 %v4944, 16
    %v5328 = vpop.permute.xlu0 %5327
    %5329 = vrot.lane.b32.xlu0 %v4948, 16
    %v5330 = vpop.permute.xlu0 %5329
    %5331 = vrot.lane.b32.xlu0 %v4954, 16
    %v5332 = vpop.permute.xlu0 %5331
    %5333 = vrot.lane.b32.xlu0 %v4958, 16
    %v5334 = vpop.permute.xlu0 %5333
    %5335 = vrot.lane.b32.xlu0 %v4964, 16
    %v5336 = vpop.permute.xlu0 %5335
    %5337 = vrot.lane.b32.xlu0 %v4968, 16
    %v5338 = vpop.permute.xlu0 %5337
    %5339 = vrot.lane.b32.xlu0 %v4974, 16
    %v5340 = vpop.permute.xlu0 %5339
    %5352 = vst.msk [vmem:[#allocation3 + $0x2c0] sm:$0xff] %vm3432, %v5320
    %5353 = vst.msk [vmem:[#allocation3 + $0x2c8] sm:$0xff] %vm3432, %v5322
    %5354 = vst.msk [vmem:[#allocation3 + $0x2d0] sm:$0xff] %vm3432, %v5324
    %5355 = vst.msk [vmem:[#allocation3 + $0x2d8] sm:$0xff] %vm3432, %v5326
    %5356 = vst.msk [vmem:[#allocation3 + $0x2e0] sm:$0xff] %vm3432, %v5328
    %5357 = vst.msk [vmem:[#allocation3 + $0x2e8] sm:$0xff] %vm3432, %v5330
    %5358 = vst.msk [vmem:[#allocation3 + $0x2f0] sm:$0xff] %vm3432, %v5332
    %5359 = vst.msk [vmem:[#allocation3 + $0x2f8] sm:$0xff] %vm3432, %v5334
    %5360 = vst.msk [vmem:[#allocation3 + $0x300] sm:$0xff] %vm3432, %v5336
    %5361 = vst.msk [vmem:[#allocation3 + $0x308] sm:$0xff] %vm3432, %v5338
    %5362 = vst.msk [vmem:[#allocation3 + $0x310] sm:$0x1] %vm3436, %v5340
    %v5363 = vld [vmem:[#allocation3] sm:$0xff]
    %v5364 = vld [vmem:[#allocation3 + $0x8] sm:$0xff]
    %v5365 = vld [vmem:[#allocation3 + $0x10] sm:$0xff]
    %v5366 = vld [vmem:[#allocation3 + $0x18] sm:$0xff]
    %v5367 = vld [vmem:[#allocation3 + $0x20] sm:$0xff]
    %v5368 = vld [vmem:[#allocation3 + $0x28] sm:$0xff]
    %v5369 = vld [vmem:[#allocation3 + $0x30] sm:$0xff]
    %v5370 = vld [vmem:[#allocation3 + $0x38] sm:$0xff]
    %v5371 = vld [vmem:[#allocation3 + $0x40] sm:$0xff]
    %v5372 = vld [vmem:[#allocation3 + $0x48] sm:$0xff]
    %v5373 = vld [vmem:[#allocation3 + $0x50] sm:$0xff]
    %v5374 = vld [vmem:[#allocation3 + $0x58] sm:$0xff]
    %v5375 = vld [vmem:[#allocation3 + $0x60] sm:$0xff]
    %v5376 = vld [vmem:[#allocation3 + $0x68] sm:$0xff]
    %v5377 = vld [vmem:[#allocation3 + $0x70] sm:$0xff]
    %v5378 = vld [vmem:[#allocation3 + $0x78] sm:$0xff]
    %v5379 = vld [vmem:[#allocation3 + $0x80] sm:$0xff]
    %v5380 = vld [vmem:[#allocation3 + $0x88] sm:$0xff]
    %v5381 = vld [vmem:[#allocation3 + $0x90] sm:$0xff]
    %v5382 = vld [vmem:[#allocation3 + $0x98] sm:$0xff]
    %v5383 = vld [vmem:[#allocation3 + $0xa0] sm:$0xff]
    %v5384 = vld [vmem:[#allocation3 + $0xa8] sm:$0xff]
    %v5385 = vld [vmem:[#allocation3 + $0xb0] sm:$0xff]
    %v5386 = vld [vmem:[#allocation3 + $0xb8] sm:$0xff]
    %v5387 = vld [vmem:[#allocation3 + $0xc0] sm:$0xff]
    %v5388 = vld [vmem:[#allocation3 + $0xc8] sm:$0xff]
    %v5389 = vld [vmem:[#allocation3 + $0xd0] sm:$0xff]
    %v5390 = vld [vmem:[#allocation3 + $0xd8] sm:$0xff]
    %v5391 = vld [vmem:[#allocation3 + $0xe0] sm:$0xff]
    %v5392 = vld [vmem:[#allocation3 + $0xe8] sm:$0xff]
    %v5393 = vld [vmem:[#allocation3 + $0xf0] sm:$0xff]
    %v5394 = vld [vmem:[#allocation3 + $0xf8] sm:$0xff]
    %v5395 = vld [vmem:[#allocation3 + $0x100] sm:$0xff]
    %v5396 = vld [vmem:[#allocation3 + $0x108] sm:$0xff]
    %v5397 = vld [vmem:[#allocation3 + $0x110] sm:$0xff]
    %v5398 = vld [vmem:[#allocation3 + $0x118] sm:$0xff]
    %v5399 = vld [vmem:[#allocation3 + $0x120] sm:$0xff]
    %v5400 = vld [vmem:[#allocation3 + $0x128] sm:$0xff]
    %v5401 = vld [vmem:[#allocation3 + $0x130] sm:$0xff]
    %v5402 = vld [vmem:[#allocation3 + $0x138] sm:$0xff]
    %v5403 = vld [vmem:[#allocation3 + $0x140] sm:$0xff]
    %v5404 = vld [vmem:[#allocation3 + $0x148] sm:$0xff]
    %v5405 = vld [vmem:[#allocation3 + $0x150] sm:$0xff]
    %v5406 = vld [vmem:[#allocation3 + $0x158] sm:$0xff]
    %v5407 = vld [vmem:[#allocation3 + $0x160] sm:$0xff]
    %v5408 = vld [vmem:[#allocation3 + $0x168] sm:$0xff]
    %v5409 = vld [vmem:[#allocation3 + $0x170] sm:$0xff]
    %v5410 = vld [vmem:[#allocation3 + $0x178] sm:$0xff]
    %v5411 = vld [vmem:[#allocation3 + $0x180] sm:$0xff]
    %v5412 = vld [vmem:[#allocation3 + $0x188] sm:$0xff]
    %v5413 = vld [vmem:[#allocation3 + $0x190] sm:$0xff]
    %v5414 = vld [vmem:[#allocation3 + $0x198] sm:$0xff]
    %v5415 = vld [vmem:[#allocation3 + $0x1a0] sm:$0xff]
    %v5416 = vld [vmem:[#allocation3 + $0x1a8] sm:$0xff]
    %v5417 = vld [vmem:[#allocation3 + $0x1b0] sm:$0xff]
    %v5418 = vld [vmem:[#allocation3 + $0x1b8] sm:$0xff]
    %v5419 = vld [vmem:[#allocation3 + $0x1c0] sm:$0xff]
    %v5420 = vld [vmem:[#allocation3 + $0x1c8] sm:$0xff]
    %v5421 = vld [vmem:[#allocation3 + $0x1d0] sm:$0xff]
    %v5422 = vld [vmem:[#allocation3 + $0x1d8] sm:$0xff]
    %v5423 = vld [vmem:[#allocation3 + $0x1e0] sm:$0xff]
    %v5424 = vld [vmem:[#allocation3 + $0x1e8] sm:$0xff]
    %v5425 = vld [vmem:[#allocation3 + $0x1f0] sm:$0xff]
    %v5426 = vld [vmem:[#allocation3 + $0x1f8] sm:$0xff]
    %v5427 = vld [vmem:[#allocation3 + $0x200] sm:$0xff]
    %v5428 = vld [vmem:[#allocation3 + $0x208] sm:$0xff]
    %v5429 = vld [vmem:[#allocation3 + $0x210] sm:$0xff]
    %v5430 = vld [vmem:[#allocation3 + $0x218] sm:$0xff]
    %v5431 = vld [vmem:[#allocation3 + $0x220] sm:$0xff]
    %v5432 = vld [vmem:[#allocation3 + $0x228] sm:$0xff]
    %v5433 = vld [vmem:[#allocation3 + $0x230] sm:$0xff]
    %v5434 = vld [vmem:[#allocation3 + $0x238] sm:$0xff]
    %v5435 = vld [vmem:[#allocation3 + $0x240] sm:$0xff]
    %v5436 = vld [vmem:[#allocation3 + $0x248] sm:$0xff]
    %v5437 = vld [vmem:[#allocation3 + $0x250] sm:$0xff]
    %v5438 = vld [vmem:[#allocation3 + $0x258] sm:$0xff]
    %v5439 = vld [vmem:[#allocation3 + $0x260] sm:$0xff]
    %v5440 = vld [vmem:[#allocation3 + $0x268] sm:$0xff]
    %v5441 = vld [vmem:[#allocation3 + $0x270] sm:$0xff]
    %v5442 = vld [vmem:[#allocation3 + $0x278] sm:$0xff]
    %v5443 = vld [vmem:[#allocation3 + $0x280] sm:$0xff]
    %v5444 = vld [vmem:[#allocation3 + $0x288] sm:$0xff]
    %v5445 = vld [vmem:[#allocation3 + $0x290] sm:$0xff]
    %v5446 = vld [vmem:[#allocation3 + $0x298] sm:$0xff]
    %v5447 = vld [vmem:[#allocation3 + $0x2a0] sm:$0xff]
    %v5448 = vld [vmem:[#allocation3 + $0x2a8] sm:$0xff]
    %v5449 = vld [vmem:[#allocation3 + $0x2b0] sm:$0xff]
    %v5450 = vld [vmem:[#allocation3 + $0x2b8] sm:$0xff]
    %v5451 = vld [vmem:[#allocation3 + $0x2c0] sm:$0xff]
    %v5452 = vld [vmem:[#allocation3 + $0x2c8] sm:$0xff]
    %v5453 = vld [vmem:[#allocation3 + $0x2d0] sm:$0xff]
    %v5454 = vld [vmem:[#allocation3 + $0x2d8] sm:$0xff]
    %v5455 = vld [vmem:[#allocation3 + $0x2e0] sm:$0xff]
    %v5456 = vld [vmem:[#allocation3 + $0x2e8] sm:$0xff]
    %v5457 = vld [vmem:[#allocation3 + $0x2f0] sm:$0xff]
    %v5458 = vld [vmem:[#allocation3 + $0x2f8] sm:$0xff]
    %v5459 = vld [vmem:[#allocation3 + $0x300] sm:$0xff]
    %v5460 = vld [vmem:[#allocation3 + $0x308] sm:$0xff]
    %v5461 = vld [vmem:[#allocation3 + $0x310] sm:$0xff]
    %vm5462 = vcmask 195584
    %v5464 = vsel %vm5462, %v4112, 0
    %v5467 = vsel %vm5462, %v4119, 0
    %v5470 = vsel %vm5462, %v4126, 0
    %v5473 = vsel %vm5462, %v4133, 0
    %v5476 = vsel %vm5462, %v4140, 0
    %v5479 = vsel %vm5462, %v4147, 0
    %v5482 = vsel %vm5462, %v4154, 0
    %v5485 = vsel %vm5462, %v4161, 0
    %v5488 = vsel %vm5462, %v4168, 0
    %v5491 = vsel %vm5462, %v4175, 0
    %v5494 = vsel %vm5462, %v4182, 0
    %v5497 = vsel %vm5462, %v4189, 0
    %v5500 = vsel %vm5462, %v4196, 0
    %v5503 = vsel %vm5462, %v4203, 0
    %v5506 = vsel %vm5462, %v4210, 0
    %v5509 = vsel %vm5462, %v4217, 0
    %v5512 = vsel %vm5462, %v4224, 0
    %v5515 = vsel %vm5462, %v4231, 0
    %v5518 = vsel %vm5462, %v4238, 0
    %v5521 = vsel %vm5462, %v4245, 0
    %v5524 = vsel %vm5462, %v4252, 0
    %v5527 = vsel %vm5462, %v4259, 0
    %v5530 = vsel %vm5462, %v4266, 0
    %v5533 = vsel %vm5462, %v4273, 0
    %v5536 = vsel %vm5462, %v4280, 0
    %v5539 = vsel %vm5462, %v4287, 0
    %v5542 = vsel %vm5462, %v4294, 0
    %v5545 = vsel %vm5462, %v4301, 0
    %v5548 = vsel %vm5462, %v4308, 0
    %v5551 = vsel %vm5462, %v4315, 0
    %v5554 = vsel %vm5462, %v4322, 0
    %v5557 = vsel %vm5462, %v4329, 0
    %v5560 = vsel %vm5462, %v4336, 0
    %v5563 = vsel %vm5462, %v4343, 0
    %v5566 = vsel %vm5462, %v4350, 0
    %v5569 = vsel %vm5462, %v4357, 0
    %v5572 = vsel %vm5462, %v4364, 0
    %5574 = vmatprep.subr.mxu0 0.0
    %5575 = vmatpush1.msra.mxu0 %v5363
    %5576 = vmatprep.subr.mxu0 0.0
    %5577 = vmatpush1.msra.mxu0 %v5364
    %5578 = vmatprep.subr.mxu0 0.0
    %5579 = vmatpush1.msra.mxu0 %v5365
    %5580 = vmatprep.subr.mxu0 0.0
    %5581 = vmatpush1.msra.mxu0 %v5366
    %5582 = vmatprep.subr.mxu0 0.0
    %5583 = vmatpush1.msra.mxu0 %v5367
    %5584 = vmatprep.subr.mxu0 0.0
    %5585 = vmatpush1.msra.mxu0 %v5368
    %5586 = vmatprep.subr.mxu0 0.0
    %5587 = vmatpush1.msra.mxu0 %v5369
    %5588 = vmatprep.subr.mxu0 0.0
    %5589 = vmatpush1.msra.mxu0 %v5370
    %5590 = vmatprep.subr.mxu0 0.0
    %5591 = vmatpush1.msra.mxu0 %v5371
    %5592 = vmatprep.subr.mxu0 0.0
    %5593 = vmatpush1.msra.mxu0 %v5372
    %5594 = vmatprep.subr.mxu0 0.0
    %5595 = vmatpush1.msra.mxu0 %v5373
    %5596 = vmatprep.subr.mxu0 0.0
    %5597 = vmatpush1.msra.mxu0 %v5374
    %5598 = vmatprep.subr.mxu0 0.0
    %5599 = vmatpush1.msra.mxu0 %v5375
    %5600 = vmatprep.subr.mxu0 0.0
    %5601 = vmatpush1.msra.mxu0 %v5376
    %5602 = vmatprep.subr.mxu0 0.0
    %5603 = vmatpush1.msra.mxu0 %v5377
    %5604 = vmatprep.subr.mxu0 0.0
    %5605 = vmatpush1.msra.mxu0 %v5378
    %5606 = vmatprep.subr.mxu0 0.0
    %5607 = vmatpush1.msra.mxu0 %v5379
    %5608 = vmatprep.subr.mxu0 0.0
    %5609 = vmatpush1.msra.mxu0 %v5380
    %5610 = vmatprep.subr.mxu0 0.0
    %5611 = vmatpush1.msra.mxu0 %v5381
    %5612 = vmatprep.subr.mxu0 0.0
    %5613 = vmatpush1.msra.mxu0 %v5382
    %5614 = vmatprep.subr.mxu0 0.0
    %5615 = vmatpush1.msra.mxu0 %v5383
    %5616 = vmatprep.subr.mxu0 0.0
    %5617 = vmatpush1.msra.mxu0 %v5384
    %5618 = vmatprep.subr.mxu0 0.0
    %5619 = vmatpush1.msra.mxu0 %v5385
    %5620 = vmatprep.subr.mxu0 0.0
    %5621 = vmatpush1.msra.mxu0 %v5386
    %5622 = vmatprep.subr.mxu0 0.0
    %5623 = vmatpush1.msra.mxu0 %v5387
    %5624 = vmatprep.subr.mxu0 0.0
    %5625 = vmatpush1.msra.mxu0 %v5388
    %5626 = vmatprep.subr.mxu0 0.0
    %5627 = vmatpush1.msra.mxu0 %v5389
    %5628 = vmatprep.subr.mxu0 0.0
    %5629 = vmatpush1.msra.mxu0 %v5390
    %5630 = vmatprep.subr.mxu0 0.0
    %5631 = vmatpush1.msra.mxu0 %v5391
    %5632 = vmatprep.subr.mxu0 0.0
    %5633 = vmatpush1.msra.mxu0 %v5392
    %5634 = vmatprep.subr.mxu0 0.0
    %5635 = vmatpush1.msra.mxu0 %v5393
    %5636 = vmatprep.subr.mxu0 0.0
    %5637 = vmatpush1.msra.mxu0 %v5394
    %5638 = vmatprep.mubr.f32.mxu0 %v4107
    %5639 = vmatmul.mubr.f32.gmra.mrb[0].mxu0 %v4106
    %v5640 = vpop.f32.mrb[0].mxu0
    %v5641 = vadd.f32 0.0, %v5640
    %v5642 = vpop.f32.mrb[0].mxu0
    %5643 = vmatprep.mubr.f32.mxu0 %v4114
    %5644 = vmatmul.mubr.f32.gmra.mrb[0].mxu0 %v4113
    %v5645 = vpop.f32.mrb[0].mxu0
    %v5646 = vadd.f32 0.0, %v5645
    %v5647 = vpop.f32.mrb[0].mxu0
    %5648 = vmatprep.mubr.f32.mxu0 %v4121
    %5649 = vmatmul.mubr.f32.gmra.mrb[0].mxu0 %v4120
    %v5650 = vpop.f32.mrb[0].mxu0
    %v5651 = vadd.f32 0.0, %v5650
    %v5652 = vpop.f32.mrb[0].mxu0
    %5653 = vmatprep.mubr.f32.mxu0 %v4128
    %5654 = vmatmul.mubr.f32.gmra.mrb[0].mxu0 %v4127
    %v5655 = vpop.f32.mrb[0].mxu0
    %v5656 = vadd.f32 0.0, %v5655
    %v5657 = vpop.f32.mrb[0].mxu0
    %5658 = vmatprep.mubr.f32.mxu0 %v4135
    %5659 = vmatmul.mubr.f32.gmra.mrb[0].mxu0 %v4134
    %v5660 = vpop.f32.mrb[0].mxu0
    %v5661 = vadd.f32 0.0, %v5660
    %v5662 = vpop.f32.mrb[0].mxu0
    %5663 = vmatprep.mubr.f32.mxu0 %v4142
    %5664 = vmatmul.mubr.f32.gmra.mrb[0].mxu0 %v4141
    %v5665 = vpop.f32.mrb[0].mxu0
    %v5666 = vadd.f32 0.0, %v5665
    %v5667 = vpop.f32.mrb[0].mxu0
    %5668 = vmatprep.mubr.f32.mxu0 %v4149
    %5669 = vmatmul.mubr.f32.gmra.mrb[0].mxu0 %v4148
    %v5670 = vpop.f32.mrb[0].mxu0
    %v5671 = vadd.f32 0.0, %v5670
    %v5672 = vpop.f32.mrb[0].mxu0
    %5673 = vmatprep.mubr.f32.mxu0 %v4156
    %5674 = vmatmul.mubr.f32.gmra.mrb[0].mxu0 %v4155
    %v5675 = vpop.f32.mrb[0].mxu0
    %v5676 = vadd.f32 0.0, %v5675
    %v5677 = vpop.f32.mrb[0].mxu0
    %5678 = vmatprep.mubr.f32.mxu0 %v4163
    %5679 = vmatmul.mubr.f32.gmra.mrb[0].mxu0 %v4162
    %v5680 = vpop.f32.mrb[0].mxu0
    %v5681 = vadd.f32 0.0, %v5680
    %v5682 = vpop.f32.mrb[0].mxu0
    %5683 = vmatprep.mubr.f32.mxu0 %v4170
    %5684 = vmatmul.mubr.f32.gmra.mrb[0].mxu0 %v4169
    %v5685 = vpop.f32.mrb[0].mxu0
    %v5686 = vadd.f32 0.0, %v5685
    %v5687 = vpop.f32.mrb[0].mxu0
    %5688 = vmatprep.mubr.f32.mxu0 %v4177
    %5689 = vmatmul.mubr.f32.gmra.mrb[0].mxu0 %v4176
    %v5690 = vpop.f32.mrb[0].mxu0
    %v5691 = vadd.f32 0.0, %v5690
    %v5692 = vpop.f32.mrb[0].mxu0
    %5693 = vmatprep.mubr.f32.mxu0 %v4184
    %5694 = vmatmul.mubr.f32.gmra.mrb[0].mxu0 %v4183
    %v5695 = vpop.f32.mrb[0].mxu0
    %v5696 = vadd.f32 0.0, %v5695
    %v5697 = vpop.f32.mrb[0].mxu0
    %5698 = vmatprep.mubr.f32.mxu0 %v4191
    %5699 = vmatmul.mubr.f32.gmra.mrb[0].mxu0 %v4190
    %v5700 = vpop.f32.mrb[0].mxu0
    %v5701 = vadd.f32 0.0, %v5700
    %v5702 = vpop.f32.mrb[0].mxu0
    %5703 = vmatprep.mubr.f32.mxu0 %v4198
    %5704 = vmatmul.mubr.f32.gmra.mrb[0].mxu0 %v4197
    %v5705 = vpop.f32.mrb[0].mxu0
    %v5706 = vadd.f32 0.0, %v5705
    %v5707 = vpop.f32.mrb[0].mxu0
    %5708 = vmatprep.mubr.f32.mxu0 %v4205
    %5709 = vmatmul.mubr.f32.gmra.mrb[0].mxu0 %v4204
    %v5710 = vpop.f32.mrb[0].mxu0
    %v5711 = vadd.f32 0.0, %v5710
    %v5712 = vpop.f32.mrb[0].mxu0
    %5713 = vmatprep.mubr.f32.mxu0 %v4212
    %5714 = vmatmul.mubr.f32.gmra.mrb[0].mxu0 %v4211
    %v5715 = vpop.f32.mrb[0].mxu0
    %v5716 = vadd.f32 0.0, %v5715
    %v5717 = vpop.f32.mrb[0].mxu0
    %5718 = vmatprep.mubr.f32.mxu0 %v4219
    %5719 = vmatmul.mubr.f32.gmra.mrb[0].mxu0 %v4218
    %v5720 = vpop.f32.mrb[0].mxu0
    %v5721 = vadd.f32 0.0, %v5720
    %v5722 = vpop.f32.mrb[0].mxu0
    %5723 = vmatprep.mubr.f32.mxu0 %v4226
    %5724 = vmatmul.mubr.f32.gmra.mrb[0].mxu0 %v4225
    %v5725 = vpop.f32.mrb[0].mxu0
    %v5726 = vadd.f32 0.0, %v5725
    %v5727 = vpop.f32.mrb[0].mxu0
    %5728 = vmatprep.mubr.f32.mxu0 %v4233
    %5729 = vmatmul.mubr.f32.gmra.mrb[0].mxu0 %v4232
    %v5730 = vpop.f32.mrb[0].mxu0
    %v5731 = vadd.f32 0.0, %v5730
    %v5732 = vpop.f32.mrb[0].mxu0
    %5733 = vmatprep.mubr.f32.mxu0 %v4240
    %5734 = vmatmul.mubr.f32.gmra.mrb[0].mxu0 %v4239
    %v5735 = vpop.f32.mrb[0].mxu0
    %v5736 = vadd.f32 0.0, %v5735
    %v5737 = vpop.f32.mrb[0].mxu0
    %5738 = vmatprep.mubr.f32.mxu0 %v4247
    %5739 = vmatmul.mubr.f32.gmra.mrb[0].mxu0 %v4246
    %v5740 = vpop.f32.mrb[0].mxu0
    %v5741 = vadd.f32 0.0, %v5740
    %v5742 = vpop.f32.mrb[0].mxu0
    %5743 = vmatprep.mubr.f32.mxu0 %v4254
    %5744 = vmatmul.mubr.f32.gmra.mrb[0].mxu0 %v4253
    %v5745 = vpop.f32.mrb[0].mxu0
    %v5746 = vadd.f32 0.0, %v5745
    %v5747 = vpop.f32.mrb[0].mxu0
    %5748 = vmatprep.mubr.f32.mxu0 %v4261
    %5749 = vmatmul.mubr.f32.gmra.mrb[0].mxu0 %v4260
    %v5750 = vpop.f32.mrb[0].mxu0
    %v5751 = vadd.f32 0.0, %v5750
    %v5752 = vpop.f32.mrb[0].mxu0
    %5753 = vmatprep.mubr.f32.mxu0 %v4268
    %5754 = vmatmul.mubr.f32.gmra.mrb[0].mxu0 %v4267
    %v5755 = vpop.f32.mrb[0].mxu0
    %v5756 = vadd.f32 0.0, %v5755
    %v5757 = vpop.f32.mrb[0].mxu0
    %5758 = vmatprep.mubr.f32.mxu0 %v4275
    %5759 = vmatmul.mubr.f32.gmra.mrb[0].mxu0 %v4274
    %v5760 = vpop.f32.mrb[0].mxu0
    %v5761 = vadd.f32 0.0, %v5760
    %v5762 = vpop.f32.mrb[0].mxu0
    %5763 = vmatprep.mubr.f32.mxu0 %v4282
    %5764 = vmatmul.mubr.f32.gmra.mrb[0].mxu0 %v4281
    %v5765 = vpop.f32.mrb[0].mxu0
    %v5766 = vadd.f32 0.0, %v5765
    %v5767 = vpop.f32.mrb[0].mxu0
    %5768 = vmatprep.mubr.f32.mxu0 %v4289
    %5769 = vmatmul.mubr.f32.gmra.mrb[0].mxu0 %v4288
    %v5770 = vpop.f32.mrb[0].mxu0
    %v5771 = vadd.f32 0.0, %v5770
    %v5772 = vpop.f32.mrb[0].mxu0
    %5773 = vmatprep.mubr.f32.mxu0 %v4296
    %5774 = vmatmul.mubr.f32.gmra.mrb[0].mxu0 %v4295
    %v5775 = vpop.f32.mrb[0].mxu0
    %v5776 = vadd.f32 0.0, %v5775
    %v5777 = vpop.f32.mrb[0].mxu0
    %5778 = vmatprep.mubr.f32.mxu0 %v4303
    %5779 = vmatmul.mubr.f32.gmra.mrb[0].mxu0 %v4302
    %v5780 = vpop.f32.mrb[0].mxu0
    %v5781 = vadd.f32 0.0, %v5780
    %v5782 = vpop.f32.mrb[0].mxu0
    %5783 = vmatprep.mubr.f32.mxu0 %v4310
    %5784 = vmatmul.mubr.f32.gmra.mrb[0].mxu0 %v4309
    %v5785 = vpop.f32.mrb[0].mxu0
    %v5786 = vadd.f32 0.0, %v5785
    %v5787 = vpop.f32.mrb[0].mxu0
    %5788 = vmatprep.mubr.f32.mxu0 %v4317
    %5789 = vmatmul.mubr.f32.gmra.mrb[0].mxu0 %v4316
    %v5790 = vpop.f32.mrb[0].mxu0
    %v5791 = vadd.f32 0.0, %v5790
    %v5792 = vpop.f32.mrb[0].mxu0
    %5793 = vmatprep.mubr.f32.mxu0 %v4324
    %5794 = vmatmul.mubr.f32.gmra.mrb[0].mxu0 %v4323
    %v5795 = vpop.f32.mrb[0].mxu0
    %v5796 = vadd.f32 0.0, %v5795
    %v5797 = vpop.f32.mrb[0].mxu0
    %5798 = vmatprep.mubr.f32.mxu0 %v4331
    %5799 = vmatmul.mubr.f32.gmra.mrb[0].mxu0 %v4330
    %v5800 = vpop.f32.mrb[0].mxu0
    %v5801 = vadd.f32 0.0, %v5800
    %v5802 = vpop.f32.mrb[0].mxu0
    %5803 = vmatprep.mubr.f32.mxu0 %v4338
    %5804 = vmatmul.mubr.f32.gmra.mrb[0].mxu0 %v4337
    %v5805 = vpop.f32.mrb[0].mxu0
    %v5806 = vadd.f32 0.0, %v5805
    %v5807 = vpop.f32.mrb[0].mxu0
    %5808 = vmatprep.mubr.f32.mxu0 %v4345
    %5809 = vmatmul.mubr.f32.gmra.mrb[0].mxu0 %v4344
    %v5810 = vpop.f32.mrb[0].mxu0
    %v5811 = vadd.f32 0.0, %v5810
    %v5812 = vpop.f32.mrb[0].mxu0
    %5813 = vmatprep.mubr.f32.mxu0 %v4352
    %5814 = vmatmul.mubr.f32.gmra.mrb[0].mxu0 %v4351
    %v5815 = vpop.f32.mrb[0].mxu0
    %v5816 = vadd.f32 0.0, %v5815
    %v5817 = vpop.f32.mrb[0].mxu0
    %5818 = vmatprep.mubr.f32.mxu0 %v4359
    %5819 = vmatmul.mubr.f32.gmra.mrb[0].mxu0 %v4358
    %v5820 = vpop.f32.mrb[0].mxu0
    %v5821 = vadd.f32 0.0, %v5820
    %v5822 = vpop.f32.mrb[0].mxu0
    %5823 = vdwg.mxu0
    %5824 = vmatprep.subr.mxu0 0.0
    %5825 = vmatpush1.msra.mxu0 %v5395
    %5826 = vmatprep.subr.mxu0 0.0
    %5827 = vmatpush1.msra.mxu0 %v5396
    %5828 = vmatprep.subr.mxu0 0.0
    %5829 = vmatpush1.msra.mxu0 %v5397
    %5830 = vmatprep.subr.mxu0 0.0
    %5831 = vmatpush1.msra.mxu0 %v5398
    %5832 = vmatprep.subr.mxu0 0.0
    %5833 = vmatpush1.msra.mxu0 %v5399
    %5834 = vmatprep.subr.mxu0 0.0
    %5835 = vmatpush1.msra.mxu0 %v5400
    %5836 = vmatprep.subr.mxu0 0.0
    %5837 = vmatpush1.msra.mxu0 %v5401
    %5838 = vmatprep.subr.mxu0 0.0
    %5839 = vmatpush1.msra.mxu0 %v5402
    %5840 = vmatprep.subr.mxu0 0.0
    %5841 = vmatpush1.msra.mxu0 %v5403
    %5842 = vmatprep.subr.mxu0 0.0
    %5843 = vmatpush1.msra.mxu0 %v5404
    %5844 = vmatprep.subr.mxu0 0.0
    %5845 = vmatpush1.msra.mxu0 %v5405
    %5846 = vmatprep.subr.mxu0 0.0
    %5847 = vmatpush1.msra.mxu0 %v5406
    %5848 = vmatprep.subr.mxu0 0.0
    %5849 = vmatpush1.msra.mxu0 %v5407
    %5850 = vmatprep.subr.mxu0 0.0
    %5851 = vmatpush1.msra.mxu0 %v5408
    %5852 = vmatprep.subr.mxu0 0.0
    %5853 = vmatpush1.msra.mxu0 %v5409
    %5854 = vmatprep.subr.mxu0 0.0
    %5855 = vmatpush1.msra.mxu0 %v5410
    %5856 = vmatprep.subr.mxu0 0.0
    %5857 = vmatpush1.msra.mxu0 %v5411
    %5858 = vmatprep.subr.mxu0 0.0
    %5859 = vmatpush1.msra.mxu0 %v5412
    %5860 = vmatprep.subr.mxu0 0.0
    %5861 = vmatpush1.msra.mxu0 %v5413
    %5862 = vmatprep.subr.mxu0 0.0
    %5863 = vmatpush1.msra.mxu0 %v5414
    %5864 = vmatprep.subr.mxu0 0.0
    %5865 = vmatpush1.msra.mxu0 %v5415
    %5866 = vmatprep.subr.mxu0 0.0
    %5867 = vmatpush1.msra.mxu0 %v5416
    %5868 = vmatprep.subr.mxu0 0.0
    %5869 = vmatpush1.msra.mxu0 %v5417
    %5870 = vmatprep.subr.mxu0 0.0
    %5871 = vmatpush1.msra.mxu0 %v5418
    %5872 = vmatprep.subr.mxu0 0.0
    %5873 = vmatpush1.msra.mxu0 %v5419
    %5874 = vmatprep.subr.mxu0 0.0
    %5875 = vmatpush1.msra.mxu0 %v5420
    %5876 = vmatprep.subr.mxu0 0.0
    %5877 = vmatpush1.msra.mxu0 %v5421
    %5878 = vmatprep.subr.mxu0 0.0
    %5879 = vmatpush1.msra.mxu0 %v5422
    %5880 = vmatprep.subr.mxu0 0.0
    %5881 = vmatpush1.msra.mxu0 %v5423
    %5882 = vmatprep.subr.mxu0 0.0
    %5883 = vmatpush1.msra.mxu0 %v5424
    %5884 = vmatprep.subr.mxu0 0.0
    %5885 = vmatpush1.msra.mxu0 %v5425
    %5886 = vmatprep.subr.mxu0 0.0
    %5887 = vmatpush1.msra.mxu0 %v5426
    %5888 = vmatprep.mubr.f32.mxu0 %v4109
    %5889 = vmatmul.mubr.f32.gmra.mrb[0].mxu0 %v4108
    %v5890 = vpop.f32.mrb[0].mxu0
    %v5891 = vadd.f32 %v5641, %v5890
    %v5892 = vpop.f32.mrb[0].mxu0
    %5893 = vmatprep.mubr.f32.mxu0 %v4116
    %5894 = vmatmul.mubr.f32.gmra.mrb[0].mxu0 %v4115
    %v5895 = vpop.f32.mrb[0].mxu0
    %v5896 = vadd.f32 %v5646, %v5895
    %v5897 = vpop.f32.mrb[0].mxu0
    %5898 = vmatprep.mubr.f32.mxu0 %v4123
    %5899 = vmatmul.mubr.f32.gmra.mrb[0].mxu0 %v4122
    %v5900 = vpop.f32.mrb[0].mxu0
    %v5901 = vadd.f32 %v5651, %v5900
    %v5902 = vpop.f32.mrb[0].mxu0
    %5903 = vmatprep.mubr.f32.mxu0 %v4130
    %5904 = vmatmul.mubr.f32.gmra.mrb[0].mxu0 %v4129
    %v5905 = vpop.f32.mrb[0].mxu0
    %v5906 = vadd.f32 %v5656, %v5905
    %v5907 = vpop.f32.mrb[0].mxu0
    %5908 = vmatprep.mubr.f32.mxu0 %v4137
    %5909 = vmatmul.mubr.f32.gmra.mrb[0].mxu0 %v4136
    %v5910 = vpop.f32.mrb[0].mxu0
    %v5911 = vadd.f32 %v5661, %v5910
    %v5912 = vpop.f32.mrb[0].mxu0
    %5913 = vmatprep.mubr.f32.mxu0 %v4144
    %5914 = vmatmul.mubr.f32.gmra.mrb[0].mxu0 %v4143
    %v5915 = vpop.f32.mrb[0].mxu0
    %v5916 = vadd.f32 %v5666, %v5915
    %v5917 = vpop.f32.mrb[0].mxu0
    %5918 = vmatprep.mubr.f32.mxu0 %v4151
    %5919 = vmatmul.mubr.f32.gmra.mrb[0].mxu0 %v4150
    %v5920 = vpop.f32.mrb[0].mxu0
    %v5921 = vadd.f32 %v5671, %v5920
    %v5922 = vpop.f32.mrb[0].mxu0
    %5923 = vmatprep.mubr.f32.mxu0 %v4158
    %5924 = vmatmul.mubr.f32.gmra.mrb[0].mxu0 %v4157
    %v5925 = vpop.f32.mrb[0].mxu0
    %v5926 = vadd.f32 %v5676, %v5925
    %v5927 = vpop.f32.mrb[0].mxu0
    %5928 = vmatprep.mubr.f32.mxu0 %v4165
    %5929 = vmatmul.mubr.f32.gmra.mrb[0].mxu0 %v4164
    %v5930 = vpop.f32.mrb[0].mxu0
    %v5931 = vadd.f32 %v5681, %v5930
    %v5932 = vpop.f32.mrb[0].mxu0
    %5933 = vmatprep.mubr.f32.mxu0 %v4172
    %5934 = vmatmul.mubr.f32.gmra.mrb[0].mxu0 %v4171
    %v5935 = vpop.f32.mrb[0].mxu0
    %v5936 = vadd.f32 %v5686, %v5935
    %v5937 = vpop.f32.mrb[0].mxu0
    %5938 = vmatprep.mubr.f32.mxu0 %v4179
    %5939 = vmatmul.mubr.f32.gmra.mrb[0].mxu0 %v4178
    %v5940 = vpop.f32.mrb[0].mxu0
    %v5941 = vadd.f32 %v5691, %v5940
    %v5942 = vpop.f32.mrb[0].mxu0
    %5943 = vmatprep.mubr.f32.mxu0 %v4186
    %5944 = vmatmul.mubr.f32.gmra.mrb[0].mxu0 %v4185
    %v5945 = vpop.f32.mrb[0].mxu0
    %v5946 = vadd.f32 %v5696, %v5945
    %v5947 = vpop.f32.mrb[0].mxu0
    %5948 = vmatprep.mubr.f32.mxu0 %v4193
    %5949 = vmatmul.mubr.f32.gmra.mrb[0].mxu0 %v4192
    %v5950 = vpop.f32.mrb[0].mxu0
    %v5951 = vadd.f32 %v5701, %v5950
    %v5952 = vpop.f32.mrb[0].mxu0
    %5953 = vmatprep.mubr.f32.mxu0 %v4200
    %5954 = vmatmul.mubr.f32.gmra.mrb[0].mxu0 %v4199
    %v5955 = vpop.f32.mrb[0].mxu0
    %v5956 = vadd.f32 %v5706, %v5955
    %v5957 = vpop.f32.mrb[0].mxu0
    %5958 = vmatprep.mubr.f32.mxu0 %v4207
    %5959 = vmatmul.mubr.f32.gmra.mrb[0].mxu0 %v4206
    %v5960 = vpop.f32.mrb[0].mxu0
    %v5961 = vadd.f32 %v5711, %v5960
    %v5962 = vpop.f32.mrb[0].mxu0
    %5963 = vmatprep.mubr.f32.mxu0 %v4214
    %5964 = vmatmul.mubr.f32.gmra.mrb[0].mxu0 %v4213
    %v5965 = vpop.f32.mrb[0].mxu0
    %v5966 = vadd.f32 %v5716, %v5965
    %v5967 = vpop.f32.mrb[0].mxu0
    %5968 = vmatprep.mubr.f32.mxu0 %v4221
    %5969 = vmatmul.mubr.f32.gmra.mrb[0].mxu0 %v4220
    %v5970 = vpop.f32.mrb[0].mxu0
    %v5971 = vadd.f32 %v5721, %v5970
    %v5972 = vpop.f32.mrb[0].mxu0
    %5973 = vmatprep.mubr.f32.mxu0 %v4228
    %5974 = vmatmul.mubr.f32.gmra.mrb[0].mxu0 %v4227
    %v5975 = vpop.f32.mrb[0].mxu0
    %v5976 = vadd.f32 %v5726, %v5975
    %v5977 = vpop.f32.mrb[0].mxu0
    %5978 = vmatprep.mubr.f32.mxu0 %v4235
    %5979 = vmatmul.mubr.f32.gmra.mrb[0].mxu0 %v4234
    %v5980 = vpop.f32.mrb[0].mxu0
    %v5981 = vadd.f32 %v5731, %v5980
    %v5982 = vpop.f32.mrb[0].mxu0
    %5983 = vmatprep.mubr.f32.mxu0 %v4242
    %5984 = vmatmul.mubr.f32.gmra.mrb[0].mxu0 %v4241
    %v5985 = vpop.f32.mrb[0].mxu0
    %v5986 = vadd.f32 %v5736, %v5985
    %v5987 = vpop.f32.mrb[0].mxu0
    %5988 = vmatprep.mubr.f32.mxu0 %v4249
    %5989 = vmatmul.mubr.f32.gmra.mrb[0].mxu0 %v4248
    %v5990 = vpop.f32.mrb[0].mxu0
    %v5991 = vadd.f32 %v5741, %v5990
    %v5992 = vpop.f32.mrb[0].mxu0
    %5993 = vmatprep.mubr.f32.mxu0 %v4256
    %5994 = vmatmul.mubr.f32.gmra.mrb[0].mxu0 %v4255
    %v5995 = vpop.f32.mrb[0].mxu0
    %v5996 = vadd.f32 %v5746, %v5995
    %v5997 = vpop.f32.mrb[0].mxu0
    %5998 = vmatprep.mubr.f32.mxu0 %v4263
    %5999 = vmatmul.mubr.f32.gmra.mrb[0].mxu0 %v4262
    %v6000 = vpop.f32.mrb[0].mxu0
    %v6001 = vadd.f32 %v5751, %v6000
    %v6002 = vpop.f32.mrb[0].mxu0
    %6003 = vmatprep.mubr.f32.mxu0 %v4270
    %6004 = vmatmul.mubr.f32.gmra.mrb[0].mxu0 %v4269
    %v6005 = vpop.f32.mrb[0].mxu0
    %v6006 = vadd.f32 %v5756, %v6005
    %v6007 = vpop.f32.mrb[0].mxu0
    %6008 = vmatprep.mubr.f32.mxu0 %v4277
    %6009 = vmatmul.mubr.f32.gmra.mrb[0].mxu0 %v4276
    %v6010 = vpop.f32.mrb[0].mxu0
    %v6011 = vadd.f32 %v5761, %v6010
    %v6012 = vpop.f32.mrb[0].mxu0
    %6013 = vmatprep.mubr.f32.mxu0 %v4284
    %6014 = vmatmul.mubr.f32.gmra.mrb[0].mxu0 %v4283
    %v6015 = vpop.f32.mrb[0].mxu0
    %v6016 = vadd.f32 %v5766, %v6015
    %v6017 = vpop.f32.mrb[0].mxu0
    %6018 = vmatprep.mubr.f32.mxu0 %v4291
    %6019 = vmatmul.mubr.f32.gmra.mrb[0].mxu0 %v4290
    %v6020 = vpop.f32.mrb[0].mxu0
    %v6021 = vadd.f32 %v5771, %v6020
    %v6022 = vpop.f32.mrb[0].mxu0
    %6023 = vmatprep.mubr.f32.mxu0 %v4298
    %6024 = vmatmul.mubr.f32.gmra.mrb[0].mxu0 %v4297
    %v6025 = vpop.f32.mrb[0].mxu0
    %v6026 = vadd.f32 %v5776, %v6025
    %v6027 = vpop.f32.mrb[0].mxu0
    %6028 = vmatprep.mubr.f32.mxu0 %v4305
    %6029 = vmatmul.mubr.f32.gmra.mrb[0].mxu0 %v4304
    %v6030 = vpop.f32.mrb[0].mxu0
    %v6031 = vadd.f32 %v5781, %v6030
    %v6032 = vpop.f32.mrb[0].mxu0
    %6033 = vmatprep.mubr.f32.mxu0 %v4312
    %6034 = vmatmul.mubr.f32.gmra.mrb[0].mxu0 %v4311
    %v6035 = vpop.f32.mrb[0].mxu0
    %v6036 = vadd.f32 %v5786, %v6035
    %v6037 = vpop.f32.mrb[0].mxu0
    %6038 = vmatprep.mubr.f32.mxu0 %v4319
    %6039 = vmatmul.mubr.f32.gmra.mrb[0].mxu0 %v4318
    %v6040 = vpop.f32.mrb[0].mxu0
    %v6041 = vadd.f32 %v5791, %v6040
    %v6042 = vpop.f32.mrb[0].mxu0
    %6043 = vmatprep.mubr.f32.mxu0 %v4326
    %6044 = vmatmul.mubr.f32.gmra.mrb[0].mxu0 %v4325
    %v6045 = vpop.f32.mrb[0].mxu0
    %v6046 = vadd.f32 %v5796, %v6045
    %v6047 = vpop.f32.mrb[0].mxu0
    %6048 = vmatprep.mubr.f32.mxu0 %v4333
    %6049 = vmatmul.mubr.f32.gmra.mrb[0].mxu0 %v4332
    %v6050 = vpop.f32.mrb[0].mxu0
    %v6051 = vadd.f32 %v5801, %v6050
    %v6052 = vpop.f32.mrb[0].mxu0
    %6053 = vmatprep.mubr.f32.mxu0 %v4340
    %6054 = vmatmul.mubr.f32.gmra.mrb[0].mxu0 %v4339
    %v6055 = vpop.f32.mrb[0].mxu0
    %v6056 = vadd.f32 %v5806, %v6055
    %v6057 = vpop.f32.mrb[0].mxu0
    %6058 = vmatprep.mubr.f32.mxu0 %v4347
    %6059 = vmatmul.mubr.f32.gmra.mrb[0].mxu0 %v4346
    %v6060 = vpop.f32.mrb[0].mxu0
    %v6061 = vadd.f32 %v5811, %v6060
    %v6062 = vpop.f32.mrb[0].mxu0
    %6063 = vmatprep.mubr.f32.mxu0 %v4354
    %6064 = vmatmul.mubr.f32.gmra.mrb[0].mxu0 %v4353
    %v6065 = vpop.f32.mrb[0].mxu0
    %v6066 = vadd.f32 %v5816, %v6065
    %v6067 = vpop.f32.mrb[0].mxu0
    %6068 = vmatprep.mubr.f32.mxu0 %v4361
    %6069 = vmatmul.mubr.f32.gmra.mrb[0].mxu0 %v4360
    %v6070 = vpop.f32.mrb[0].mxu0
    %v6071 = vadd.f32 %v5821, %v6070
    %v6072 = vpop.f32.mrb[0].mxu0
    %6073 = vdwg.mxu0
    %6074 = vmatprep.subr.mxu0 0.0
    %6075 = vmatpush1.msra.mxu0 %v5427
    %6076 = vmatprep.subr.mxu0 0.0
    %6077 = vmatpush1.msra.mxu0 %v5428
    %6078 = vmatprep.subr.mxu0 0.0
    %6079 = vmatpush1.msra.mxu0 %v5429
    %6080 = vmatprep.subr.mxu0 0.0
    %6081 = vmatpush1.msra.mxu0 %v5430
    %6082 = vmatprep.subr.mxu0 0.0
    %6083 = vmatpush1.msra.mxu0 %v5431
    %6084 = vmatprep.subr.mxu0 0.0
    %6085 = vmatpush1.msra.mxu0 %v5432
    %6086 = vmatprep.subr.mxu0 0.0
    %6087 = vmatpush1.msra.mxu0 %v5433
    %6088 = vmatprep.subr.mxu0 0.0
    %6089 = vmatpush1.msra.mxu0 %v5434
    %6090 = vmatprep.subr.mxu0 0.0
    %6091 = vmatpush1.msra.mxu0 %v5435
    %6092 = vmatprep.subr.mxu0 0.0
    %6093 = vmatpush1.msra.mxu0 %v5436
    %6094 = vmatprep.subr.mxu0 0.0
    %6095 = vmatpush1.msra.mxu0 %v5437
    %6096 = vmatprep.subr.mxu0 0.0
    %6097 = vmatpush1.msra.mxu0 %v5438
    %6098 = vmatprep.subr.mxu0 0.0
    %6099 = vmatpush1.msra.mxu0 %v5439
    %6100 = vmatprep.subr.mxu0 0.0
    %6101 = vmatpush1.msra.mxu0 %v5440
    %6102 = vmatprep.subr.mxu0 0.0
    %6103 = vmatpush1.msra.mxu0 %v5441
    %6104 = vmatprep.subr.mxu0 0.0
    %6105 = vmatpush1.msra.mxu0 %v5442
    %6106 = vmatprep.subr.mxu0 0.0
    %6107 = vmatpush1.msra.mxu0 %v5443
    %6108 = vmatprep.subr.mxu0 0.0
    %6109 = vmatpush1.msra.mxu0 %v5444
    %6110 = vmatprep.subr.mxu0 0.0
    %6111 = vmatpush1.msra.mxu0 %v5445
    %6112 = vmatprep.subr.mxu0 0.0
    %6113 = vmatpush1.msra.mxu0 %v5446
    %6114 = vmatprep.subr.mxu0 0.0
    %6115 = vmatpush1.msra.mxu0 %v5447
    %6116 = vmatprep.subr.mxu0 0.0
    %6117 = vmatpush1.msra.mxu0 %v5448
    %6118 = vmatprep.subr.mxu0 0.0
    %6119 = vmatpush1.msra.mxu0 %v5449
    %6120 = vmatprep.subr.mxu0 0.0
    %6121 = vmatpush1.msra.mxu0 %v5450
    %6122 = vmatprep.subr.mxu0 0.0
    %6123 = vmatpush1.msra.mxu0 %v5451
    %6124 = vmatprep.subr.mxu0 0.0
    %6125 = vmatpush1.msra.mxu0 %v5452
    %6126 = vmatprep.subr.mxu0 0.0
    %6127 = vmatpush1.msra.mxu0 %v5453
    %6128 = vmatprep.subr.mxu0 0.0
    %6129 = vmatpush1.msra.mxu0 %v5454
    %6130 = vmatprep.subr.mxu0 0.0
    %6131 = vmatpush1.msra.mxu0 %v5455
    %6132 = vmatprep.subr.mxu0 0.0
    %6133 = vmatpush1.msra.mxu0 %v5456
    %6134 = vmatprep.subr.mxu0 0.0
    %6135 = vmatpush1.msra.mxu0 %v5457
    %6136 = vmatprep.subr.mxu0 0.0
    %6137 = vmatpush1.msra.mxu0 %v5458
    %6138 = vmatprep.mubr.f32.mxu0 %v4111
    %6139 = vmatmul.mubr.f32.gmra.mrb[0].mxu0 %v4110
    %v6140 = vpop.f32.mrb[0].mxu0
    %v6141 = vadd.f32 %v5891, %v6140
    %v6142 = vpop.f32.mrb[0].mxu0
    %6143 = vmatprep.mubr.f32.mxu0 %v4118
    %6144 = vmatmul.mubr.f32.gmra.mrb[0].mxu0 %v4117
    %v6145 = vpop.f32.mrb[0].mxu0
    %v6146 = vadd.f32 %v5896, %v6145
    %v6147 = vpop.f32.mrb[0].mxu0
    %6148 = vmatprep.mubr.f32.mxu0 %v4125
    %6149 = vmatmul.mubr.f32.gmra.mrb[0].mxu0 %v4124
    %v6150 = vpop.f32.mrb[0].mxu0
    %v6151 = vadd.f32 %v5901, %v6150
    %v6152 = vpop.f32.mrb[0].mxu0
    %6153 = vmatprep.mubr.f32.mxu0 %v4132
    %6154 = vmatmul.mubr.f32.gmra.mrb[0].mxu0 %v4131
    %v6155 = vpop.f32.mrb[0].mxu0
    %v6156 = vadd.f32 %v5906, %v6155
    %v6157 = vpop.f32.mrb[0].mxu0
    %6158 = vmatprep.mubr.f32.mxu0 %v4139
    %6159 = vmatmul.mubr.f32.gmra.mrb[0].mxu0 %v4138
    %v6160 = vpop.f32.mrb[0].mxu0
    %v6161 = vadd.f32 %v5911, %v6160
    %v6162 = vpop.f32.mrb[0].mxu0
    %6163 = vmatprep.mubr.f32.mxu0 %v4146
    %6164 = vmatmul.mubr.f32.gmra.mrb[0].mxu0 %v4145
    %v6165 = vpop.f32.mrb[0].mxu0
    %v6166 = vadd.f32 %v5916, %v6165
    %v6167 = vpop.f32.mrb[0].mxu0
    %6168 = vmatprep.mubr.f32.mxu0 %v4153
    %6169 = vmatmul.mubr.f32.gmra.mrb[0].mxu0 %v4152
    %v6170 = vpop.f32.mrb[0].mxu0
    %v6171 = vadd.f32 %v5921, %v6170
    %v6172 = vpop.f32.mrb[0].mxu0
    %6173 = vmatprep.mubr.f32.mxu0 %v4160
    %6174 = vmatmul.mubr.f32.gmra.mrb[0].mxu0 %v4159
    %v6175 = vpop.f32.mrb[0].mxu0
    %v6176 = vadd.f32 %v5926, %v6175
    %v6177 = vpop.f32.mrb[0].mxu0
    %6178 = vmatprep.mubr.f32.mxu0 %v4167
    %6179 = vmatmul.mubr.f32.gmra.mrb[0].mxu0 %v4166
    %v6180 = vpop.f32.mrb[0].mxu0
    %v6181 = vadd.f32 %v5931, %v6180
    %v6182 = vpop.f32.mrb[0].mxu0
    %6183 = vmatprep.mubr.f32.mxu0 %v4174
    %6184 = vmatmul.mubr.f32.gmra.mrb[0].mxu0 %v4173
    %v6185 = vpop.f32.mrb[0].mxu0
    %v6186 = vadd.f32 %v5936, %v6185
    %v6187 = vpop.f32.mrb[0].mxu0
    %6188 = vmatprep.mubr.f32.mxu0 %v4181
    %6189 = vmatmul.mubr.f32.gmra.mrb[0].mxu0 %v4180
    %v6190 = vpop.f32.mrb[0].mxu0
    %v6191 = vadd.f32 %v5941, %v6190
    %v6192 = vpop.f32.mrb[0].mxu0
    %6193 = vmatprep.mubr.f32.mxu0 %v4188
    %6194 = vmatmul.mubr.f32.gmra.mrb[0].mxu0 %v4187
    %v6195 = vpop.f32.mrb[0].mxu0
    %v6196 = vadd.f32 %v5946, %v6195
    %v6197 = vpop.f32.mrb[0].mxu0
    %6198 = vmatprep.mubr.f32.mxu0 %v4195
    %6199 = vmatmul.mubr.f32.gmra.mrb[0].mxu0 %v4194
    %v6200 = vpop.f32.mrb[0].mxu0
    %v6201 = vadd.f32 %v5951, %v6200
    %v6202 = vpop.f32.mrb[0].mxu0
    %6203 = vmatprep.mubr.f32.mxu0 %v4202
    %6204 = vmatmul.mubr.f32.gmra.mrb[0].mxu0 %v4201
    %v6205 = vpop.f32.mrb[0].mxu0
    %v6206 = vadd.f32 %v5956, %v6205
    %v6207 = vpop.f32.mrb[0].mxu0
    %6208 = vmatprep.mubr.f32.mxu0 %v4209
    %6209 = vmatmul.mubr.f32.gmra.mrb[0].mxu0 %v4208
    %v6210 = vpop.f32.mrb[0].mxu0
    %v6211 = vadd.f32 %v5961, %v6210
    %v6212 = vpop.f32.mrb[0].mxu0
    %6213 = vmatprep.mubr.f32.mxu0 %v4216
    %6214 = vmatmul.mubr.f32.gmra.mrb[0].mxu0 %v4215
    %v6215 = vpop.f32.mrb[0].mxu0
    %v6216 = vadd.f32 %v5966, %v6215
    %v6217 = vpop.f32.mrb[0].mxu0
    %6218 = vmatprep.mubr.f32.mxu0 %v4223
    %6219 = vmatmul.mubr.f32.gmra.mrb[0].mxu0 %v4222
    %v6220 = vpop.f32.mrb[0].mxu0
    %v6221 = vadd.f32 %v5971, %v6220
    %v6222 = vpop.f32.mrb[0].mxu0
    %6223 = vmatprep.mubr.f32.mxu0 %v4230
    %6224 = vmatmul.mubr.f32.gmra.mrb[0].mxu0 %v4229
    %v6225 = vpop.f32.mrb[0].mxu0
    %v6226 = vadd.f32 %v5976, %v6225
    %v6227 = vpop.f32.mrb[0].mxu0
    %6228 = vmatprep.mubr.f32.mxu0 %v4237
    %6229 = vmatmul.mubr.f32.gmra.mrb[0].mxu0 %v4236
    %v6230 = vpop.f32.mrb[0].mxu0
    %v6231 = vadd.f32 %v5981, %v6230
    %v6232 = vpop.f32.mrb[0].mxu0
    %6233 = vmatprep.mubr.f32.mxu0 %v4244
    %6234 = vmatmul.mubr.f32.gmra.mrb[0].mxu0 %v4243
    %v6235 = vpop.f32.mrb[0].mxu0
    %v6236 = vadd.f32 %v5986, %v6235
    %v6237 = vpop.f32.mrb[0].mxu0
    %6238 = vmatprep.mubr.f32.mxu0 %v4251
    %6239 = vmatmul.mubr.f32.gmra.mrb[0].mxu0 %v4250
    %v6240 = vpop.f32.mrb[0].mxu0
    %v6241 = vadd.f32 %v5991, %v6240
    %v6242 = vpop.f32.mrb[0].mxu0
    %6243 = vmatprep.mubr.f32.mxu0 %v4258
    %6244 = vmatmul.mubr.f32.gmra.mrb[0].mxu0 %v4257
    %v6245 = vpop.f32.mrb[0].mxu0
    %v6246 = vadd.f32 %v5996, %v6245
    %v6247 = vpop.f32.mrb[0].mxu0
    %6248 = vmatprep.mubr.f32.mxu0 %v4265
    %6249 = vmatmul.mubr.f32.gmra.mrb[0].mxu0 %v4264
    %v6250 = vpop.f32.mrb[0].mxu0
    %v6251 = vadd.f32 %v6001, %v6250
    %v6252 = vpop.f32.mrb[0].mxu0
    %6253 = vmatprep.mubr.f32.mxu0 %v4272
    %6254 = vmatmul.mubr.f32.gmra.mrb[0].mxu0 %v4271
    %v6255 = vpop.f32.mrb[0].mxu0
    %v6256 = vadd.f32 %v6006, %v6255
    %v6257 = vpop.f32.mrb[0].mxu0
    %6258 = vmatprep.mubr.f32.mxu0 %v4279
    %6259 = vmatmul.mubr.f32.gmra.mrb[0].mxu0 %v4278
    %v6260 = vpop.f32.mrb[0].mxu0
    %v6261 = vadd.f32 %v6011, %v6260
    %v6262 = vpop.f32.mrb[0].mxu0
    %6263 = vmatprep.mubr.f32.mxu0 %v4286
    %6264 = vmatmul.mubr.f32.gmra.mrb[0].mxu0 %v4285
    %v6265 = vpop.f32.mrb[0].mxu0
    %v6266 = vadd.f32 %v6016, %v6265
    %v6267 = vpop.f32.mrb[0].mxu0
    %6268 = vmatprep.mubr.f32.mxu0 %v4293
    %6269 = vmatmul.mubr.f32.gmra.mrb[0].mxu0 %v4292
    %v6270 = vpop.f32.mrb[0].mxu0
    %v6271 = vadd.f32 %v6021, %v6270
    %v6272 = vpop.f32.mrb[0].mxu0
    %6273 = vmatprep.mubr.f32.mxu0 %v4300
    %6274 = vmatmul.mubr.f32.gmra.mrb[0].mxu0 %v4299
    %v6275 = vpop.f32.mrb[0].mxu0
    %v6276 = vadd.f32 %v6026, %v6275
    %v6277 = vpop.f32.mrb[0].mxu0
    %6278 = vmatprep.mubr.f32.mxu0 %v4307
    %6279 = vmatmul.mubr.f32.gmra.mrb[0].mxu0 %v4306
    %v6280 = vpop.f32.mrb[0].mxu0
    %v6281 = vadd.f32 %v6031, %v6280
    %v6282 = vpop.f32.mrb[0].mxu0
    %6283 = vmatprep.mubr.f32.mxu0 %v4314
    %6284 = vmatmul.mubr.f32.gmra.mrb[0].mxu0 %v4313
    %v6285 = vpop.f32.mrb[0].mxu0
    %v6286 = vadd.f32 %v6036, %v6285
    %v6287 = vpop.f32.mrb[0].mxu0
    %6288 = vmatprep.mubr.f32.mxu0 %v4321
    %6289 = vmatmul.mubr.f32.gmra.mrb[0].mxu0 %v4320
    %v6290 = vpop.f32.mrb[0].mxu0
    %v6291 = vadd.f32 %v6041, %v6290
    %v6292 = vpop.f32.mrb[0].mxu0
    %6293 = vmatprep.mubr.f32.mxu0 %v4328
    %6294 = vmatmul.mubr.f32.gmra.mrb[0].mxu0 %v4327
    %v6295 = vpop.f32.mrb[0].mxu0
    %v6296 = vadd.f32 %v6046, %v6295
    %v6297 = vpop.f32.mrb[0].mxu0
    %6298 = vmatprep.mubr.f32.mxu0 %v4335
    %6299 = vmatmul.mubr.f32.gmra.mrb[0].mxu0 %v4334
    %v6300 = vpop.f32.mrb[0].mxu0
    %v6301 = vadd.f32 %v6051, %v6300
    %v6302 = vpop.f32.mrb[0].mxu0
    %6303 = vmatprep.mubr.f32.mxu0 %v4342
    %6304 = vmatmul.mubr.f32.gmra.mrb[0].mxu0 %v4341
    %v6305 = vpop.f32.mrb[0].mxu0
    %v6306 = vadd.f32 %v6056, %v6305
    %v6307 = vpop.f32.mrb[0].mxu0
    %6308 = vmatprep.mubr.f32.mxu0 %v4349
    %6309 = vmatmul.mubr.f32.gmra.mrb[0].mxu0 %v4348
    %v6310 = vpop.f32.mrb[0].mxu0
    %v6311 = vadd.f32 %v6061, %v6310
    %v6312 = vpop.f32.mrb[0].mxu0
    %6313 = vmatprep.mubr.f32.mxu0 %v4356
    %6314 = vmatmul.mubr.f32.gmra.mrb[0].mxu0 %v4355
    %v6315 = vpop.f32.mrb[0].mxu0
    %v6316 = vadd.f32 %v6066, %v6315
    %v6317 = vpop.f32.mrb[0].mxu0
    %6318 = vmatprep.mubr.f32.mxu0 %v4363
    %6319 = vmatmul.mubr.f32.gmra.mrb[0].mxu0 %v4362
    %v6320 = vpop.f32.mrb[0].mxu0
    %v6321 = vadd.f32 %v6071, %v6320
    %v6322 = vpop.f32.mrb[0].mxu0
    %6323 = vdwg.mxu0
    %6324 = vmatprep.subr.mxu0 0.0
    %6325 = vmatpush1.msra.mxu0 %v5459
    %6326 = vmatprep.subr.mxu0 0.0
    %6327 = vmatpush1.msra.mxu0 %v5460
    %6328 = vmatprep.subr.mxu0 0.0
    %6329 = vmatpush1.msra.mxu0 %v5461
    %6330 = vmatprep.subr.mxu0 0.0
    %6331 = vmatpush1.msra.mxu0 0.0
    %6332 = vmatprep.subr.mxu0 0.0
    %6333 = vmatpush1.msra.mxu0 0.0
    %6334 = vmatprep.subr.mxu0 0.0
    %6335 = vmatpush1.msra.mxu0 0.0
    %6336 = vmatprep.subr.mxu0 0.0
    %6337 = vmatpush1.msra.mxu0 0.0
    %6338 = vmatprep.subr.mxu0 0.0
    %6339 = vmatpush1.msra.mxu0 0.0
    %6340 = vmatprep.subr.mxu0 0.0
    %6341 = vmatpush1.msra.mxu0 0.0
    %6342 = vmatprep.subr.mxu0 0.0
    %6343 = vmatpush1.msra.mxu0 0.0
    %6344 = vmatprep.subr.mxu0 0.0
    %6345 = vmatpush1.msra.mxu0 0.0
    %6346 = vmatprep.subr.mxu0 0.0
    %6347 = vmatpush1.msra.mxu0 0.0
    %6348 = vmatprep.subr.mxu0 0.0
    %6349 = vmatpush1.msra.mxu0 0.0
    %6350 = vmatprep.subr.mxu0 0.0
    %6351 = vmatpush1.msra.mxu0 0.0
    %6352 = vmatprep.subr.mxu0 0.0
    %6353 = vmatpush1.msra.mxu0 0.0
    %6354 = vmatprep.subr.mxu0 0.0
    %6355 = vmatpush1.msra.mxu0 0.0
    %6356 = vmatprep.subr.mxu0 0.0
    %6357 = vmatpush1.msra.mxu0 0.0
    %6358 = vmatprep.subr.mxu0 0.0
    %6359 = vmatpush1.msra.mxu0 0.0
    %6360 = vmatprep.subr.mxu0 0.0
    %6361 = vmatpush1.msra.mxu0 0.0
    %6362 = vmatprep.subr.mxu0 0.0
    %6363 = vmatpush1.msra.mxu0 0.0
    %6364 = vmatprep.subr.mxu0 0.0
    %6365 = vmatpush1.msra.mxu0 0.0
    %6366 = vmatprep.subr.mxu0 0.0
    %6367 = vmatpush1.msra.mxu0 0.0
    %6368 = vmatprep.subr.mxu0 0.0
    %6369 = vmatpush1.msra.mxu0 0.0
    %6370 = vmatprep.subr.mxu0 0.0
    %6371 = vmatpush1.msra.mxu0 0.0
    %6372 = vmatprep.subr.mxu0 0.0
    %6373 = vmatpush1.msra.mxu0 0.0
    %6374 = vmatprep.subr.mxu0 0.0
    %6375 = vmatpush1.msra.mxu0 0.0
    %6376 = vmatprep.subr.mxu0 0.0
    %6377 = vmatpush1.msra.mxu0 0.0
    %6378 = vmatprep.subr.mxu0 0.0
    %6379 = vmatpush1.msra.mxu0 0.0
    %6380 = vmatprep.subr.mxu0 0.0
    %6381 = vmatpush1.msra.mxu0 0.0
    %6382 = vmatprep.subr.mxu0 0.0
    %6383 = vmatpush1.msra.mxu0 0.0
    %6384 = vmatprep.subr.mxu0 0.0
    %6385 = vmatpush1.msra.mxu0 0.0
    %6386 = vmatprep.subr.mxu0 0.0
    %6387 = vmatpush1.msra.mxu0 0.0
    %6388 = vmatprep.mubr.f32.mxu0 0.0
    %6389 = vmatmul.mubr.f32.gmra.mrb[0].mxu0 %v5464
    %v6390 = vpop.f32.mrb[0].mxu0
    %v6391 = vadd.f32 %v6141, %v6390
    %v6392 = vpop.f32.mrb[0].mxu0
    %6393 = vmatprep.mubr.f32.mxu0 0.0
    %6394 = vmatmul.mubr.f32.gmra.mrb[0].mxu0 %v5467
    %v6395 = vpop.f32.mrb[0].mxu0
    %v6396 = vadd.f32 %v6146, %v6395
    %v6397 = vpop.f32.mrb[0].mxu0
    %6398 = vmatprep.mubr.f32.mxu0 0.0
    %6399 = vmatmul.mubr.f32.gmra.mrb[0].mxu0 %v5470
    %v6400 = vpop.f32.mrb[0].mxu0
    %v6401 = vadd.f32 %v6151, %v6400
    %v6402 = vpop.f32.mrb[0].mxu0
    %6403 = vmatprep.mubr.f32.mxu0 0.0
    %6404 = vmatmul.mubr.f32.gmra.mrb[0].mxu0 %v5473
    %v6405 = vpop.f32.mrb[0].mxu0
    %v6406 = vadd.f32 %v6156, %v6405
    %v6407 = vpop.f32.mrb[0].mxu0
    %6408 = vmatprep.mubr.f32.mxu0 0.0
    %6409 = vmatmul.mubr.f32.gmra.mrb[0].mxu0 %v5476
    %v6410 = vpop.f32.mrb[0].mxu0
    %v6411 = vadd.f32 %v6161, %v6410
    %v6412 = vpop.f32.mrb[0].mxu0
    %6413 = vmatprep.mubr.f32.mxu0 0.0
    %6414 = vmatmul.mubr.f32.gmra.mrb[0].mxu0 %v5479
    %v6415 = vpop.f32.mrb[0].mxu0
    %v6416 = vadd.f32 %v6166, %v6415
    %v6417 = vpop.f32.mrb[0].mxu0
    %6418 = vmatprep.mubr.f32.mxu0 0.0
    %6419 = vmatmul.mubr.f32.gmra.mrb[0].mxu0 %v5482
    %v6420 = vpop.f32.mrb[0].mxu0
    %v6421 = vadd.f32 %v6171, %v6420
    %v6422 = vpop.f32.mrb[0].mxu0
    %6423 = vmatprep.mubr.f32.mxu0 0.0
    %6424 = vmatmul.mubr.f32.gmra.mrb[0].mxu0 %v5485
    %v6425 = vpop.f32.mrb[0].mxu0
    %v6426 = vadd.f32 %v6176, %v6425
    %v6427 = vpop.f32.mrb[0].mxu0
    %6428 = vmatprep.mubr.f32.mxu0 0.0
    %6429 = vmatmul.mubr.f32.gmra.mrb[0].mxu0 %v5488
    %v6430 = vpop.f32.mrb[0].mxu0
    %v6431 = vadd.f32 %v6181, %v6430
    %v6432 = vpop.f32.mrb[0].mxu0
    %6433 = vmatprep.mubr.f32.mxu0 0.0
    %6434 = vmatmul.mubr.f32.gmra.mrb[0].mxu0 %v5491
    %v6435 = vpop.f32.mrb[0].mxu0
    %v6436 = vadd.f32 %v6186, %v6435
    %v6437 = vpop.f32.mrb[0].mxu0
    %6438 = vmatprep.mubr.f32.mxu0 0.0
    %6439 = vmatmul.mubr.f32.gmra.mrb[0].mxu0 %v5494
    %v6440 = vpop.f32.mrb[0].mxu0
    %v6441 = vadd.f32 %v6191, %v6440
    %v6442 = vpop.f32.mrb[0].mxu0
    %6443 = vmatprep.mubr.f32.mxu0 0.0
    %6444 = vmatmul.mubr.f32.gmra.mrb[0].mxu0 %v5497
    %v6445 = vpop.f32.mrb[0].mxu0
    %v6446 = vadd.f32 %v6196, %v6445
    %v6447 = vpop.f32.mrb[0].mxu0
    %6448 = vmatprep.mubr.f32.mxu0 0.0
    %6449 = vmatmul.mubr.f32.gmra.mrb[0].mxu0 %v5500
    %v6450 = vpop.f32.mrb[0].mxu0
    %v6451 = vadd.f32 %v6201, %v6450
    %v6452 = vpop.f32.mrb[0].mxu0
    %6453 = vmatprep.mubr.f32.mxu0 0.0
    %6454 = vmatmul.mubr.f32.gmra.mrb[0].mxu0 %v5503
    %v6455 = vpop.f32.mrb[0].mxu0
    %v6456 = vadd.f32 %v6206, %v6455
    %v6457 = vpop.f32.mrb[0].mxu0
    %6458 = vmatprep.mubr.f32.mxu0 0.0
    %6459 = vmatmul.mubr.f32.gmra.mrb[0].mxu0 %v5506
    %v6460 = vpop.f32.mrb[0].mxu0
    %v6461 = vadd.f32 %v6211, %v6460
    %v6462 = vpop.f32.mrb[0].mxu0
    %6463 = vmatprep.mubr.f32.mxu0 0.0
    %6464 = vmatmul.mubr.f32.gmra.mrb[0].mxu0 %v5509
    %v6465 = vpop.f32.mrb[0].mxu0
    %v6466 = vadd.f32 %v6216, %v6465
    %v6467 = vpop.f32.mrb[0].mxu0
    %6468 = vmatprep.mubr.f32.mxu0 0.0
    %6469 = vmatmul.mubr.f32.gmra.mrb[0].mxu0 %v5512
    %v6470 = vpop.f32.mrb[0].mxu0
    %v6471 = vadd.f32 %v6221, %v6470
    %v6472 = vpop.f32.mrb[0].mxu0
    %6473 = vmatprep.mubr.f32.mxu0 0.0
    %6474 = vmatmul.mubr.f32.gmra.mrb[0].mxu0 %v5515
    %v6475 = vpop.f32.mrb[0].mxu0
    %v6476 = vadd.f32 %v6226, %v6475
    %v6477 = vpop.f32.mrb[0].mxu0
    %6478 = vmatprep.mubr.f32.mxu0 0.0
    %6479 = vmatmul.mubr.f32.gmra.mrb[0].mxu0 %v5518
    %v6480 = vpop.f32.mrb[0].mxu0
    %v6481 = vadd.f32 %v6231, %v6480
    %v6482 = vpop.f32.mrb[0].mxu0
    %6483 = vmatprep.mubr.f32.mxu0 0.0
    %6484 = vmatmul.mubr.f32.gmra.mrb[0].mxu0 %v5521
    %v6485 = vpop.f32.mrb[0].mxu0
    %v6486 = vadd.f32 %v6236, %v6485
    %v6487 = vpop.f32.mrb[0].mxu0
    %6488 = vmatprep.mubr.f32.mxu0 0.0
    %6489 = vmatmul.mubr.f32.gmra.mrb[0].mxu0 %v5524
    %v6490 = vpop.f32.mrb[0].mxu0
    %v6491 = vadd.f32 %v6241, %v6490
    %v6492 = vpop.f32.mrb[0].mxu0
    %6493 = vmatprep.mubr.f32.mxu0 0.0
    %6494 = vmatmul.mubr.f32.gmra.mrb[0].mxu0 %v5527
    %v6495 = vpop.f32.mrb[0].mxu0
    %v6496 = vadd.f32 %v6246, %v6495
    %v6497 = vpop.f32.mrb[0].mxu0
    %6498 = vmatprep.mubr.f32.mxu0 0.0
    %6499 = vmatmul.mubr.f32.gmra.mrb[0].mxu0 %v5530
    %v6500 = vpop.f32.mrb[0].mxu0
    %v6501 = vadd.f32 %v6251, %v6500
    %v6502 = vpop.f32.mrb[0].mxu0
    %6503 = vmatprep.mubr.f32.mxu0 0.0
    %6504 = vmatmul.mubr.f32.gmra.mrb[0].mxu0 %v5533
    %v6505 = vpop.f32.mrb[0].mxu0
    %v6506 = vadd.f32 %v6256, %v6505
    %v6507 = vpop.f32.mrb[0].mxu0
    %6508 = vmatprep.mubr.f32.mxu0 0.0
    %6509 = vmatmul.mubr.f32.gmra.mrb[0].mxu0 %v5536
    %v6510 = vpop.f32.mrb[0].mxu0
    %v6511 = vadd.f32 %v6261, %v6510
    %v6512 = vpop.f32.mrb[0].mxu0
    %6513 = vmatprep.mubr.f32.mxu0 0.0
    %6514 = vmatmul.mubr.f32.gmra.mrb[0].mxu0 %v5539
    %v6515 = vpop.f32.mrb[0].mxu0
    %v6516 = vadd.f32 %v6266, %v6515
    %v6517 = vpop.f32.mrb[0].mxu0
    %6518 = vmatprep.mubr.f32.mxu0 0.0
    %6519 = vmatmul.mubr.f32.gmra.mrb[0].mxu0 %v5542
    %v6520 = vpop.f32.mrb[0].mxu0
    %v6521 = vadd.f32 %v6271, %v6520
    %v6522 = vpop.f32.mrb[0].mxu0
    %6523 = vmatprep.mubr.f32.mxu0 0.0
    %6524 = vmatmul.mubr.f32.gmra.mrb[0].mxu0 %v5545
    %v6525 = vpop.f32.mrb[0].mxu0
    %v6526 = vadd.f32 %v6276, %v6525
    %v6527 = vpop.f32.mrb[0].mxu0
    %6528 = vmatprep.mubr.f32.mxu0 0.0
    %6529 = vmatmul.mubr.f32.gmra.mrb[0].mxu0 %v5548
    %v6530 = vpop.f32.mrb[0].mxu0
    %v6531 = vadd.f32 %v6281, %v6530
    %v6532 = vpop.f32.mrb[0].mxu0
    %6533 = vmatprep.mubr.f32.mxu0 0.0
    %6534 = vmatmul.mubr.f32.gmra.mrb[0].mxu0 %v5551
    %v6535 = vpop.f32.mrb[0].mxu0
    %v6536 = vadd.f32 %v6286, %v6535
    %v6537 = vpop.f32.mrb[0].mxu0
    %6538 = vmatprep.mubr.f32.mxu0 0.0
    %6539 = vmatmul.mubr.f32.gmra.mrb[0].mxu0 %v5554
    %v6540 = vpop.f32.mrb[0].mxu0
    %v6541 = vadd.f32 %v6291, %v6540
    %v6542 = vpop.f32.mrb[0].mxu0
    %6543 = vmatprep.mubr.f32.mxu0 0.0
    %6544 = vmatmul.mubr.f32.gmra.mrb[0].mxu0 %v5557
    %v6545 = vpop.f32.mrb[0].mxu0
    %v6546 = vadd.f32 %v6296, %v6545
    %v6547 = vpop.f32.mrb[0].mxu0
    %6548 = vmatprep.mubr.f32.mxu0 0.0
    %6549 = vmatmul.mubr.f32.gmra.mrb[0].mxu0 %v5560
    %v6550 = vpop.f32.mrb[0].mxu0
    %v6551 = vadd.f32 %v6301, %v6550
    %v6552 = vpop.f32.mrb[0].mxu0
    %6553 = vmatprep.mubr.f32.mxu0 0.0
    %6554 = vmatmul.mubr.f32.gmra.mrb[0].mxu0 %v5563
    %v6555 = vpop.f32.mrb[0].mxu0
    %v6556 = vadd.f32 %v6306, %v6555
    %v6557 = vpop.f32.mrb[0].mxu0
    %6558 = vmatprep.mubr.f32.mxu0 0.0
    %6559 = vmatmul.mubr.f32.gmra.mrb[0].mxu0 %v5566
    %v6560 = vpop.f32.mrb[0].mxu0
    %v6561 = vadd.f32 %v6311, %v6560
    %v6562 = vpop.f32.mrb[0].mxu0
    %6563 = vmatprep.mubr.f32.mxu0 0.0
    %6564 = vmatmul.mubr.f32.gmra.mrb[0].mxu0 %v5569
    %v6565 = vpop.f32.mrb[0].mxu0
    %v6566 = vadd.f32 %v6316, %v6565
    %v6567 = vpop.f32.mrb[0].mxu0
    %6568 = vmatprep.mubr.f32.mxu0 0.0
    %6569 = vmatmul.mubr.f32.gmra.mrb[0].mxu0 %v5572
    %v6570 = vpop.f32.mrb[0].mxu0
    %v6571 = vadd.f32 %v6321, %v6570
    %v6572 = vpop.f32.mrb[0].mxu0
    %6573 = vdwg.mxu0
    %v6574 = vld [vmem:[#allocation10 + $0x20] ss:$0 sm:$0xff]
    %v6575 = vadd.f32 %v6391, %v6574
    %v6576 = vadd.f32 %v6396, %v6574
    %v6577 = vadd.f32 %v6401, %v6574
    %v6578 = vadd.f32 %v6406, %v6574
    %v6579 = vadd.f32 %v6411, %v6574
    %v6580 = vadd.f32 %v6416, %v6574
    %v6581 = vadd.f32 %v6421, %v6574
    %v6582 = vadd.f32 %v6426, %v6574
    %v6583 = vadd.f32 %v6431, %v6574
    %v6584 = vadd.f32 %v6436, %v6574
    %v6585 = vadd.f32 %v6441, %v6574
    %v6586 = vadd.f32 %v6446, %v6574
    %v6587 = vadd.f32 %v6451, %v6574
    %v6588 = vadd.f32 %v6456, %v6574
    %v6589 = vadd.f32 %v6461, %v6574
    %v6590 = vadd.f32 %v6466, %v6574
    %v6591 = vadd.f32 %v6471, %v6574
    %v6592 = vadd.f32 %v6476, %v6574
    %v6593 = vadd.f32 %v6481, %v6574
    %v6594 = vadd.f32 %v6486, %v6574
    %v6595 = vadd.f32 %v6491, %v6574
    %v6596 = vadd.f32 %v6496, %v6574
    %v6597 = vadd.f32 %v6501, %v6574
    %v6598 = vadd.f32 %v6506, %v6574
    %v6599 = vadd.f32 %v6511, %v6574
    %v6600 = vadd.f32 %v6516, %v6574
    %v6601 = vadd.f32 %v6521, %v6574
    %v6602 = vadd.f32 %v6526, %v6574
    %v6603 = vadd.f32 %v6531, %v6574
    %v6604 = vadd.f32 %v6536, %v6574
    %v6605 = vadd.f32 %v6541, %v6574
    %v6606 = vadd.f32 %v6546, %v6574
    %v6607 = vadd.f32 %v6551, %v6574
    %v6608 = vadd.f32 %v6556, %v6574
    %v6609 = vadd.f32 %v6561, %v6574
    %v6610 = vadd.f32 %v6566, %v6574
    %v6611 = vadd.f32 %v6571, %v6574
    %6613 = vrot.lane.b32.xlu0 %v6574, 16
    %v6614 = vpop.permute.xlu0 %6613
    %v6616 = vadd.f32 %v6391, %v6614
    %v6617 = vadd.f32 %v6396, %v6614
    %v6618 = vadd.f32 %v6401, %v6614
    %v6619 = vadd.f32 %v6406, %v6614
    %v6620 = vadd.f32 %v6411, %v6614
    %v6621 = vadd.f32 %v6416, %v6614
    %v6622 = vadd.f32 %v6421, %v6614
    %v6623 = vadd.f32 %v6426, %v6614
    %v6624 = vadd.f32 %v6431, %v6614
    %v6625 = vadd.f32 %v6436, %v6614
    %v6626 = vadd.f32 %v6441, %v6614
    %v6627 = vadd.f32 %v6446, %v6614
    %v6628 = vadd.f32 %v6451, %v6614
    %v6629 = vadd.f32 %v6456, %v6614
    %v6630 = vadd.f32 %v6461, %v6614
    %v6631 = vadd.f32 %v6466, %v6614
    %v6632 = vadd.f32 %v6471, %v6614
    %v6633 = vadd.f32 %v6476, %v6614
    %v6634 = vadd.f32 %v6481, %v6614
    %v6635 = vadd.f32 %v6486, %v6614
    %v6636 = vadd.f32 %v6491, %v6614
    %v6637 = vadd.f32 %v6496, %v6614
    %v6638 = vadd.f32 %v6501, %v6614
    %v6639 = vadd.f32 %v6506, %v6614
    %v6640 = vadd.f32 %v6511, %v6614
    %v6641 = vadd.f32 %v6516, %v6614
    %v6642 = vadd.f32 %v6521, %v6614
    %v6643 = vadd.f32 %v6526, %v6614
    %v6644 = vadd.f32 %v6531, %v6614
    %v6645 = vadd.f32 %v6536, %v6614
    %v6646 = vadd.f32 %v6541, %v6614
    %v6647 = vadd.f32 %v6546, %v6614
    %v6648 = vadd.f32 %v6551, %v6614
    %v6649 = vadd.f32 %v6556, %v6614
    %v6650 = vadd.f32 %v6561, %v6614
    %v6651 = vadd.f32 %v6566, %v6614
    %v6652 = vadd.f32 %v6571, %v6614
    %6653 = vst.msk [vmem:[%s11] sm:$0xff] %vm2934, %v6575
    %6654 = vst.msk [vmem:[%s11 + $0x8] sm:$0xff] %vm2934, %v6576
    %6655 = vst.msk [vmem:[%s11 + $0x10] sm:$0xff] %vm2934, %v6577
    %6656 = vst.msk [vmem:[%s11 + $0x18] sm:$0xff] %vm2934, %v6578
    %6657 = vst.msk [vmem:[%s11 + $0x20] sm:$0xff] %vm2934, %v6579
    %6658 = vst.msk [vmem:[%s11 + $0x28] sm:$0xff] %vm2934, %v6580
    %6659 = vst.msk [vmem:[%s11 + $0x30] sm:$0xff] %vm2934, %v6581
    %6660 = vst.msk [vmem:[%s11 + $0x38] sm:$0xff] %vm2934, %v6582
    %6661 = vst.msk [vmem:[%s11 + $0x40] sm:$0xff] %vm2934, %v6583
    %6662 = vst.msk [vmem:[%s11 + $0x48] sm:$0xff] %vm2934, %v6584
    %6663 = vst.msk [vmem:[%s11 + $0x50] sm:$0xff] %vm2934, %v6585
    %6664 = vst.msk [vmem:[%s11 + $0x58] sm:$0xff] %vm2934, %v6586
    %6665 = vst.msk [vmem:[%s11 + $0x60] sm:$0xff] %vm2934, %v6587
    %6666 = vst.msk [vmem:[%s11 + $0x68] sm:$0xff] %vm2934, %v6588
    %6667 = vst.msk [vmem:[%s11 + $0x70] sm:$0xff] %vm2934, %v6589
    %6668 = vst.msk [vmem:[%s11 + $0x78] sm:$0xff] %vm2934, %v6590
    %6669 = vst.msk [vmem:[%s11 + $0x80] sm:$0xff] %vm2934, %v6591
    %6670 = vst.msk [vmem:[%s11 + $0x88] sm:$0xff] %vm2934, %v6592
    %6671 = vst.msk [vmem:[%s11 + $0x90] sm:$0xff] %vm2934, %v6593
    %6672 = vst.msk [vmem:[%s11 + $0x98] sm:$0xff] %vm2934, %v6594
    %6673 = vst.msk [vmem:[%s11 + $0xa0] sm:$0xff] %vm2934, %v6595
    %6674 = vst.msk [vmem:[%s11 + $0xa8] sm:$0xff] %vm2934, %v6596
    %6675 = vst.msk [vmem:[%s11 + $0xb0] sm:$0xff] %vm2934, %v6597
    %6676 = vst.msk [vmem:[%s11 + $0xb8] sm:$0xff] %vm2934, %v6598
    %6677 = vst.msk [vmem:[%s11 + $0xc0] sm:$0xff] %vm2934, %v6599
    %6678 = vst.msk [vmem:[%s11 + $0xc8] sm:$0xff] %vm2934, %v6600
    %6679 = vst.msk [vmem:[%s11 + $0xd0] sm:$0xff] %vm2934, %v6601
    %6680 = vst.msk [vmem:[%s11 + $0xd8] sm:$0xff] %vm2934, %v6602
    %6681 = vst.msk [vmem:[%s11 + $0xe0] sm:$0xff] %vm2934, %v6603
    %6682 = vst.msk [vmem:[%s11 + $0xe8] sm:$0xff] %vm2934, %v6604
    %6683 = vst.msk [vmem:[%s11 + $0xf0] sm:$0xff] %vm2934, %v6605
    %6684 = vst.msk [vmem:[%s11 + $0xf8] sm:$0xff] %vm2934, %v6606
    %6685 = vst.msk [vmem:[%s11 + $0x100] sm:$0xff] %vm2934, %v6607
    %6686 = vst.msk [vmem:[%s11 + $0x108] sm:$0xff] %vm2934, %v6608
    %6687 = vst.msk [vmem:[%s11 + $0x110] sm:$0xff] %vm2934, %v6609
    %6688 = vst.msk [vmem:[%s11 + $0x118] sm:$0xff] %vm2934, %v6610
    %6689 = vst.msk [vmem:[%s11 + $0x120] sm:$0x1] %vm3283, %v6611
    %6727 = vrot.lane.b32.xlu0 %v6616, 112
    %v6728 = vpop.permute.xlu0 %6727
    %6729 = vrot.lane.b32.xlu0 %v6617, 112
    %v6730 = vpop.permute.xlu0 %6729
    %6731 = vrot.lane.b32.xlu0 %v6618, 112
    %v6732 = vpop.permute.xlu0 %6731
    %6733 = vrot.lane.b32.xlu0 %v6619, 112
    %v6734 = vpop.permute.xlu0 %6733
    %6735 = vrot.lane.b32.xlu0 %v6620, 112
    %v6736 = vpop.permute.xlu0 %6735
    %6737 = vrot.lane.b32.xlu0 %v6621, 112
    %v6738 = vpop.permute.xlu0 %6737
    %6739 = vrot.lane.b32.xlu0 %v6622, 112
    %v6740 = vpop.permute.xlu0 %6739
    %6741 = vrot.lane.b32.xlu0 %v6623, 112
    %v6742 = vpop.permute.xlu0 %6741
    %6743 = vrot.lane.b32.xlu0 %v6624, 112
    %v6744 = vpop.permute.xlu0 %6743
    %6745 = vrot.lane.b32.xlu0 %v6625, 112
    %v6746 = vpop.permute.xlu0 %6745
    %6747 = vrot.lane.b32.xlu0 %v6626, 112
    %v6748 = vpop.permute.xlu0 %6747
    %6749 = vrot.lane.b32.xlu0 %v6627, 112
    %v6750 = vpop.permute.xlu0 %6749
    %6751 = vrot.lane.b32.xlu0 %v6628, 112
    %v6752 = vpop.permute.xlu0 %6751
    %6753 = vrot.lane.b32.xlu0 %v6629, 112
    %v6754 = vpop.permute.xlu0 %6753
    %6755 = vrot.lane.b32.xlu0 %v6630, 112
    %v6756 = vpop.permute.xlu0 %6755
    %6757 = vrot.lane.b32.xlu0 %v6631, 112
    %v6758 = vpop.permute.xlu0 %6757
    %6759 = vrot.lane.b32.xlu0 %v6632, 112
    %v6760 = vpop.permute.xlu0 %6759
    %6761 = vrot.lane.b32.xlu0 %v6633, 112
    %v6762 = vpop.permute.xlu0 %6761
    %6763 = vrot.lane.b32.xlu0 %v6634, 112
    %v6764 = vpop.permute.xlu0 %6763
    %6765 = vrot.lane.b32.xlu0 %v6635, 112
    %v6766 = vpop.permute.xlu0 %6765
    %6767 = vrot.lane.b32.xlu0 %v6636, 112
    %v6768 = vpop.permute.xlu0 %6767
    %6769 = vrot.lane.b32.xlu0 %v6637, 112
    %v6770 = vpop.permute.xlu0 %6769
    %6771 = vrot.lane.b32.xlu0 %v6638, 112
    %v6772 = vpop.permute.xlu0 %6771
    %6773 = vrot.lane.b32.xlu0 %v6639, 112
    %v6774 = vpop.permute.xlu0 %6773
    %6775 = vrot.lane.b32.xlu0 %v6640, 112
    %v6776 = vpop.permute.xlu0 %6775
    %6777 = vrot.lane.b32.xlu0 %v6641, 112
    %v6778 = vpop.permute.xlu0 %6777
    %6779 = vrot.lane.b32.xlu0 %v6642, 112
    %v6780 = vpop.permute.xlu0 %6779
    %6781 = vrot.lane.b32.xlu0 %v6643, 112
    %v6782 = vpop.permute.xlu0 %6781
    %6783 = vrot.lane.b32.xlu0 %v6644, 112
    %v6784 = vpop.permute.xlu0 %6783
    %6785 = vrot.lane.b32.xlu0 %v6645, 112
    %v6786 = vpop.permute.xlu0 %6785
    %6787 = vrot.lane.b32.xlu0 %v6646, 112
    %v6788 = vpop.permute.xlu0 %6787
    %6789 = vrot.lane.b32.xlu0 %v6647, 112
    %v6790 = vpop.permute.xlu0 %6789
    %6791 = vrot.lane.b32.xlu0 %v6648, 112
    %v6792 = vpop.permute.xlu0 %6791
    %6793 = vrot.lane.b32.xlu0 %v6649, 112
    %v6794 = vpop.permute.xlu0 %6793
    %6795 = vrot.lane.b32.xlu0 %v6650, 112
    %v6796 = vpop.permute.xlu0 %6795
    %6797 = vrot.lane.b32.xlu0 %v6651, 112
    %v6798 = vpop.permute.xlu0 %6797
    %6799 = vrot.lane.b32.xlu0 %v6652, 112
    %v6800 = vpop.permute.xlu0 %6799
    %s6838 = scalar_lea.vmem %s11, 296
    %6839 = vst.msk [vmem:[%s6838] sm:$0xff] %vm2934, %v6728
    %6840 = vst.msk [vmem:[%s6838 + $0x8] sm:$0xff] %vm2934, %v6730
    %6841 = vst.msk [vmem:[%s6838 + $0x10] sm:$0xff] %vm2934, %v6732
    %6842 = vst.msk [vmem:[%s6838 + $0x18] sm:$0xff] %vm2934, %v6734
    %6843 = vst.msk [vmem:[%s6838 + $0x20] sm:$0xff] %vm2934, %v6736
    %6844 = vst.msk [vmem:[%s6838 + $0x28] sm:$0xff] %vm2934, %v6738
    %6845 = vst.msk [vmem:[%s6838 + $0x30] sm:$0xff] %vm2934, %v6740
    %6846 = vst.msk [vmem:[%s6838 + $0x38] sm:$0xff] %vm2934, %v6742
    %6847 = vst.msk [vmem:[%s6838 + $0x40] sm:$0xff] %vm2934, %v6744
    %6848 = vst.msk [vmem:[%s6838 + $0x48] sm:$0xff] %vm2934, %v6746
    %6849 = vst.msk [vmem:[%s6838 + $0x50] sm:$0xff] %vm2934, %v6748
    %6850 = vst.msk [vmem:[%s6838 + $0x58] sm:$0xff] %vm2934, %v6750
    %6851 = vst.msk [vmem:[%s6838 + $0x60] sm:$0xff] %vm2934, %v6752
    %6852 = vst.msk [vmem:[%s6838 + $0x68] sm:$0xff] %vm2934, %v6754
    %6853 = vst.msk [vmem:[%s6838 + $0x70] sm:$0xff] %vm2934, %v6756
    %6854 = vst.msk [vmem:[%s6838 + $0x78] sm:$0xff] %vm2934, %v6758
    %6855 = vst.msk [vmem:[%s6838 + $0x80] sm:$0xff] %vm2934, %v6760
    %6856 = vst.msk [vmem:[%s6838 + $0x88] sm:$0xff] %vm2934, %v6762
    %6857 = vst.msk [vmem:[%s6838 + $0x90] sm:$0xff] %vm2934, %v6764
    %6858 = vst.msk [vmem:[%s6838 + $0x98] sm:$0xff] %vm2934, %v6766
    %6859 = vst.msk [vmem:[%s6838 + $0xa0] sm:$0xff] %vm2934, %v6768
    %6860 = vst.msk [vmem:[%s6838 + $0xa8] sm:$0xff] %vm2934, %v6770
    %6861 = vst.msk [vmem:[%s6838 + $0xb0] sm:$0xff] %vm2934, %v6772
    %6862 = vst.msk [vmem:[%s6838 + $0xb8] sm:$0xff] %vm2934, %v6774
    %6863 = vst.msk [vmem:[%s6838 + $0xc0] sm:$0xff] %vm2934, %v6776
    %6864 = vst.msk [vmem:[%s6838 + $0xc8] sm:$0xff] %vm2934, %v6778
    %6865 = vst.msk [vmem:[%s6838 + $0xd0] sm:$0xff] %vm2934, %v6780
    %6866 = vst.msk [vmem:[%s6838 + $0xd8] sm:$0xff] %vm2934, %v6782
    %6867 = vst.msk [vmem:[%s6838 + $0xe0] sm:$0xff] %vm2934, %v6784
    %6868 = vst.msk [vmem:[%s6838 + $0xe8] sm:$0xff] %vm2934, %v6786
    %6869 = vst.msk [vmem:[%s6838 + $0xf0] sm:$0xff] %vm2934, %v6788
    %6870 = vst.msk [vmem:[%s6838 + $0xf8] sm:$0xff] %vm2934, %v6790
    %6871 = vst.msk [vmem:[%s6838 + $0x100] sm:$0xff] %vm2934, %v6792
    %6872 = vst.msk [vmem:[%s6838 + $0x108] sm:$0xff] %vm2934, %v6794
    %6873 = vst.msk [vmem:[%s6838 + $0x110] sm:$0xff] %vm2934, %v6796
    %6874 = vst.msk [vmem:[%s6838 + $0x118] sm:$0xff] %vm2934, %v6798
    %6875 = vst.msk [vmem:[%s6838 + $0x120] sm:$0x1] %vm3283, %v6800
    // Predicated region
    $region107: #{decoder_forward.1} parent=1 // pred_check
      _
    $region108: #{decoder_forward.1} parent=1 // pred_check_branch
      %6877 = sbr.rel (0) target = $region110
    $region109: #{decoder_forward.1} parent=1 // pred_region
      _
    $region110: #{decoder_forward.1} parent=1 // pred_fallthru
      _
    // Predicated region
    $region111: #{decoder_forward.1} parent=1 // pred_check
      _
    $region112: #{decoder_forward.1} parent=1 // pred_check_branch
      %6879 = sbr.rel (0) target = $region114
    $region113: #{decoder_forward.1} parent=1 // pred_region
      _
    $region114: #{decoder_forward.1} parent=1 // pred_fallthru
      _
    %6880 = vsyncpa [#allocation7], 1
    %6881 = vsyncpa [#allocation9], 1
    %6882 = vsyncpa [#allocation12], 1
    %6883 = vsyncpa [#allocation15], 1
  %6884 = vsyncmov [#allocation5]
  %s6885 = vpop.sfrf %6884
  %p6886 = scmp.eq.s32.totalorder %s6885, 0
  %p6887 = pneg %p6886
  %6889 = shalt.err (%p6887)

</llo_original>
